<compile_context>
chip_gen: v7x
topology: tpu7x:2x2x1
jax: 0.10.0
libtpu: 0.0.40
codegen_flags: <defaults>
</compile_context>

<pallas_src>
import functools

import jax
import jax.numpy as jnp
from jax import lax
from jax.experimental import pallas as pl
from jax.experimental.pallas import tpu as pltpu


# ---------------------------------------------------------------------------
# In-kernel helpers
# ---------------------------------------------------------------------------
def _edge_masks(n_rows, h, w):
    """Validity masks for the off-center taps of a 3x3, padding=1 conv.

    Works for B images stacked along sublanes (n_rows = B*h*w): masks are
    built from the per-image local index, so rolled taps that would cross an
    image (or batch) boundary are zeroed.
    """
    p = lax.broadcasted_iota(jnp.int32, (n_rows, 1), 0) % (h * w)
    col = p % w
    row_lo = p >= w               # source row i-1 exists
    row_hi = p < (h - 1) * w      # source row i+1 exists
    col_lo = col >= 1             # source col j-1 exists
    col_hi = col < (w - 1)        # source col j+1 exists
    return row_lo, row_hi, col_lo, col_hi


def _subsample2(y, n_image_rows, w, c):
    """Keep even image rows / even cols: (n_image_rows*w, c) -> (.../4, c)."""
    ro, wo = n_image_rows // 2, w // 2
    y = y.reshape(n_image_rows * wo, 2 * c)[:, :c]    # drop odd image columns
    y = y.reshape(ro, 2, wo, c)[:, 0]                 # drop odd image rows
    return y.reshape(ro * wo, c)


def _build_taps(x, masks, w, c, taps_ref, *, stride):
    """Write the 9 shifted+masked (and stride-subsampled) taps of a 3x3
    padding=1 conv into `taps_ref` as a (rows_out, 9*c) bf16 im2col tensor.

    x: (rows, c) f32 with rows = B*h*w (B images stacked along sublanes).
    Each tap = XLU sublane roll + VPU boundary mask; only one f32 tap is live
    at a time (the im2col scratch and the matmul operands are bf16).
    TODO(synk): roll directly in bf16 once packed sublane rotates are
                guaranteed on all TPU targets.
    """
    rows = x.shape[0]
    row_lo, row_hi, col_lo, col_hi = masks
    for kh in range(3):
        dh = kh - 1
        for kw in range(3):
            dw = kw - 1
            t = kh * 3 + kw
            d = dh * w + dw
            tap = x if d == 0 else pltpu.roll(x, (-d) % rows, axis=0)
            valid = None
            if dh == -1:
                valid = row_lo
            elif dh == 1:
                valid = row_hi
            if dw == -1:
                valid = col_lo if valid is None else jnp.logical_and(valid, col_lo)
            elif dw == 1:
                valid = col_hi if valid is None else jnp.logical_and(valid, col_hi)
            if valid is not None:
                tap = jnp.where(valid, tap, 0.0)
            if stride == 2:
                tap = _subsample2(tap, rows // w, w, c)
            taps_ref[:, t * c:(t + 1) * c] = tap.astype(taps_ref.dtype)


def _residual_block_kernel(x_ref, w1_ref, s1_ref, b1_ref, w2_ref, s2_ref, b2_ref,
                           *rest, H, W, Cin, Cout, stride, has_ds):
    if has_ds:
        sd_ref, bd_ref, o_ref, taps1_ref, taps2_ref = rest
    else:
        o_ref, taps1_ref, taps2_ref = rest

    B = x_ref.shape[0]
    ho, wo = H // stride, W // stride

    # (B, H*W, Cin) bf16 -> (B*H*W, Cin); f32 only for the roll/mask step.
    x = x_ref[...].reshape(B * H * W, Cin)
    x32 = x.astype(jnp.float32)

    # --- im2col taps for conv1 (+ downsample conv): built ONCE and shared. ---
    masks_in = _edge_masks(B * H * W, H, W)
    _build_taps(x32, masks_in, W, Cin, taps1_ref, stride=stride)

    # conv1 (and downsample conv if present) as a single big-K matmul:
    # the wrapper concatenated [w1 | wd] along the output-channel axis.
    acc = jnp.dot(taps1_ref[...], w1_ref[...], preferred_element_type=jnp.float32)

    y = jnp.maximum(acc[:, :Cout] * s1_ref[...] + b1_ref[...], 0.0)    # BN1 + ReLU
    if has_ds:
        r = acc[:, Cout:] * sd_ref[...] + bd_ref[...]                  # downsample BN
    else:
        r = x32                                   # identity (stride==1, Cin==Cout)

    # --- conv2 (stride 1) as a second im2col matmul. ---
    masks_out = masks_in if stride == 1 else _edge_masks(B * ho * wo, ho, wo)
    _build_taps(y, masks_out, wo, Cout, taps2_ref, stride=1)
    out = jnp.dot(taps2_ref[...], w2_ref[...], preferred_element_type=jnp.float32)

    out = jnp.maximum(out * s2_ref[...] + b2_ref[...] + r, 0.0)        # BN2 + add + ReLU
    o_ref[...] = out.astype(o_ref.dtype).reshape(B, ho * wo, Cout)


# ---------------------------------------------------------------------------
# Wrapper
# ---------------------------------------------------------------------------
def _flat_w(w):
    """(3,3,ci,co) HWIO conv weight -> (9*ci, co) bf16, matching the
    tap-major / channel-minor im2col column order used by _build_taps."""
    kh, kw, ci, co = w.shape
    return w.reshape(kh * kw * ci, co).astype(jnp.bfloat16)


def nchw_to_flat(x_nchw):
    """(N, C, H, W) -> (N, H*W, C) bf16 flat-NHWC kernel layout."""
    n, c, h, w = x_nchw.shape
    return jnp.transpose(x_nchw, (0, 2, 3, 1)).reshape(n, h * w, c).astype(jnp.bfloat16)


def flat_to_nchw(x_flat, h, w):
    n, hw, c = x_flat.shape
    return jnp.transpose(x_flat.reshape(n, h, w, c), (0, 3, 1, 2)).astype(jnp.float32)


def residual_block_flat(x_flat, params, *, height, width, stride=1, batch_tile=None):
    """ResidualBlock forward on flat-NHWC bf16 activations.

    x_flat: (N, height*width, Cin) bf16 -> (N, (height//s)*(width//s), Cout) bf16.
    Chained blocks stay in this layout (no NCHW<->NHWC / f32 round trips).
    """
    N, hw, Cin = x_flat.shape
    assert hw == height * width
    Cout = params["w1"].shape[-1]
    has_ds = "wd" in params
    assert stride in (1, 2)
    if stride == 2:
        assert height % 2 == 0 and width % 2 == 0
    if not has_ds:
        assert stride == 1 and Cin == Cout, "identity shortcut needs matching shapes"
    ho, wo = height // stride, width // stride

    # Several images per grid step amortize the ~0.35us per-step overhead for
    # these tiny CIFAR feature maps; realistic (56x56x64+) maps should switch
    # to batch_tile=1 plus row-strip tiling instead.
    if batch_tile is None:
        batch_tile = N if N <= 4 else 1
    assert N % batch_tile == 0
    # TODO(synk): for v7x with N == 1, add a second "parallel" grid axis (e.g.
    #             output-channel or row-strip split) so both TensorCores work.

    x_flat = x_flat.astype(jnp.bfloat16)
    w1 = _flat_w(params["w1"])
    if has_ds:
        w1 = jnp.concatenate([w1, _flat_w(params["wd"])], axis=1)   # [w1 | wd]
    w2 = _flat_w(params["w2"])
    cout_eff = w1.shape[1]

    def bn(name):                      # folded eval-mode BN: (co,) -> (1, co) f32
        return params[name].reshape(1, Cout).astype(jnp.float32)

    args = [x_flat, w1, bn("s1"), bn("b1"), w2, bn("s2"), bn("b2")]
    in_specs = [
        pl.BlockSpec((batch_tile, hw, Cin), lambda n: (n, 0, 0)),
        pl.BlockSpec((9 * Cin, cout_eff), lambda n: (0, 0)),
        pl.BlockSpec((1, Cout), lambda n: (0, 0)),
        pl.BlockSpec((1, Cout), lambda n: (0, 0)),
        pl.BlockSpec((9 * Cout, Cout), lambda n: (0, 0)),
        pl.BlockSpec((1, Cout), lambda n: (0, 0)),
        pl.BlockSpec((1, Cout), lambda n: (0, 0)),
    ]
    if has_ds:
        args += [bn("sd"), bn("bd")]
        in_specs += [pl.BlockSpec((1, Cout), lambda n: (0, 0)),
                     pl.BlockSpec((1, Cout), lambda n: (0, 0))]

    kernel = functools.partial(_residual_block_kernel, H=height, W=width,
                               Cin=Cin, Cout=Cout, stride=stride, has_ds=has_ds)

    rows_out = batch_tile * ho * wo
    flops = (2 * N * ho * wo * (9 * Cin) * cout_eff        # conv1 (+ downsample conv)
             + 2 * N * ho * wo * (9 * Cout) * Cout)        # conv2
    bytes_accessed = (N * hw * Cin * 2
                      + (9 * Cin * cout_eff + 9 * Cout * Cout) * 2
                      + (6 if has_ds else 4) * Cout * 4
                      + N * ho * wo * Cout * 2)

    out = pl.pallas_call(
        kernel,
        out_shape=jax.ShapeDtypeStruct((N, ho * wo, Cout), jnp.bfloat16),
        grid=(N // batch_tile,),
        in_specs=in_specs,
        out_specs=pl.BlockSpec((batch_tile, ho * wo, Cout), lambda n: (n, 0, 0)),
        scratch_shapes=[pltpu.VMEM((rows_out, 9 * Cin), jnp.bfloat16),    # conv1/wd taps
                        pltpu.VMEM((rows_out, 9 * Cout), jnp.bfloat16)],  # conv2 taps
        compiler_params=pltpu.CompilerParams(
            dimension_semantics=("parallel",),
            vmem_limit_bytes=32 * 1024 * 1024),
        cost_estimate=pl.CostEstimate(flops=int(flops), transcendentals=0,
                                      bytes_accessed=int(bytes_accessed)),
    )(*args)
    return out


# ---------------------------------------------------------------------------
# Reference (plain JAX) and deterministic synthetic parameters
# ---------------------------------------------------------------------------
def reference_block(x_nchw, params, *, stride=1):
    """Pure-JAX reference that mirrors the kernel's bf16 rounding points."""
    rb = lambda a: a.astype(jnp.bfloat16).astype(jnp.float32)
    x = rb(jnp.transpose(x_nchw, (0, 2, 3, 1)))

    def conv(inp, w, s):
        return lax.conv_general_dilated(inp, rb(w), (s, s), ((1, 1), (1, 1)),
                                        dimension_numbers=("NHWC", "HWIO", "NHWC"),
                                        precision=lax.Precision.HIGHEST)

    y = jnp.maximum(conv(x, params["w1"], stride) * params["s1"] + params["b1"], 0.0)
    if "wd" in params:
        r = conv(x, params["wd"], stride) * params["sd"] + params["bd"]
    else:
        r = x
    out = jnp.maximum(conv(rb(y), params["w2"], 1) * params["s2"] + params["b2"] + r, 0.0)
    return jnp.transpose(rb(out), (0, 3, 1, 2))


def _init_conv(key, cin, cout):
    return jax.random.normal(key, (3, 3, cin, cout), jnp.float32) * (0.3 / (cin ** 0.5))


def _init_folded_bn(key, c, eps=1e-5):
    k1, k2, k3, k4 = jax.random.split(key, 4)
    gamma = 1.0 + 0.1 * jax.random.normal(k1, (c,), jnp.float32)
    beta = 0.1 * jax.random.normal(k2, (c,), jnp.float32)
    rmean = 0.1 * jax.random.normal(k3, (c,), jnp.float32)
    rvar = 1.0 + 0.1 * jnp.abs(jax.random.normal(k4, (c,), jnp.float32))
    scale = gamma / jnp.sqrt(rvar + eps)
    shift = beta - rmean * scale
    return scale, shift


def make_block_params(key, cin, cout, *, stride=1):
    keys = iter(jax.random.split(key, 8))
    p = {}
    p["w1"] = _init_conv(next(keys), cin, cout)
    p["s1"], p["b1"] = _init_folded_bn(next(keys), cout)
    p["w2"] = _init_conv(next(keys), cout, cout)
    p["s2"], p["b2"] = _init_folded_bn(next(keys), cout)
    if stride != 1 or cin != cout:
        p["wd"] = _init_conv(next(keys), cin, cout)
        p["sd"], p["bd"] = _init_folded_bn(next(keys), cout)
    return p


# ---------------------------------------------------------------------------
if __name__ == "__main__":
    key = jax.random.PRNGKey(0)
    kx, k1, k2 = jax.random.split(key, 3)

    N, C1, H, W = 2, 32, 16, 16
    C2 = 64

    x = jax.random.normal(kx, (N, C1, H, W), jnp.float32)

    blk1 = make_block_params(k1, C1, C1, stride=1)   # identity shortcut
    blk2 = make_block_params(k2, C1, C2, stride=2)   # conv3x3(s2)+BN shortcut

    # Chain the blocks in flat-NHWC bf16: one layout conversion total.
    x_flat = nchw_to_flat(x)
    y1_flat = residual_block_flat(x_flat, blk1, height=H, width=W, stride=1)
    y2_flat = residual_block_flat(y1_flat, blk2, height=H, width=W, stride=2)
    y2_flat = jax.block_until_ready(y2_flat)

    y1 = flat_to_nchw(y1_flat, H, W)
    y2 = flat_to_nchw(y2_flat, H // 2, W // 2)

    assert y1.shape == (N, C1, H, W), y1.shape
    assert y2.shape == (N, C2, H // 2, W // 2), y2.shape
    assert bool(jnp.all(jnp.isfinite(y1))) and bool(jnp.all(jnp.isfinite(y2)))

    # Per-block numerical check against a plain-JAX reference.
    err1 = float(jnp.max(jnp.abs(y1 - reference_block(x, blk1, stride=1))))
    err2 = float(jnp.max(jnp.abs(y2 - reference_block(y1, blk2, stride=2))))
    assert err1 < 5e-2 and err2 < 5e-2, (err1, err2)

    print("KERNEL_OK")
</pallas_src>

<mosaic_0001>
module attributes {stable_mosaic.version = 11 : i64} {
  func.func @_residual_block_kernel(%arg0: i32, %arg1: memref<2x256x32xbf16, #tpu.memory_space<vmem>>, %arg2: memref<288x32xbf16, #tpu.memory_space<vmem>>, %arg3: memref<1x32xf32, #tpu.memory_space<vmem>>, %arg4: memref<1x32xf32, #tpu.memory_space<vmem>>, %arg5: memref<288x32xbf16, #tpu.memory_space<vmem>>, %arg6: memref<1x32xf32, #tpu.memory_space<vmem>>, %arg7: memref<1x32xf32, #tpu.memory_space<vmem>>, %arg8: memref<2x256x32xbf16, #tpu.memory_space<vmem>>, %arg9: memref<512x288xbf16, #tpu.memory_space<vmem>>, %arg10: memref<512x288xbf16, #tpu.memory_space<vmem>>) attributes {dimension_semantics = [#tpu.dimension_semantics<parallel>], iteration_bounds = array<i64: 1>, scalar_prefetch = 0 : i64, scratch_operands = 2 : i64, tpu.core_type = #tpu.core_type<tc>, window_params = [{transform_indices = @transform_0, window_bounds = array<i64: 2, 256, 32>}, {pipeline_mode = #tpu.pipeline_mode<synchronous>, transform_indices = @transform_1, window_bounds = array<i64: 288, 32>}, {pipeline_mode = #tpu.pipeline_mode<synchronous>, transform_indices = @transform_2, window_bounds = array<i64: 1, 32>}, {pipeline_mode = #tpu.pipeline_mode<synchronous>, transform_indices = @transform_3, window_bounds = array<i64: 1, 32>}, {pipeline_mode = #tpu.pipeline_mode<synchronous>, transform_indices = @transform_4, window_bounds = array<i64: 288, 32>}, {pipeline_mode = #tpu.pipeline_mode<synchronous>, transform_indices = @transform_5, window_bounds = array<i64: 1, 32>}, {pipeline_mode = #tpu.pipeline_mode<synchronous>, transform_indices = @transform_6, window_bounds = array<i64: 1, 32>}, {transform_indices = @transform_7, window_bounds = array<i64: 2, 256, 32>}]} {
    %c0 = arith.constant 0 : index
    %c0_0 = arith.constant 0 : index
    %c0_1 = arith.constant 0 : index
    %0 = vector.load %arg1[%c0, %c0_0, %c0_1] : memref<2x256x32xbf16, #tpu.memory_space<vmem>>, vector<2x256x32xbf16>
    %1 = vector.shape_cast %0 : vector<2x256x32xbf16> to vector<512x32xbf16>
    %2 = arith.extf %1 : vector<512x32xbf16> to vector<512x32xf32>
    %3 = tpu.iota {dimensions = array<i32: 0>} : vector<512x1xi32>
    %c256_i32 = arith.constant 256 : i32
    %c0_i32 = arith.constant 0 : i32
    %4 = arith.cmpi eq, %c256_i32, %c0_i32 : i32
    %c1_i32 = arith.constant 1 : i32
    %5 = arith.select %4, %c1_i32, %c256_i32 : i32
    %6 = vector.broadcast %5 : i32 to vector<512x1xi32>
    %7 = arith.remsi %3, %6 : vector<512x1xi32>
    %c0_i32_2 = arith.constant 0 : i32
    %8 = vector.broadcast %c0_i32_2 : i32 to vector<512x1xi32>
    %9 = arith.cmpi ne, %7, %8 : vector<512x1xi32>
    %c0_i32_3 = arith.constant 0 : i32
    %10 = vector.broadcast %c0_i32_3 : i32 to vector<512x1xi32>
    %11 = arith.cmpi slt, %7, %10 : vector<512x1xi32>
    %c0_i32_4 = arith.constant 0 : i32
    %12 = arith.cmpi slt, %5, %c0_i32_4 : i32
    %13 = vector.broadcast %12 : i1 to vector<512x1xi1>
    %14 = vector.broadcast %13 : vector<512x1xi1> to vector<512x1xi1>
    %15 = arith.xori %11, %14 : vector<512x1xi1>
    %16 = arith.andi %15, %9 : vector<512x1xi1>
    %17 = vector.broadcast %5 : i32 to vector<512x1xi32>
    %18 = arith.addi %7, %17 : vector<512x1xi32>
    %19 = arith.select %16, %18, %7 : vector<512x1xi1>, vector<512x1xi32>
    %c16_i32 = arith.constant 16 : i32
    %c0_i32_5 = arith.constant 0 : i32
    %20 = arith.cmpi eq, %c16_i32, %c0_i32_5 : i32
    %c1_i32_6 = arith.constant 1 : i32
    %21 = arith.select %20, %c1_i32_6, %c16_i32 : i32
    %22 = vector.broadcast %21 : i32 to vector<512x1xi32>
    %23 = arith.remsi %19, %22 : vector<512x1xi32>
    %c0_i32_7 = arith.constant 0 : i32
    %24 = vector.broadcast %c0_i32_7 : i32 to vector<512x1xi32>
    %25 = arith.cmpi ne, %23, %24 : vector<512x1xi32>
    %c0_i32_8 = arith.constant 0 : i32
    %26 = vector.broadcast %c0_i32_8 : i32 to vector<512x1xi32>
    %27 = arith.cmpi slt, %23, %26 : vector<512x1xi32>
    %c0_i32_9 = arith.constant 0 : i32
    %28 = arith.cmpi slt, %21, %c0_i32_9 : i32
    %29 = vector.broadcast %28 : i1 to vector<512x1xi1>
    %30 = vector.broadcast %29 : vector<512x1xi1> to vector<512x1xi1>
    %31 = arith.xori %27, %30 : vector<512x1xi1>
    %32 = arith.andi %31, %25 : vector<512x1xi1>
    %33 = vector.broadcast %21 : i32 to vector<512x1xi32>
    %34 = arith.addi %23, %33 : vector<512x1xi32>
    %35 = arith.select %32, %34, %23 : vector<512x1xi1>, vector<512x1xi32>
    %c16_i32_10 = arith.constant 16 : i32
    %36 = vector.broadcast %c16_i32_10 : i32 to vector<512x1xi32>
    %37 = arith.cmpi sge, %19, %36 : vector<512x1xi32>
    %c240_i32 = arith.constant 240 : i32
    %38 = vector.broadcast %c240_i32 : i32 to vector<512x1xi32>
    %39 = arith.cmpi slt, %19, %38 : vector<512x1xi32>
    %c1_i32_11 = arith.constant 1 : i32
    %40 = vector.broadcast %c1_i32_11 : i32 to vector<512x1xi32>
    %41 = arith.cmpi sge, %35, %40 : vector<512x1xi32>
    %c15_i32 = arith.constant 15 : i32
    %42 = vector.broadcast %c15_i32 : i32 to vector<512x1xi32>
    %43 = arith.cmpi slt, %35, %42 : vector<512x1xi32>
    %c17_i32 = arith.constant 17 : i32
    %44 = tpu.dynamic_rotate %2 by %c17_i32 dim 0 : vector<512x32xf32>, i32 -> vector<512x32xf32>
    %45 = arith.andi %37, %41 : vector<512x1xi1>
    %cst = arith.constant 0.000000e+00 : f32
    %46 = vector.shape_cast %45 : vector<512x1xi1> to vector<512x1xi1>
    %47 = vector.broadcast %46 : vector<512x1xi1> to vector<512x32xi1>
    %48 = vector.broadcast %cst : f32 to vector<512x32xf32>
    %49 = arith.select %47, %44, %48 : vector<512x32xi1>, vector<512x32xf32>
    %50 = arith.truncf %49 : vector<512x32xf32> to vector<512x32xbf16>
    %c0_12 = arith.constant 0 : index
    %c0_13 = arith.constant 0 : index
    %51 = vector.load %arg9[%c0_12, %c0_13] : memref<512x288xbf16, #tpu.memory_space<vmem>>, vector<512x32xbf16>
    tpu.vector_store %arg9[%c0_12, %c0_13], %50 {strides = array<i32>} : memref<512x288xbf16, #tpu.memory_space<vmem>>, vector<512x32xbf16>,
    %c16_i32_14 = arith.constant 16 : i32
    %52 = tpu.dynamic_rotate %2 by %c16_i32_14 dim 0 : vector<512x32xf32>, i32 -> vector<512x32xf32>
    %cst_15 = arith.constant 0.000000e+00 : f32
    %53 = vector.shape_cast %37 : vector<512x1xi1> to vector<512x1xi1>
    %54 = vector.broadcast %53 : vector<512x1xi1> to vector<512x32xi1>
    %55 = vector.broadcast %cst_15 : f32 to vector<512x32xf32>
    %56 = arith.select %54, %52, %55 : vector<512x32xi1>, vector<512x32xf32>
    %57 = arith.truncf %56 : vector<512x32xf32> to vector<512x32xbf16>
    %c0_16 = arith.constant 0 : index
    %c32 = arith.constant 32 : index
    %58 = vector.load %arg9[%c0_16, %c32] : memref<512x288xbf16, #tpu.memory_space<vmem>>, vector<512x32xbf16>
    tpu.vector_store %arg9[%c0_16, %c32], %57 {strides = array<i32>} : memref<512x288xbf16, #tpu.memory_space<vmem>>, vector<512x32xbf16>,
    %c15_i32_17 = arith.constant 15 : i32
    %59 = tpu.dynamic_rotate %2 by %c15_i32_17 dim 0 : vector<512x32xf32>, i32 -> vector<512x32xf32>
    %60 = arith.andi %37, %43 : vector<512x1xi1>
    %cst_18 = arith.constant 0.000000e+00 : f32
    %61 = vector.shape_cast %60 : vector<512x1xi1> to vector<512x1xi1>
    %62 = vector.broadcast %61 : vector<512x1xi1> to vector<512x32xi1>
    %63 = vector.broadcast %cst_18 : f32 to vector<512x32xf32>
    %64 = arith.select %62, %59, %63 : vector<512x32xi1>, vector<512x32xf32>
    %65 = arith.truncf %64 : vector<512x32xf32> to vector<512x32xbf16>
    %c0_19 = arith.constant 0 : index
    %c64 = arith.constant 64 : index
    %66 = vector.load %arg9[%c0_19, %c64] : memref<512x288xbf16, #tpu.memory_space<vmem>>, vector<512x32xbf16>
    tpu.vector_store %arg9[%c0_19, %c64], %65 {strides = array<i32>} : memref<512x288xbf16, #tpu.memory_space<vmem>>, vector<512x32xbf16>,
    %c1_i32_20 = arith.constant 1 : i32
    %67 = tpu.dynamic_rotate %2 by %c1_i32_20 dim 0 : vector<512x32xf32>, i32 -> vector<512x32xf32>
    %cst_21 = arith.constant 0.000000e+00 : f32
    %68 = vector.shape_cast %41 : vector<512x1xi1> to vector<512x1xi1>
    %69 = vector.broadcast %68 : vector<512x1xi1> to vector<512x32xi1>
    %70 = vector.broadcast %cst_21 : f32 to vector<512x32xf32>
    %71 = arith.select %69, %67, %70 : vector<512x32xi1>, vector<512x32xf32>
    %72 = arith.truncf %71 : vector<512x32xf32> to vector<512x32xbf16>
    %c0_22 = arith.constant 0 : index
    %c96 = arith.constant 96 : index
    %73 = vector.load %arg9[%c0_22, %c96] : memref<512x288xbf16, #tpu.memory_space<vmem>>, vector<512x32xbf16>
    tpu.vector_store %arg9[%c0_22, %c96], %72 {strides = array<i32>} : memref<512x288xbf16, #tpu.memory_space<vmem>>, vector<512x32xbf16>,
    %74 = arith.truncf %2 : vector<512x32xf32> to vector<512x32xbf16>
    %c0_23 = arith.constant 0 : index
    %c128 = arith.constant 128 : index
    %75 = vector.load %arg9[%c0_23, %c128] : memref<512x288xbf16, #tpu.memory_space<vmem>>, vector<512x32xbf16>
    tpu.vector_store %arg9[%c0_23, %c128], %74 {strides = array<i32>} : memref<512x288xbf16, #tpu.memory_space<vmem>>, vector<512x32xbf16>,
    %c511_i32 = arith.constant 511 : i32
    %76 = tpu.dynamic_rotate %2 by %c511_i32 dim 0 : vector<512x32xf32>, i32 -> vector<512x32xf32>
    %cst_24 = arith.constant 0.000000e+00 : f32
    %77 = vector.shape_cast %43 : vector<512x1xi1> to vector<512x1xi1>
    %78 = vector.broadcast %77 : vector<512x1xi1> to vector<512x32xi1>
    %79 = vector.broadcast %cst_24 : f32 to vector<512x32xf32>
    %80 = arith.select %78, %76, %79 : vector<512x32xi1>, vector<512x32xf32>
    %81 = arith.truncf %80 : vector<512x32xf32> to vector<512x32xbf16>
    %c0_25 = arith.constant 0 : index
    %c160 = arith.constant 160 : index
    %82 = vector.load %arg9[%c0_25, %c160] : memref<512x288xbf16, #tpu.memory_space<vmem>>, vector<512x32xbf16>
    tpu.vector_store %arg9[%c0_25, %c160], %81 {strides = array<i32>} : memref<512x288xbf16, #tpu.memory_space<vmem>>, vector<512x32xbf16>,
    %c497_i32 = arith.constant 497 : i32
    %83 = tpu.dynamic_rotate %2 by %c497_i32 dim 0 : vector<512x32xf32>, i32 -> vector<512x32xf32>
    %84 = arith.andi %39, %41 : vector<512x1xi1>
    %cst_26 = arith.constant 0.000000e+00 : f32
    %85 = vector.shape_cast %84 : vector<512x1xi1> to vector<512x1xi1>
    %86 = vector.broadcast %85 : vector<512x1xi1> to vector<512x32xi1>
    %87 = vector.broadcast %cst_26 : f32 to vector<512x32xf32>
    %88 = arith.select %86, %83, %87 : vector<512x32xi1>, vector<512x32xf32>
    %89 = arith.truncf %88 : vector<512x32xf32> to vector<512x32xbf16>
    %c0_27 = arith.constant 0 : index
    %c192 = arith.constant 192 : index
    %90 = vector.load %arg9[%c0_27, %c192] : memref<512x288xbf16, #tpu.memory_space<vmem>>, vector<512x32xbf16>
    tpu.vector_store %arg9[%c0_27, %c192], %89 {strides = array<i32>} : memref<512x288xbf16, #tpu.memory_space<vmem>>, vector<512x32xbf16>,
    %c496_i32 = arith.constant 496 : i32
    %91 = tpu.dynamic_rotate %2 by %c496_i32 dim 0 : vector<512x32xf32>, i32 -> vector<512x32xf32>
    %cst_28 = arith.constant 0.000000e+00 : f32
    %92 = vector.shape_cast %39 : vector<512x1xi1> to vector<512x1xi1>
    %93 = vector.broadcast %92 : vector<512x1xi1> to vector<512x32xi1>
    %94 = vector.broadcast %cst_28 : f32 to vector<512x32xf32>
    %95 = arith.select %93, %91, %94 : vector<512x32xi1>, vector<512x32xf32>
    %96 = arith.truncf %95 : vector<512x32xf32> to vector<512x32xbf16>
    %c0_29 = arith.constant 0 : index
    %c224 = arith.constant 224 : index
    %97 = vector.load %arg9[%c0_29, %c224] : memref<512x288xbf16, #tpu.memory_space<vmem>>, vector<512x32xbf16>
    tpu.vector_store %arg9[%c0_29, %c224], %96 {strides = array<i32>} : memref<512x288xbf16, #tpu.memory_space<vmem>>, vector<512x32xbf16>,
    %c495_i32 = arith.constant 495 : i32
    %98 = tpu.dynamic_rotate %2 by %c495_i32 dim 0 : vector<512x32xf32>, i32 -> vector<512x32xf32>
    %99 = arith.andi %39, %43 : vector<512x1xi1>
    %cst_30 = arith.constant 0.000000e+00 : f32
    %100 = vector.shape_cast %99 : vector<512x1xi1> to vector<512x1xi1>
    %101 = vector.broadcast %100 : vector<512x1xi1> to vector<512x32xi1>
    %102 = vector.broadcast %cst_30 : f32 to vector<512x32xf32>
    %103 = arith.select %101, %98, %102 : vector<512x32xi1>, vector<512x32xf32>
    %104 = arith.truncf %103 : vector<512x32xf32> to vector<512x32xbf16>
    %c0_31 = arith.constant 0 : index
    %c256 = arith.constant 256 : index
    %105 = vector.load %arg9[%c0_31, %c256] : memref<512x288xbf16, #tpu.memory_space<vmem>>, vector<512x32xbf16>
    tpu.vector_store %arg9[%c0_31, %c256], %104 {strides = array<i32>} : memref<512x288xbf16, #tpu.memory_space<vmem>>, vector<512x32xbf16>,
    %c0_32 = arith.constant 0 : index
    %c0_33 = arith.constant 0 : index
    %106 = vector.load %arg9[%c0_32, %c0_33] : memref<512x288xbf16, #tpu.memory_space<vmem>>, vector<512x288xbf16>
    %c0_34 = arith.constant 0 : index
    %c0_35 = arith.constant 0 : index
    %107 = vector.load %arg2[%c0_34, %c0_35] : memref<288x32xbf16, #tpu.memory_space<vmem>>, vector<288x32xbf16>
    %cst_36 = arith.constant dense<0.000000e+00> : vector<512x32xf32>
    %108 = tpu.matmul %106, %107, %cst_36 {dimension_numbers = #tpu.dot_dimension_numbers<[1], [0], [0], [1], [0, 0, 1, 1], [], []>} : vector<512x288xbf16>, vector<288x32xbf16>, vector<512x32xf32> -> vector<512x32xf32>
    %c0_37 = arith.constant 0 : index
    %c0_38 = arith.constant 0 : index
    %109 = vector.load %arg3[%c0_37, %c0_38] : memref<1x32xf32, #tpu.memory_space<vmem>>, vector<1x32xf32>
    %110 = vector.broadcast %109 : vector<1x32xf32> to vector<512x32xf32>
    %111 = arith.mulf %108, %110 : vector<512x32xf32>
    %c0_39 = arith.constant 0 : index
    %c0_40 = arith.constant 0 : index
    %112 = vector.load %arg4[%c0_39, %c0_40] : memref<1x32xf32, #tpu.memory_space<vmem>>, vector<1x32xf32>
    %113 = vector.broadcast %112 : vector<1x32xf32> to vector<512x32xf32>
    %114 = arith.addf %111, %113 : vector<512x32xf32>
    %cst_41 = arith.constant 0.000000e+00 : f32
    %115 = vector.broadcast %cst_41 : f32 to vector<512x32xf32>
    %116 = arith.maximumf %114, %115 : vector<512x32xf32>
    %c17_i32_42 = arith.constant 17 : i32
    %117 = tpu.dynamic_rotate %116 by %c17_i32_42 dim 0 : vector<512x32xf32>, i32 -> vector<512x32xf32>
    %118 = arith.andi %37, %41 : vector<512x1xi1>
    %cst_43 = arith.constant 0.000000e+00 : f32
    %119 = vector.shape_cast %118 : vector<512x1xi1> to vector<512x1xi1>
    %120 = vector.broadcast %119 : vector<512x1xi1> to vector<512x32xi1>
    %121 = vector.broadcast %cst_43 : f32 to vector<512x32xf32>
    %122 = arith.select %120, %117, %121 : vector<512x32xi1>, vector<512x32xf32>
    %123 = arith.truncf %122 : vector<512x32xf32> to vector<512x32xbf16>
    %c0_44 = arith.constant 0 : index
    %c0_45 = arith.constant 0 : index
    %124 = vector.load %arg10[%c0_44, %c0_45] : memref<512x288xbf16, #tpu.memory_space<vmem>>, vector<512x32xbf16>
    tpu.vector_store %arg10[%c0_44, %c0_45], %123 {strides = array<i32>} : memref<512x288xbf16, #tpu.memory_space<vmem>>, vector<512x32xbf16>,
    %c16_i32_46 = arith.constant 16 : i32
    %125 = tpu.dynamic_rotate %116 by %c16_i32_46 dim 0 : vector<512x32xf32>, i32 -> vector<512x32xf32>
    %cst_47 = arith.constant 0.000000e+00 : f32
    %126 = vector.shape_cast %37 : vector<512x1xi1> to vector<512x1xi1>
    %127 = vector.broadcast %126 : vector<512x1xi1> to vector<512x32xi1>
    %128 = vector.broadcast %cst_47 : f32 to vector<512x32xf32>
    %129 = arith.select %127, %125, %128 : vector<512x32xi1>, vector<512x32xf32>
    %130 = arith.truncf %129 : vector<512x32xf32> to vector<512x32xbf16>
    %c0_48 = arith.constant 0 : index
    %c32_49 = arith.constant 32 : index
    %131 = vector.load %arg10[%c0_48, %c32_49] : memref<512x288xbf16, #tpu.memory_space<vmem>>, vector<512x32xbf16>
    tpu.vector_store %arg10[%c0_48, %c32_49], %130 {strides = array<i32>} : memref<512x288xbf16, #tpu.memory_space<vmem>>, vector<512x32xbf16>,
    %c15_i32_50 = arith.constant 15 : i32
    %132 = tpu.dynamic_rotate %116 by %c15_i32_50 dim 0 : vector<512x32xf32>, i32 -> vector<512x32xf32>
    %133 = arith.andi %37, %43 : vector<512x1xi1>
    %cst_51 = arith.constant 0.000000e+00 : f32
    %134 = vector.shape_cast %133 : vector<512x1xi1> to vector<512x1xi1>
    %135 = vector.broadcast %134 : vector<512x1xi1> to vector<512x32xi1>
    %136 = vector.broadcast %cst_51 : f32 to vector<512x32xf32>
    %137 = arith.select %135, %132, %136 : vector<512x32xi1>, vector<512x32xf32>
    %138 = arith.truncf %137 : vector<512x32xf32> to vector<512x32xbf16>
    %c0_52 = arith.constant 0 : index
    %c64_53 = arith.constant 64 : index
    %139 = vector.load %arg10[%c0_52, %c64_53] : memref<512x288xbf16, #tpu.memory_space<vmem>>, vector<512x32xbf16>
    tpu.vector_store %arg10[%c0_52, %c64_53], %138 {strides = array<i32>} : memref<512x288xbf16, #tpu.memory_space<vmem>>, vector<512x32xbf16>,
    %c1_i32_54 = arith.constant 1 : i32
    %140 = tpu.dynamic_rotate %116 by %c1_i32_54 dim 0 : vector<512x32xf32>, i32 -> vector<512x32xf32>
    %cst_55 = arith.constant 0.000000e+00 : f32
    %141 = vector.shape_cast %41 : vector<512x1xi1> to vector<512x1xi1>
    %142 = vector.broadcast %141 : vector<512x1xi1> to vector<512x32xi1>
    %143 = vector.broadcast %cst_55 : f32 to vector<512x32xf32>
    %144 = arith.select %142, %140, %143 : vector<512x32xi1>, vector<512x32xf32>
    %145 = arith.truncf %144 : vector<512x32xf32> to vector<512x32xbf16>
    %c0_56 = arith.constant 0 : index
    %c96_57 = arith.constant 96 : index
    %146 = vector.load %arg10[%c0_56, %c96_57] : memref<512x288xbf16, #tpu.memory_space<vmem>>, vector<512x32xbf16>
    tpu.vector_store %arg10[%c0_56, %c96_57], %145 {strides = array<i32>} : memref<512x288xbf16, #tpu.memory_space<vmem>>, vector<512x32xbf16>,
    %147 = arith.truncf %116 : vector<512x32xf32> to vector<512x32xbf16>
    %c0_58 = arith.constant 0 : index
    %c128_59 = arith.constant 128 : index
    %148 = vector.load %arg10[%c0_58, %c128_59] : memref<512x288xbf16, #tpu.memory_space<vmem>>, vector<512x32xbf16>
    tpu.vector_store %arg10[%c0_58, %c128_59], %147 {strides = array<i32>} : memref<512x288xbf16, #tpu.memory_space<vmem>>, vector<512x32xbf16>,
    %c511_i32_60 = arith.constant 511 : i32
    %149 = tpu.dynamic_rotate %116 by %c511_i32_60 dim 0 : vector<512x32xf32>, i32 -> vector<512x32xf32>
    %cst_61 = arith.constant 0.000000e+00 : f32
    %150 = vector.shape_cast %43 : vector<512x1xi1> to vector<512x1xi1>
    %151 = vector.broadcast %150 : vector<512x1xi1> to vector<512x32xi1>
    %152 = vector.broadcast %cst_61 : f32 to vector<512x32xf32>
    %153 = arith.select %151, %149, %152 : vector<512x32xi1>, vector<512x32xf32>
    %154 = arith.truncf %153 : vector<512x32xf32> to vector<512x32xbf16>
    %c0_62 = arith.constant 0 : index
    %c160_63 = arith.constant 160 : index
    %155 = vector.load %arg10[%c0_62, %c160_63] : memref<512x288xbf16, #tpu.memory_space<vmem>>, vector<512x32xbf16>
    tpu.vector_store %arg10[%c0_62, %c160_63], %154 {strides = array<i32>} : memref<512x288xbf16, #tpu.memory_space<vmem>>, vector<512x32xbf16>,
    %c497_i32_64 = arith.constant 497 : i32
    %156 = tpu.dynamic_rotate %116 by %c497_i32_64 dim 0 : vector<512x32xf32>, i32 -> vector<512x32xf32>
    %157 = arith.andi %39, %41 : vector<512x1xi1>
    %cst_65 = arith.constant 0.000000e+00 : f32
    %158 = vector.shape_cast %157 : vector<512x1xi1> to vector<512x1xi1>
    %159 = vector.broadcast %158 : vector<512x1xi1> to vector<512x32xi1>
    %160 = vector.broadcast %cst_65 : f32 to vector<512x32xf32>
    %161 = arith.select %159, %156, %160 : vector<512x32xi1>, vector<512x32xf32>
    %162 = arith.truncf %161 : vector<512x32xf32> to vector<512x32xbf16>
    %c0_66 = arith.constant 0 : index
    %c192_67 = arith.constant 192 : index
    %163 = vector.load %arg10[%c0_66, %c192_67] : memref<512x288xbf16, #tpu.memory_space<vmem>>, vector<512x32xbf16>
    tpu.vector_store %arg10[%c0_66, %c192_67], %162 {strides = array<i32>} : memref<512x288xbf16, #tpu.memory_space<vmem>>, vector<512x32xbf16>,
    %c496_i32_68 = arith.constant 496 : i32
    %164 = tpu.dynamic_rotate %116 by %c496_i32_68 dim 0 : vector<512x32xf32>, i32 -> vector<512x32xf32>
    %cst_69 = arith.constant 0.000000e+00 : f32
    %165 = vector.shape_cast %39 : vector<512x1xi1> to vector<512x1xi1>
    %166 = vector.broadcast %165 : vector<512x1xi1> to vector<512x32xi1>
    %167 = vector.broadcast %cst_69 : f32 to vector<512x32xf32>
    %168 = arith.select %166, %164, %167 : vector<512x32xi1>, vector<512x32xf32>
    %169 = arith.truncf %168 : vector<512x32xf32> to vector<512x32xbf16>
    %c0_70 = arith.constant 0 : index
    %c224_71 = arith.constant 224 : index
    %170 = vector.load %arg10[%c0_70, %c224_71] : memref<512x288xbf16, #tpu.memory_space<vmem>>, vector<512x32xbf16>
    tpu.vector_store %arg10[%c0_70, %c224_71], %169 {strides = array<i32>} : memref<512x288xbf16, #tpu.memory_space<vmem>>, vector<512x32xbf16>,
    %c495_i32_72 = arith.constant 495 : i32
    %171 = tpu.dynamic_rotate %116 by %c495_i32_72 dim 0 : vector<512x32xf32>, i32 -> vector<512x32xf32>
    %172 = arith.andi %39, %43 : vector<512x1xi1>
    %cst_73 = arith.constant 0.000000e+00 : f32
    %173 = vector.shape_cast %172 : vector<512x1xi1> to vector<512x1xi1>
    %174 = vector.broadcast %173 : vector<512x1xi1> to vector<512x32xi1>
    %175 = vector.broadcast %cst_73 : f32 to vector<512x32xf32>
    %176 = arith.select %174, %171, %175 : vector<512x32xi1>, vector<512x32xf32>
    %177 = arith.truncf %176 : vector<512x32xf32> to vector<512x32xbf16>
    %c0_74 = arith.constant 0 : index
    %c256_75 = arith.constant 256 : index
    %178 = vector.load %arg10[%c0_74, %c256_75] : memref<512x288xbf16, #tpu.memory_space<vmem>>, vector<512x32xbf16>
    tpu.vector_store %arg10[%c0_74, %c256_75], %177 {strides = array<i32>} : memref<512x288xbf16, #tpu.memory_space<vmem>>, vector<512x32xbf16>,
    %c0_76 = arith.constant 0 : index
    %c0_77 = arith.constant 0 : index
    %179 = vector.load %arg10[%c0_76, %c0_77] : memref<512x288xbf16, #tpu.memory_space<vmem>>, vector<512x288xbf16>
    %c0_78 = arith.constant 0 : index
    %c0_79 = arith.constant 0 : index
    %180 = vector.load %arg5[%c0_78, %c0_79] : memref<288x32xbf16, #tpu.memory_space<vmem>>, vector<288x32xbf16>
    %cst_80 = arith.constant dense<0.000000e+00> : vector<512x32xf32>
    %181 = tpu.matmul %179, %180, %cst_80 {dimension_numbers = #tpu.dot_dimension_numbers<[1], [0], [0], [1], [0, 0, 1, 1], [], []>} : vector<512x288xbf16>, vector<288x32xbf16>, vector<512x32xf32> -> vector<512x32xf32>
    %c0_81 = arith.constant 0 : index
    %c0_82 = arith.constant 0 : index
    %182 = vector.load %arg6[%c0_81, %c0_82] : memref<1x32xf32, #tpu.memory_space<vmem>>, vector<1x32xf32>
    %183 = vector.broadcast %182 : vector<1x32xf32> to vector<512x32xf32>
    %184 = arith.mulf %181, %183 : vector<512x32xf32>
    %c0_83 = arith.constant 0 : index
    %c0_84 = arith.constant 0 : index
    %185 = vector.load %arg7[%c0_83, %c0_84] : memref<1x32xf32, #tpu.memory_space<vmem>>, vector<1x32xf32>
    %186 = vector.broadcast %185 : vector<1x32xf32> to vector<512x32xf32>
    %187 = arith.addf %184, %186 : vector<512x32xf32>
    %188 = arith.addf %187, %2 : vector<512x32xf32>
    %cst_85 = arith.constant 0.000000e+00 : f32
    %189 = vector.broadcast %cst_85 : f32 to vector<512x32xf32>
    %190 = arith.maximumf %188, %189 : vector<512x32xf32>
    %191 = arith.truncf %190 : vector<512x32xf32> to vector<512x32xbf16>
    %192 = vector.shape_cast %191 : vector<512x32xbf16> to vector<2x256x32xbf16>
    %c0_86 = arith.constant 0 : index
    %c0_87 = arith.constant 0 : index
    %c0_88 = arith.constant 0 : index
    %193 = vector.load %arg8[%c0_86, %c0_87, %c0_88] : memref<2x256x32xbf16, #tpu.memory_space<vmem>>, vector<2x256x32xbf16>
    tpu.vector_store %arg8[%c0_86, %c0_87, %c0_88], %192 {strides = array<i32>} : memref<2x256x32xbf16, #tpu.memory_space<vmem>>, vector<2x256x32xbf16>,
    return
  }
  func.func @transform_0(%arg0: i32) -> (i32, i32, i32) {
    %c0_i32 = arith.constant 0 : i32
    %c0_i32_0 = arith.constant 0 : i32
    %c0_i32_1 = arith.constant 0 : i32
    return %arg0, %c0_i32, %c0_i32_0 : i32, i32, i32
  }
  func.func @transform_1(%arg0: i32) -> (i32, i32) {
    %c0_i32 = arith.constant 0 : i32
    %c0_i32_0 = arith.constant 0 : i32
    %c0_i32_1 = arith.constant 0 : i32
    return %c0_i32, %c0_i32_0 : i32, i32
  }
  func.func @transform_2(%arg0: i32) -> (i32, i32) {
    %c0_i32 = arith.constant 0 : i32
    %c0_i32_0 = arith.constant 0 : i32
    %c0_i32_1 = arith.constant 0 : i32
    return %c0_i32, %c0_i32_0 : i32, i32
  }
  func.func @transform_3(%arg0: i32) -> (i32, i32) {
    %c0_i32 = arith.constant 0 : i32
    %c0_i32_0 = arith.constant 0 : i32
    %c0_i32_1 = arith.constant 0 : i32
    return %c0_i32, %c0_i32_0 : i32, i32
  }
  func.func @transform_4(%arg0: i32) -> (i32, i32) {
    %c0_i32 = arith.constant 0 : i32
    %c0_i32_0 = arith.constant 0 : i32
    %c0_i32_1 = arith.constant 0 : i32
    return %c0_i32, %c0_i32_0 : i32, i32
  }
  func.func @transform_5(%arg0: i32) -> (i32, i32) {
    %c0_i32 = arith.constant 0 : i32
    %c0_i32_0 = arith.constant 0 : i32
    %c0_i32_1 = arith.constant 0 : i32
    return %c0_i32, %c0_i32_0 : i32, i32
  }
  func.func @transform_6(%arg0: i32) -> (i32, i32) {
    %c0_i32 = arith.constant 0 : i32
    %c0_i32_0 = arith.constant 0 : i32
    %c0_i32_1 = arith.constant 0 : i32
    return %c0_i32, %c0_i32_0 : i32, i32
  }
  func.func @transform_7(%arg0: i32) -> (i32, i32, i32) {
    %c0_i32 = arith.constant 0 : i32
    %c0_i32_0 = arith.constant 0 : i32
    %c0_i32_1 = arith.constant 0 : i32
    return %arg0, %c0_i32, %c0_i32_0 : i32, i32, i32
  }
}

</mosaic_0001>

<llo_original>
// kernel: tpu_custom_call.1
$region0: #{tpu_custom_call.1}
  #allocation0 [shape = 'u32[]', space=smem, size = 0x4, offset = 0x4, fixed_abs, tag = 'smem constant byte address 0x4 - core index']
  #allocation1 [shape = 'u32[144,128]{1,0:T(1,128)}', space=vmem, size = 0x12000, scoped, tag = 'internal scratch']
  #allocation2 [shape = 'bf16[512,288]{1,0:T(16,128)(2,1)}', space=vmem, size = 0x60000, scoped, tag = 'scratch operand']
  #allocation3 [shape = 'bf16[512,288]{1,0:T(16,128)(2,1)}', space=vmem, size = 0x60000, scoped, tag = 'scratch operand']
  %s0 = inlined_call_operand.vmem [shape: bf16[2,256,32], index: 0, kind: input, shape index: {}]
  %s1 = inlined_call_operand.vmem [shape: bf16[288,32], index: 1, kind: input, shape index: {}]
  %s2 = inlined_call_operand.vmem [shape: f32[1,32], index: 2, kind: input, shape index: {}]
  %s3 = inlined_call_operand.vmem [shape: f32[1,32], index: 3, kind: input, shape index: {}]
  %s4 = inlined_call_operand.vmem [shape: bf16[288,32], index: 4, kind: input, shape index: {}]
  %s5 = inlined_call_operand.vmem [shape: f32[1,32], index: 5, kind: input, shape index: {}]
  %s6 = inlined_call_operand.vmem [shape: f32[1,32], index: 6, kind: input, shape index: {}]
  %s7 = inlined_call_operand.vmem [shape: bf16[2,256,32], index: 7, kind: output, shape index: {}]
  %s8 = sld [smem:[#allocation0]]
  $region38: #{tpu_custom_call.1} parent=0
    _
  %s10 = ssub.s32 1, %s8
  %s11 = scalar_select 0, %s10, %s8
  // Predicated region
  $region2: #{tpu_custom_call.1} parent=0 // pred_check
    _
  $region3: #{tpu_custom_call.1} parent=0 // pred_check_branch
    %13 = sbr.rel (0) target = $region5
  $region4: #{tpu_custom_call.1} parent=0 // pred_region
    _
  $region5: #{tpu_custom_call.1} parent=0 // pred_fallthru
    _
  // Predicated region
  $region6: #{tpu_custom_call.1} parent=0 // pred_check
    _
  $region7: #{tpu_custom_call.1} parent=0 // pred_check_branch
    %15 = sbr.rel (0) target = $region9
  $region8: #{tpu_custom_call.1} parent=0 // pred_region
    _
  $region9: #{tpu_custom_call.1} parent=0 // pred_fallthru
    _
  // Predicated region
  $region10: #{tpu_custom_call.1} parent=0 // pred_check
    _
  $region11: #{tpu_custom_call.1} parent=0 // pred_check_branch
    %17 = sbr.rel (0) target = $region13
  $region12: #{tpu_custom_call.1} parent=0 // pred_region
    _
  $region13: #{tpu_custom_call.1} parent=0 // pred_fallthru
    _
  // Predicated region
  $region14: #{tpu_custom_call.1} parent=0 // pred_check
    _
  $region15: #{tpu_custom_call.1} parent=0 // pred_check_branch
    %19 = sbr.rel (0) target = $region17
  $region16: #{tpu_custom_call.1} parent=0 // pred_region
    _
  $region17: #{tpu_custom_call.1} parent=0 // pred_fallthru
    _
  // Predicated region
  $region18: #{tpu_custom_call.1} parent=0 // pred_check
    _
  $region19: #{tpu_custom_call.1} parent=0 // pred_check_branch
    %21 = sbr.rel (0) target = $region21
  $region20: #{tpu_custom_call.1} parent=0 // pred_region
    _
  $region21: #{tpu_custom_call.1} parent=0 // pred_fallthru
    _
  // Predicated region
  $region22: #{tpu_custom_call.1} parent=0 // pred_check
    _
  $region23: #{tpu_custom_call.1} parent=0 // pred_check_branch
    %23 = sbr.rel (0) target = $region25
  $region24: #{tpu_custom_call.1} parent=0 // pred_region
    _
  $region25: #{tpu_custom_call.1} parent=0 // pred_fallthru
    _
  // Predicated region
  $region26: #{tpu_custom_call.1} parent=0 // pred_check
    _
  $region27: #{tpu_custom_call.1} parent=0 // pred_check_branch
    %25 = sbr.rel (0) target = $region29
  $region28: #{tpu_custom_call.1} parent=0 // pred_region
    _
  $region29: #{tpu_custom_call.1} parent=0 // pred_fallthru
    _
  %v27 = vld [vmem:[%s0] sm:$0xf]
  %v28 = vld [vmem:[%s0 + $0x4] sm:$0xf]
  %v29 = vld [vmem:[%s0 + $0x8] sm:$0xf]
  %v30 = vld [vmem:[%s0 + $0xc] sm:$0xf]
  %v31 = vld [vmem:[%s0 + $0x10] sm:$0xf]
  %v32 = vld [vmem:[%s0 + $0x14] sm:$0xf]
  %v33 = vld [vmem:[%s0 + $0x18] sm:$0xf]
  %v34 = vld [vmem:[%s0 + $0x1c] sm:$0xf]
  %v35 = vld [vmem:[%s0 + $0x20] sm:$0xf]
  %v36 = vld [vmem:[%s0 + $0x24] sm:$0xf]
  %v37 = vld [vmem:[%s0 + $0x28] sm:$0xf]
  %v38 = vld [vmem:[%s0 + $0x2c] sm:$0xf]
  %v39 = vld [vmem:[%s0 + $0x30] sm:$0xf]
  %v40 = vld [vmem:[%s0 + $0x34] sm:$0xf]
  %v41 = vld [vmem:[%s0 + $0x38] sm:$0xf]
  %v42 = vld [vmem:[%s0 + $0x3c] sm:$0xf]
  %v43 = vld [vmem:[%s0 + $0x40] sm:$0xf]
  %v44 = vld [vmem:[%s0 + $0x44] sm:$0xf]
  %v45 = vld [vmem:[%s0 + $0x48] sm:$0xf]
  %v46 = vld [vmem:[%s0 + $0x4c] sm:$0xf]
  %v47 = vld [vmem:[%s0 + $0x50] sm:$0xf]
  %v48 = vld [vmem:[%s0 + $0x54] sm:$0xf]
  %v49 = vld [vmem:[%s0 + $0x58] sm:$0xf]
  %v50 = vld [vmem:[%s0 + $0x5c] sm:$0xf]
  %v51 = vld [vmem:[%s0 + $0x60] sm:$0xf]
  %v52 = vld [vmem:[%s0 + $0x64] sm:$0xf]
  %v53 = vld [vmem:[%s0 + $0x68] sm:$0xf]
  %v54 = vld [vmem:[%s0 + $0x6c] sm:$0xf]
  %v55 = vld [vmem:[%s0 + $0x70] sm:$0xf]
  %v56 = vld [vmem:[%s0 + $0x74] sm:$0xf]
  %v57 = vld [vmem:[%s0 + $0x78] sm:$0xf]
  %v58 = vld [vmem:[%s0 + $0x7c] sm:$0xf]
  %v59 = vld [vmem:[%s0 + $0x80] sm:$0xf]
  %v60 = vld [vmem:[%s0 + $0x84] sm:$0xf]
  %v61 = vld [vmem:[%s0 + $0x88] sm:$0xf]
  %v62 = vld [vmem:[%s0 + $0x8c] sm:$0xf]
  %v63 = vld [vmem:[%s0 + $0x90] sm:$0xf]
  %v64 = vld [vmem:[%s0 + $0x94] sm:$0xf]
  %v65 = vld [vmem:[%s0 + $0x98] sm:$0xf]
  %v66 = vld [vmem:[%s0 + $0x9c] sm:$0xf]
  %v67 = vld [vmem:[%s0 + $0xa0] sm:$0xf]
  %v68 = vld [vmem:[%s0 + $0xa4] sm:$0xf]
  %v69 = vld [vmem:[%s0 + $0xa8] sm:$0xf]
  %v70 = vld [vmem:[%s0 + $0xac] sm:$0xf]
  %v71 = vld [vmem:[%s0 + $0xb0] sm:$0xf]
  %v72 = vld [vmem:[%s0 + $0xb4] sm:$0xf]
  %v73 = vld [vmem:[%s0 + $0xb8] sm:$0xf]
  %v74 = vld [vmem:[%s0 + $0xbc] sm:$0xf]
  %v75 = vld [vmem:[%s0 + $0xc0] sm:$0xf]
  %v76 = vld [vmem:[%s0 + $0xc4] sm:$0xf]
  %v77 = vld [vmem:[%s0 + $0xc8] sm:$0xf]
  %v78 = vld [vmem:[%s0 + $0xcc] sm:$0xf]
  %v79 = vld [vmem:[%s0 + $0xd0] sm:$0xf]
  %v80 = vld [vmem:[%s0 + $0xd4] sm:$0xf]
  %v81 = vld [vmem:[%s0 + $0xd8] sm:$0xf]
  %v82 = vld [vmem:[%s0 + $0xdc] sm:$0xf]
  %v83 = vld [vmem:[%s0 + $0xe0] sm:$0xf]
  %v84 = vld [vmem:[%s0 + $0xe4] sm:$0xf]
  %v85 = vld [vmem:[%s0 + $0xe8] sm:$0xf]
  %v86 = vld [vmem:[%s0 + $0xec] sm:$0xf]
  %v87 = vld [vmem:[%s0 + $0xf0] sm:$0xf]
  %v88 = vld [vmem:[%s0 + $0xf4] sm:$0xf]
  %v89 = vld [vmem:[%s0 + $0xf8] sm:$0xf]
  %v90 = vld [vmem:[%s0 + $0xfc] sm:$0xf]
  %v91 = vunpack.c.l.bf16 %v27
  %v92 = vunpack.c.l.bf16 %v28
  %v93 = vunpack.c.l.bf16 %v29
  %v94 = vunpack.c.l.bf16 %v30
  %v95 = vunpack.c.l.bf16 %v31
  %v96 = vunpack.c.l.bf16 %v32
  %v97 = vunpack.c.l.bf16 %v33
  %v98 = vunpack.c.l.bf16 %v34
  %v99 = vunpack.c.l.bf16 %v35
  %v100 = vunpack.c.l.bf16 %v36
  %v101 = vunpack.c.l.bf16 %v37
  %v102 = vunpack.c.l.bf16 %v38
  %v103 = vunpack.c.l.bf16 %v39
  %v104 = vunpack.c.l.bf16 %v40
  %v105 = vunpack.c.l.bf16 %v41
  %v106 = vunpack.c.l.bf16 %v42
  %v107 = vunpack.c.l.bf16 %v43
  %v108 = vunpack.c.l.bf16 %v44
  %v109 = vunpack.c.l.bf16 %v45
  %v110 = vunpack.c.l.bf16 %v46
  %v111 = vunpack.c.l.bf16 %v47
  %v112 = vunpack.c.l.bf16 %v48
  %v113 = vunpack.c.l.bf16 %v49
  %v114 = vunpack.c.l.bf16 %v50
  %v115 = vunpack.c.l.bf16 %v51
  %v116 = vunpack.c.l.bf16 %v52
  %v117 = vunpack.c.l.bf16 %v53
  %v118 = vunpack.c.l.bf16 %v54
  %v119 = vunpack.c.l.bf16 %v55
  %v120 = vunpack.c.l.bf16 %v56
  %v121 = vunpack.c.l.bf16 %v57
  %v122 = vunpack.c.l.bf16 %v58
  %v123 = vunpack.c.l.bf16 %v59
  %v124 = vunpack.c.l.bf16 %v60
  %v125 = vunpack.c.l.bf16 %v61
  %v126 = vunpack.c.l.bf16 %v62
  %v127 = vunpack.c.l.bf16 %v63
  %v128 = vunpack.c.l.bf16 %v64
  %v129 = vunpack.c.l.bf16 %v65
  %v130 = vunpack.c.l.bf16 %v66
  %v131 = vunpack.c.l.bf16 %v67
  %v132 = vunpack.c.l.bf16 %v68
  %v133 = vunpack.c.l.bf16 %v69
  %v134 = vunpack.c.l.bf16 %v70
  %v135 = vunpack.c.l.bf16 %v71
  %v136 = vunpack.c.l.bf16 %v72
  %v137 = vunpack.c.l.bf16 %v73
  %v138 = vunpack.c.l.bf16 %v74
  %v139 = vunpack.c.l.bf16 %v75
  %v140 = vunpack.c.l.bf16 %v76
  %v141 = vunpack.c.l.bf16 %v77
  %v142 = vunpack.c.l.bf16 %v78
  %v143 = vunpack.c.l.bf16 %v79
  %v144 = vunpack.c.l.bf16 %v80
  %v145 = vunpack.c.l.bf16 %v81
  %v146 = vunpack.c.l.bf16 %v82
  %v147 = vunpack.c.l.bf16 %v83
  %v148 = vunpack.c.l.bf16 %v84
  %v149 = vunpack.c.l.bf16 %v85
  %v150 = vunpack.c.l.bf16 %v86
  %v151 = vunpack.c.l.bf16 %v87
  %v152 = vunpack.c.l.bf16 %v88
  %v153 = vunpack.c.l.bf16 %v89
  %v154 = vunpack.c.l.bf16 %v90
  %v155 = vlaneseq
  %v156 = vshrl.u32 %v155, 7
  %v157 = vadd.s32 %v156, 8
  %v158 = vadd.s32 %v156, 16
  %v159 = vadd.s32 %v156, 24
  %v160 = vadd.s32 %v156, 32
  %v161 = vadd.s32 %v156, 40
  %v162 = vadd.s32 %v156, 48
  %v163 = vadd.s32 %v156, 56
  %v164 = vadd.s32 %v156, 64
  %v165 = vadd.s32 %v156, 72
  %v166 = vadd.s32 %v156, 80
  %v167 = vadd.s32 %v156, 88
  %v168 = vadd.s32 %v156, 96
  %v169 = vadd.s32 %v156, 104
  %v170 = vadd.s32 %v156, 112
  %v171 = vadd.s32 %v156, 120
  %v172 = vadd.s32 %v156, 128
  %v173 = vadd.s32 %v156, 136
  %v174 = vadd.s32 %v156, 144
  %v175 = vadd.s32 %v156, 152
  %v176 = vadd.s32 %v156, 160
  %v177 = vadd.s32 %v156, 168
  %v178 = vadd.s32 %v156, 176
  %v179 = vadd.s32 %v156, 184
  %v180 = vadd.s32 %v156, 192
  %v181 = vadd.s32 %v156, 200
  %v182 = vadd.s32 %v156, 208
  %v183 = vadd.s32 %v156, 216
  %v184 = vadd.s32 %v156, 224
  %v185 = vadd.s32 %v156, 232
  %v186 = vadd.s32 %v156, 240
  %v187 = vadd.s32 %v156, 248
  %v188 = vadd.s32 %v156, 256
  %v189 = vadd.s32 %v156, 264
  %v190 = vadd.s32 %v156, 272
  %v191 = vadd.s32 %v156, 280
  %v192 = vadd.s32 %v156, 288
  %v193 = vadd.s32 %v156, 296
  %v194 = vadd.s32 %v156, 304
  %v195 = vadd.s32 %v156, 312
  %v196 = vadd.s32 %v156, 320
  %v197 = vadd.s32 %v156, 328
  %v198 = vadd.s32 %v156, 336
  %v199 = vadd.s32 %v156, 344
  %v200 = vadd.s32 %v156, 352
  %v201 = vadd.s32 %v156, 360
  %v202 = vadd.s32 %v156, 368
  %v203 = vadd.s32 %v156, 376
  %v204 = vadd.s32 %v156, 384
  %v205 = vadd.s32 %v156, 392
  %v206 = vadd.s32 %v156, 400
  %v207 = vadd.s32 %v156, 408
  %v208 = vadd.s32 %v156, 416
  %v209 = vadd.s32 %v156, 424
  %v210 = vadd.s32 %v156, 432
  %v211 = vadd.s32 %v156, 440
  %v212 = vadd.s32 %v156, 448
  %v213 = vadd.s32 %v156, 456
  %v214 = vadd.s32 %v156, 464
  %v215 = vadd.s32 %v156, 472
  %v216 = vadd.s32 %v156, 480
  %v217 = vadd.s32 %v156, 488
  %v218 = vadd.s32 %v156, 496
  %v219 = vadd.s32 %v156, 504
  %vm220 = vcmp.lt.s32.totalorder %v156, 0
  %v221 = vsub.s32 0, %v156
  %v222 = vsel %vm220, %v221, %v156
  %v223 = vshrl.u32 %v222, 8
  %v224 = vand.u32 %v222, 255
  %v225 = vsub.s32 0, %v224
  %v226 = vsel %vm220, %v225, %v224
  %vm227 = vcmp.lt.s32.totalorder %v157, 0
  %v228 = vsub.s32 0, %v157
  %v229 = vsel %vm227, %v228, %v157
  %v230 = vshrl.u32 %v229, 8
  %v231 = vand.u32 %v229, 255
  %v232 = vsub.s32 0, %v231
  %v233 = vsel %vm227, %v232, %v231
  %vm234 = vcmp.lt.s32.totalorder %v158, 0
  %v235 = vsub.s32 0, %v158
  %v236 = vsel %vm234, %v235, %v158
  %v237 = vshrl.u32 %v236, 8
  %v238 = vand.u32 %v236, 255
  %v239 = vsub.s32 0, %v238
  %v240 = vsel %vm234, %v239, %v238
  %vm241 = vcmp.lt.s32.totalorder %v159, 0
  %v242 = vsub.s32 0, %v159
  %v243 = vsel %vm241, %v242, %v159
  %v244 = vshrl.u32 %v243, 8
  %v245 = vand.u32 %v243, 255
  %v246 = vsub.s32 0, %v245
  %v247 = vsel %vm241, %v246, %v245
  %vm248 = vcmp.lt.s32.totalorder %v160, 0
  %v249 = vsub.s32 0, %v160
  %v250 = vsel %vm248, %v249, %v160
  %v251 = vshrl.u32 %v250, 8
  %v252 = vand.u32 %v250, 255
  %v253 = vsub.s32 0, %v252
  %v254 = vsel %vm248, %v253, %v252
  %vm255 = vcmp.lt.s32.totalorder %v161, 0
  %v256 = vsub.s32 0, %v161
  %v257 = vsel %vm255, %v256, %v161
  %v258 = vshrl.u32 %v257, 8
  %v259 = vand.u32 %v257, 255
  %v260 = vsub.s32 0, %v259
  %v261 = vsel %vm255, %v260, %v259
  %vm262 = vcmp.lt.s32.totalorder %v162, 0
  %v263 = vsub.s32 0, %v162
  %v264 = vsel %vm262, %v263, %v162
  %v265 = vshrl.u32 %v264, 8
  %v266 = vand.u32 %v264, 255
  %v267 = vsub.s32 0, %v266
  %v268 = vsel %vm262, %v267, %v266
  %vm269 = vcmp.lt.s32.totalorder %v163, 0
  %v270 = vsub.s32 0, %v163
  %v271 = vsel %vm269, %v270, %v163
  %v272 = vshrl.u32 %v271, 8
  %v273 = vand.u32 %v271, 255
  %v274 = vsub.s32 0, %v273
  %v275 = vsel %vm269, %v274, %v273
  %vm276 = vcmp.lt.s32.totalorder %v164, 0
  %v277 = vsub.s32 0, %v164
  %v278 = vsel %vm276, %v277, %v164
  %v279 = vshrl.u32 %v278, 8
  %v280 = vand.u32 %v278, 255
  %v281 = vsub.s32 0, %v280
  %v282 = vsel %vm276, %v281, %v280
  %vm283 = vcmp.lt.s32.totalorder %v165, 0
  %v284 = vsub.s32 0, %v165
  %v285 = vsel %vm283, %v284, %v165
  %v286 = vshrl.u32 %v285, 8
  %v287 = vand.u32 %v285, 255
  %v288 = vsub.s32 0, %v287
  %v289 = vsel %vm283, %v288, %v287
  %vm290 = vcmp.lt.s32.totalorder %v166, 0
  %v291 = vsub.s32 0, %v166
  %v292 = vsel %vm290, %v291, %v166
  %v293 = vshrl.u32 %v292, 8
  %v294 = vand.u32 %v292, 255
  %v295 = vsub.s32 0, %v294
  %v296 = vsel %vm290, %v295, %v294
  %vm297 = vcmp.lt.s32.totalorder %v167, 0
  %v298 = vsub.s32 0, %v167
  %v299 = vsel %vm297, %v298, %v167
  %v300 = vshrl.u32 %v299, 8
  %v301 = vand.u32 %v299, 255
  %v302 = vsub.s32 0, %v301
  %v303 = vsel %vm297, %v302, %v301
  %vm304 = vcmp.lt.s32.totalorder %v168, 0
  %v305 = vsub.s32 0, %v168
  %v306 = vsel %vm304, %v305, %v168
  %v307 = vshrl.u32 %v306, 8
  %v308 = vand.u32 %v306, 255
  %v309 = vsub.s32 0, %v308
  %v310 = vsel %vm304, %v309, %v308
  %vm311 = vcmp.lt.s32.totalorder %v169, 0
  %v312 = vsub.s32 0, %v169
  %v313 = vsel %vm311, %v312, %v169
  %v314 = vshrl.u32 %v313, 8
  %v315 = vand.u32 %v313, 255
  %v316 = vsub.s32 0, %v315
  %v317 = vsel %vm311, %v316, %v315
  %vm318 = vcmp.lt.s32.totalorder %v170, 0
  %v319 = vsub.s32 0, %v170
  %v320 = vsel %vm318, %v319, %v170
  %v321 = vshrl.u32 %v320, 8
  %v322 = vand.u32 %v320, 255
  %v323 = vsub.s32 0, %v322
  %v324 = vsel %vm318, %v323, %v322
  %vm325 = vcmp.lt.s32.totalorder %v171, 0
  %v326 = vsub.s32 0, %v171
  %v327 = vsel %vm325, %v326, %v171
  %v328 = vshrl.u32 %v327, 8
  %v329 = vand.u32 %v327, 255
  %v330 = vsub.s32 0, %v329
  %v331 = vsel %vm325, %v330, %v329
  %vm332 = vcmp.lt.s32.totalorder %v172, 0
  %v333 = vsub.s32 0, %v172
  %v334 = vsel %vm332, %v333, %v172
  %v335 = vshrl.u32 %v334, 8
  %v336 = vand.u32 %v334, 255
  %v337 = vsub.s32 0, %v336
  %v338 = vsel %vm332, %v337, %v336
  %vm339 = vcmp.lt.s32.totalorder %v173, 0
  %v340 = vsub.s32 0, %v173
  %v341 = vsel %vm339, %v340, %v173
  %v342 = vshrl.u32 %v341, 8
  %v343 = vand.u32 %v341, 255
  %v344 = vsub.s32 0, %v343
  %v345 = vsel %vm339, %v344, %v343
  %vm346 = vcmp.lt.s32.totalorder %v174, 0
  %v347 = vsub.s32 0, %v174
  %v348 = vsel %vm346, %v347, %v174
  %v349 = vshrl.u32 %v348, 8
  %v350 = vand.u32 %v348, 255
  %v351 = vsub.s32 0, %v350
  %v352 = vsel %vm346, %v351, %v350
  %vm353 = vcmp.lt.s32.totalorder %v175, 0
  %v354 = vsub.s32 0, %v175
  %v355 = vsel %vm353, %v354, %v175
  %v356 = vshrl.u32 %v355, 8
  %v357 = vand.u32 %v355, 255
  %v358 = vsub.s32 0, %v357
  %v359 = vsel %vm353, %v358, %v357
  %vm360 = vcmp.lt.s32.totalorder %v176, 0
  %v361 = vsub.s32 0, %v176
  %v362 = vsel %vm360, %v361, %v176
  %v363 = vshrl.u32 %v362, 8
  %v364 = vand.u32 %v362, 255
  %v365 = vsub.s32 0, %v364
  %v366 = vsel %vm360, %v365, %v364
  %vm367 = vcmp.lt.s32.totalorder %v177, 0
  %v368 = vsub.s32 0, %v177
  %v369 = vsel %vm367, %v368, %v177
  %v370 = vshrl.u32 %v369, 8
  %v371 = vand.u32 %v369, 255
  %v372 = vsub.s32 0, %v371
  %v373 = vsel %vm367, %v372, %v371
  %vm374 = vcmp.lt.s32.totalorder %v178, 0
  %v375 = vsub.s32 0, %v178
  %v376 = vsel %vm374, %v375, %v178
  %v377 = vshrl.u32 %v376, 8
  %v378 = vand.u32 %v376, 255
  %v379 = vsub.s32 0, %v378
  %v380 = vsel %vm374, %v379, %v378
  %vm381 = vcmp.lt.s32.totalorder %v179, 0
  %v382 = vsub.s32 0, %v179
  %v383 = vsel %vm381, %v382, %v179
  %v384 = vshrl.u32 %v383, 8
  %v385 = vand.u32 %v383, 255
  %v386 = vsub.s32 0, %v385
  %v387 = vsel %vm381, %v386, %v385
  %vm388 = vcmp.lt.s32.totalorder %v180, 0
  %v389 = vsub.s32 0, %v180
  %v390 = vsel %vm388, %v389, %v180
  %v391 = vshrl.u32 %v390, 8
  %v392 = vand.u32 %v390, 255
  %v393 = vsub.s32 0, %v392
  %v394 = vsel %vm388, %v393, %v392
  %vm395 = vcmp.lt.s32.totalorder %v181, 0
  %v396 = vsub.s32 0, %v181
  %v397 = vsel %vm395, %v396, %v181
  %v398 = vshrl.u32 %v397, 8
  %v399 = vand.u32 %v397, 255
  %v400 = vsub.s32 0, %v399
  %v401 = vsel %vm395, %v400, %v399
  %vm402 = vcmp.lt.s32.totalorder %v182, 0
  %v403 = vsub.s32 0, %v182
  %v404 = vsel %vm402, %v403, %v182
  %v405 = vshrl.u32 %v404, 8
  %v406 = vand.u32 %v404, 255
  %v407 = vsub.s32 0, %v406
  %v408 = vsel %vm402, %v407, %v406
  %vm409 = vcmp.lt.s32.totalorder %v183, 0
  %v410 = vsub.s32 0, %v183
  %v411 = vsel %vm409, %v410, %v183
  %v412 = vshrl.u32 %v411, 8
  %v413 = vand.u32 %v411, 255
  %v414 = vsub.s32 0, %v413
  %v415 = vsel %vm409, %v414, %v413
  %vm416 = vcmp.lt.s32.totalorder %v184, 0
  %v417 = vsub.s32 0, %v184
  %v418 = vsel %vm416, %v417, %v184
  %v419 = vshrl.u32 %v418, 8
  %v420 = vand.u32 %v418, 255
  %v421 = vsub.s32 0, %v420
  %v422 = vsel %vm416, %v421, %v420
  %vm423 = vcmp.lt.s32.totalorder %v185, 0
  %v424 = vsub.s32 0, %v185
  %v425 = vsel %vm423, %v424, %v185
  %v426 = vshrl.u32 %v425, 8
  %v427 = vand.u32 %v425, 255
  %v428 = vsub.s32 0, %v427
  %v429 = vsel %vm423, %v428, %v427
  %vm430 = vcmp.lt.s32.totalorder %v186, 0
  %v431 = vsub.s32 0, %v186
  %v432 = vsel %vm430, %v431, %v186
  %v433 = vshrl.u32 %v432, 8
  %v434 = vand.u32 %v432, 255
  %v435 = vsub.s32 0, %v434
  %v436 = vsel %vm430, %v435, %v434
  %vm437 = vcmp.lt.s32.totalorder %v187, 0
  %v438 = vsub.s32 0, %v187
  %v439 = vsel %vm437, %v438, %v187
  %v440 = vshrl.u32 %v439, 8
  %v441 = vand.u32 %v439, 255
  %v442 = vsub.s32 0, %v441
  %v443 = vsel %vm437, %v442, %v441
  %vm444 = vcmp.lt.s32.totalorder %v188, 0
  %v445 = vsub.s32 0, %v188
  %v446 = vsel %vm444, %v445, %v188
  %v447 = vshrl.u32 %v446, 8
  %v448 = vand.u32 %v446, 255
  %v449 = vsub.s32 0, %v448
  %v450 = vsel %vm444, %v449, %v448
  %vm451 = vcmp.lt.s32.totalorder %v189, 0
  %v452 = vsub.s32 0, %v189
  %v453 = vsel %vm451, %v452, %v189
  %v454 = vshrl.u32 %v453, 8
  %v455 = vand.u32 %v453, 255
  %v456 = vsub.s32 0, %v455
  %v457 = vsel %vm451, %v456, %v455
  %vm458 = vcmp.lt.s32.totalorder %v190, 0
  %v459 = vsub.s32 0, %v190
  %v460 = vsel %vm458, %v459, %v190
  %v461 = vshrl.u32 %v460, 8
  %v462 = vand.u32 %v460, 255
  %v463 = vsub.s32 0, %v462
  %v464 = vsel %vm458, %v463, %v462
  %vm465 = vcmp.lt.s32.totalorder %v191, 0
  %v466 = vsub.s32 0, %v191
  %v467 = vsel %vm465, %v466, %v191
  %v468 = vshrl.u32 %v467, 8
  %v469 = vand.u32 %v467, 255
  %v470 = vsub.s32 0, %v469
  %v471 = vsel %vm465, %v470, %v469
  %vm472 = vcmp.lt.s32.totalorder %v192, 0
  %v473 = vsub.s32 0, %v192
  %v474 = vsel %vm472, %v473, %v192
  %v475 = vshrl.u32 %v474, 8
  %v476 = vand.u32 %v474, 255
  %v477 = vsub.s32 0, %v476
  %v478 = vsel %vm472, %v477, %v476
  %vm479 = vcmp.lt.s32.totalorder %v193, 0
  %v480 = vsub.s32 0, %v193
  %v481 = vsel %vm479, %v480, %v193
  %v482 = vshrl.u32 %v481, 8
  %v483 = vand.u32 %v481, 255
  %v484 = vsub.s32 0, %v483
  %v485 = vsel %vm479, %v484, %v483
  %vm486 = vcmp.lt.s32.totalorder %v194, 0
  %v487 = vsub.s32 0, %v194
  %v488 = vsel %vm486, %v487, %v194
  %v489 = vshrl.u32 %v488, 8
  %v490 = vand.u32 %v488, 255
  %v491 = vsub.s32 0, %v490
  %v492 = vsel %vm486, %v491, %v490
  %vm493 = vcmp.lt.s32.totalorder %v195, 0
  %v494 = vsub.s32 0, %v195
  %v495 = vsel %vm493, %v494, %v195
  %v496 = vshrl.u32 %v495, 8
  %v497 = vand.u32 %v495, 255
  %v498 = vsub.s32 0, %v497
  %v499 = vsel %vm493, %v498, %v497
  %vm500 = vcmp.lt.s32.totalorder %v196, 0
  %v501 = vsub.s32 0, %v196
  %v502 = vsel %vm500, %v501, %v196
  %v503 = vshrl.u32 %v502, 8
  %v504 = vand.u32 %v502, 255
  %v505 = vsub.s32 0, %v504
  %v506 = vsel %vm500, %v505, %v504
  %vm507 = vcmp.lt.s32.totalorder %v197, 0
  %v508 = vsub.s32 0, %v197
  %v509 = vsel %vm507, %v508, %v197
  %v510 = vshrl.u32 %v509, 8
  %v511 = vand.u32 %v509, 255
  %v512 = vsub.s32 0, %v511
  %v513 = vsel %vm507, %v512, %v511
  %vm514 = vcmp.lt.s32.totalorder %v198, 0
  %v515 = vsub.s32 0, %v198
  %v516 = vsel %vm514, %v515, %v198
  %v517 = vshrl.u32 %v516, 8
  %v518 = vand.u32 %v516, 255
  %v519 = vsub.s32 0, %v518
  %v520 = vsel %vm514, %v519, %v518
  %vm521 = vcmp.lt.s32.totalorder %v199, 0
  %v522 = vsub.s32 0, %v199
  %v523 = vsel %vm521, %v522, %v199
  %v524 = vshrl.u32 %v523, 8
  %v525 = vand.u32 %v523, 255
  %v526 = vsub.s32 0, %v525
  %v527 = vsel %vm521, %v526, %v525
  %vm528 = vcmp.lt.s32.totalorder %v200, 0
  %v529 = vsub.s32 0, %v200
  %v530 = vsel %vm528, %v529, %v200
  %v531 = vshrl.u32 %v530, 8
  %v532 = vand.u32 %v530, 255
  %v533 = vsub.s32 0, %v532
  %v534 = vsel %vm528, %v533, %v532
  %vm535 = vcmp.lt.s32.totalorder %v201, 0
  %v536 = vsub.s32 0, %v201
  %v537 = vsel %vm535, %v536, %v201
  %v538 = vshrl.u32 %v537, 8
  %v539 = vand.u32 %v537, 255
  %v540 = vsub.s32 0, %v539
  %v541 = vsel %vm535, %v540, %v539
  %vm542 = vcmp.lt.s32.totalorder %v202, 0
  %v543 = vsub.s32 0, %v202
  %v544 = vsel %vm542, %v543, %v202
  %v545 = vshrl.u32 %v544, 8
  %v546 = vand.u32 %v544, 255
  %v547 = vsub.s32 0, %v546
  %v548 = vsel %vm542, %v547, %v546
  %vm549 = vcmp.lt.s32.totalorder %v203, 0
  %v550 = vsub.s32 0, %v203
  %v551 = vsel %vm549, %v550, %v203
  %v552 = vshrl.u32 %v551, 8
  %v553 = vand.u32 %v551, 255
  %v554 = vsub.s32 0, %v553
  %v555 = vsel %vm549, %v554, %v553
  %vm556 = vcmp.lt.s32.totalorder %v204, 0
  %v557 = vsub.s32 0, %v204
  %v558 = vsel %vm556, %v557, %v204
  %v559 = vshrl.u32 %v558, 8
  %v560 = vand.u32 %v558, 255
  %v561 = vsub.s32 0, %v560
  %v562 = vsel %vm556, %v561, %v560
  %vm563 = vcmp.lt.s32.totalorder %v205, 0
  %v564 = vsub.s32 0, %v205
  %v565 = vsel %vm563, %v564, %v205
  %v566 = vshrl.u32 %v565, 8
  %v567 = vand.u32 %v565, 255
  %v568 = vsub.s32 0, %v567
  %v569 = vsel %vm563, %v568, %v567
  %vm570 = vcmp.lt.s32.totalorder %v206, 0
  %v571 = vsub.s32 0, %v206
  %v572 = vsel %vm570, %v571, %v206
  %v573 = vshrl.u32 %v572, 8
  %v574 = vand.u32 %v572, 255
  %v575 = vsub.s32 0, %v574
  %v576 = vsel %vm570, %v575, %v574
  %vm577 = vcmp.lt.s32.totalorder %v207, 0
  %v578 = vsub.s32 0, %v207
  %v579 = vsel %vm577, %v578, %v207
  %v580 = vshrl.u32 %v579, 8
  %v581 = vand.u32 %v579, 255
  %v582 = vsub.s32 0, %v581
  %v583 = vsel %vm577, %v582, %v581
  %vm584 = vcmp.lt.s32.totalorder %v208, 0
  %v585 = vsub.s32 0, %v208
  %v586 = vsel %vm584, %v585, %v208
  %v587 = vshrl.u32 %v586, 8
  %v588 = vand.u32 %v586, 255
  %v589 = vsub.s32 0, %v588
  %v590 = vsel %vm584, %v589, %v588
  %vm591 = vcmp.lt.s32.totalorder %v209, 0
  %v592 = vsub.s32 0, %v209
  %v593 = vsel %vm591, %v592, %v209
  %v594 = vshrl.u32 %v593, 8
  %v595 = vand.u32 %v593, 255
  %v596 = vsub.s32 0, %v595
  %v597 = vsel %vm591, %v596, %v595
  %vm598 = vcmp.lt.s32.totalorder %v210, 0
  %v599 = vsub.s32 0, %v210
  %v600 = vsel %vm598, %v599, %v210
  %v601 = vshrl.u32 %v600, 8
  %v602 = vand.u32 %v600, 255
  %v603 = vsub.s32 0, %v602
  %v604 = vsel %vm598, %v603, %v602
  %vm605 = vcmp.lt.s32.totalorder %v211, 0
  %v606 = vsub.s32 0, %v211
  %v607 = vsel %vm605, %v606, %v211
  %v608 = vshrl.u32 %v607, 8
  %v609 = vand.u32 %v607, 255
  %v610 = vsub.s32 0, %v609
  %v611 = vsel %vm605, %v610, %v609
  %vm612 = vcmp.lt.s32.totalorder %v212, 0
  %v613 = vsub.s32 0, %v212
  %v614 = vsel %vm612, %v613, %v212
  %v615 = vshrl.u32 %v614, 8
  %v616 = vand.u32 %v614, 255
  %v617 = vsub.s32 0, %v616
  %v618 = vsel %vm612, %v617, %v616
  %vm619 = vcmp.lt.s32.totalorder %v213, 0
  %v620 = vsub.s32 0, %v213
  %v621 = vsel %vm619, %v620, %v213
  %v622 = vshrl.u32 %v621, 8
  %v623 = vand.u32 %v621, 255
  %v624 = vsub.s32 0, %v623
  %v625 = vsel %vm619, %v624, %v623
  %vm626 = vcmp.lt.s32.totalorder %v214, 0
  %v627 = vsub.s32 0, %v214
  %v628 = vsel %vm626, %v627, %v214
  %v629 = vshrl.u32 %v628, 8
  %v630 = vand.u32 %v628, 255
  %v631 = vsub.s32 0, %v630
  %v632 = vsel %vm626, %v631, %v630
  %vm633 = vcmp.lt.s32.totalorder %v215, 0
  %v634 = vsub.s32 0, %v215
  %v635 = vsel %vm633, %v634, %v215
  %v636 = vshrl.u32 %v635, 8
  %v637 = vand.u32 %v635, 255
  %v638 = vsub.s32 0, %v637
  %v639 = vsel %vm633, %v638, %v637
  %vm640 = vcmp.lt.s32.totalorder %v216, 0
  %v641 = vsub.s32 0, %v216
  %v642 = vsel %vm640, %v641, %v216
  %v643 = vshrl.u32 %v642, 8
  %v644 = vand.u32 %v642, 255
  %v645 = vsub.s32 0, %v644
  %v646 = vsel %vm640, %v645, %v644
  %vm647 = vcmp.lt.s32.totalorder %v217, 0
  %v648 = vsub.s32 0, %v217
  %v649 = vsel %vm647, %v648, %v217
  %v650 = vshrl.u32 %v649, 8
  %v651 = vand.u32 %v649, 255
  %v652 = vsub.s32 0, %v651
  %v653 = vsel %vm647, %v652, %v651
  %vm654 = vcmp.lt.s32.totalorder %v218, 0
  %v655 = vsub.s32 0, %v218
  %v656 = vsel %vm654, %v655, %v218
  %v657 = vshrl.u32 %v656, 8
  %v658 = vand.u32 %v656, 255
  %v659 = vsub.s32 0, %v658
  %v660 = vsel %vm654, %v659, %v658
  %vm661 = vcmp.lt.s32.totalorder %v219, 0
  %v662 = vsub.s32 0, %v219
  %v663 = vsel %vm661, %v662, %v219
  %v664 = vshrl.u32 %v663, 8
  %v665 = vand.u32 %v663, 255
  %v666 = vsub.s32 0, %v665
  %v667 = vsel %vm661, %v666, %v665
  %vm668 = vcmp.ne.s32.totalorder %v226, 0
  %vm669 = vcmp.ne.s32.totalorder %v233, 0
  %vm670 = vcmp.ne.s32.totalorder %v240, 0
  %vm671 = vcmp.ne.s32.totalorder %v247, 0
  %vm672 = vcmp.ne.s32.totalorder %v254, 0
  %vm673 = vcmp.ne.s32.totalorder %v261, 0
  %vm674 = vcmp.ne.s32.totalorder %v268, 0
  %vm675 = vcmp.ne.s32.totalorder %v275, 0
  %vm676 = vcmp.ne.s32.totalorder %v282, 0
  %vm677 = vcmp.ne.s32.totalorder %v289, 0
  %vm678 = vcmp.ne.s32.totalorder %v296, 0
  %vm679 = vcmp.ne.s32.totalorder %v303, 0
  %vm680 = vcmp.ne.s32.totalorder %v310, 0
  %vm681 = vcmp.ne.s32.totalorder %v317, 0
  %vm682 = vcmp.ne.s32.totalorder %v324, 0
  %vm683 = vcmp.ne.s32.totalorder %v331, 0
  %vm684 = vcmp.ne.s32.totalorder %v338, 0
  %vm685 = vcmp.ne.s32.totalorder %v345, 0
  %vm686 = vcmp.ne.s32.totalorder %v352, 0
  %vm687 = vcmp.ne.s32.totalorder %v359, 0
  %vm688 = vcmp.ne.s32.totalorder %v366, 0
  %vm689 = vcmp.ne.s32.totalorder %v373, 0
  %vm690 = vcmp.ne.s32.totalorder %v380, 0
  %vm691 = vcmp.ne.s32.totalorder %v387, 0
  %vm692 = vcmp.ne.s32.totalorder %v394, 0
  %vm693 = vcmp.ne.s32.totalorder %v401, 0
  %vm694 = vcmp.ne.s32.totalorder %v408, 0
  %vm695 = vcmp.ne.s32.totalorder %v415, 0
  %vm696 = vcmp.ne.s32.totalorder %v422, 0
  %vm697 = vcmp.ne.s32.totalorder %v429, 0
  %vm698 = vcmp.ne.s32.totalorder %v436, 0
  %vm699 = vcmp.ne.s32.totalorder %v443, 0
  %vm700 = vcmp.ne.s32.totalorder %v450, 0
  %vm701 = vcmp.ne.s32.totalorder %v457, 0
  %vm702 = vcmp.ne.s32.totalorder %v464, 0
  %vm703 = vcmp.ne.s32.totalorder %v471, 0
  %vm704 = vcmp.ne.s32.totalorder %v478, 0
  %vm705 = vcmp.ne.s32.totalorder %v485, 0
  %vm706 = vcmp.ne.s32.totalorder %v492, 0
  %vm707 = vcmp.ne.s32.totalorder %v499, 0
  %vm708 = vcmp.ne.s32.totalorder %v506, 0
  %vm709 = vcmp.ne.s32.totalorder %v513, 0
  %vm710 = vcmp.ne.s32.totalorder %v520, 0
  %vm711 = vcmp.ne.s32.totalorder %v527, 0
  %vm712 = vcmp.ne.s32.totalorder %v534, 0
  %vm713 = vcmp.ne.s32.totalorder %v541, 0
  %vm714 = vcmp.ne.s32.totalorder %v548, 0
  %vm715 = vcmp.ne.s32.totalorder %v555, 0
  %vm716 = vcmp.ne.s32.totalorder %v562, 0
  %vm717 = vcmp.ne.s32.totalorder %v569, 0
  %vm718 = vcmp.ne.s32.totalorder %v576, 0
  %vm719 = vcmp.ne.s32.totalorder %v583, 0
  %vm720 = vcmp.ne.s32.totalorder %v590, 0
  %vm721 = vcmp.ne.s32.totalorder %v597, 0
  %vm722 = vcmp.ne.s32.totalorder %v604, 0
  %vm723 = vcmp.ne.s32.totalorder %v611, 0
  %vm724 = vcmp.ne.s32.totalorder %v618, 0
  %vm725 = vcmp.ne.s32.totalorder %v625, 0
  %vm726 = vcmp.ne.s32.totalorder %v632, 0
  %vm727 = vcmp.ne.s32.totalorder %v639, 0
  %vm728 = vcmp.ne.s32.totalorder %v646, 0
  %vm729 = vcmp.ne.s32.totalorder %v653, 0
  %vm730 = vcmp.ne.s32.totalorder %v660, 0
  %vm731 = vcmp.ne.s32.totalorder %v667, 0
  %vm732 = vcmp.lt.s32.totalorder %v226, 0
  %vm733 = vcmp.lt.s32.totalorder %v233, 0
  %vm734 = vcmp.lt.s32.totalorder %v240, 0
  %vm735 = vcmp.lt.s32.totalorder %v247, 0
  %vm736 = vcmp.lt.s32.totalorder %v254, 0
  %vm737 = vcmp.lt.s32.totalorder %v261, 0
  %vm738 = vcmp.lt.s32.totalorder %v268, 0
  %vm739 = vcmp.lt.s32.totalorder %v275, 0
  %vm740 = vcmp.lt.s32.totalorder %v282, 0
  %vm741 = vcmp.lt.s32.totalorder %v289, 0
  %vm742 = vcmp.lt.s32.totalorder %v296, 0
  %vm743 = vcmp.lt.s32.totalorder %v303, 0
  %vm744 = vcmp.lt.s32.totalorder %v310, 0
  %vm745 = vcmp.lt.s32.totalorder %v317, 0
  %vm746 = vcmp.lt.s32.totalorder %v324, 0
  %vm747 = vcmp.lt.s32.totalorder %v331, 0
  %vm748 = vcmp.lt.s32.totalorder %v338, 0
  %vm749 = vcmp.lt.s32.totalorder %v345, 0
  %vm750 = vcmp.lt.s32.totalorder %v352, 0
  %vm751 = vcmp.lt.s32.totalorder %v359, 0
  %vm752 = vcmp.lt.s32.totalorder %v366, 0
  %vm753 = vcmp.lt.s32.totalorder %v373, 0
  %vm754 = vcmp.lt.s32.totalorder %v380, 0
  %vm755 = vcmp.lt.s32.totalorder %v387, 0
  %vm756 = vcmp.lt.s32.totalorder %v394, 0
  %vm757 = vcmp.lt.s32.totalorder %v401, 0
  %vm758 = vcmp.lt.s32.totalorder %v408, 0
  %vm759 = vcmp.lt.s32.totalorder %v415, 0
  %vm760 = vcmp.lt.s32.totalorder %v422, 0
  %vm761 = vcmp.lt.s32.totalorder %v429, 0
  %vm762 = vcmp.lt.s32.totalorder %v436, 0
  %vm763 = vcmp.lt.s32.totalorder %v443, 0
  %vm764 = vcmp.lt.s32.totalorder %v450, 0
  %vm765 = vcmp.lt.s32.totalorder %v457, 0
  %vm766 = vcmp.lt.s32.totalorder %v464, 0
  %vm767 = vcmp.lt.s32.totalorder %v471, 0
  %vm768 = vcmp.lt.s32.totalorder %v478, 0
  %vm769 = vcmp.lt.s32.totalorder %v485, 0
  %vm770 = vcmp.lt.s32.totalorder %v492, 0
  %vm771 = vcmp.lt.s32.totalorder %v499, 0
  %vm772 = vcmp.lt.s32.totalorder %v506, 0
  %vm773 = vcmp.lt.s32.totalorder %v513, 0
  %vm774 = vcmp.lt.s32.totalorder %v520, 0
  %vm775 = vcmp.lt.s32.totalorder %v527, 0
  %vm776 = vcmp.lt.s32.totalorder %v534, 0
  %vm777 = vcmp.lt.s32.totalorder %v541, 0
  %vm778 = vcmp.lt.s32.totalorder %v548, 0
  %vm779 = vcmp.lt.s32.totalorder %v555, 0
  %vm780 = vcmp.lt.s32.totalorder %v562, 0
  %vm781 = vcmp.lt.s32.totalorder %v569, 0
  %vm782 = vcmp.lt.s32.totalorder %v576, 0
  %vm783 = vcmp.lt.s32.totalorder %v583, 0
  %vm784 = vcmp.lt.s32.totalorder %v590, 0
  %vm785 = vcmp.lt.s32.totalorder %v597, 0
  %vm786 = vcmp.lt.s32.totalorder %v604, 0
  %vm787 = vcmp.lt.s32.totalorder %v611, 0
  %vm788 = vcmp.lt.s32.totalorder %v618, 0
  %vm789 = vcmp.lt.s32.totalorder %v625, 0
  %vm790 = vcmp.lt.s32.totalorder %v632, 0
  %vm791 = vcmp.lt.s32.totalorder %v639, 0
  %vm792 = vcmp.lt.s32.totalorder %v646, 0
  %vm793 = vcmp.lt.s32.totalorder %v653, 0
  %vm794 = vcmp.lt.s32.totalorder %v660, 0
  %vm795 = vcmp.lt.s32.totalorder %v667, 0
  %vm796 = vmand %vm732, %vm668
  %vm797 = vmand %vm733, %vm669
  %vm798 = vmand %vm734, %vm670
  %vm799 = vmand %vm735, %vm671
  %vm800 = vmand %vm736, %vm672
  %vm801 = vmand %vm737, %vm673
  %vm802 = vmand %vm738, %vm674
  %vm803 = vmand %vm739, %vm675
  %vm804 = vmand %vm740, %vm676
  %vm805 = vmand %vm741, %vm677
  %vm806 = vmand %vm742, %vm678
  %vm807 = vmand %vm743, %vm679
  %vm808 = vmand %vm744, %vm680
  %vm809 = vmand %vm745, %vm681
  %vm810 = vmand %vm746, %vm682
  %vm811 = vmand %vm747, %vm683
  %vm812 = vmand %vm748, %vm684
  %vm813 = vmand %vm749, %vm685
  %vm814 = vmand %vm750, %vm686
  %vm815 = vmand %vm751, %vm687
  %vm816 = vmand %vm752, %vm688
  %vm817 = vmand %vm753, %vm689
  %vm818 = vmand %vm754, %vm690
  %vm819 = vmand %vm755, %vm691
  %vm820 = vmand %vm756, %vm692
  %vm821 = vmand %vm757, %vm693
  %vm822 = vmand %vm758, %vm694
  %vm823 = vmand %vm759, %vm695
  %vm824 = vmand %vm760, %vm696
  %vm825 = vmand %vm761, %vm697
  %vm826 = vmand %vm762, %vm698
  %vm827 = vmand %vm763, %vm699
  %vm828 = vmand %vm764, %vm700
  %vm829 = vmand %vm765, %vm701
  %vm830 = vmand %vm766, %vm702
  %vm831 = vmand %vm767, %vm703
  %vm832 = vmand %vm768, %vm704
  %vm833 = vmand %vm769, %vm705
  %vm834 = vmand %vm770, %vm706
  %vm835 = vmand %vm771, %vm707
  %vm836 = vmand %vm772, %vm708
  %vm837 = vmand %vm773, %vm709
  %vm838 = vmand %vm774, %vm710
  %vm839 = vmand %vm775, %vm711
  %vm840 = vmand %vm776, %vm712
  %vm841 = vmand %vm777, %vm713
  %vm842 = vmand %vm778, %vm714
  %vm843 = vmand %vm779, %vm715
  %vm844 = vmand %vm780, %vm716
  %vm845 = vmand %vm781, %vm717
  %vm846 = vmand %vm782, %vm718
  %vm847 = vmand %vm783, %vm719
  %vm848 = vmand %vm784, %vm720
  %vm849 = vmand %vm785, %vm721
  %vm850 = vmand %vm786, %vm722
  %vm851 = vmand %vm787, %vm723
  %vm852 = vmand %vm788, %vm724
  %vm853 = vmand %vm789, %vm725
  %vm854 = vmand %vm790, %vm726
  %vm855 = vmand %vm791, %vm727
  %vm856 = vmand %vm792, %vm728
  %vm857 = vmand %vm793, %vm729
  %vm858 = vmand %vm794, %vm730
  %vm859 = vmand %vm795, %vm731
  %v860 = vadd.s32 %v226, 256
  %v861 = vadd.s32 %v233, 256
  %v862 = vadd.s32 %v240, 256
  %v863 = vadd.s32 %v247, 256
  %v864 = vadd.s32 %v254, 256
  %v865 = vadd.s32 %v261, 256
  %v866 = vadd.s32 %v268, 256
  %v867 = vadd.s32 %v275, 256
  %v868 = vadd.s32 %v282, 256
  %v869 = vadd.s32 %v289, 256
  %v870 = vadd.s32 %v296, 256
  %v871 = vadd.s32 %v303, 256
  %v872 = vadd.s32 %v310, 256
  %v873 = vadd.s32 %v317, 256
  %v874 = vadd.s32 %v324, 256
  %v875 = vadd.s32 %v331, 256
  %v876 = vadd.s32 %v338, 256
  %v877 = vadd.s32 %v345, 256
  %v878 = vadd.s32 %v352, 256
  %v879 = vadd.s32 %v359, 256
  %v880 = vadd.s32 %v366, 256
  %v881 = vadd.s32 %v373, 256
  %v882 = vadd.s32 %v380, 256
  %v883 = vadd.s32 %v387, 256
  %v884 = vadd.s32 %v394, 256
  %v885 = vadd.s32 %v401, 256
  %v886 = vadd.s32 %v408, 256
  %v887 = vadd.s32 %v415, 256
  %v888 = vadd.s32 %v422, 256
  %v889 = vadd.s32 %v429, 256
  %v890 = vadd.s32 %v436, 256
  %v891 = vadd.s32 %v443, 256
  %v892 = vadd.s32 %v450, 256
  %v893 = vadd.s32 %v457, 256
  %v894 = vadd.s32 %v464, 256
  %v895 = vadd.s32 %v471, 256
  %v896 = vadd.s32 %v478, 256
  %v897 = vadd.s32 %v485, 256
  %v898 = vadd.s32 %v492, 256
  %v899 = vadd.s32 %v499, 256
  %v900 = vadd.s32 %v506, 256
  %v901 = vadd.s32 %v513, 256
  %v902 = vadd.s32 %v520, 256
  %v903 = vadd.s32 %v527, 256
  %v904 = vadd.s32 %v534, 256
  %v905 = vadd.s32 %v541, 256
  %v906 = vadd.s32 %v548, 256
  %v907 = vadd.s32 %v555, 256
  %v908 = vadd.s32 %v562, 256
  %v909 = vadd.s32 %v569, 256
  %v910 = vadd.s32 %v576, 256
  %v911 = vadd.s32 %v583, 256
  %v912 = vadd.s32 %v590, 256
  %v913 = vadd.s32 %v597, 256
  %v914 = vadd.s32 %v604, 256
  %v915 = vadd.s32 %v611, 256
  %v916 = vadd.s32 %v618, 256
  %v917 = vadd.s32 %v625, 256
  %v918 = vadd.s32 %v632, 256
  %v919 = vadd.s32 %v639, 256
  %v920 = vadd.s32 %v646, 256
  %v921 = vadd.s32 %v653, 256
  %v922 = vadd.s32 %v660, 256
  %v923 = vadd.s32 %v667, 256
  %v924 = vsel %vm796, %v860, %v226
  %v925 = vsel %vm797, %v861, %v233
  %v926 = vsel %vm798, %v862, %v240
  %v927 = vsel %vm799, %v863, %v247
  %v928 = vsel %vm800, %v864, %v254
  %v929 = vsel %vm801, %v865, %v261
  %v930 = vsel %vm802, %v866, %v268
  %v931 = vsel %vm803, %v867, %v275
  %v932 = vsel %vm804, %v868, %v282
  %v933 = vsel %vm805, %v869, %v289
  %v934 = vsel %vm806, %v870, %v296
  %v935 = vsel %vm807, %v871, %v303
  %v936 = vsel %vm808, %v872, %v310
  %v937 = vsel %vm809, %v873, %v317
  %v938 = vsel %vm810, %v874, %v324
  %v939 = vsel %vm811, %v875, %v331
  %v940 = vsel %vm812, %v876, %v338
  %v941 = vsel %vm813, %v877, %v345
  %v942 = vsel %vm814, %v878, %v352
  %v943 = vsel %vm815, %v879, %v359
  %v944 = vsel %vm816, %v880, %v366
  %v945 = vsel %vm817, %v881, %v373
  %v946 = vsel %vm818, %v882, %v380
  %v947 = vsel %vm819, %v883, %v387
  %v948 = vsel %vm820, %v884, %v394
  %v949 = vsel %vm821, %v885, %v401
  %v950 = vsel %vm822, %v886, %v408
  %v951 = vsel %vm823, %v887, %v415
  %v952 = vsel %vm824, %v888, %v422
  %v953 = vsel %vm825, %v889, %v429
  %v954 = vsel %vm826, %v890, %v436
  %v955 = vsel %vm827, %v891, %v443
  %v956 = vsel %vm828, %v892, %v450
  %v957 = vsel %vm829, %v893, %v457
  %v958 = vsel %vm830, %v894, %v464
  %v959 = vsel %vm831, %v895, %v471
  %v960 = vsel %vm832, %v896, %v478
  %v961 = vsel %vm833, %v897, %v485
  %v962 = vsel %vm834, %v898, %v492
  %v963 = vsel %vm835, %v899, %v499
  %v964 = vsel %vm836, %v900, %v506
  %v965 = vsel %vm837, %v901, %v513
  %v966 = vsel %vm838, %v902, %v520
  %v967 = vsel %vm839, %v903, %v527
  %v968 = vsel %vm840, %v904, %v534
  %v969 = vsel %vm841, %v905, %v541
  %v970 = vsel %vm842, %v906, %v548
  %v971 = vsel %vm843, %v907, %v555
  %v972 = vsel %vm844, %v908, %v562
  %v973 = vsel %vm845, %v909, %v569
  %v974 = vsel %vm846, %v910, %v576
  %v975 = vsel %vm847, %v911, %v583
  %v976 = vsel %vm848, %v912, %v590
  %v977 = vsel %vm849, %v913, %v597
  %v978 = vsel %vm850, %v914, %v604
  %v979 = vsel %vm851, %v915, %v611
  %v980 = vsel %vm852, %v916, %v618
  %v981 = vsel %vm853, %v917, %v625
  %v982 = vsel %vm854, %v918, %v632
  %v983 = vsel %vm855, %v919, %v639
  %v984 = vsel %vm856, %v920, %v646
  %v985 = vsel %vm857, %v921, %v653
  %v986 = vsel %vm858, %v922, %v660
  %v987 = vsel %vm859, %v923, %v667
  %vm988 = vcmp.lt.s32.totalorder %v924, 0
  %v989 = vsub.s32 0, %v924
  %v990 = vsel %vm988, %v989, %v924
  %v991 = vshrl.u32 %v990, 4
  %v992 = vand.u32 %v990, 15
  %v993 = vsub.s32 0, %v992
  %v994 = vsel %vm988, %v993, %v992
  %vm995 = vcmp.lt.s32.totalorder %v925, 0
  %v996 = vsub.s32 0, %v925
  %v997 = vsel %vm995, %v996, %v925
  %v998 = vshrl.u32 %v997, 4
  %v999 = vand.u32 %v997, 15
  %v1000 = vsub.s32 0, %v999
  %v1001 = vsel %vm995, %v1000, %v999
  %vm1002 = vcmp.lt.s32.totalorder %v926, 0
  %v1003 = vsub.s32 0, %v926
  %v1004 = vsel %vm1002, %v1003, %v926
  %v1005 = vshrl.u32 %v1004, 4
  %v1006 = vand.u32 %v1004, 15
  %v1007 = vsub.s32 0, %v1006
  %v1008 = vsel %vm1002, %v1007, %v1006
  %vm1009 = vcmp.lt.s32.totalorder %v927, 0
  %v1010 = vsub.s32 0, %v927
  %v1011 = vsel %vm1009, %v1010, %v927
  %v1012 = vshrl.u32 %v1011, 4
  %v1013 = vand.u32 %v1011, 15
  %v1014 = vsub.s32 0, %v1013
  %v1015 = vsel %vm1009, %v1014, %v1013
  %vm1016 = vcmp.lt.s32.totalorder %v928, 0
  %v1017 = vsub.s32 0, %v928
  %v1018 = vsel %vm1016, %v1017, %v928
  %v1019 = vshrl.u32 %v1018, 4
  %v1020 = vand.u32 %v1018, 15
  %v1021 = vsub.s32 0, %v1020
  %v1022 = vsel %vm1016, %v1021, %v1020
  %vm1023 = vcmp.lt.s32.totalorder %v929, 0
  %v1024 = vsub.s32 0, %v929
  %v1025 = vsel %vm1023, %v1024, %v929
  %v1026 = vshrl.u32 %v1025, 4
  %v1027 = vand.u32 %v1025, 15
  %v1028 = vsub.s32 0, %v1027
  %v1029 = vsel %vm1023, %v1028, %v1027
  %vm1030 = vcmp.lt.s32.totalorder %v930, 0
  %v1031 = vsub.s32 0, %v930
  %v1032 = vsel %vm1030, %v1031, %v930
  %v1033 = vshrl.u32 %v1032, 4
  %v1034 = vand.u32 %v1032, 15
  %v1035 = vsub.s32 0, %v1034
  %v1036 = vsel %vm1030, %v1035, %v1034
  %vm1037 = vcmp.lt.s32.totalorder %v931, 0
  %v1038 = vsub.s32 0, %v931
  %v1039 = vsel %vm1037, %v1038, %v931
  %v1040 = vshrl.u32 %v1039, 4
  %v1041 = vand.u32 %v1039, 15
  %v1042 = vsub.s32 0, %v1041
  %v1043 = vsel %vm1037, %v1042, %v1041
  %vm1044 = vcmp.lt.s32.totalorder %v932, 0
  %v1045 = vsub.s32 0, %v932
  %v1046 = vsel %vm1044, %v1045, %v932
  %v1047 = vshrl.u32 %v1046, 4
  %v1048 = vand.u32 %v1046, 15
  %v1049 = vsub.s32 0, %v1048
  %v1050 = vsel %vm1044, %v1049, %v1048
  %vm1051 = vcmp.lt.s32.totalorder %v933, 0
  %v1052 = vsub.s32 0, %v933
  %v1053 = vsel %vm1051, %v1052, %v933
  %v1054 = vshrl.u32 %v1053, 4
  %v1055 = vand.u32 %v1053, 15
  %v1056 = vsub.s32 0, %v1055
  %v1057 = vsel %vm1051, %v1056, %v1055
  %vm1058 = vcmp.lt.s32.totalorder %v934, 0
  %v1059 = vsub.s32 0, %v934
  %v1060 = vsel %vm1058, %v1059, %v934
  %v1061 = vshrl.u32 %v1060, 4
  %v1062 = vand.u32 %v1060, 15
  %v1063 = vsub.s32 0, %v1062
  %v1064 = vsel %vm1058, %v1063, %v1062
  %vm1065 = vcmp.lt.s32.totalorder %v935, 0
  %v1066 = vsub.s32 0, %v935
  %v1067 = vsel %vm1065, %v1066, %v935
  %v1068 = vshrl.u32 %v1067, 4
  %v1069 = vand.u32 %v1067, 15
  %v1070 = vsub.s32 0, %v1069
  %v1071 = vsel %vm1065, %v1070, %v1069
  %vm1072 = vcmp.lt.s32.totalorder %v936, 0
  %v1073 = vsub.s32 0, %v936
  %v1074 = vsel %vm1072, %v1073, %v936
  %v1075 = vshrl.u32 %v1074, 4
  %v1076 = vand.u32 %v1074, 15
  %v1077 = vsub.s32 0, %v1076
  %v1078 = vsel %vm1072, %v1077, %v1076
  %vm1079 = vcmp.lt.s32.totalorder %v937, 0
  %v1080 = vsub.s32 0, %v937
  %v1081 = vsel %vm1079, %v1080, %v937
  %v1082 = vshrl.u32 %v1081, 4
  %v1083 = vand.u32 %v1081, 15
  %v1084 = vsub.s32 0, %v1083
  %v1085 = vsel %vm1079, %v1084, %v1083
  %vm1086 = vcmp.lt.s32.totalorder %v938, 0
  %v1087 = vsub.s32 0, %v938
  %v1088 = vsel %vm1086, %v1087, %v938
  %v1089 = vshrl.u32 %v1088, 4
  %v1090 = vand.u32 %v1088, 15
  %v1091 = vsub.s32 0, %v1090
  %v1092 = vsel %vm1086, %v1091, %v1090
  %vm1093 = vcmp.lt.s32.totalorder %v939, 0
  %v1094 = vsub.s32 0, %v939
  %v1095 = vsel %vm1093, %v1094, %v939
  %v1096 = vshrl.u32 %v1095, 4
  %v1097 = vand.u32 %v1095, 15
  %v1098 = vsub.s32 0, %v1097
  %v1099 = vsel %vm1093, %v1098, %v1097
  %vm1100 = vcmp.lt.s32.totalorder %v940, 0
  %v1101 = vsub.s32 0, %v940
  %v1102 = vsel %vm1100, %v1101, %v940
  %v1103 = vshrl.u32 %v1102, 4
  %v1104 = vand.u32 %v1102, 15
  %v1105 = vsub.s32 0, %v1104
  %v1106 = vsel %vm1100, %v1105, %v1104
  %vm1107 = vcmp.lt.s32.totalorder %v941, 0
  %v1108 = vsub.s32 0, %v941
  %v1109 = vsel %vm1107, %v1108, %v941
  %v1110 = vshrl.u32 %v1109, 4
  %v1111 = vand.u32 %v1109, 15
  %v1112 = vsub.s32 0, %v1111
  %v1113 = vsel %vm1107, %v1112, %v1111
  %vm1114 = vcmp.lt.s32.totalorder %v942, 0
  %v1115 = vsub.s32 0, %v942
  %v1116 = vsel %vm1114, %v1115, %v942
  %v1117 = vshrl.u32 %v1116, 4
  %v1118 = vand.u32 %v1116, 15
  %v1119 = vsub.s32 0, %v1118
  %v1120 = vsel %vm1114, %v1119, %v1118
  %vm1121 = vcmp.lt.s32.totalorder %v943, 0
  %v1122 = vsub.s32 0, %v943
  %v1123 = vsel %vm1121, %v1122, %v943
  %v1124 = vshrl.u32 %v1123, 4
  %v1125 = vand.u32 %v1123, 15
  %v1126 = vsub.s32 0, %v1125
  %v1127 = vsel %vm1121, %v1126, %v1125
  %vm1128 = vcmp.lt.s32.totalorder %v944, 0
  %v1129 = vsub.s32 0, %v944
  %v1130 = vsel %vm1128, %v1129, %v944
  %v1131 = vshrl.u32 %v1130, 4
  %v1132 = vand.u32 %v1130, 15
  %v1133 = vsub.s32 0, %v1132
  %v1134 = vsel %vm1128, %v1133, %v1132
  %vm1135 = vcmp.lt.s32.totalorder %v945, 0
  %v1136 = vsub.s32 0, %v945
  %v1137 = vsel %vm1135, %v1136, %v945
  %v1138 = vshrl.u32 %v1137, 4
  %v1139 = vand.u32 %v1137, 15
  %v1140 = vsub.s32 0, %v1139
  %v1141 = vsel %vm1135, %v1140, %v1139
  %vm1142 = vcmp.lt.s32.totalorder %v946, 0
  %v1143 = vsub.s32 0, %v946
  %v1144 = vsel %vm1142, %v1143, %v946
  %v1145 = vshrl.u32 %v1144, 4
  %v1146 = vand.u32 %v1144, 15
  %v1147 = vsub.s32 0, %v1146
  %v1148 = vsel %vm1142, %v1147, %v1146
  %vm1149 = vcmp.lt.s32.totalorder %v947, 0
  %v1150 = vsub.s32 0, %v947
  %v1151 = vsel %vm1149, %v1150, %v947
  %v1152 = vshrl.u32 %v1151, 4
  %v1153 = vand.u32 %v1151, 15
  %v1154 = vsub.s32 0, %v1153
  %v1155 = vsel %vm1149, %v1154, %v1153
  %vm1156 = vcmp.lt.s32.totalorder %v948, 0
  %v1157 = vsub.s32 0, %v948
  %v1158 = vsel %vm1156, %v1157, %v948
  %v1159 = vshrl.u32 %v1158, 4
  %v1160 = vand.u32 %v1158, 15
  %v1161 = vsub.s32 0, %v1160
  %v1162 = vsel %vm1156, %v1161, %v1160
  %vm1163 = vcmp.lt.s32.totalorder %v949, 0
  %v1164 = vsub.s32 0, %v949
  %v1165 = vsel %vm1163, %v1164, %v949
  %v1166 = vshrl.u32 %v1165, 4
  %v1167 = vand.u32 %v1165, 15
  %v1168 = vsub.s32 0, %v1167
  %v1169 = vsel %vm1163, %v1168, %v1167
  %vm1170 = vcmp.lt.s32.totalorder %v950, 0
  %v1171 = vsub.s32 0, %v950
  %v1172 = vsel %vm1170, %v1171, %v950
  %v1173 = vshrl.u32 %v1172, 4
  %v1174 = vand.u32 %v1172, 15
  %v1175 = vsub.s32 0, %v1174
  %v1176 = vsel %vm1170, %v1175, %v1174
  %vm1177 = vcmp.lt.s32.totalorder %v951, 0
  %v1178 = vsub.s32 0, %v951
  %v1179 = vsel %vm1177, %v1178, %v951
  %v1180 = vshrl.u32 %v1179, 4
  %v1181 = vand.u32 %v1179, 15
  %v1182 = vsub.s32 0, %v1181
  %v1183 = vsel %vm1177, %v1182, %v1181
  %vm1184 = vcmp.lt.s32.totalorder %v952, 0
  %v1185 = vsub.s32 0, %v952
  %v1186 = vsel %vm1184, %v1185, %v952
  %v1187 = vshrl.u32 %v1186, 4
  %v1188 = vand.u32 %v1186, 15
  %v1189 = vsub.s32 0, %v1188
  %v1190 = vsel %vm1184, %v1189, %v1188
  %vm1191 = vcmp.lt.s32.totalorder %v953, 0
  %v1192 = vsub.s32 0, %v953
  %v1193 = vsel %vm1191, %v1192, %v953
  %v1194 = vshrl.u32 %v1193, 4
  %v1195 = vand.u32 %v1193, 15
  %v1196 = vsub.s32 0, %v1195
  %v1197 = vsel %vm1191, %v1196, %v1195
  %vm1198 = vcmp.lt.s32.totalorder %v954, 0
  %v1199 = vsub.s32 0, %v954
  %v1200 = vsel %vm1198, %v1199, %v954
  %v1201 = vshrl.u32 %v1200, 4
  %v1202 = vand.u32 %v1200, 15
  %v1203 = vsub.s32 0, %v1202
  %v1204 = vsel %vm1198, %v1203, %v1202
  %vm1205 = vcmp.lt.s32.totalorder %v955, 0
  %v1206 = vsub.s32 0, %v955
  %v1207 = vsel %vm1205, %v1206, %v955
  %v1208 = vshrl.u32 %v1207, 4
  %v1209 = vand.u32 %v1207, 15
  %v1210 = vsub.s32 0, %v1209
  %v1211 = vsel %vm1205, %v1210, %v1209
  %vm1212 = vcmp.lt.s32.totalorder %v956, 0
  %v1213 = vsub.s32 0, %v956
  %v1214 = vsel %vm1212, %v1213, %v956
  %v1215 = vshrl.u32 %v1214, 4
  %v1216 = vand.u32 %v1214, 15
  %v1217 = vsub.s32 0, %v1216
  %v1218 = vsel %vm1212, %v1217, %v1216
  %vm1219 = vcmp.lt.s32.totalorder %v957, 0
  %v1220 = vsub.s32 0, %v957
  %v1221 = vsel %vm1219, %v1220, %v957
  %v1222 = vshrl.u32 %v1221, 4
  %v1223 = vand.u32 %v1221, 15
  %v1224 = vsub.s32 0, %v1223
  %v1225 = vsel %vm1219, %v1224, %v1223
  %vm1226 = vcmp.lt.s32.totalorder %v958, 0
  %v1227 = vsub.s32 0, %v958
  %v1228 = vsel %vm1226, %v1227, %v958
  %v1229 = vshrl.u32 %v1228, 4
  %v1230 = vand.u32 %v1228, 15
  %v1231 = vsub.s32 0, %v1230
  %v1232 = vsel %vm1226, %v1231, %v1230
  %vm1233 = vcmp.lt.s32.totalorder %v959, 0
  %v1234 = vsub.s32 0, %v959
  %v1235 = vsel %vm1233, %v1234, %v959
  %v1236 = vshrl.u32 %v1235, 4
  %v1237 = vand.u32 %v1235, 15
  %v1238 = vsub.s32 0, %v1237
  %v1239 = vsel %vm1233, %v1238, %v1237
  %vm1240 = vcmp.lt.s32.totalorder %v960, 0
  %v1241 = vsub.s32 0, %v960
  %v1242 = vsel %vm1240, %v1241, %v960
  %v1243 = vshrl.u32 %v1242, 4
  %v1244 = vand.u32 %v1242, 15
  %v1245 = vsub.s32 0, %v1244
  %v1246 = vsel %vm1240, %v1245, %v1244
  %vm1247 = vcmp.lt.s32.totalorder %v961, 0
  %v1248 = vsub.s32 0, %v961
  %v1249 = vsel %vm1247, %v1248, %v961
  %v1250 = vshrl.u32 %v1249, 4
  %v1251 = vand.u32 %v1249, 15
  %v1252 = vsub.s32 0, %v1251
  %v1253 = vsel %vm1247, %v1252, %v1251
  %vm1254 = vcmp.lt.s32.totalorder %v962, 0
  %v1255 = vsub.s32 0, %v962
  %v1256 = vsel %vm1254, %v1255, %v962
  %v1257 = vshrl.u32 %v1256, 4
  %v1258 = vand.u32 %v1256, 15
  %v1259 = vsub.s32 0, %v1258
  %v1260 = vsel %vm1254, %v1259, %v1258
  %vm1261 = vcmp.lt.s32.totalorder %v963, 0
  %v1262 = vsub.s32 0, %v963
  %v1263 = vsel %vm1261, %v1262, %v963
  %v1264 = vshrl.u32 %v1263, 4
  %v1265 = vand.u32 %v1263, 15
  %v1266 = vsub.s32 0, %v1265
  %v1267 = vsel %vm1261, %v1266, %v1265
  %vm1268 = vcmp.lt.s32.totalorder %v964, 0
  %v1269 = vsub.s32 0, %v964
  %v1270 = vsel %vm1268, %v1269, %v964
  %v1271 = vshrl.u32 %v1270, 4
  %v1272 = vand.u32 %v1270, 15
  %v1273 = vsub.s32 0, %v1272
  %v1274 = vsel %vm1268, %v1273, %v1272
  %vm1275 = vcmp.lt.s32.totalorder %v965, 0
  %v1276 = vsub.s32 0, %v965
  %v1277 = vsel %vm1275, %v1276, %v965
  %v1278 = vshrl.u32 %v1277, 4
  %v1279 = vand.u32 %v1277, 15
  %v1280 = vsub.s32 0, %v1279
  %v1281 = vsel %vm1275, %v1280, %v1279
  %vm1282 = vcmp.lt.s32.totalorder %v966, 0
  %v1283 = vsub.s32 0, %v966
  %v1284 = vsel %vm1282, %v1283, %v966
  %v1285 = vshrl.u32 %v1284, 4
  %v1286 = vand.u32 %v1284, 15
  %v1287 = vsub.s32 0, %v1286
  %v1288 = vsel %vm1282, %v1287, %v1286
  %vm1289 = vcmp.lt.s32.totalorder %v967, 0
  %v1290 = vsub.s32 0, %v967
  %v1291 = vsel %vm1289, %v1290, %v967
  %v1292 = vshrl.u32 %v1291, 4
  %v1293 = vand.u32 %v1291, 15
  %v1294 = vsub.s32 0, %v1293
  %v1295 = vsel %vm1289, %v1294, %v1293
  %vm1296 = vcmp.lt.s32.totalorder %v968, 0
  %v1297 = vsub.s32 0, %v968
  %v1298 = vsel %vm1296, %v1297, %v968
  %v1299 = vshrl.u32 %v1298, 4
  %v1300 = vand.u32 %v1298, 15
  %v1301 = vsub.s32 0, %v1300
  %v1302 = vsel %vm1296, %v1301, %v1300
  %vm1303 = vcmp.lt.s32.totalorder %v969, 0
  %v1304 = vsub.s32 0, %v969
  %v1305 = vsel %vm1303, %v1304, %v969
  %v1306 = vshrl.u32 %v1305, 4
  %v1307 = vand.u32 %v1305, 15
  %v1308 = vsub.s32 0, %v1307
  %v1309 = vsel %vm1303, %v1308, %v1307
  %vm1310 = vcmp.lt.s32.totalorder %v970, 0
  %v1311 = vsub.s32 0, %v970
  %v1312 = vsel %vm1310, %v1311, %v970
  %v1313 = vshrl.u32 %v1312, 4
  %v1314 = vand.u32 %v1312, 15
  %v1315 = vsub.s32 0, %v1314
  %v1316 = vsel %vm1310, %v1315, %v1314
  %vm1317 = vcmp.lt.s32.totalorder %v971, 0
  %v1318 = vsub.s32 0, %v971
  %v1319 = vsel %vm1317, %v1318, %v971
  %v1320 = vshrl.u32 %v1319, 4
  %v1321 = vand.u32 %v1319, 15
  %v1322 = vsub.s32 0, %v1321
  %v1323 = vsel %vm1317, %v1322, %v1321
  %vm1324 = vcmp.lt.s32.totalorder %v972, 0
  %v1325 = vsub.s32 0, %v972
  %v1326 = vsel %vm1324, %v1325, %v972
  %v1327 = vshrl.u32 %v1326, 4
  %v1328 = vand.u32 %v1326, 15
  %v1329 = vsub.s32 0, %v1328
  %v1330 = vsel %vm1324, %v1329, %v1328
  %vm1331 = vcmp.lt.s32.totalorder %v973, 0
  %v1332 = vsub.s32 0, %v973
  %v1333 = vsel %vm1331, %v1332, %v973
  %v1334 = vshrl.u32 %v1333, 4
  %v1335 = vand.u32 %v1333, 15
  %v1336 = vsub.s32 0, %v1335
  %v1337 = vsel %vm1331, %v1336, %v1335
  %vm1338 = vcmp.lt.s32.totalorder %v974, 0
  %v1339 = vsub.s32 0, %v974
  %v1340 = vsel %vm1338, %v1339, %v974
  %v1341 = vshrl.u32 %v1340, 4
  %v1342 = vand.u32 %v1340, 15
  %v1343 = vsub.s32 0, %v1342
  %v1344 = vsel %vm1338, %v1343, %v1342
  %vm1345 = vcmp.lt.s32.totalorder %v975, 0
  %v1346 = vsub.s32 0, %v975
  %v1347 = vsel %vm1345, %v1346, %v975
  %v1348 = vshrl.u32 %v1347, 4
  %v1349 = vand.u32 %v1347, 15
  %v1350 = vsub.s32 0, %v1349
  %v1351 = vsel %vm1345, %v1350, %v1349
  %vm1352 = vcmp.lt.s32.totalorder %v976, 0
  %v1353 = vsub.s32 0, %v976
  %v1354 = vsel %vm1352, %v1353, %v976
  %v1355 = vshrl.u32 %v1354, 4
  %v1356 = vand.u32 %v1354, 15
  %v1357 = vsub.s32 0, %v1356
  %v1358 = vsel %vm1352, %v1357, %v1356
  %vm1359 = vcmp.lt.s32.totalorder %v977, 0
  %v1360 = vsub.s32 0, %v977
  %v1361 = vsel %vm1359, %v1360, %v977
  %v1362 = vshrl.u32 %v1361, 4
  %v1363 = vand.u32 %v1361, 15
  %v1364 = vsub.s32 0, %v1363
  %v1365 = vsel %vm1359, %v1364, %v1363
  %vm1366 = vcmp.lt.s32.totalorder %v978, 0
  %v1367 = vsub.s32 0, %v978
  %v1368 = vsel %vm1366, %v1367, %v978
  %v1369 = vshrl.u32 %v1368, 4
  %v1370 = vand.u32 %v1368, 15
  %v1371 = vsub.s32 0, %v1370
  %v1372 = vsel %vm1366, %v1371, %v1370
  %vm1373 = vcmp.lt.s32.totalorder %v979, 0
  %v1374 = vsub.s32 0, %v979
  %v1375 = vsel %vm1373, %v1374, %v979
  %v1376 = vshrl.u32 %v1375, 4
  %v1377 = vand.u32 %v1375, 15
  %v1378 = vsub.s32 0, %v1377
  %v1379 = vsel %vm1373, %v1378, %v1377
  %vm1380 = vcmp.lt.s32.totalorder %v980, 0
  %v1381 = vsub.s32 0, %v980
  %v1382 = vsel %vm1380, %v1381, %v980
  %v1383 = vshrl.u32 %v1382, 4
  %v1384 = vand.u32 %v1382, 15
  %v1385 = vsub.s32 0, %v1384
  %v1386 = vsel %vm1380, %v1385, %v1384
  %vm1387 = vcmp.lt.s32.totalorder %v981, 0
  %v1388 = vsub.s32 0, %v981
  %v1389 = vsel %vm1387, %v1388, %v981
  %v1390 = vshrl.u32 %v1389, 4
  %v1391 = vand.u32 %v1389, 15
  %v1392 = vsub.s32 0, %v1391
  %v1393 = vsel %vm1387, %v1392, %v1391
  %vm1394 = vcmp.lt.s32.totalorder %v982, 0
  %v1395 = vsub.s32 0, %v982
  %v1396 = vsel %vm1394, %v1395, %v982
  %v1397 = vshrl.u32 %v1396, 4
  %v1398 = vand.u32 %v1396, 15
  %v1399 = vsub.s32 0, %v1398
  %v1400 = vsel %vm1394, %v1399, %v1398
  %vm1401 = vcmp.lt.s32.totalorder %v983, 0
  %v1402 = vsub.s32 0, %v983
  %v1403 = vsel %vm1401, %v1402, %v983
  %v1404 = vshrl.u32 %v1403, 4
  %v1405 = vand.u32 %v1403, 15
  %v1406 = vsub.s32 0, %v1405
  %v1407 = vsel %vm1401, %v1406, %v1405
  %vm1408 = vcmp.lt.s32.totalorder %v984, 0
  %v1409 = vsub.s32 0, %v984
  %v1410 = vsel %vm1408, %v1409, %v984
  %v1411 = vshrl.u32 %v1410, 4
  %v1412 = vand.u32 %v1410, 15
  %v1413 = vsub.s32 0, %v1412
  %v1414 = vsel %vm1408, %v1413, %v1412
  %vm1415 = vcmp.lt.s32.totalorder %v985, 0
  %v1416 = vsub.s32 0, %v985
  %v1417 = vsel %vm1415, %v1416, %v985
  %v1418 = vshrl.u32 %v1417, 4
  %v1419 = vand.u32 %v1417, 15
  %v1420 = vsub.s32 0, %v1419
  %v1421 = vsel %vm1415, %v1420, %v1419
  %vm1422 = vcmp.lt.s32.totalorder %v986, 0
  %v1423 = vsub.s32 0, %v986
  %v1424 = vsel %vm1422, %v1423, %v986
  %v1425 = vshrl.u32 %v1424, 4
  %v1426 = vand.u32 %v1424, 15
  %v1427 = vsub.s32 0, %v1426
  %v1428 = vsel %vm1422, %v1427, %v1426
  %vm1429 = vcmp.lt.s32.totalorder %v987, 0
  %v1430 = vsub.s32 0, %v987
  %v1431 = vsel %vm1429, %v1430, %v987
  %v1432 = vshrl.u32 %v1431, 4
  %v1433 = vand.u32 %v1431, 15
  %v1434 = vsub.s32 0, %v1433
  %v1435 = vsel %vm1429, %v1434, %v1433
  %vm1436 = vcmp.ne.s32.totalorder %v994, 0
  %vm1437 = vcmp.ne.s32.totalorder %v1001, 0
  %vm1438 = vcmp.ne.s32.totalorder %v1008, 0
  %vm1439 = vcmp.ne.s32.totalorder %v1015, 0
  %vm1440 = vcmp.ne.s32.totalorder %v1022, 0
  %vm1441 = vcmp.ne.s32.totalorder %v1029, 0
  %vm1442 = vcmp.ne.s32.totalorder %v1036, 0
  %vm1443 = vcmp.ne.s32.totalorder %v1043, 0
  %vm1444 = vcmp.ne.s32.totalorder %v1050, 0
  %vm1445 = vcmp.ne.s32.totalorder %v1057, 0
  %vm1446 = vcmp.ne.s32.totalorder %v1064, 0
  %vm1447 = vcmp.ne.s32.totalorder %v1071, 0
  %vm1448 = vcmp.ne.s32.totalorder %v1078, 0
  %vm1449 = vcmp.ne.s32.totalorder %v1085, 0
  %vm1450 = vcmp.ne.s32.totalorder %v1092, 0
  %vm1451 = vcmp.ne.s32.totalorder %v1099, 0
  %vm1452 = vcmp.ne.s32.totalorder %v1106, 0
  %vm1453 = vcmp.ne.s32.totalorder %v1113, 0
  %vm1454 = vcmp.ne.s32.totalorder %v1120, 0
  %vm1455 = vcmp.ne.s32.totalorder %v1127, 0
  %vm1456 = vcmp.ne.s32.totalorder %v1134, 0
  %vm1457 = vcmp.ne.s32.totalorder %v1141, 0
  %vm1458 = vcmp.ne.s32.totalorder %v1148, 0
  %vm1459 = vcmp.ne.s32.totalorder %v1155, 0
  %vm1460 = vcmp.ne.s32.totalorder %v1162, 0
  %vm1461 = vcmp.ne.s32.totalorder %v1169, 0
  %vm1462 = vcmp.ne.s32.totalorder %v1176, 0
  %vm1463 = vcmp.ne.s32.totalorder %v1183, 0
  %vm1464 = vcmp.ne.s32.totalorder %v1190, 0
  %vm1465 = vcmp.ne.s32.totalorder %v1197, 0
  %vm1466 = vcmp.ne.s32.totalorder %v1204, 0
  %vm1467 = vcmp.ne.s32.totalorder %v1211, 0
  %vm1468 = vcmp.ne.s32.totalorder %v1218, 0
  %vm1469 = vcmp.ne.s32.totalorder %v1225, 0
  %vm1470 = vcmp.ne.s32.totalorder %v1232, 0
  %vm1471 = vcmp.ne.s32.totalorder %v1239, 0
  %vm1472 = vcmp.ne.s32.totalorder %v1246, 0
  %vm1473 = vcmp.ne.s32.totalorder %v1253, 0
  %vm1474 = vcmp.ne.s32.totalorder %v1260, 0
  %vm1475 = vcmp.ne.s32.totalorder %v1267, 0
  %vm1476 = vcmp.ne.s32.totalorder %v1274, 0
  %vm1477 = vcmp.ne.s32.totalorder %v1281, 0
  %vm1478 = vcmp.ne.s32.totalorder %v1288, 0
  %vm1479 = vcmp.ne.s32.totalorder %v1295, 0
  %vm1480 = vcmp.ne.s32.totalorder %v1302, 0
  %vm1481 = vcmp.ne.s32.totalorder %v1309, 0
  %vm1482 = vcmp.ne.s32.totalorder %v1316, 0
  %vm1483 = vcmp.ne.s32.totalorder %v1323, 0
  %vm1484 = vcmp.ne.s32.totalorder %v1330, 0
  %vm1485 = vcmp.ne.s32.totalorder %v1337, 0
  %vm1486 = vcmp.ne.s32.totalorder %v1344, 0
  %vm1487 = vcmp.ne.s32.totalorder %v1351, 0
  %vm1488 = vcmp.ne.s32.totalorder %v1358, 0
  %vm1489 = vcmp.ne.s32.totalorder %v1365, 0
  %vm1490 = vcmp.ne.s32.totalorder %v1372, 0
  %vm1491 = vcmp.ne.s32.totalorder %v1379, 0
  %vm1492 = vcmp.ne.s32.totalorder %v1386, 0
  %vm1493 = vcmp.ne.s32.totalorder %v1393, 0
  %vm1494 = vcmp.ne.s32.totalorder %v1400, 0
  %vm1495 = vcmp.ne.s32.totalorder %v1407, 0
  %vm1496 = vcmp.ne.s32.totalorder %v1414, 0
  %vm1497 = vcmp.ne.s32.totalorder %v1421, 0
  %vm1498 = vcmp.ne.s32.totalorder %v1428, 0
  %vm1499 = vcmp.ne.s32.totalorder %v1435, 0
  %vm1500 = vcmp.lt.s32.totalorder %v994, 0
  %vm1501 = vcmp.lt.s32.totalorder %v1001, 0
  %vm1502 = vcmp.lt.s32.totalorder %v1008, 0
  %vm1503 = vcmp.lt.s32.totalorder %v1015, 0
  %vm1504 = vcmp.lt.s32.totalorder %v1022, 0
  %vm1505 = vcmp.lt.s32.totalorder %v1029, 0
  %vm1506 = vcmp.lt.s32.totalorder %v1036, 0
  %vm1507 = vcmp.lt.s32.totalorder %v1043, 0
  %vm1508 = vcmp.lt.s32.totalorder %v1050, 0
  %vm1509 = vcmp.lt.s32.totalorder %v1057, 0
  %vm1510 = vcmp.lt.s32.totalorder %v1064, 0
  %vm1511 = vcmp.lt.s32.totalorder %v1071, 0
  %vm1512 = vcmp.lt.s32.totalorder %v1078, 0
  %vm1513 = vcmp.lt.s32.totalorder %v1085, 0
  %vm1514 = vcmp.lt.s32.totalorder %v1092, 0
  %vm1515 = vcmp.lt.s32.totalorder %v1099, 0
  %vm1516 = vcmp.lt.s32.totalorder %v1106, 0
  %vm1517 = vcmp.lt.s32.totalorder %v1113, 0
  %vm1518 = vcmp.lt.s32.totalorder %v1120, 0
  %vm1519 = vcmp.lt.s32.totalorder %v1127, 0
  %vm1520 = vcmp.lt.s32.totalorder %v1134, 0
  %vm1521 = vcmp.lt.s32.totalorder %v1141, 0
  %vm1522 = vcmp.lt.s32.totalorder %v1148, 0
  %vm1523 = vcmp.lt.s32.totalorder %v1155, 0
  %vm1524 = vcmp.lt.s32.totalorder %v1162, 0
  %vm1525 = vcmp.lt.s32.totalorder %v1169, 0
  %vm1526 = vcmp.lt.s32.totalorder %v1176, 0
  %vm1527 = vcmp.lt.s32.totalorder %v1183, 0
  %vm1528 = vcmp.lt.s32.totalorder %v1190, 0
  %vm1529 = vcmp.lt.s32.totalorder %v1197, 0
  %vm1530 = vcmp.lt.s32.totalorder %v1204, 0
  %vm1531 = vcmp.lt.s32.totalorder %v1211, 0
  %vm1532 = vcmp.lt.s32.totalorder %v1218, 0
  %vm1533 = vcmp.lt.s32.totalorder %v1225, 0
  %vm1534 = vcmp.lt.s32.totalorder %v1232, 0
  %vm1535 = vcmp.lt.s32.totalorder %v1239, 0
  %vm1536 = vcmp.lt.s32.totalorder %v1246, 0
  %vm1537 = vcmp.lt.s32.totalorder %v1253, 0
  %vm1538 = vcmp.lt.s32.totalorder %v1260, 0
  %vm1539 = vcmp.lt.s32.totalorder %v1267, 0
  %vm1540 = vcmp.lt.s32.totalorder %v1274, 0
  %vm1541 = vcmp.lt.s32.totalorder %v1281, 0
  %vm1542 = vcmp.lt.s32.totalorder %v1288, 0
  %vm1543 = vcmp.lt.s32.totalorder %v1295, 0
  %vm1544 = vcmp.lt.s32.totalorder %v1302, 0
  %vm1545 = vcmp.lt.s32.totalorder %v1309, 0
  %vm1546 = vcmp.lt.s32.totalorder %v1316, 0
  %vm1547 = vcmp.lt.s32.totalorder %v1323, 0
  %vm1548 = vcmp.lt.s32.totalorder %v1330, 0
  %vm1549 = vcmp.lt.s32.totalorder %v1337, 0
  %vm1550 = vcmp.lt.s32.totalorder %v1344, 0
  %vm1551 = vcmp.lt.s32.totalorder %v1351, 0
  %vm1552 = vcmp.lt.s32.totalorder %v1358, 0
  %vm1553 = vcmp.lt.s32.totalorder %v1365, 0
  %vm1554 = vcmp.lt.s32.totalorder %v1372, 0
  %vm1555 = vcmp.lt.s32.totalorder %v1379, 0
  %vm1556 = vcmp.lt.s32.totalorder %v1386, 0
  %vm1557 = vcmp.lt.s32.totalorder %v1393, 0
  %vm1558 = vcmp.lt.s32.totalorder %v1400, 0
  %vm1559 = vcmp.lt.s32.totalorder %v1407, 0
  %vm1560 = vcmp.lt.s32.totalorder %v1414, 0
  %vm1561 = vcmp.lt.s32.totalorder %v1421, 0
  %vm1562 = vcmp.lt.s32.totalorder %v1428, 0
  %vm1563 = vcmp.lt.s32.totalorder %v1435, 0
  %vm1564 = vmand %vm1500, %vm1436
  %vm1565 = vmand %vm1501, %vm1437
  %vm1566 = vmand %vm1502, %vm1438
  %vm1567 = vmand %vm1503, %vm1439
  %vm1568 = vmand %vm1504, %vm1440
  %vm1569 = vmand %vm1505, %vm1441
  %vm1570 = vmand %vm1506, %vm1442
  %vm1571 = vmand %vm1507, %vm1443
  %vm1572 = vmand %vm1508, %vm1444
  %vm1573 = vmand %vm1509, %vm1445
  %vm1574 = vmand %vm1510, %vm1446
  %vm1575 = vmand %vm1511, %vm1447
  %vm1576 = vmand %vm1512, %vm1448
  %vm1577 = vmand %vm1513, %vm1449
  %vm1578 = vmand %vm1514, %vm1450
  %vm1579 = vmand %vm1515, %vm1451
  %vm1580 = vmand %vm1516, %vm1452
  %vm1581 = vmand %vm1517, %vm1453
  %vm1582 = vmand %vm1518, %vm1454
  %vm1583 = vmand %vm1519, %vm1455
  %vm1584 = vmand %vm1520, %vm1456
  %vm1585 = vmand %vm1521, %vm1457
  %vm1586 = vmand %vm1522, %vm1458
  %vm1587 = vmand %vm1523, %vm1459
  %vm1588 = vmand %vm1524, %vm1460
  %vm1589 = vmand %vm1525, %vm1461
  %vm1590 = vmand %vm1526, %vm1462
  %vm1591 = vmand %vm1527, %vm1463
  %vm1592 = vmand %vm1528, %vm1464
  %vm1593 = vmand %vm1529, %vm1465
  %vm1594 = vmand %vm1530, %vm1466
  %vm1595 = vmand %vm1531, %vm1467
  %vm1596 = vmand %vm1532, %vm1468
  %vm1597 = vmand %vm1533, %vm1469
  %vm1598 = vmand %vm1534, %vm1470
  %vm1599 = vmand %vm1535, %vm1471
  %vm1600 = vmand %vm1536, %vm1472
  %vm1601 = vmand %vm1537, %vm1473
  %vm1602 = vmand %vm1538, %vm1474
  %vm1603 = vmand %vm1539, %vm1475
  %vm1604 = vmand %vm1540, %vm1476
  %vm1605 = vmand %vm1541, %vm1477
  %vm1606 = vmand %vm1542, %vm1478
  %vm1607 = vmand %vm1543, %vm1479
  %vm1608 = vmand %vm1544, %vm1480
  %vm1609 = vmand %vm1545, %vm1481
  %vm1610 = vmand %vm1546, %vm1482
  %vm1611 = vmand %vm1547, %vm1483
  %vm1612 = vmand %vm1548, %vm1484
  %vm1613 = vmand %vm1549, %vm1485
  %vm1614 = vmand %vm1550, %vm1486
  %vm1615 = vmand %vm1551, %vm1487
  %vm1616 = vmand %vm1552, %vm1488
  %vm1617 = vmand %vm1553, %vm1489
  %vm1618 = vmand %vm1554, %vm1490
  %vm1619 = vmand %vm1555, %vm1491
  %vm1620 = vmand %vm1556, %vm1492
  %vm1621 = vmand %vm1557, %vm1493
  %vm1622 = vmand %vm1558, %vm1494
  %vm1623 = vmand %vm1559, %vm1495
  %vm1624 = vmand %vm1560, %vm1496
  %vm1625 = vmand %vm1561, %vm1497
  %vm1626 = vmand %vm1562, %vm1498
  %vm1627 = vmand %vm1563, %vm1499
  %v1628 = vadd.s32 %v994, 16
  %v1629 = vadd.s32 %v1001, 16
  %v1630 = vadd.s32 %v1008, 16
  %v1631 = vadd.s32 %v1015, 16
  %v1632 = vadd.s32 %v1022, 16
  %v1633 = vadd.s32 %v1029, 16
  %v1634 = vadd.s32 %v1036, 16
  %v1635 = vadd.s32 %v1043, 16
  %v1636 = vadd.s32 %v1050, 16
  %v1637 = vadd.s32 %v1057, 16
  %v1638 = vadd.s32 %v1064, 16
  %v1639 = vadd.s32 %v1071, 16
  %v1640 = vadd.s32 %v1078, 16
  %v1641 = vadd.s32 %v1085, 16
  %v1642 = vadd.s32 %v1092, 16
  %v1643 = vadd.s32 %v1099, 16
  %v1644 = vadd.s32 %v1106, 16
  %v1645 = vadd.s32 %v1113, 16
  %v1646 = vadd.s32 %v1120, 16
  %v1647 = vadd.s32 %v1127, 16
  %v1648 = vadd.s32 %v1134, 16
  %v1649 = vadd.s32 %v1141, 16
  %v1650 = vadd.s32 %v1148, 16
  %v1651 = vadd.s32 %v1155, 16
  %v1652 = vadd.s32 %v1162, 16
  %v1653 = vadd.s32 %v1169, 16
  %v1654 = vadd.s32 %v1176, 16
  %v1655 = vadd.s32 %v1183, 16
  %v1656 = vadd.s32 %v1190, 16
  %v1657 = vadd.s32 %v1197, 16
  %v1658 = vadd.s32 %v1204, 16
  %v1659 = vadd.s32 %v1211, 16
  %v1660 = vadd.s32 %v1218, 16
  %v1661 = vadd.s32 %v1225, 16
  %v1662 = vadd.s32 %v1232, 16
  %v1663 = vadd.s32 %v1239, 16
  %v1664 = vadd.s32 %v1246, 16
  %v1665 = vadd.s32 %v1253, 16
  %v1666 = vadd.s32 %v1260, 16
  %v1667 = vadd.s32 %v1267, 16
  %v1668 = vadd.s32 %v1274, 16
  %v1669 = vadd.s32 %v1281, 16
  %v1670 = vadd.s32 %v1288, 16
  %v1671 = vadd.s32 %v1295, 16
  %v1672 = vadd.s32 %v1302, 16
  %v1673 = vadd.s32 %v1309, 16
  %v1674 = vadd.s32 %v1316, 16
  %v1675 = vadd.s32 %v1323, 16
  %v1676 = vadd.s32 %v1330, 16
  %v1677 = vadd.s32 %v1337, 16
  %v1678 = vadd.s32 %v1344, 16
  %v1679 = vadd.s32 %v1351, 16
  %v1680 = vadd.s32 %v1358, 16
  %v1681 = vadd.s32 %v1365, 16
  %v1682 = vadd.s32 %v1372, 16
  %v1683 = vadd.s32 %v1379, 16
  %v1684 = vadd.s32 %v1386, 16
  %v1685 = vadd.s32 %v1393, 16
  %v1686 = vadd.s32 %v1400, 16
  %v1687 = vadd.s32 %v1407, 16
  %v1688 = vadd.s32 %v1414, 16
  %v1689 = vadd.s32 %v1421, 16
  %v1690 = vadd.s32 %v1428, 16
  %v1691 = vadd.s32 %v1435, 16
  %v1692 = vsel %vm1564, %v1628, %v994
  %v1693 = vsel %vm1565, %v1629, %v1001
  %v1694 = vsel %vm1566, %v1630, %v1008
  %v1695 = vsel %vm1567, %v1631, %v1015
  %v1696 = vsel %vm1568, %v1632, %v1022
  %v1697 = vsel %vm1569, %v1633, %v1029
  %v1698 = vsel %vm1570, %v1634, %v1036
  %v1699 = vsel %vm1571, %v1635, %v1043
  %v1700 = vsel %vm1572, %v1636, %v1050
  %v1701 = vsel %vm1573, %v1637, %v1057
  %v1702 = vsel %vm1574, %v1638, %v1064
  %v1703 = vsel %vm1575, %v1639, %v1071
  %v1704 = vsel %vm1576, %v1640, %v1078
  %v1705 = vsel %vm1577, %v1641, %v1085
  %v1706 = vsel %vm1578, %v1642, %v1092
  %v1707 = vsel %vm1579, %v1643, %v1099
  %v1708 = vsel %vm1580, %v1644, %v1106
  %v1709 = vsel %vm1581, %v1645, %v1113
  %v1710 = vsel %vm1582, %v1646, %v1120
  %v1711 = vsel %vm1583, %v1647, %v1127
  %v1712 = vsel %vm1584, %v1648, %v1134
  %v1713 = vsel %vm1585, %v1649, %v1141
  %v1714 = vsel %vm1586, %v1650, %v1148
  %v1715 = vsel %vm1587, %v1651, %v1155
  %v1716 = vsel %vm1588, %v1652, %v1162
  %v1717 = vsel %vm1589, %v1653, %v1169
  %v1718 = vsel %vm1590, %v1654, %v1176
  %v1719 = vsel %vm1591, %v1655, %v1183
  %v1720 = vsel %vm1592, %v1656, %v1190
  %v1721 = vsel %vm1593, %v1657, %v1197
  %v1722 = vsel %vm1594, %v1658, %v1204
  %v1723 = vsel %vm1595, %v1659, %v1211
  %v1724 = vsel %vm1596, %v1660, %v1218
  %v1725 = vsel %vm1597, %v1661, %v1225
  %v1726 = vsel %vm1598, %v1662, %v1232
  %v1727 = vsel %vm1599, %v1663, %v1239
  %v1728 = vsel %vm1600, %v1664, %v1246
  %v1729 = vsel %vm1601, %v1665, %v1253
  %v1730 = vsel %vm1602, %v1666, %v1260
  %v1731 = vsel %vm1603, %v1667, %v1267
  %v1732 = vsel %vm1604, %v1668, %v1274
  %v1733 = vsel %vm1605, %v1669, %v1281
  %v1734 = vsel %vm1606, %v1670, %v1288
  %v1735 = vsel %vm1607, %v1671, %v1295
  %v1736 = vsel %vm1608, %v1672, %v1302
  %v1737 = vsel %vm1609, %v1673, %v1309
  %v1738 = vsel %vm1610, %v1674, %v1316
  %v1739 = vsel %vm1611, %v1675, %v1323
  %v1740 = vsel %vm1612, %v1676, %v1330
  %v1741 = vsel %vm1613, %v1677, %v1337
  %v1742 = vsel %vm1614, %v1678, %v1344
  %v1743 = vsel %vm1615, %v1679, %v1351
  %v1744 = vsel %vm1616, %v1680, %v1358
  %v1745 = vsel %vm1617, %v1681, %v1365
  %v1746 = vsel %vm1618, %v1682, %v1372
  %v1747 = vsel %vm1619, %v1683, %v1379
  %v1748 = vsel %vm1620, %v1684, %v1386
  %v1749 = vsel %vm1621, %v1685, %v1393
  %v1750 = vsel %vm1622, %v1686, %v1400
  %v1751 = vsel %vm1623, %v1687, %v1407
  %v1752 = vsel %vm1624, %v1688, %v1414
  %v1753 = vsel %vm1625, %v1689, %v1421
  %v1754 = vsel %vm1626, %v1690, %v1428
  %v1755 = vsel %vm1627, %v1691, %v1435
  %vm1756 = vcmp.ge.s32.totalorder %v924, 16
  %vm1757 = vcmp.ge.s32.totalorder %v925, 16
  %vm1758 = vcmp.ge.s32.totalorder %v926, 16
  %vm1759 = vcmp.ge.s32.totalorder %v927, 16
  %vm1760 = vcmp.ge.s32.totalorder %v928, 16
  %vm1761 = vcmp.ge.s32.totalorder %v929, 16
  %vm1762 = vcmp.ge.s32.totalorder %v930, 16
  %vm1763 = vcmp.ge.s32.totalorder %v931, 16
  %vm1764 = vcmp.ge.s32.totalorder %v932, 16
  %vm1765 = vcmp.ge.s32.totalorder %v933, 16
  %vm1766 = vcmp.ge.s32.totalorder %v934, 16
  %vm1767 = vcmp.ge.s32.totalorder %v935, 16
  %vm1768 = vcmp.ge.s32.totalorder %v936, 16
  %vm1769 = vcmp.ge.s32.totalorder %v937, 16
  %vm1770 = vcmp.ge.s32.totalorder %v938, 16
  %vm1771 = vcmp.ge.s32.totalorder %v939, 16
  %vm1772 = vcmp.ge.s32.totalorder %v940, 16
  %vm1773 = vcmp.ge.s32.totalorder %v941, 16
  %vm1774 = vcmp.ge.s32.totalorder %v942, 16
  %vm1775 = vcmp.ge.s32.totalorder %v943, 16
  %vm1776 = vcmp.ge.s32.totalorder %v944, 16
  %vm1777 = vcmp.ge.s32.totalorder %v945, 16
  %vm1778 = vcmp.ge.s32.totalorder %v946, 16
  %vm1779 = vcmp.ge.s32.totalorder %v947, 16
  %vm1780 = vcmp.ge.s32.totalorder %v948, 16
  %vm1781 = vcmp.ge.s32.totalorder %v949, 16
  %vm1782 = vcmp.ge.s32.totalorder %v950, 16
  %vm1783 = vcmp.ge.s32.totalorder %v951, 16
  %vm1784 = vcmp.ge.s32.totalorder %v952, 16
  %vm1785 = vcmp.ge.s32.totalorder %v953, 16
  %vm1786 = vcmp.ge.s32.totalorder %v954, 16
  %vm1787 = vcmp.ge.s32.totalorder %v955, 16
  %vm1788 = vcmp.ge.s32.totalorder %v956, 16
  %vm1789 = vcmp.ge.s32.totalorder %v957, 16
  %vm1790 = vcmp.ge.s32.totalorder %v958, 16
  %vm1791 = vcmp.ge.s32.totalorder %v959, 16
  %vm1792 = vcmp.ge.s32.totalorder %v960, 16
  %vm1793 = vcmp.ge.s32.totalorder %v961, 16
  %vm1794 = vcmp.ge.s32.totalorder %v962, 16
  %vm1795 = vcmp.ge.s32.totalorder %v963, 16
  %vm1796 = vcmp.ge.s32.totalorder %v964, 16
  %vm1797 = vcmp.ge.s32.totalorder %v965, 16
  %vm1798 = vcmp.ge.s32.totalorder %v966, 16
  %vm1799 = vcmp.ge.s32.totalorder %v967, 16
  %vm1800 = vcmp.ge.s32.totalorder %v968, 16
  %vm1801 = vcmp.ge.s32.totalorder %v969, 16
  %vm1802 = vcmp.ge.s32.totalorder %v970, 16
  %vm1803 = vcmp.ge.s32.totalorder %v971, 16
  %vm1804 = vcmp.ge.s32.totalorder %v972, 16
  %vm1805 = vcmp.ge.s32.totalorder %v973, 16
  %vm1806 = vcmp.ge.s32.totalorder %v974, 16
  %vm1807 = vcmp.ge.s32.totalorder %v975, 16
  %vm1808 = vcmp.ge.s32.totalorder %v976, 16
  %vm1809 = vcmp.ge.s32.totalorder %v977, 16
  %vm1810 = vcmp.ge.s32.totalorder %v978, 16
  %vm1811 = vcmp.ge.s32.totalorder %v979, 16
  %vm1812 = vcmp.ge.s32.totalorder %v980, 16
  %vm1813 = vcmp.ge.s32.totalorder %v981, 16
  %vm1814 = vcmp.ge.s32.totalorder %v982, 16
  %vm1815 = vcmp.ge.s32.totalorder %v983, 16
  %vm1816 = vcmp.ge.s32.totalorder %v984, 16
  %vm1817 = vcmp.ge.s32.totalorder %v985, 16
  %vm1818 = vcmp.ge.s32.totalorder %v986, 16
  %vm1819 = vcmp.ge.s32.totalorder %v987, 16
  %vm1820 = vcmp.lt.s32.totalorder %v924, 240
  %vm1821 = vcmp.lt.s32.totalorder %v925, 240
  %vm1822 = vcmp.lt.s32.totalorder %v926, 240
  %vm1823 = vcmp.lt.s32.totalorder %v927, 240
  %vm1824 = vcmp.lt.s32.totalorder %v928, 240
  %vm1825 = vcmp.lt.s32.totalorder %v929, 240
  %vm1826 = vcmp.lt.s32.totalorder %v930, 240
  %vm1827 = vcmp.lt.s32.totalorder %v931, 240
  %vm1828 = vcmp.lt.s32.totalorder %v932, 240
  %vm1829 = vcmp.lt.s32.totalorder %v933, 240
  %vm1830 = vcmp.lt.s32.totalorder %v934, 240
  %vm1831 = vcmp.lt.s32.totalorder %v935, 240
  %vm1832 = vcmp.lt.s32.totalorder %v936, 240
  %vm1833 = vcmp.lt.s32.totalorder %v937, 240
  %vm1834 = vcmp.lt.s32.totalorder %v938, 240
  %vm1835 = vcmp.lt.s32.totalorder %v939, 240
  %vm1836 = vcmp.lt.s32.totalorder %v940, 240
  %vm1837 = vcmp.lt.s32.totalorder %v941, 240
  %vm1838 = vcmp.lt.s32.totalorder %v942, 240
  %vm1839 = vcmp.lt.s32.totalorder %v943, 240
  %vm1840 = vcmp.lt.s32.totalorder %v944, 240
  %vm1841 = vcmp.lt.s32.totalorder %v945, 240
  %vm1842 = vcmp.lt.s32.totalorder %v946, 240
  %vm1843 = vcmp.lt.s32.totalorder %v947, 240
  %vm1844 = vcmp.lt.s32.totalorder %v948, 240
  %vm1845 = vcmp.lt.s32.totalorder %v949, 240
  %vm1846 = vcmp.lt.s32.totalorder %v950, 240
  %vm1847 = vcmp.lt.s32.totalorder %v951, 240
  %vm1848 = vcmp.lt.s32.totalorder %v952, 240
  %vm1849 = vcmp.lt.s32.totalorder %v953, 240
  %vm1850 = vcmp.lt.s32.totalorder %v954, 240
  %vm1851 = vcmp.lt.s32.totalorder %v955, 240
  %vm1852 = vcmp.lt.s32.totalorder %v956, 240
  %vm1853 = vcmp.lt.s32.totalorder %v957, 240
  %vm1854 = vcmp.lt.s32.totalorder %v958, 240
  %vm1855 = vcmp.lt.s32.totalorder %v959, 240
  %vm1856 = vcmp.lt.s32.totalorder %v960, 240
  %vm1857 = vcmp.lt.s32.totalorder %v961, 240
  %vm1858 = vcmp.lt.s32.totalorder %v962, 240
  %vm1859 = vcmp.lt.s32.totalorder %v963, 240
  %vm1860 = vcmp.lt.s32.totalorder %v964, 240
  %vm1861 = vcmp.lt.s32.totalorder %v965, 240
  %vm1862 = vcmp.lt.s32.totalorder %v966, 240
  %vm1863 = vcmp.lt.s32.totalorder %v967, 240
  %vm1864 = vcmp.lt.s32.totalorder %v968, 240
  %vm1865 = vcmp.lt.s32.totalorder %v969, 240
  %vm1866 = vcmp.lt.s32.totalorder %v970, 240
  %vm1867 = vcmp.lt.s32.totalorder %v971, 240
  %vm1868 = vcmp.lt.s32.totalorder %v972, 240
  %vm1869 = vcmp.lt.s32.totalorder %v973, 240
  %vm1870 = vcmp.lt.s32.totalorder %v974, 240
  %vm1871 = vcmp.lt.s32.totalorder %v975, 240
  %vm1872 = vcmp.lt.s32.totalorder %v976, 240
  %vm1873 = vcmp.lt.s32.totalorder %v977, 240
  %vm1874 = vcmp.lt.s32.totalorder %v978, 240
  %vm1875 = vcmp.lt.s32.totalorder %v979, 240
  %vm1876 = vcmp.lt.s32.totalorder %v980, 240
  %vm1877 = vcmp.lt.s32.totalorder %v981, 240
  %vm1878 = vcmp.lt.s32.totalorder %v982, 240
  %vm1879 = vcmp.lt.s32.totalorder %v983, 240
  %vm1880 = vcmp.lt.s32.totalorder %v984, 240
  %vm1881 = vcmp.lt.s32.totalorder %v985, 240
  %vm1882 = vcmp.lt.s32.totalorder %v986, 240
  %vm1883 = vcmp.lt.s32.totalorder %v987, 240
  %vm1884 = vcmp.ge.s32.totalorder %v1692, 1
  %vm1885 = vcmp.ge.s32.totalorder %v1693, 1
  %vm1886 = vcmp.ge.s32.totalorder %v1694, 1
  %vm1887 = vcmp.ge.s32.totalorder %v1695, 1
  %vm1888 = vcmp.ge.s32.totalorder %v1696, 1
  %vm1889 = vcmp.ge.s32.totalorder %v1697, 1
  %vm1890 = vcmp.ge.s32.totalorder %v1698, 1
  %vm1891 = vcmp.ge.s32.totalorder %v1699, 1
  %vm1892 = vcmp.ge.s32.totalorder %v1700, 1
  %vm1893 = vcmp.ge.s32.totalorder %v1701, 1
  %vm1894 = vcmp.ge.s32.totalorder %v1702, 1
  %vm1895 = vcmp.ge.s32.totalorder %v1703, 1
  %vm1896 = vcmp.ge.s32.totalorder %v1704, 1
  %vm1897 = vcmp.ge.s32.totalorder %v1705, 1
  %vm1898 = vcmp.ge.s32.totalorder %v1706, 1
  %vm1899 = vcmp.ge.s32.totalorder %v1707, 1
  %vm1900 = vcmp.ge.s32.totalorder %v1708, 1
  %vm1901 = vcmp.ge.s32.totalorder %v1709, 1
  %vm1902 = vcmp.ge.s32.totalorder %v1710, 1
  %vm1903 = vcmp.ge.s32.totalorder %v1711, 1
  %vm1904 = vcmp.ge.s32.totalorder %v1712, 1
  %vm1905 = vcmp.ge.s32.totalorder %v1713, 1
  %vm1906 = vcmp.ge.s32.totalorder %v1714, 1
  %vm1907 = vcmp.ge.s32.totalorder %v1715, 1
  %vm1908 = vcmp.ge.s32.totalorder %v1716, 1
  %vm1909 = vcmp.ge.s32.totalorder %v1717, 1
  %vm1910 = vcmp.ge.s32.totalorder %v1718, 1
  %vm1911 = vcmp.ge.s32.totalorder %v1719, 1
  %vm1912 = vcmp.ge.s32.totalorder %v1720, 1
  %vm1913 = vcmp.ge.s32.totalorder %v1721, 1
  %vm1914 = vcmp.ge.s32.totalorder %v1722, 1
  %vm1915 = vcmp.ge.s32.totalorder %v1723, 1
  %vm1916 = vcmp.ge.s32.totalorder %v1724, 1
  %vm1917 = vcmp.ge.s32.totalorder %v1725, 1
  %vm1918 = vcmp.ge.s32.totalorder %v1726, 1
  %vm1919 = vcmp.ge.s32.totalorder %v1727, 1
  %vm1920 = vcmp.ge.s32.totalorder %v1728, 1
  %vm1921 = vcmp.ge.s32.totalorder %v1729, 1
  %vm1922 = vcmp.ge.s32.totalorder %v1730, 1
  %vm1923 = vcmp.ge.s32.totalorder %v1731, 1
  %vm1924 = vcmp.ge.s32.totalorder %v1732, 1
  %vm1925 = vcmp.ge.s32.totalorder %v1733, 1
  %vm1926 = vcmp.ge.s32.totalorder %v1734, 1
  %vm1927 = vcmp.ge.s32.totalorder %v1735, 1
  %vm1928 = vcmp.ge.s32.totalorder %v1736, 1
  %vm1929 = vcmp.ge.s32.totalorder %v1737, 1
  %vm1930 = vcmp.ge.s32.totalorder %v1738, 1
  %vm1931 = vcmp.ge.s32.totalorder %v1739, 1
  %vm1932 = vcmp.ge.s32.totalorder %v1740, 1
  %vm1933 = vcmp.ge.s32.totalorder %v1741, 1
  %vm1934 = vcmp.ge.s32.totalorder %v1742, 1
  %vm1935 = vcmp.ge.s32.totalorder %v1743, 1
  %vm1936 = vcmp.ge.s32.totalorder %v1744, 1
  %vm1937 = vcmp.ge.s32.totalorder %v1745, 1
  %vm1938 = vcmp.ge.s32.totalorder %v1746, 1
  %vm1939 = vcmp.ge.s32.totalorder %v1747, 1
  %vm1940 = vcmp.ge.s32.totalorder %v1748, 1
  %vm1941 = vcmp.ge.s32.totalorder %v1749, 1
  %vm1942 = vcmp.ge.s32.totalorder %v1750, 1
  %vm1943 = vcmp.ge.s32.totalorder %v1751, 1
  %vm1944 = vcmp.ge.s32.totalorder %v1752, 1
  %vm1945 = vcmp.ge.s32.totalorder %v1753, 1
  %vm1946 = vcmp.ge.s32.totalorder %v1754, 1
  %vm1947 = vcmp.ge.s32.totalorder %v1755, 1
  %vm1948 = vcmp.lt.s32.totalorder %v1692, 15
  %vm1949 = vcmp.lt.s32.totalorder %v1693, 15
  %vm1950 = vcmp.lt.s32.totalorder %v1694, 15
  %vm1951 = vcmp.lt.s32.totalorder %v1695, 15
  %vm1952 = vcmp.lt.s32.totalorder %v1696, 15
  %vm1953 = vcmp.lt.s32.totalorder %v1697, 15
  %vm1954 = vcmp.lt.s32.totalorder %v1698, 15
  %vm1955 = vcmp.lt.s32.totalorder %v1699, 15
  %vm1956 = vcmp.lt.s32.totalorder %v1700, 15
  %vm1957 = vcmp.lt.s32.totalorder %v1701, 15
  %vm1958 = vcmp.lt.s32.totalorder %v1702, 15
  %vm1959 = vcmp.lt.s32.totalorder %v1703, 15
  %vm1960 = vcmp.lt.s32.totalorder %v1704, 15
  %vm1961 = vcmp.lt.s32.totalorder %v1705, 15
  %vm1962 = vcmp.lt.s32.totalorder %v1706, 15
  %vm1963 = vcmp.lt.s32.totalorder %v1707, 15
  %vm1964 = vcmp.lt.s32.totalorder %v1708, 15
  %vm1965 = vcmp.lt.s32.totalorder %v1709, 15
  %vm1966 = vcmp.lt.s32.totalorder %v1710, 15
  %vm1967 = vcmp.lt.s32.totalorder %v1711, 15
  %vm1968 = vcmp.lt.s32.totalorder %v1712, 15
  %vm1969 = vcmp.lt.s32.totalorder %v1713, 15
  %vm1970 = vcmp.lt.s32.totalorder %v1714, 15
  %vm1971 = vcmp.lt.s32.totalorder %v1715, 15
  %vm1972 = vcmp.lt.s32.totalorder %v1716, 15
  %vm1973 = vcmp.lt.s32.totalorder %v1717, 15
  %vm1974 = vcmp.lt.s32.totalorder %v1718, 15
  %vm1975 = vcmp.lt.s32.totalorder %v1719, 15
  %vm1976 = vcmp.lt.s32.totalorder %v1720, 15
  %vm1977 = vcmp.lt.s32.totalorder %v1721, 15
  %vm1978 = vcmp.lt.s32.totalorder %v1722, 15
  %vm1979 = vcmp.lt.s32.totalorder %v1723, 15
  %vm1980 = vcmp.lt.s32.totalorder %v1724, 15
  %vm1981 = vcmp.lt.s32.totalorder %v1725, 15
  %vm1982 = vcmp.lt.s32.totalorder %v1726, 15
  %vm1983 = vcmp.lt.s32.totalorder %v1727, 15
  %vm1984 = vcmp.lt.s32.totalorder %v1728, 15
  %vm1985 = vcmp.lt.s32.totalorder %v1729, 15
  %vm1986 = vcmp.lt.s32.totalorder %v1730, 15
  %vm1987 = vcmp.lt.s32.totalorder %v1731, 15
  %vm1988 = vcmp.lt.s32.totalorder %v1732, 15
  %vm1989 = vcmp.lt.s32.totalorder %v1733, 15
  %vm1990 = vcmp.lt.s32.totalorder %v1734, 15
  %vm1991 = vcmp.lt.s32.totalorder %v1735, 15
  %vm1992 = vcmp.lt.s32.totalorder %v1736, 15
  %vm1993 = vcmp.lt.s32.totalorder %v1737, 15
  %vm1994 = vcmp.lt.s32.totalorder %v1738, 15
  %vm1995 = vcmp.lt.s32.totalorder %v1739, 15
  %vm1996 = vcmp.lt.s32.totalorder %v1740, 15
  %vm1997 = vcmp.lt.s32.totalorder %v1741, 15
  %vm1998 = vcmp.lt.s32.totalorder %v1742, 15
  %vm1999 = vcmp.lt.s32.totalorder %v1743, 15
  %vm2000 = vcmp.lt.s32.totalorder %v1744, 15
  %vm2001 = vcmp.lt.s32.totalorder %v1745, 15
  %vm2002 = vcmp.lt.s32.totalorder %v1746, 15
  %vm2003 = vcmp.lt.s32.totalorder %v1747, 15
  %vm2004 = vcmp.lt.s32.totalorder %v1748, 15
  %vm2005 = vcmp.lt.s32.totalorder %v1749, 15
  %vm2006 = vcmp.lt.s32.totalorder %v1750, 15
  %vm2007 = vcmp.lt.s32.totalorder %v1751, 15
  %vm2008 = vcmp.lt.s32.totalorder %v1752, 15
  %vm2009 = vcmp.lt.s32.totalorder %v1753, 15
  %vm2010 = vcmp.lt.s32.totalorder %v1754, 15
  %vm2011 = vcmp.lt.s32.totalorder %v1755, 15
  %v2012 = vrot.slane %v91, 7
  %v2013 = vrot.slane %v92, 7
  %v2014 = vrot.slane %v93, 7
  %v2015 = vrot.slane %v94, 7
  %v2016 = vrot.slane %v95, 7
  %v2017 = vrot.slane %v96, 7
  %v2018 = vrot.slane %v97, 7
  %v2019 = vrot.slane %v98, 7
  %v2020 = vrot.slane %v99, 7
  %v2021 = vrot.slane %v100, 7
  %v2022 = vrot.slane %v101, 7
  %v2023 = vrot.slane %v102, 7
  %v2024 = vrot.slane %v103, 7
  %v2025 = vrot.slane %v104, 7
  %v2026 = vrot.slane %v105, 7
  %v2027 = vrot.slane %v106, 7
  %v2028 = vrot.slane %v107, 7
  %v2029 = vrot.slane %v108, 7
  %v2030 = vrot.slane %v109, 7
  %v2031 = vrot.slane %v110, 7
  %v2032 = vrot.slane %v111, 7
  %v2033 = vrot.slane %v112, 7
  %v2034 = vrot.slane %v113, 7
  %v2035 = vrot.slane %v114, 7
  %v2036 = vrot.slane %v115, 7
  %v2037 = vrot.slane %v116, 7
  %v2038 = vrot.slane %v117, 7
  %v2039 = vrot.slane %v118, 7
  %v2040 = vrot.slane %v119, 7
  %v2041 = vrot.slane %v120, 7
  %v2042 = vrot.slane %v121, 7
  %v2043 = vrot.slane %v122, 7
  %v2044 = vrot.slane %v123, 7
  %v2045 = vrot.slane %v124, 7
  %v2046 = vrot.slane %v125, 7
  %v2047 = vrot.slane %v126, 7
  %v2048 = vrot.slane %v127, 7
  %v2049 = vrot.slane %v128, 7
  %v2050 = vrot.slane %v129, 7
  %v2051 = vrot.slane %v130, 7
  %v2052 = vrot.slane %v131, 7
  %v2053 = vrot.slane %v132, 7
  %v2054 = vrot.slane %v133, 7
  %v2055 = vrot.slane %v134, 7
  %v2056 = vrot.slane %v135, 7
  %v2057 = vrot.slane %v136, 7
  %v2058 = vrot.slane %v137, 7
  %v2059 = vrot.slane %v138, 7
  %v2060 = vrot.slane %v139, 7
  %v2061 = vrot.slane %v140, 7
  %v2062 = vrot.slane %v141, 7
  %v2063 = vrot.slane %v142, 7
  %v2064 = vrot.slane %v143, 7
  %v2065 = vrot.slane %v144, 7
  %v2066 = vrot.slane %v145, 7
  %v2067 = vrot.slane %v146, 7
  %v2068 = vrot.slane %v147, 7
  %v2069 = vrot.slane %v148, 7
  %v2070 = vrot.slane %v149, 7
  %v2071 = vrot.slane %v150, 7
  %v2072 = vrot.slane %v151, 7
  %v2073 = vrot.slane %v152, 7
  %v2074 = vrot.slane %v153, 7
  %v2075 = vrot.slane %v154, 7
  %vm2076 = vcmp.lt.s32.totalorder %v156, 1
  %v2077 = vsel %vm2076, %v2074, %v2075
  %v2078 = vsel %vm2076, %v2073, %v2074
  %v2079 = vsel %vm2076, %v2072, %v2073
  %v2080 = vsel %vm2076, %v2071, %v2072
  %v2081 = vsel %vm2076, %v2070, %v2071
  %v2082 = vsel %vm2076, %v2069, %v2070
  %v2083 = vsel %vm2076, %v2068, %v2069
  %v2084 = vsel %vm2076, %v2067, %v2068
  %v2085 = vsel %vm2076, %v2066, %v2067
  %v2086 = vsel %vm2076, %v2065, %v2066
  %v2087 = vsel %vm2076, %v2064, %v2065
  %v2088 = vsel %vm2076, %v2063, %v2064
  %v2089 = vsel %vm2076, %v2062, %v2063
  %v2090 = vsel %vm2076, %v2061, %v2062
  %v2091 = vsel %vm2076, %v2060, %v2061
  %v2092 = vsel %vm2076, %v2059, %v2060
  %v2093 = vsel %vm2076, %v2058, %v2059
  %v2094 = vsel %vm2076, %v2057, %v2058
  %v2095 = vsel %vm2076, %v2056, %v2057
  %v2096 = vsel %vm2076, %v2055, %v2056
  %v2097 = vsel %vm2076, %v2054, %v2055
  %v2098 = vsel %vm2076, %v2053, %v2054
  %v2099 = vsel %vm2076, %v2052, %v2053
  %v2100 = vsel %vm2076, %v2051, %v2052
  %v2101 = vsel %vm2076, %v2050, %v2051
  %v2102 = vsel %vm2076, %v2049, %v2050
  %v2103 = vsel %vm2076, %v2048, %v2049
  %v2104 = vsel %vm2076, %v2047, %v2048
  %v2105 = vsel %vm2076, %v2046, %v2047
  %v2106 = vsel %vm2076, %v2045, %v2046
  %v2107 = vsel %vm2076, %v2044, %v2045
  %v2108 = vsel %vm2076, %v2043, %v2044
  %v2109 = vsel %vm2076, %v2042, %v2043
  %v2110 = vsel %vm2076, %v2041, %v2042
  %v2111 = vsel %vm2076, %v2040, %v2041
  %v2112 = vsel %vm2076, %v2039, %v2040
  %v2113 = vsel %vm2076, %v2038, %v2039
  %v2114 = vsel %vm2076, %v2037, %v2038
  %v2115 = vsel %vm2076, %v2036, %v2037
  %v2116 = vsel %vm2076, %v2035, %v2036
  %v2117 = vsel %vm2076, %v2034, %v2035
  %v2118 = vsel %vm2076, %v2033, %v2034
  %v2119 = vsel %vm2076, %v2032, %v2033
  %v2120 = vsel %vm2076, %v2031, %v2032
  %v2121 = vsel %vm2076, %v2030, %v2031
  %v2122 = vsel %vm2076, %v2029, %v2030
  %v2123 = vsel %vm2076, %v2028, %v2029
  %v2124 = vsel %vm2076, %v2027, %v2028
  %v2125 = vsel %vm2076, %v2026, %v2027
  %v2126 = vsel %vm2076, %v2025, %v2026
  %v2127 = vsel %vm2076, %v2024, %v2025
  %v2128 = vsel %vm2076, %v2023, %v2024
  %v2129 = vsel %vm2076, %v2022, %v2023
  %v2130 = vsel %vm2076, %v2021, %v2022
  %v2131 = vsel %vm2076, %v2020, %v2021
  %v2132 = vsel %vm2076, %v2019, %v2020
  %v2133 = vsel %vm2076, %v2018, %v2019
  %v2134 = vsel %vm2076, %v2017, %v2018
  %v2135 = vsel %vm2076, %v2016, %v2017
  %v2136 = vsel %vm2076, %v2015, %v2016
  %v2137 = vsel %vm2076, %v2014, %v2015
  %v2138 = vsel %vm2076, %v2013, %v2014
  %v2139 = vsel %vm2076, %v2012, %v2013
  %v2140 = vsel %vm2076, %v2075, %v2012
  %vm2141 = vmand %vm1756, %vm1884
  %vm2142 = vmand %vm1757, %vm1885
  %vm2143 = vmand %vm1758, %vm1886
  %vm2144 = vmand %vm1759, %vm1887
  %vm2145 = vmand %vm1760, %vm1888
  %vm2146 = vmand %vm1761, %vm1889
  %vm2147 = vmand %vm1762, %vm1890
  %vm2148 = vmand %vm1763, %vm1891
  %vm2149 = vmand %vm1764, %vm1892
  %vm2150 = vmand %vm1765, %vm1893
  %vm2151 = vmand %vm1766, %vm1894
  %vm2152 = vmand %vm1767, %vm1895
  %vm2153 = vmand %vm1768, %vm1896
  %vm2154 = vmand %vm1769, %vm1897
  %vm2155 = vmand %vm1770, %vm1898
  %vm2156 = vmand %vm1771, %vm1899
  %vm2157 = vmand %vm1772, %vm1900
  %vm2158 = vmand %vm1773, %vm1901
  %vm2159 = vmand %vm1774, %vm1902
  %vm2160 = vmand %vm1775, %vm1903
  %vm2161 = vmand %vm1776, %vm1904
  %vm2162 = vmand %vm1777, %vm1905
  %vm2163 = vmand %vm1778, %vm1906
  %vm2164 = vmand %vm1779, %vm1907
  %vm2165 = vmand %vm1780, %vm1908
  %vm2166 = vmand %vm1781, %vm1909
  %vm2167 = vmand %vm1782, %vm1910
  %vm2168 = vmand %vm1783, %vm1911
  %vm2169 = vmand %vm1784, %vm1912
  %vm2170 = vmand %vm1785, %vm1913
  %vm2171 = vmand %vm1786, %vm1914
  %vm2172 = vmand %vm1787, %vm1915
  %vm2173 = vmand %vm1788, %vm1916
  %vm2174 = vmand %vm1789, %vm1917
  %vm2175 = vmand %vm1790, %vm1918
  %vm2176 = vmand %vm1791, %vm1919
  %vm2177 = vmand %vm1792, %vm1920
  %vm2178 = vmand %vm1793, %vm1921
  %vm2179 = vmand %vm1794, %vm1922
  %vm2180 = vmand %vm1795, %vm1923
  %vm2181 = vmand %vm1796, %vm1924
  %vm2182 = vmand %vm1797, %vm1925
  %vm2183 = vmand %vm1798, %vm1926
  %vm2184 = vmand %vm1799, %vm1927
  %vm2185 = vmand %vm1800, %vm1928
  %vm2186 = vmand %vm1801, %vm1929
  %vm2187 = vmand %vm1802, %vm1930
  %vm2188 = vmand %vm1803, %vm1931
  %vm2189 = vmand %vm1804, %vm1932
  %vm2190 = vmand %vm1805, %vm1933
  %vm2191 = vmand %vm1806, %vm1934
  %vm2192 = vmand %vm1807, %vm1935
  %vm2193 = vmand %vm1808, %vm1936
  %vm2194 = vmand %vm1809, %vm1937
  %vm2195 = vmand %vm1810, %vm1938
  %vm2196 = vmand %vm1811, %vm1939
  %vm2197 = vmand %vm1812, %vm1940
  %vm2198 = vmand %vm1813, %vm1941
  %vm2199 = vmand %vm1814, %vm1942
  %vm2200 = vmand %vm1815, %vm1943
  %vm2201 = vmand %vm1816, %vm1944
  %vm2202 = vmand %vm1817, %vm1945
  %vm2203 = vmand %vm1818, %vm1946
  %vm2204 = vmand %vm1819, %vm1947
  %v2205 = vsel %vm2141, 1, 0
  %v2206 = vsel %vm2142, 1, 0
  %v2207 = vsel %vm2143, 1, 0
  %v2208 = vsel %vm2144, 1, 0
  %v2209 = vsel %vm2145, 1, 0
  %v2210 = vsel %vm2146, 1, 0
  %v2211 = vsel %vm2147, 1, 0
  %v2212 = vsel %vm2148, 1, 0
  %v2213 = vsel %vm2149, 1, 0
  %v2214 = vsel %vm2150, 1, 0
  %v2215 = vsel %vm2151, 1, 0
  %v2216 = vsel %vm2152, 1, 0
  %v2217 = vsel %vm2153, 1, 0
  %v2218 = vsel %vm2154, 1, 0
  %v2219 = vsel %vm2155, 1, 0
  %v2220 = vsel %vm2156, 1, 0
  %v2221 = vsel %vm2157, 1, 0
  %v2222 = vsel %vm2158, 1, 0
  %v2223 = vsel %vm2159, 1, 0
  %v2224 = vsel %vm2160, 1, 0
  %v2225 = vsel %vm2161, 1, 0
  %v2226 = vsel %vm2162, 1, 0
  %v2227 = vsel %vm2163, 1, 0
  %v2228 = vsel %vm2164, 1, 0
  %v2229 = vsel %vm2165, 1, 0
  %v2230 = vsel %vm2166, 1, 0
  %v2231 = vsel %vm2167, 1, 0
  %v2232 = vsel %vm2168, 1, 0
  %v2233 = vsel %vm2169, 1, 0
  %v2234 = vsel %vm2170, 1, 0
  %v2235 = vsel %vm2171, 1, 0
  %v2236 = vsel %vm2172, 1, 0
  %v2237 = vsel %vm2173, 1, 0
  %v2238 = vsel %vm2174, 1, 0
  %v2239 = vsel %vm2175, 1, 0
  %v2240 = vsel %vm2176, 1, 0
  %v2241 = vsel %vm2177, 1, 0
  %v2242 = vsel %vm2178, 1, 0
  %v2243 = vsel %vm2179, 1, 0
  %v2244 = vsel %vm2180, 1, 0
  %v2245 = vsel %vm2181, 1, 0
  %v2246 = vsel %vm2182, 1, 0
  %v2247 = vsel %vm2183, 1, 0
  %v2248 = vsel %vm2184, 1, 0
  %v2249 = vsel %vm2185, 1, 0
  %v2250 = vsel %vm2186, 1, 0
  %v2251 = vsel %vm2187, 1, 0
  %v2252 = vsel %vm2188, 1, 0
  %v2253 = vsel %vm2189, 1, 0
  %v2254 = vsel %vm2190, 1, 0
  %v2255 = vsel %vm2191, 1, 0
  %v2256 = vsel %vm2192, 1, 0
  %v2257 = vsel %vm2193, 1, 0
  %v2258 = vsel %vm2194, 1, 0
  %v2259 = vsel %vm2195, 1, 0
  %v2260 = vsel %vm2196, 1, 0
  %v2261 = vsel %vm2197, 1, 0
  %v2262 = vsel %vm2198, 1, 0
  %v2263 = vsel %vm2199, 1, 0
  %v2264 = vsel %vm2200, 1, 0
  %v2265 = vsel %vm2201, 1, 0
  %v2266 = vsel %vm2202, 1, 0
  %v2267 = vsel %vm2203, 1, 0
  %v2268 = vsel %vm2204, 1, 0
  %vm2269 = vcmp.eq.s32.totalorder %v2205, 1
  %vm2270 = vcmp.eq.s32.totalorder %v2206, 1
  %vm2271 = vcmp.eq.s32.totalorder %v2207, 1
  %vm2272 = vcmp.eq.s32.totalorder %v2208, 1
  %vm2273 = vcmp.eq.s32.totalorder %v2209, 1
  %vm2274 = vcmp.eq.s32.totalorder %v2210, 1
  %vm2275 = vcmp.eq.s32.totalorder %v2211, 1
  %vm2276 = vcmp.eq.s32.totalorder %v2212, 1
  %vm2277 = vcmp.eq.s32.totalorder %v2213, 1
  %vm2278 = vcmp.eq.s32.totalorder %v2214, 1
  %vm2279 = vcmp.eq.s32.totalorder %v2215, 1
  %vm2280 = vcmp.eq.s32.totalorder %v2216, 1
  %vm2281 = vcmp.eq.s32.totalorder %v2217, 1
  %vm2282 = vcmp.eq.s32.totalorder %v2218, 1
  %vm2283 = vcmp.eq.s32.totalorder %v2219, 1
  %vm2284 = vcmp.eq.s32.totalorder %v2220, 1
  %vm2285 = vcmp.eq.s32.totalorder %v2221, 1
  %vm2286 = vcmp.eq.s32.totalorder %v2222, 1
  %vm2287 = vcmp.eq.s32.totalorder %v2223, 1
  %vm2288 = vcmp.eq.s32.totalorder %v2224, 1
  %vm2289 = vcmp.eq.s32.totalorder %v2225, 1
  %vm2290 = vcmp.eq.s32.totalorder %v2226, 1
  %vm2291 = vcmp.eq.s32.totalorder %v2227, 1
  %vm2292 = vcmp.eq.s32.totalorder %v2228, 1
  %vm2293 = vcmp.eq.s32.totalorder %v2229, 1
  %vm2294 = vcmp.eq.s32.totalorder %v2230, 1
  %vm2295 = vcmp.eq.s32.totalorder %v2231, 1
  %vm2296 = vcmp.eq.s32.totalorder %v2232, 1
  %vm2297 = vcmp.eq.s32.totalorder %v2233, 1
  %vm2298 = vcmp.eq.s32.totalorder %v2234, 1
  %vm2299 = vcmp.eq.s32.totalorder %v2235, 1
  %vm2300 = vcmp.eq.s32.totalorder %v2236, 1
  %vm2301 = vcmp.eq.s32.totalorder %v2237, 1
  %vm2302 = vcmp.eq.s32.totalorder %v2238, 1
  %vm2303 = vcmp.eq.s32.totalorder %v2239, 1
  %vm2304 = vcmp.eq.s32.totalorder %v2240, 1
  %vm2305 = vcmp.eq.s32.totalorder %v2241, 1
  %vm2306 = vcmp.eq.s32.totalorder %v2242, 1
  %vm2307 = vcmp.eq.s32.totalorder %v2243, 1
  %vm2308 = vcmp.eq.s32.totalorder %v2244, 1
  %vm2309 = vcmp.eq.s32.totalorder %v2245, 1
  %vm2310 = vcmp.eq.s32.totalorder %v2246, 1
  %vm2311 = vcmp.eq.s32.totalorder %v2247, 1
  %vm2312 = vcmp.eq.s32.totalorder %v2248, 1
  %vm2313 = vcmp.eq.s32.totalorder %v2249, 1
  %vm2314 = vcmp.eq.s32.totalorder %v2250, 1
  %vm2315 = vcmp.eq.s32.totalorder %v2251, 1
  %vm2316 = vcmp.eq.s32.totalorder %v2252, 1
  %vm2317 = vcmp.eq.s32.totalorder %v2253, 1
  %vm2318 = vcmp.eq.s32.totalorder %v2254, 1
  %vm2319 = vcmp.eq.s32.totalorder %v2255, 1
  %vm2320 = vcmp.eq.s32.totalorder %v2256, 1
  %vm2321 = vcmp.eq.s32.totalorder %v2257, 1
  %vm2322 = vcmp.eq.s32.totalorder %v2258, 1
  %vm2323 = vcmp.eq.s32.totalorder %v2259, 1
  %vm2324 = vcmp.eq.s32.totalorder %v2260, 1
  %vm2325 = vcmp.eq.s32.totalorder %v2261, 1
  %vm2326 = vcmp.eq.s32.totalorder %v2262, 1
  %vm2327 = vcmp.eq.s32.totalorder %v2263, 1
  %vm2328 = vcmp.eq.s32.totalorder %v2264, 1
  %vm2329 = vcmp.eq.s32.totalorder %v2265, 1
  %vm2330 = vcmp.eq.s32.totalorder %v2266, 1
  %vm2331 = vcmp.eq.s32.totalorder %v2267, 1
  %vm2332 = vcmp.eq.s32.totalorder %v2268, 1
  %v2333 = vsel %vm2269, %v2078, 0.0
  %v2334 = vsel %vm2270, %v2077, 0.0
  %v2335 = vsel %vm2271, %v2140, 0.0
  %v2336 = vsel %vm2272, %v2139, 0.0
  %v2337 = vsel %vm2273, %v2138, 0.0
  %v2338 = vsel %vm2274, %v2137, 0.0
  %v2339 = vsel %vm2275, %v2136, 0.0
  %v2340 = vsel %vm2276, %v2135, 0.0
  %v2341 = vsel %vm2277, %v2134, 0.0
  %v2342 = vsel %vm2278, %v2133, 0.0
  %v2343 = vsel %vm2279, %v2132, 0.0
  %v2344 = vsel %vm2280, %v2131, 0.0
  %v2345 = vsel %vm2281, %v2130, 0.0
  %v2346 = vsel %vm2282, %v2129, 0.0
  %v2347 = vsel %vm2283, %v2128, 0.0
  %v2348 = vsel %vm2284, %v2127, 0.0
  %v2349 = vsel %vm2285, %v2126, 0.0
  %v2350 = vsel %vm2286, %v2125, 0.0
  %v2351 = vsel %vm2287, %v2124, 0.0
  %v2352 = vsel %vm2288, %v2123, 0.0
  %v2353 = vsel %vm2289, %v2122, 0.0
  %v2354 = vsel %vm2290, %v2121, 0.0
  %v2355 = vsel %vm2291, %v2120, 0.0
  %v2356 = vsel %vm2292, %v2119, 0.0
  %v2357 = vsel %vm2293, %v2118, 0.0
  %v2358 = vsel %vm2294, %v2117, 0.0
  %v2359 = vsel %vm2295, %v2116, 0.0
  %v2360 = vsel %vm2296, %v2115, 0.0
  %v2361 = vsel %vm2297, %v2114, 0.0
  %v2362 = vsel %vm2298, %v2113, 0.0
  %v2363 = vsel %vm2299, %v2112, 0.0
  %v2364 = vsel %vm2300, %v2111, 0.0
  %v2365 = vsel %vm2301, %v2110, 0.0
  %v2366 = vsel %vm2302, %v2109, 0.0
  %v2367 = vsel %vm2303, %v2108, 0.0
  %v2368 = vsel %vm2304, %v2107, 0.0
  %v2369 = vsel %vm2305, %v2106, 0.0
  %v2370 = vsel %vm2306, %v2105, 0.0
  %v2371 = vsel %vm2307, %v2104, 0.0
  %v2372 = vsel %vm2308, %v2103, 0.0
  %v2373 = vsel %vm2309, %v2102, 0.0
  %v2374 = vsel %vm2310, %v2101, 0.0
  %v2375 = vsel %vm2311, %v2100, 0.0
  %v2376 = vsel %vm2312, %v2099, 0.0
  %v2377 = vsel %vm2313, %v2098, 0.0
  %v2378 = vsel %vm2314, %v2097, 0.0
  %v2379 = vsel %vm2315, %v2096, 0.0
  %v2380 = vsel %vm2316, %v2095, 0.0
  %v2381 = vsel %vm2317, %v2094, 0.0
  %v2382 = vsel %vm2318, %v2093, 0.0
  %v2383 = vsel %vm2319, %v2092, 0.0
  %v2384 = vsel %vm2320, %v2091, 0.0
  %v2385 = vsel %vm2321, %v2090, 0.0
  %v2386 = vsel %vm2322, %v2089, 0.0
  %v2387 = vsel %vm2323, %v2088, 0.0
  %v2388 = vsel %vm2324, %v2087, 0.0
  %v2389 = vsel %vm2325, %v2086, 0.0
  %v2390 = vsel %vm2326, %v2085, 0.0
  %v2391 = vsel %vm2327, %v2084, 0.0
  %v2392 = vsel %vm2328, %v2083, 0.0
  %v2393 = vsel %vm2329, %v2082, 0.0
  %v2394 = vsel %vm2330, %v2081, 0.0
  %v2395 = vsel %vm2331, %v2080, 0.0
  %v2396 = vsel %vm2332, %v2079, 0.0
  %v2397 = vpack.c.bf16 %v2334, %v2333
  %v2398 = vpack.c.bf16 %v2336, %v2335
  %v2399 = vpack.c.bf16 %v2338, %v2337
  %v2400 = vpack.c.bf16 %v2340, %v2339
  %v2401 = vpack.c.bf16 %v2342, %v2341
  %v2402 = vpack.c.bf16 %v2344, %v2343
  %v2403 = vpack.c.bf16 %v2346, %v2345
  %v2404 = vpack.c.bf16 %v2348, %v2347
  %v2405 = vpack.c.bf16 %v2350, %v2349
  %v2406 = vpack.c.bf16 %v2352, %v2351
  %v2407 = vpack.c.bf16 %v2354, %v2353
  %v2408 = vpack.c.bf16 %v2356, %v2355
  %v2409 = vpack.c.bf16 %v2358, %v2357
  %v2410 = vpack.c.bf16 %v2360, %v2359
  %v2411 = vpack.c.bf16 %v2362, %v2361
  %v2412 = vpack.c.bf16 %v2364, %v2363
  %v2413 = vpack.c.bf16 %v2366, %v2365
  %v2414 = vpack.c.bf16 %v2368, %v2367
  %v2415 = vpack.c.bf16 %v2370, %v2369
  %v2416 = vpack.c.bf16 %v2372, %v2371
  %v2417 = vpack.c.bf16 %v2374, %v2373
  %v2418 = vpack.c.bf16 %v2376, %v2375
  %v2419 = vpack.c.bf16 %v2378, %v2377
  %v2420 = vpack.c.bf16 %v2380, %v2379
  %v2421 = vpack.c.bf16 %v2382, %v2381
  %v2422 = vpack.c.bf16 %v2384, %v2383
  %v2423 = vpack.c.bf16 %v2386, %v2385
  %v2424 = vpack.c.bf16 %v2388, %v2387
  %v2425 = vpack.c.bf16 %v2390, %v2389
  %v2426 = vpack.c.bf16 %v2392, %v2391
  %v2427 = vpack.c.bf16 %v2394, %v2393
  %v2428 = vpack.c.bf16 %v2396, %v2395
  %vm2429 = vcmask 261120
  %2430 = vst.msk [vmem:[#allocation2] sm:$0xff] %vm2429, %v2397
  %2431 = vst.msk [vmem:[#allocation2 + $0x18] sm:$0xff] %vm2429, %v2398
  %2432 = vst.msk [vmem:[#allocation2 + $0x30] sm:$0xff] %vm2429, %v2399
  %2433 = vst.msk [vmem:[#allocation2 + $0x48] sm:$0xff] %vm2429, %v2400
  %2434 = vst.msk [vmem:[#allocation2 + $0x60] sm:$0xff] %vm2429, %v2401
  %2435 = vst.msk [vmem:[#allocation2 + $0x78] sm:$0xff] %vm2429, %v2402
  %2436 = vst.msk [vmem:[#allocation2 + $0x90] sm:$0xff] %vm2429, %v2403
  %2437 = vst.msk [vmem:[#allocation2 + $0xa8] sm:$0xff] %vm2429, %v2404
  %2438 = vst.msk [vmem:[#allocation2 + $0xc0] sm:$0xff] %vm2429, %v2405
  %2439 = vst.msk [vmem:[#allocation2 + $0xd8] sm:$0xff] %vm2429, %v2406
  %2440 = vst.msk [vmem:[#allocation2 + $0xf0] sm:$0xff] %vm2429, %v2407
  %2441 = vst.msk [vmem:[#allocation2 + $0x108] sm:$0xff] %vm2429, %v2408
  %2442 = vst.msk [vmem:[#allocation2 + $0x120] sm:$0xff] %vm2429, %v2409
  %2443 = vst.msk [vmem:[#allocation2 + $0x138] sm:$0xff] %vm2429, %v2410
  %2444 = vst.msk [vmem:[#allocation2 + $0x150] sm:$0xff] %vm2429, %v2411
  %2445 = vst.msk [vmem:[#allocation2 + $0x168] sm:$0xff] %vm2429, %v2412
  %2446 = vst.msk [vmem:[#allocation2 + $0x180] sm:$0xff] %vm2429, %v2413
  %2447 = vst.msk [vmem:[#allocation2 + $0x198] sm:$0xff] %vm2429, %v2414
  %2448 = vst.msk [vmem:[#allocation2 + $0x1b0] sm:$0xff] %vm2429, %v2415
  %2449 = vst.msk [vmem:[#allocation2 + $0x1c8] sm:$0xff] %vm2429, %v2416
  %2450 = vst.msk [vmem:[#allocation2 + $0x1e0] sm:$0xff] %vm2429, %v2417
  %2451 = vst.msk [vmem:[#allocation2 + $0x1f8] sm:$0xff] %vm2429, %v2418
  %2452 = vst.msk [vmem:[#allocation2 + $0x210] sm:$0xff] %vm2429, %v2419
  %2453 = vst.msk [vmem:[#allocation2 + $0x228] sm:$0xff] %vm2429, %v2420
  %2454 = vst.msk [vmem:[#allocation2 + $0x240] sm:$0xff] %vm2429, %v2421
  %2455 = vst.msk [vmem:[#allocation2 + $0x258] sm:$0xff] %vm2429, %v2422
  %2456 = vst.msk [vmem:[#allocation2 + $0x270] sm:$0xff] %vm2429, %v2423
  %2457 = vst.msk [vmem:[#allocation2 + $0x288] sm:$0xff] %vm2429, %v2424
  %2458 = vst.msk [vmem:[#allocation2 + $0x2a0] sm:$0xff] %vm2429, %v2425
  %2459 = vst.msk [vmem:[#allocation2 + $0x2b8] sm:$0xff] %vm2429, %v2426
  %2460 = vst.msk [vmem:[#allocation2 + $0x2d0] sm:$0xff] %vm2429, %v2427
  %2461 = vst.msk [vmem:[#allocation2 + $0x2e8] sm:$0xff] %vm2429, %v2428
  %v2462 = vsel %vm1756, 1, 0
  %v2463 = vsel %vm1757, 1, 0
  %v2464 = vsel %vm1758, 1, 0
  %v2465 = vsel %vm1759, 1, 0
  %v2466 = vsel %vm1760, 1, 0
  %v2467 = vsel %vm1761, 1, 0
  %v2468 = vsel %vm1762, 1, 0
  %v2469 = vsel %vm1763, 1, 0
  %v2470 = vsel %vm1764, 1, 0
  %v2471 = vsel %vm1765, 1, 0
  %v2472 = vsel %vm1766, 1, 0
  %v2473 = vsel %vm1767, 1, 0
  %v2474 = vsel %vm1768, 1, 0
  %v2475 = vsel %vm1769, 1, 0
  %v2476 = vsel %vm1770, 1, 0
  %v2477 = vsel %vm1771, 1, 0
  %v2478 = vsel %vm1772, 1, 0
  %v2479 = vsel %vm1773, 1, 0
  %v2480 = vsel %vm1774, 1, 0
  %v2481 = vsel %vm1775, 1, 0
  %v2482 = vsel %vm1776, 1, 0
  %v2483 = vsel %vm1777, 1, 0
  %v2484 = vsel %vm1778, 1, 0
  %v2485 = vsel %vm1779, 1, 0
  %v2486 = vsel %vm1780, 1, 0
  %v2487 = vsel %vm1781, 1, 0
  %v2488 = vsel %vm1782, 1, 0
  %v2489 = vsel %vm1783, 1, 0
  %v2490 = vsel %vm1784, 1, 0
  %v2491 = vsel %vm1785, 1, 0
  %v2492 = vsel %vm1786, 1, 0
  %v2493 = vsel %vm1787, 1, 0
  %v2494 = vsel %vm1788, 1, 0
  %v2495 = vsel %vm1789, 1, 0
  %v2496 = vsel %vm1790, 1, 0
  %v2497 = vsel %vm1791, 1, 0
  %v2498 = vsel %vm1792, 1, 0
  %v2499 = vsel %vm1793, 1, 0
  %v2500 = vsel %vm1794, 1, 0
  %v2501 = vsel %vm1795, 1, 0
  %v2502 = vsel %vm1796, 1, 0
  %v2503 = vsel %vm1797, 1, 0
  %v2504 = vsel %vm1798, 1, 0
  %v2505 = vsel %vm1799, 1, 0
  %v2506 = vsel %vm1800, 1, 0
  %v2507 = vsel %vm1801, 1, 0
  %v2508 = vsel %vm1802, 1, 0
  %v2509 = vsel %vm1803, 1, 0
  %v2510 = vsel %vm1804, 1, 0
  %v2511 = vsel %vm1805, 1, 0
  %v2512 = vsel %vm1806, 1, 0
  %v2513 = vsel %vm1807, 1, 0
  %v2514 = vsel %vm1808, 1, 0
  %v2515 = vsel %vm1809, 1, 0
  %v2516 = vsel %vm1810, 1, 0
  %v2517 = vsel %vm1811, 1, 0
  %v2518 = vsel %vm1812, 1, 0
  %v2519 = vsel %vm1813, 1, 0
  %v2520 = vsel %vm1814, 1, 0
  %v2521 = vsel %vm1815, 1, 0
  %v2522 = vsel %vm1816, 1, 0
  %v2523 = vsel %vm1817, 1, 0
  %v2524 = vsel %vm1818, 1, 0
  %v2525 = vsel %vm1819, 1, 0
  %vm2526 = vcmp.eq.s32.totalorder %v2462, 1
  %vm2527 = vcmp.eq.s32.totalorder %v2463, 1
  %vm2528 = vcmp.eq.s32.totalorder %v2464, 1
  %vm2529 = vcmp.eq.s32.totalorder %v2465, 1
  %vm2530 = vcmp.eq.s32.totalorder %v2466, 1
  %vm2531 = vcmp.eq.s32.totalorder %v2467, 1
  %vm2532 = vcmp.eq.s32.totalorder %v2468, 1
  %vm2533 = vcmp.eq.s32.totalorder %v2469, 1
  %vm2534 = vcmp.eq.s32.totalorder %v2470, 1
  %vm2535 = vcmp.eq.s32.totalorder %v2471, 1
  %vm2536 = vcmp.eq.s32.totalorder %v2472, 1
  %vm2537 = vcmp.eq.s32.totalorder %v2473, 1
  %vm2538 = vcmp.eq.s32.totalorder %v2474, 1
  %vm2539 = vcmp.eq.s32.totalorder %v2475, 1
  %vm2540 = vcmp.eq.s32.totalorder %v2476, 1
  %vm2541 = vcmp.eq.s32.totalorder %v2477, 1
  %vm2542 = vcmp.eq.s32.totalorder %v2478, 1
  %vm2543 = vcmp.eq.s32.totalorder %v2479, 1
  %vm2544 = vcmp.eq.s32.totalorder %v2480, 1
  %vm2545 = vcmp.eq.s32.totalorder %v2481, 1
  %vm2546 = vcmp.eq.s32.totalorder %v2482, 1
  %vm2547 = vcmp.eq.s32.totalorder %v2483, 1
  %vm2548 = vcmp.eq.s32.totalorder %v2484, 1
  %vm2549 = vcmp.eq.s32.totalorder %v2485, 1
  %vm2550 = vcmp.eq.s32.totalorder %v2486, 1
  %vm2551 = vcmp.eq.s32.totalorder %v2487, 1
  %vm2552 = vcmp.eq.s32.totalorder %v2488, 1
  %vm2553 = vcmp.eq.s32.totalorder %v2489, 1
  %vm2554 = vcmp.eq.s32.totalorder %v2490, 1
  %vm2555 = vcmp.eq.s32.totalorder %v2491, 1
  %vm2556 = vcmp.eq.s32.totalorder %v2492, 1
  %vm2557 = vcmp.eq.s32.totalorder %v2493, 1
  %vm2558 = vcmp.eq.s32.totalorder %v2494, 1
  %vm2559 = vcmp.eq.s32.totalorder %v2495, 1
  %vm2560 = vcmp.eq.s32.totalorder %v2496, 1
  %vm2561 = vcmp.eq.s32.totalorder %v2497, 1
  %vm2562 = vcmp.eq.s32.totalorder %v2498, 1
  %vm2563 = vcmp.eq.s32.totalorder %v2499, 1
  %vm2564 = vcmp.eq.s32.totalorder %v2500, 1
  %vm2565 = vcmp.eq.s32.totalorder %v2501, 1
  %vm2566 = vcmp.eq.s32.totalorder %v2502, 1
  %vm2567 = vcmp.eq.s32.totalorder %v2503, 1
  %vm2568 = vcmp.eq.s32.totalorder %v2504, 1
  %vm2569 = vcmp.eq.s32.totalorder %v2505, 1
  %vm2570 = vcmp.eq.s32.totalorder %v2506, 1
  %vm2571 = vcmp.eq.s32.totalorder %v2507, 1
  %vm2572 = vcmp.eq.s32.totalorder %v2508, 1
  %vm2573 = vcmp.eq.s32.totalorder %v2509, 1
  %vm2574 = vcmp.eq.s32.totalorder %v2510, 1
  %vm2575 = vcmp.eq.s32.totalorder %v2511, 1
  %vm2576 = vcmp.eq.s32.totalorder %v2512, 1
  %vm2577 = vcmp.eq.s32.totalorder %v2513, 1
  %vm2578 = vcmp.eq.s32.totalorder %v2514, 1
  %vm2579 = vcmp.eq.s32.totalorder %v2515, 1
  %vm2580 = vcmp.eq.s32.totalorder %v2516, 1
  %vm2581 = vcmp.eq.s32.totalorder %v2517, 1
  %vm2582 = vcmp.eq.s32.totalorder %v2518, 1
  %vm2583 = vcmp.eq.s32.totalorder %v2519, 1
  %vm2584 = vcmp.eq.s32.totalorder %v2520, 1
  %vm2585 = vcmp.eq.s32.totalorder %v2521, 1
  %vm2586 = vcmp.eq.s32.totalorder %v2522, 1
  %vm2587 = vcmp.eq.s32.totalorder %v2523, 1
  %vm2588 = vcmp.eq.s32.totalorder %v2524, 1
  %vm2589 = vcmp.eq.s32.totalorder %v2525, 1
  %v2590 = vsel %vm2526, %v153, 0.0
  %v2591 = vsel %vm2527, %v154, 0.0
  %v2592 = vsel %vm2528, %v91, 0.0
  %v2593 = vsel %vm2529, %v92, 0.0
  %v2594 = vsel %vm2530, %v93, 0.0
  %v2595 = vsel %vm2531, %v94, 0.0
  %v2596 = vsel %vm2532, %v95, 0.0
  %v2597 = vsel %vm2533, %v96, 0.0
  %v2598 = vsel %vm2534, %v97, 0.0
  %v2599 = vsel %vm2535, %v98, 0.0
  %v2600 = vsel %vm2536, %v99, 0.0
  %v2601 = vsel %vm2537, %v100, 0.0
  %v2602 = vsel %vm2538, %v101, 0.0
  %v2603 = vsel %vm2539, %v102, 0.0
  %v2604 = vsel %vm2540, %v103, 0.0
  %v2605 = vsel %vm2541, %v104, 0.0
  %v2606 = vsel %vm2542, %v105, 0.0
  %v2607 = vsel %vm2543, %v106, 0.0
  %v2608 = vsel %vm2544, %v107, 0.0
  %v2609 = vsel %vm2545, %v108, 0.0
  %v2610 = vsel %vm2546, %v109, 0.0
  %v2611 = vsel %vm2547, %v110, 0.0
  %v2612 = vsel %vm2548, %v111, 0.0
  %v2613 = vsel %vm2549, %v112, 0.0
  %v2614 = vsel %vm2550, %v113, 0.0
  %v2615 = vsel %vm2551, %v114, 0.0
  %v2616 = vsel %vm2552, %v115, 0.0
  %v2617 = vsel %vm2553, %v116, 0.0
  %v2618 = vsel %vm2554, %v117, 0.0
  %v2619 = vsel %vm2555, %v118, 0.0
  %v2620 = vsel %vm2556, %v119, 0.0
  %v2621 = vsel %vm2557, %v120, 0.0
  %v2622 = vsel %vm2558, %v121, 0.0
  %v2623 = vsel %vm2559, %v122, 0.0
  %v2624 = vsel %vm2560, %v123, 0.0
  %v2625 = vsel %vm2561, %v124, 0.0
  %v2626 = vsel %vm2562, %v125, 0.0
  %v2627 = vsel %vm2563, %v126, 0.0
  %v2628 = vsel %vm2564, %v127, 0.0
  %v2629 = vsel %vm2565, %v128, 0.0
  %v2630 = vsel %vm2566, %v129, 0.0
  %v2631 = vsel %vm2567, %v130, 0.0
  %v2632 = vsel %vm2568, %v131, 0.0
  %v2633 = vsel %vm2569, %v132, 0.0
  %v2634 = vsel %vm2570, %v133, 0.0
  %v2635 = vsel %vm2571, %v134, 0.0
  %v2636 = vsel %vm2572, %v135, 0.0
  %v2637 = vsel %vm2573, %v136, 0.0
  %v2638 = vsel %vm2574, %v137, 0.0
  %v2639 = vsel %vm2575, %v138, 0.0
  %v2640 = vsel %vm2576, %v139, 0.0
  %v2641 = vsel %vm2577, %v140, 0.0
  %v2642 = vsel %vm2578, %v141, 0.0
  %v2643 = vsel %vm2579, %v142, 0.0
  %v2644 = vsel %vm2580, %v143, 0.0
  %v2645 = vsel %vm2581, %v144, 0.0
  %v2646 = vsel %vm2582, %v145, 0.0
  %v2647 = vsel %vm2583, %v146, 0.0
  %v2648 = vsel %vm2584, %v147, 0.0
  %v2649 = vsel %vm2585, %v148, 0.0
  %v2650 = vsel %vm2586, %v149, 0.0
  %v2651 = vsel %vm2587, %v150, 0.0
  %v2652 = vsel %vm2588, %v151, 0.0
  %v2653 = vsel %vm2589, %v152, 0.0
  %v2654 = vpack.c.bf16 %v2591, %v2590
  %v2655 = vpack.c.bf16 %v2593, %v2592
  %v2656 = vpack.c.bf16 %v2595, %v2594
  %v2657 = vpack.c.bf16 %v2597, %v2596
  %v2658 = vpack.c.bf16 %v2599, %v2598
  %v2659 = vpack.c.bf16 %v2601, %v2600
  %v2660 = vpack.c.bf16 %v2603, %v2602
  %v2661 = vpack.c.bf16 %v2605, %v2604
  %v2662 = vpack.c.bf16 %v2607, %v2606
  %v2663 = vpack.c.bf16 %v2609, %v2608
  %v2664 = vpack.c.bf16 %v2611, %v2610
  %v2665 = vpack.c.bf16 %v2613, %v2612
  %v2666 = vpack.c.bf16 %v2615, %v2614
  %v2667 = vpack.c.bf16 %v2617, %v2616
  %v2668 = vpack.c.bf16 %v2619, %v2618
  %v2669 = vpack.c.bf16 %v2621, %v2620
  %v2670 = vpack.c.bf16 %v2623, %v2622
  %v2671 = vpack.c.bf16 %v2625, %v2624
  %v2672 = vpack.c.bf16 %v2627, %v2626
  %v2673 = vpack.c.bf16 %v2629, %v2628
  %v2674 = vpack.c.bf16 %v2631, %v2630
  %v2675 = vpack.c.bf16 %v2633, %v2632
  %v2676 = vpack.c.bf16 %v2635, %v2634
  %v2677 = vpack.c.bf16 %v2637, %v2636
  %v2678 = vpack.c.bf16 %v2639, %v2638
  %v2679 = vpack.c.bf16 %v2641, %v2640
  %v2680 = vpack.c.bf16 %v2643, %v2642
  %v2681 = vpack.c.bf16 %v2645, %v2644
  %v2682 = vpack.c.bf16 %v2647, %v2646
  %v2683 = vpack.c.bf16 %v2649, %v2648
  %v2684 = vpack.c.bf16 %v2651, %v2650
  %v2685 = vpack.c.bf16 %v2653, %v2652
  %2718 = vrot.lane.b32.xlu0 %v2654, 32
  %v2719 = vpop.permute.xlu0 %2718
  %2720 = vrot.lane.b32.xlu0 %v2655, 32
  %v2721 = vpop.permute.xlu0 %2720
  %2722 = vrot.lane.b32.xlu0 %v2656, 32
  %v2723 = vpop.permute.xlu0 %2722
  %2724 = vrot.lane.b32.xlu0 %v2657, 32
  %v2725 = vpop.permute.xlu0 %2724
  %2726 = vrot.lane.b32.xlu0 %v2658, 32
  %v2727 = vpop.permute.xlu0 %2726
  %2728 = vrot.lane.b32.xlu0 %v2659, 32
  %v2729 = vpop.permute.xlu0 %2728
  %2730 = vrot.lane.b32.xlu0 %v2660, 32
  %v2731 = vpop.permute.xlu0 %2730
  %2732 = vrot.lane.b32.xlu0 %v2661, 32
  %v2733 = vpop.permute.xlu0 %2732
  %2734 = vrot.lane.b32.xlu0 %v2662, 32
  %v2735 = vpop.permute.xlu0 %2734
  %2736 = vrot.lane.b32.xlu0 %v2663, 32
  %v2737 = vpop.permute.xlu0 %2736
  %2738 = vrot.lane.b32.xlu0 %v2664, 32
  %v2739 = vpop.permute.xlu0 %2738
  %2740 = vrot.lane.b32.xlu0 %v2665, 32
  %v2741 = vpop.permute.xlu0 %2740
  %2742 = vrot.lane.b32.xlu0 %v2666, 32
  %v2743 = vpop.permute.xlu0 %2742
  %2744 = vrot.lane.b32.xlu0 %v2667, 32
  %v2745 = vpop.permute.xlu0 %2744
  %2746 = vrot.lane.b32.xlu0 %v2668, 32
  %v2747 = vpop.permute.xlu0 %2746
  %2748 = vrot.lane.b32.xlu0 %v2669, 32
  %v2749 = vpop.permute.xlu0 %2748
  %2750 = vrot.lane.b32.xlu0 %v2670, 32
  %v2751 = vpop.permute.xlu0 %2750
  %2752 = vrot.lane.b32.xlu0 %v2671, 32
  %v2753 = vpop.permute.xlu0 %2752
  %2754 = vrot.lane.b32.xlu0 %v2672, 32
  %v2755 = vpop.permute.xlu0 %2754
  %2756 = vrot.lane.b32.xlu0 %v2673, 32
  %v2757 = vpop.permute.xlu0 %2756
  %2758 = vrot.lane.b32.xlu0 %v2674, 32
  %v2759 = vpop.permute.xlu0 %2758
  %2760 = vrot.lane.b32.xlu0 %v2675, 32
  %v2761 = vpop.permute.xlu0 %2760
  %2762 = vrot.lane.b32.xlu0 %v2676, 32
  %v2763 = vpop.permute.xlu0 %2762
  %2764 = vrot.lane.b32.xlu0 %v2677, 32
  %v2765 = vpop.permute.xlu0 %2764
  %2766 = vrot.lane.b32.xlu0 %v2678, 32
  %v2767 = vpop.permute.xlu0 %2766
  %2768 = vrot.lane.b32.xlu0 %v2679, 32
  %v2769 = vpop.permute.xlu0 %2768
  %2770 = vrot.lane.b32.xlu0 %v2680, 32
  %v2771 = vpop.permute.xlu0 %2770
  %2772 = vrot.lane.b32.xlu0 %v2681, 32
  %v2773 = vpop.permute.xlu0 %2772
  %2774 = vrot.lane.b32.xlu0 %v2682, 32
  %v2775 = vpop.permute.xlu0 %2774
  %2776 = vrot.lane.b32.xlu0 %v2683, 32
  %v2777 = vpop.permute.xlu0 %2776
  %2778 = vrot.lane.b32.xlu0 %v2684, 32
  %v2779 = vpop.permute.xlu0 %2778
  %2780 = vrot.lane.b32.xlu0 %v2685, 32
  %v2781 = vpop.permute.xlu0 %2780
  %vm2814 = vcmask 523520
  %2815 = vst.msk [vmem:[#allocation2] sm:$0xff] %vm2814, %v2719
  %2816 = vst.msk [vmem:[#allocation2 + $0x18] sm:$0xff] %vm2814, %v2721
  %2817 = vst.msk [vmem:[#allocation2 + $0x30] sm:$0xff] %vm2814, %v2723
  %2818 = vst.msk [vmem:[#allocation2 + $0x48] sm:$0xff] %vm2814, %v2725
  %2819 = vst.msk [vmem:[#allocation2 + $0x60] sm:$0xff] %vm2814, %v2727
  %2820 = vst.msk [vmem:[#allocation2 + $0x78] sm:$0xff] %vm2814, %v2729
  %2821 = vst.msk [vmem:[#allocation2 + $0x90] sm:$0xff] %vm2814, %v2731
  %2822 = vst.msk [vmem:[#allocation2 + $0xa8] sm:$0xff] %vm2814, %v2733
  %2823 = vst.msk [vmem:[#allocation2 + $0xc0] sm:$0xff] %vm2814, %v2735
  %2824 = vst.msk [vmem:[#allocation2 + $0xd8] sm:$0xff] %vm2814, %v2737
  %2825 = vst.msk [vmem:[#allocation2 + $0xf0] sm:$0xff] %vm2814, %v2739
  %2826 = vst.msk [vmem:[#allocation2 + $0x108] sm:$0xff] %vm2814, %v2741
  %2827 = vst.msk [vmem:[#allocation2 + $0x120] sm:$0xff] %vm2814, %v2743
  %2828 = vst.msk [vmem:[#allocation2 + $0x138] sm:$0xff] %vm2814, %v2745
  %2829 = vst.msk [vmem:[#allocation2 + $0x150] sm:$0xff] %vm2814, %v2747
  %2830 = vst.msk [vmem:[#allocation2 + $0x168] sm:$0xff] %vm2814, %v2749
  %2831 = vst.msk [vmem:[#allocation2 + $0x180] sm:$0xff] %vm2814, %v2751
  %2832 = vst.msk [vmem:[#allocation2 + $0x198] sm:$0xff] %vm2814, %v2753
  %2833 = vst.msk [vmem:[#allocation2 + $0x1b0] sm:$0xff] %vm2814, %v2755
  %2834 = vst.msk [vmem:[#allocation2 + $0x1c8] sm:$0xff] %vm2814, %v2757
  %2835 = vst.msk [vmem:[#allocation2 + $0x1e0] sm:$0xff] %vm2814, %v2759
  %2836 = vst.msk [vmem:[#allocation2 + $0x1f8] sm:$0xff] %vm2814, %v2761
  %2837 = vst.msk [vmem:[#allocation2 + $0x210] sm:$0xff] %vm2814, %v2763
  %2838 = vst.msk [vmem:[#allocation2 + $0x228] sm:$0xff] %vm2814, %v2765
  %2839 = vst.msk [vmem:[#allocation2 + $0x240] sm:$0xff] %vm2814, %v2767
  %2840 = vst.msk [vmem:[#allocation2 + $0x258] sm:$0xff] %vm2814, %v2769
  %2841 = vst.msk [vmem:[#allocation2 + $0x270] sm:$0xff] %vm2814, %v2771
  %2842 = vst.msk [vmem:[#allocation2 + $0x288] sm:$0xff] %vm2814, %v2773
  %2843 = vst.msk [vmem:[#allocation2 + $0x2a0] sm:$0xff] %vm2814, %v2775
  %2844 = vst.msk [vmem:[#allocation2 + $0x2b8] sm:$0xff] %vm2814, %v2777
  %2845 = vst.msk [vmem:[#allocation2 + $0x2d0] sm:$0xff] %vm2814, %v2779
  %2846 = vst.msk [vmem:[#allocation2 + $0x2e8] sm:$0xff] %vm2814, %v2781
  %v2847 = vrot.slane %v91, 1
  %v2848 = vrot.slane %v92, 1
  %v2849 = vrot.slane %v93, 1
  %v2850 = vrot.slane %v94, 1
  %v2851 = vrot.slane %v95, 1
  %v2852 = vrot.slane %v96, 1
  %v2853 = vrot.slane %v97, 1
  %v2854 = vrot.slane %v98, 1
  %v2855 = vrot.slane %v99, 1
  %v2856 = vrot.slane %v100, 1
  %v2857 = vrot.slane %v101, 1
  %v2858 = vrot.slane %v102, 1
  %v2859 = vrot.slane %v103, 1
  %v2860 = vrot.slane %v104, 1
  %v2861 = vrot.slane %v105, 1
  %v2862 = vrot.slane %v106, 1
  %v2863 = vrot.slane %v107, 1
  %v2864 = vrot.slane %v108, 1
  %v2865 = vrot.slane %v109, 1
  %v2866 = vrot.slane %v110, 1
  %v2867 = vrot.slane %v111, 1
  %v2868 = vrot.slane %v112, 1
  %v2869 = vrot.slane %v113, 1
  %v2870 = vrot.slane %v114, 1
  %v2871 = vrot.slane %v115, 1
  %v2872 = vrot.slane %v116, 1
  %v2873 = vrot.slane %v117, 1
  %v2874 = vrot.slane %v118, 1
  %v2875 = vrot.slane %v119, 1
  %v2876 = vrot.slane %v120, 1
  %v2877 = vrot.slane %v121, 1
  %v2878 = vrot.slane %v122, 1
  %v2879 = vrot.slane %v123, 1
  %v2880 = vrot.slane %v124, 1
  %v2881 = vrot.slane %v125, 1
  %v2882 = vrot.slane %v126, 1
  %v2883 = vrot.slane %v127, 1
  %v2884 = vrot.slane %v128, 1
  %v2885 = vrot.slane %v129, 1
  %v2886 = vrot.slane %v130, 1
  %v2887 = vrot.slane %v131, 1
  %v2888 = vrot.slane %v132, 1
  %v2889 = vrot.slane %v133, 1
  %v2890 = vrot.slane %v134, 1
  %v2891 = vrot.slane %v135, 1
  %v2892 = vrot.slane %v136, 1
  %v2893 = vrot.slane %v137, 1
  %v2894 = vrot.slane %v138, 1
  %v2895 = vrot.slane %v139, 1
  %v2896 = vrot.slane %v140, 1
  %v2897 = vrot.slane %v141, 1
  %v2898 = vrot.slane %v142, 1
  %v2899 = vrot.slane %v143, 1
  %v2900 = vrot.slane %v144, 1
  %v2901 = vrot.slane %v145, 1
  %v2902 = vrot.slane %v146, 1
  %v2903 = vrot.slane %v147, 1
  %v2904 = vrot.slane %v148, 1
  %v2905 = vrot.slane %v149, 1
  %v2906 = vrot.slane %v150, 1
  %v2907 = vrot.slane %v151, 1
  %v2908 = vrot.slane %v152, 1
  %v2909 = vrot.slane %v153, 1
  %v2910 = vrot.slane %v154, 1
  %vm2911 = vcmp.lt.s32.totalorder %v156, 7
  %v2912 = vsel %vm2911, %v2909, %v2910
  %v2913 = vsel %vm2911, %v2908, %v2909
  %v2914 = vsel %vm2911, %v2907, %v2908
  %v2915 = vsel %vm2911, %v2906, %v2907
  %v2916 = vsel %vm2911, %v2905, %v2906
  %v2917 = vsel %vm2911, %v2904, %v2905
  %v2918 = vsel %vm2911, %v2903, %v2904
  %v2919 = vsel %vm2911, %v2902, %v2903
  %v2920 = vsel %vm2911, %v2901, %v2902
  %v2921 = vsel %vm2911, %v2900, %v2901
  %v2922 = vsel %vm2911, %v2899, %v2900
  %v2923 = vsel %vm2911, %v2898, %v2899
  %v2924 = vsel %vm2911, %v2897, %v2898
  %v2925 = vsel %vm2911, %v2896, %v2897
  %v2926 = vsel %vm2911, %v2895, %v2896
  %v2927 = vsel %vm2911, %v2894, %v2895
  %v2928 = vsel %vm2911, %v2893, %v2894
  %v2929 = vsel %vm2911, %v2892, %v2893
  %v2930 = vsel %vm2911, %v2891, %v2892
  %v2931 = vsel %vm2911, %v2890, %v2891
  %v2932 = vsel %vm2911, %v2889, %v2890
  %v2933 = vsel %vm2911, %v2888, %v2889
  %v2934 = vsel %vm2911, %v2887, %v2888
  %v2935 = vsel %vm2911, %v2886, %v2887
  %v2936 = vsel %vm2911, %v2885, %v2886
  %v2937 = vsel %vm2911, %v2884, %v2885
  %v2938 = vsel %vm2911, %v2883, %v2884
  %v2939 = vsel %vm2911, %v2882, %v2883
  %v2940 = vsel %vm2911, %v2881, %v2882
  %v2941 = vsel %vm2911, %v2880, %v2881
  %v2942 = vsel %vm2911, %v2879, %v2880
  %v2943 = vsel %vm2911, %v2878, %v2879
  %v2944 = vsel %vm2911, %v2877, %v2878
  %v2945 = vsel %vm2911, %v2876, %v2877
  %v2946 = vsel %vm2911, %v2875, %v2876
  %v2947 = vsel %vm2911, %v2874, %v2875
  %v2948 = vsel %vm2911, %v2873, %v2874
  %v2949 = vsel %vm2911, %v2872, %v2873
  %v2950 = vsel %vm2911, %v2871, %v2872
  %v2951 = vsel %vm2911, %v2870, %v2871
  %v2952 = vsel %vm2911, %v2869, %v2870
  %v2953 = vsel %vm2911, %v2868, %v2869
  %v2954 = vsel %vm2911, %v2867, %v2868
  %v2955 = vsel %vm2911, %v2866, %v2867
  %v2956 = vsel %vm2911, %v2865, %v2866
  %v2957 = vsel %vm2911, %v2864, %v2865
  %v2958 = vsel %vm2911, %v2863, %v2864
  %v2959 = vsel %vm2911, %v2862, %v2863
  %v2960 = vsel %vm2911, %v2861, %v2862
  %v2961 = vsel %vm2911, %v2860, %v2861
  %v2962 = vsel %vm2911, %v2859, %v2860
  %v2963 = vsel %vm2911, %v2858, %v2859
  %v2964 = vsel %vm2911, %v2857, %v2858
  %v2965 = vsel %vm2911, %v2856, %v2857
  %v2966 = vsel %vm2911, %v2855, %v2856
  %v2967 = vsel %vm2911, %v2854, %v2855
  %v2968 = vsel %vm2911, %v2853, %v2854
  %v2969 = vsel %vm2911, %v2852, %v2853
  %v2970 = vsel %vm2911, %v2851, %v2852
  %v2971 = vsel %vm2911, %v2850, %v2851
  %v2972 = vsel %vm2911, %v2849, %v2850
  %v2973 = vsel %vm2911, %v2848, %v2849
  %v2974 = vsel %vm2911, %v2847, %v2848
  %v2975 = vsel %vm2911, %v2910, %v2847
  %vm2976 = vmand %vm1756, %vm1948
  %vm2977 = vmand %vm1757, %vm1949
  %vm2978 = vmand %vm1758, %vm1950
  %vm2979 = vmand %vm1759, %vm1951
  %vm2980 = vmand %vm1760, %vm1952
  %vm2981 = vmand %vm1761, %vm1953
  %vm2982 = vmand %vm1762, %vm1954
  %vm2983 = vmand %vm1763, %vm1955
  %vm2984 = vmand %vm1764, %vm1956
  %vm2985 = vmand %vm1765, %vm1957
  %vm2986 = vmand %vm1766, %vm1958
  %vm2987 = vmand %vm1767, %vm1959
  %vm2988 = vmand %vm1768, %vm1960
  %vm2989 = vmand %vm1769, %vm1961
  %vm2990 = vmand %vm1770, %vm1962
  %vm2991 = vmand %vm1771, %vm1963
  %vm2992 = vmand %vm1772, %vm1964
  %vm2993 = vmand %vm1773, %vm1965
  %vm2994 = vmand %vm1774, %vm1966
  %vm2995 = vmand %vm1775, %vm1967
  %vm2996 = vmand %vm1776, %vm1968
  %vm2997 = vmand %vm1777, %vm1969
  %vm2998 = vmand %vm1778, %vm1970
  %vm2999 = vmand %vm1779, %vm1971
  %vm3000 = vmand %vm1780, %vm1972
  %vm3001 = vmand %vm1781, %vm1973
  %vm3002 = vmand %vm1782, %vm1974
  %vm3003 = vmand %vm1783, %vm1975
  %vm3004 = vmand %vm1784, %vm1976
  %vm3005 = vmand %vm1785, %vm1977
  %vm3006 = vmand %vm1786, %vm1978
  %vm3007 = vmand %vm1787, %vm1979
  %vm3008 = vmand %vm1788, %vm1980
  %vm3009 = vmand %vm1789, %vm1981
  %vm3010 = vmand %vm1790, %vm1982
  %vm3011 = vmand %vm1791, %vm1983
  %vm3012 = vmand %vm1792, %vm1984
  %vm3013 = vmand %vm1793, %vm1985
  %vm3014 = vmand %vm1794, %vm1986
  %vm3015 = vmand %vm1795, %vm1987
  %vm3016 = vmand %vm1796, %vm1988
  %vm3017 = vmand %vm1797, %vm1989
  %vm3018 = vmand %vm1798, %vm1990
  %vm3019 = vmand %vm1799, %vm1991
  %vm3020 = vmand %vm1800, %vm1992
  %vm3021 = vmand %vm1801, %vm1993
  %vm3022 = vmand %vm1802, %vm1994
  %vm3023 = vmand %vm1803, %vm1995
  %vm3024 = vmand %vm1804, %vm1996
  %vm3025 = vmand %vm1805, %vm1997
  %vm3026 = vmand %vm1806, %vm1998
  %vm3027 = vmand %vm1807, %vm1999
  %vm3028 = vmand %vm1808, %vm2000
  %vm3029 = vmand %vm1809, %vm2001
  %vm3030 = vmand %vm1810, %vm2002
  %vm3031 = vmand %vm1811, %vm2003
  %vm3032 = vmand %vm1812, %vm2004
  %vm3033 = vmand %vm1813, %vm2005
  %vm3034 = vmand %vm1814, %vm2006
  %vm3035 = vmand %vm1815, %vm2007
  %vm3036 = vmand %vm1816, %vm2008
  %vm3037 = vmand %vm1817, %vm2009
  %vm3038 = vmand %vm1818, %vm2010
  %vm3039 = vmand %vm1819, %vm2011
  %v3040 = vsel %vm2976, 1, 0
  %v3041 = vsel %vm2977, 1, 0
  %v3042 = vsel %vm2978, 1, 0
  %v3043 = vsel %vm2979, 1, 0
  %v3044 = vsel %vm2980, 1, 0
  %v3045 = vsel %vm2981, 1, 0
  %v3046 = vsel %vm2982, 1, 0
  %v3047 = vsel %vm2983, 1, 0
  %v3048 = vsel %vm2984, 1, 0
  %v3049 = vsel %vm2985, 1, 0
  %v3050 = vsel %vm2986, 1, 0
  %v3051 = vsel %vm2987, 1, 0
  %v3052 = vsel %vm2988, 1, 0
  %v3053 = vsel %vm2989, 1, 0
  %v3054 = vsel %vm2990, 1, 0
  %v3055 = vsel %vm2991, 1, 0
  %v3056 = vsel %vm2992, 1, 0
  %v3057 = vsel %vm2993, 1, 0
  %v3058 = vsel %vm2994, 1, 0
  %v3059 = vsel %vm2995, 1, 0
  %v3060 = vsel %vm2996, 1, 0
  %v3061 = vsel %vm2997, 1, 0
  %v3062 = vsel %vm2998, 1, 0
  %v3063 = vsel %vm2999, 1, 0
  %v3064 = vsel %vm3000, 1, 0
  %v3065 = vsel %vm3001, 1, 0
  %v3066 = vsel %vm3002, 1, 0
  %v3067 = vsel %vm3003, 1, 0
  %v3068 = vsel %vm3004, 1, 0
  %v3069 = vsel %vm3005, 1, 0
  %v3070 = vsel %vm3006, 1, 0
  %v3071 = vsel %vm3007, 1, 0
  %v3072 = vsel %vm3008, 1, 0
  %v3073 = vsel %vm3009, 1, 0
  %v3074 = vsel %vm3010, 1, 0
  %v3075 = vsel %vm3011, 1, 0
  %v3076 = vsel %vm3012, 1, 0
  %v3077 = vsel %vm3013, 1, 0
  %v3078 = vsel %vm3014, 1, 0
  %v3079 = vsel %vm3015, 1, 0
  %v3080 = vsel %vm3016, 1, 0
  %v3081 = vsel %vm3017, 1, 0
  %v3082 = vsel %vm3018, 1, 0
  %v3083 = vsel %vm3019, 1, 0
  %v3084 = vsel %vm3020, 1, 0
  %v3085 = vsel %vm3021, 1, 0
  %v3086 = vsel %vm3022, 1, 0
  %v3087 = vsel %vm3023, 1, 0
  %v3088 = vsel %vm3024, 1, 0
  %v3089 = vsel %vm3025, 1, 0
  %v3090 = vsel %vm3026, 1, 0
  %v3091 = vsel %vm3027, 1, 0
  %v3092 = vsel %vm3028, 1, 0
  %v3093 = vsel %vm3029, 1, 0
  %v3094 = vsel %vm3030, 1, 0
  %v3095 = vsel %vm3031, 1, 0
  %v3096 = vsel %vm3032, 1, 0
  %v3097 = vsel %vm3033, 1, 0
  %v3098 = vsel %vm3034, 1, 0
  %v3099 = vsel %vm3035, 1, 0
  %v3100 = vsel %vm3036, 1, 0
  %v3101 = vsel %vm3037, 1, 0
  %v3102 = vsel %vm3038, 1, 0
  %v3103 = vsel %vm3039, 1, 0
  %vm3104 = vcmp.eq.s32.totalorder %v3040, 1
  %vm3105 = vcmp.eq.s32.totalorder %v3041, 1
  %vm3106 = vcmp.eq.s32.totalorder %v3042, 1
  %vm3107 = vcmp.eq.s32.totalorder %v3043, 1
  %vm3108 = vcmp.eq.s32.totalorder %v3044, 1
  %vm3109 = vcmp.eq.s32.totalorder %v3045, 1
  %vm3110 = vcmp.eq.s32.totalorder %v3046, 1
  %vm3111 = vcmp.eq.s32.totalorder %v3047, 1
  %vm3112 = vcmp.eq.s32.totalorder %v3048, 1
  %vm3113 = vcmp.eq.s32.totalorder %v3049, 1
  %vm3114 = vcmp.eq.s32.totalorder %v3050, 1
  %vm3115 = vcmp.eq.s32.totalorder %v3051, 1
  %vm3116 = vcmp.eq.s32.totalorder %v3052, 1
  %vm3117 = vcmp.eq.s32.totalorder %v3053, 1
  %vm3118 = vcmp.eq.s32.totalorder %v3054, 1
  %vm3119 = vcmp.eq.s32.totalorder %v3055, 1
  %vm3120 = vcmp.eq.s32.totalorder %v3056, 1
  %vm3121 = vcmp.eq.s32.totalorder %v3057, 1
  %vm3122 = vcmp.eq.s32.totalorder %v3058, 1
  %vm3123 = vcmp.eq.s32.totalorder %v3059, 1
  %vm3124 = vcmp.eq.s32.totalorder %v3060, 1
  %vm3125 = vcmp.eq.s32.totalorder %v3061, 1
  %vm3126 = vcmp.eq.s32.totalorder %v3062, 1
  %vm3127 = vcmp.eq.s32.totalorder %v3063, 1
  %vm3128 = vcmp.eq.s32.totalorder %v3064, 1
  %vm3129 = vcmp.eq.s32.totalorder %v3065, 1
  %vm3130 = vcmp.eq.s32.totalorder %v3066, 1
  %vm3131 = vcmp.eq.s32.totalorder %v3067, 1
  %vm3132 = vcmp.eq.s32.totalorder %v3068, 1
  %vm3133 = vcmp.eq.s32.totalorder %v3069, 1
  %vm3134 = vcmp.eq.s32.totalorder %v3070, 1
  %vm3135 = vcmp.eq.s32.totalorder %v3071, 1
  %vm3136 = vcmp.eq.s32.totalorder %v3072, 1
  %vm3137 = vcmp.eq.s32.totalorder %v3073, 1
  %vm3138 = vcmp.eq.s32.totalorder %v3074, 1
  %vm3139 = vcmp.eq.s32.totalorder %v3075, 1
  %vm3140 = vcmp.eq.s32.totalorder %v3076, 1
  %vm3141 = vcmp.eq.s32.totalorder %v3077, 1
  %vm3142 = vcmp.eq.s32.totalorder %v3078, 1
  %vm3143 = vcmp.eq.s32.totalorder %v3079, 1
  %vm3144 = vcmp.eq.s32.totalorder %v3080, 1
  %vm3145 = vcmp.eq.s32.totalorder %v3081, 1
  %vm3146 = vcmp.eq.s32.totalorder %v3082, 1
  %vm3147 = vcmp.eq.s32.totalorder %v3083, 1
  %vm3148 = vcmp.eq.s32.totalorder %v3084, 1
  %vm3149 = vcmp.eq.s32.totalorder %v3085, 1
  %vm3150 = vcmp.eq.s32.totalorder %v3086, 1
  %vm3151 = vcmp.eq.s32.totalorder %v3087, 1
  %vm3152 = vcmp.eq.s32.totalorder %v3088, 1
  %vm3153 = vcmp.eq.s32.totalorder %v3089, 1
  %vm3154 = vcmp.eq.s32.totalorder %v3090, 1
  %vm3155 = vcmp.eq.s32.totalorder %v3091, 1
  %vm3156 = vcmp.eq.s32.totalorder %v3092, 1
  %vm3157 = vcmp.eq.s32.totalorder %v3093, 1
  %vm3158 = vcmp.eq.s32.totalorder %v3094, 1
  %vm3159 = vcmp.eq.s32.totalorder %v3095, 1
  %vm3160 = vcmp.eq.s32.totalorder %v3096, 1
  %vm3161 = vcmp.eq.s32.totalorder %v3097, 1
  %vm3162 = vcmp.eq.s32.totalorder %v3098, 1
  %vm3163 = vcmp.eq.s32.totalorder %v3099, 1
  %vm3164 = vcmp.eq.s32.totalorder %v3100, 1
  %vm3165 = vcmp.eq.s32.totalorder %v3101, 1
  %vm3166 = vcmp.eq.s32.totalorder %v3102, 1
  %vm3167 = vcmp.eq.s32.totalorder %v3103, 1
  %v3168 = vsel %vm3104, %v2912, 0.0
  %v3169 = vsel %vm3105, %v2975, 0.0
  %v3170 = vsel %vm3106, %v2974, 0.0
  %v3171 = vsel %vm3107, %v2973, 0.0
  %v3172 = vsel %vm3108, %v2972, 0.0
  %v3173 = vsel %vm3109, %v2971, 0.0
  %v3174 = vsel %vm3110, %v2970, 0.0
  %v3175 = vsel %vm3111, %v2969, 0.0
  %v3176 = vsel %vm3112, %v2968, 0.0
  %v3177 = vsel %vm3113, %v2967, 0.0
  %v3178 = vsel %vm3114, %v2966, 0.0
  %v3179 = vsel %vm3115, %v2965, 0.0
  %v3180 = vsel %vm3116, %v2964, 0.0
  %v3181 = vsel %vm3117, %v2963, 0.0
  %v3182 = vsel %vm3118, %v2962, 0.0
  %v3183 = vsel %vm3119, %v2961, 0.0
  %v3184 = vsel %vm3120, %v2960, 0.0
  %v3185 = vsel %vm3121, %v2959, 0.0
  %v3186 = vsel %vm3122, %v2958, 0.0
  %v3187 = vsel %vm3123, %v2957, 0.0
  %v3188 = vsel %vm3124, %v2956, 0.0
  %v3189 = vsel %vm3125, %v2955, 0.0
  %v3190 = vsel %vm3126, %v2954, 0.0
  %v3191 = vsel %vm3127, %v2953, 0.0
  %v3192 = vsel %vm3128, %v2952, 0.0
  %v3193 = vsel %vm3129, %v2951, 0.0
  %v3194 = vsel %vm3130, %v2950, 0.0
  %v3195 = vsel %vm3131, %v2949, 0.0
  %v3196 = vsel %vm3132, %v2948, 0.0
  %v3197 = vsel %vm3133, %v2947, 0.0
  %v3198 = vsel %vm3134, %v2946, 0.0
  %v3199 = vsel %vm3135, %v2945, 0.0
  %v3200 = vsel %vm3136, %v2944, 0.0
  %v3201 = vsel %vm3137, %v2943, 0.0
  %v3202 = vsel %vm3138, %v2942, 0.0
  %v3203 = vsel %vm3139, %v2941, 0.0
  %v3204 = vsel %vm3140, %v2940, 0.0
  %v3205 = vsel %vm3141, %v2939, 0.0
  %v3206 = vsel %vm3142, %v2938, 0.0
  %v3207 = vsel %vm3143, %v2937, 0.0
  %v3208 = vsel %vm3144, %v2936, 0.0
  %v3209 = vsel %vm3145, %v2935, 0.0
  %v3210 = vsel %vm3146, %v2934, 0.0
  %v3211 = vsel %vm3147, %v2933, 0.0
  %v3212 = vsel %vm3148, %v2932, 0.0
  %v3213 = vsel %vm3149, %v2931, 0.0
  %v3214 = vsel %vm3150, %v2930, 0.0
  %v3215 = vsel %vm3151, %v2929, 0.0
  %v3216 = vsel %vm3152, %v2928, 0.0
  %v3217 = vsel %vm3153, %v2927, 0.0
  %v3218 = vsel %vm3154, %v2926, 0.0
  %v3219 = vsel %vm3155, %v2925, 0.0
  %v3220 = vsel %vm3156, %v2924, 0.0
  %v3221 = vsel %vm3157, %v2923, 0.0
  %v3222 = vsel %vm3158, %v2922, 0.0
  %v3223 = vsel %vm3159, %v2921, 0.0
  %v3224 = vsel %vm3160, %v2920, 0.0
  %v3225 = vsel %vm3161, %v2919, 0.0
  %v3226 = vsel %vm3162, %v2918, 0.0
  %v3227 = vsel %vm3163, %v2917, 0.0
  %v3228 = vsel %vm3164, %v2916, 0.0
  %v3229 = vsel %vm3165, %v2915, 0.0
  %v3230 = vsel %vm3166, %v2914, 0.0
  %v3231 = vsel %vm3167, %v2913, 0.0
  %v3232 = vpack.c.bf16 %v3169, %v3168
  %v3233 = vpack.c.bf16 %v3171, %v3170
  %v3234 = vpack.c.bf16 %v3173, %v3172
  %v3235 = vpack.c.bf16 %v3175, %v3174
  %v3236 = vpack.c.bf16 %v3177, %v3176
  %v3237 = vpack.c.bf16 %v3179, %v3178
  %v3238 = vpack.c.bf16 %v3181, %v3180
  %v3239 = vpack.c.bf16 %v3183, %v3182
  %v3240 = vpack.c.bf16 %v3185, %v3184
  %v3241 = vpack.c.bf16 %v3187, %v3186
  %v3242 = vpack.c.bf16 %v3189, %v3188
  %v3243 = vpack.c.bf16 %v3191, %v3190
  %v3244 = vpack.c.bf16 %v3193, %v3192
  %v3245 = vpack.c.bf16 %v3195, %v3194
  %v3246 = vpack.c.bf16 %v3197, %v3196
  %v3247 = vpack.c.bf16 %v3199, %v3198
  %v3248 = vpack.c.bf16 %v3201, %v3200
  %v3249 = vpack.c.bf16 %v3203, %v3202
  %v3250 = vpack.c.bf16 %v3205, %v3204
  %v3251 = vpack.c.bf16 %v3207, %v3206
  %v3252 = vpack.c.bf16 %v3209, %v3208
  %v3253 = vpack.c.bf16 %v3211, %v3210
  %v3254 = vpack.c.bf16 %v3213, %v3212
  %v3255 = vpack.c.bf16 %v3215, %v3214
  %v3256 = vpack.c.bf16 %v3217, %v3216
  %v3257 = vpack.c.bf16 %v3219, %v3218
  %v3258 = vpack.c.bf16 %v3221, %v3220
  %v3259 = vpack.c.bf16 %v3223, %v3222
  %v3260 = vpack.c.bf16 %v3225, %v3224
  %v3261 = vpack.c.bf16 %v3227, %v3226
  %v3262 = vpack.c.bf16 %v3229, %v3228
  %v3263 = vpack.c.bf16 %v3231, %v3230
  %3296 = vrot.lane.b32.xlu0 %v3232, 64
  %v3297 = vpop.permute.xlu0 %3296
  %3298 = vrot.lane.b32.xlu0 %v3233, 64
  %v3299 = vpop.permute.xlu0 %3298
  %3300 = vrot.lane.b32.xlu0 %v3234, 64
  %v3301 = vpop.permute.xlu0 %3300
  %3302 = vrot.lane.b32.xlu0 %v3235, 64
  %v3303 = vpop.permute.xlu0 %3302
  %3304 = vrot.lane.b32.xlu0 %v3236, 64
  %v3305 = vpop.permute.xlu0 %3304
  %3306 = vrot.lane.b32.xlu0 %v3237, 64
  %v3307 = vpop.permute.xlu0 %3306
  %3308 = vrot.lane.b32.xlu0 %v3238, 64
  %v3309 = vpop.permute.xlu0 %3308
  %3310 = vrot.lane.b32.xlu0 %v3239, 64
  %v3311 = vpop.permute.xlu0 %3310
  %3312 = vrot.lane.b32.xlu0 %v3240, 64
  %v3313 = vpop.permute.xlu0 %3312
  %3314 = vrot.lane.b32.xlu0 %v3241, 64
  %v3315 = vpop.permute.xlu0 %3314
  %3316 = vrot.lane.b32.xlu0 %v3242, 64
  %v3317 = vpop.permute.xlu0 %3316
  %3318 = vrot.lane.b32.xlu0 %v3243, 64
  %v3319 = vpop.permute.xlu0 %3318
  %3320 = vrot.lane.b32.xlu0 %v3244, 64
  %v3321 = vpop.permute.xlu0 %3320
  %3322 = vrot.lane.b32.xlu0 %v3245, 64
  %v3323 = vpop.permute.xlu0 %3322
  %3324 = vrot.lane.b32.xlu0 %v3246, 64
  %v3325 = vpop.permute.xlu0 %3324
  %3326 = vrot.lane.b32.xlu0 %v3247, 64
  %v3327 = vpop.permute.xlu0 %3326
  %3328 = vrot.lane.b32.xlu0 %v3248, 64
  %v3329 = vpop.permute.xlu0 %3328
  %3330 = vrot.lane.b32.xlu0 %v3249, 64
  %v3331 = vpop.permute.xlu0 %3330
  %3332 = vrot.lane.b32.xlu0 %v3250, 64
  %v3333 = vpop.permute.xlu0 %3332
  %3334 = vrot.lane.b32.xlu0 %v3251, 64
  %v3335 = vpop.permute.xlu0 %3334
  %3336 = vrot.lane.b32.xlu0 %v3252, 64
  %v3337 = vpop.permute.xlu0 %3336
  %3338 = vrot.lane.b32.xlu0 %v3253, 64
  %v3339 = vpop.permute.xlu0 %3338
  %3340 = vrot.lane.b32.xlu0 %v3254, 64
  %v3341 = vpop.permute.xlu0 %3340
  %3342 = vrot.lane.b32.xlu0 %v3255, 64
  %v3343 = vpop.permute.xlu0 %3342
  %3344 = vrot.lane.b32.xlu0 %v3256, 64
  %v3345 = vpop.permute.xlu0 %3344
  %3346 = vrot.lane.b32.xlu0 %v3257, 64
  %v3347 = vpop.permute.xlu0 %3346
  %3348 = vrot.lane.b32.xlu0 %v3258, 64
  %v3349 = vpop.permute.xlu0 %3348
  %3350 = vrot.lane.b32.xlu0 %v3259, 64
  %v3351 = vpop.permute.xlu0 %3350
  %3352 = vrot.lane.b32.xlu0 %v3260, 64
  %v3353 = vpop.permute.xlu0 %3352
  %3354 = vrot.lane.b32.xlu0 %v3261, 64
  %v3355 = vpop.permute.xlu0 %3354
  %3356 = vrot.lane.b32.xlu0 %v3262, 64
  %v3357 = vpop.permute.xlu0 %3356
  %3358 = vrot.lane.b32.xlu0 %v3263, 64
  %v3359 = vpop.permute.xlu0 %3358
  %vm3392 = vcmask 785920
  %3393 = vst.msk [vmem:[#allocation2] sm:$0xff] %vm3392, %v3297
  %3394 = vst.msk [vmem:[#allocation2 + $0x18] sm:$0xff] %vm3392, %v3299
  %3395 = vst.msk [vmem:[#allocation2 + $0x30] sm:$0xff] %vm3392, %v3301
  %3396 = vst.msk [vmem:[#allocation2 + $0x48] sm:$0xff] %vm3392, %v3303
  %3397 = vst.msk [vmem:[#allocation2 + $0x60] sm:$0xff] %vm3392, %v3305
  %3398 = vst.msk [vmem:[#allocation2 + $0x78] sm:$0xff] %vm3392, %v3307
  %3399 = vst.msk [vmem:[#allocation2 + $0x90] sm:$0xff] %vm3392, %v3309
  %3400 = vst.msk [vmem:[#allocation2 + $0xa8] sm:$0xff] %vm3392, %v3311
  %3401 = vst.msk [vmem:[#allocation2 + $0xc0] sm:$0xff] %vm3392, %v3313
  %3402 = vst.msk [vmem:[#allocation2 + $0xd8] sm:$0xff] %vm3392, %v3315
  %3403 = vst.msk [vmem:[#allocation2 + $0xf0] sm:$0xff] %vm3392, %v3317
  %3404 = vst.msk [vmem:[#allocation2 + $0x108] sm:$0xff] %vm3392, %v3319
  %3405 = vst.msk [vmem:[#allocation2 + $0x120] sm:$0xff] %vm3392, %v3321
  %3406 = vst.msk [vmem:[#allocation2 + $0x138] sm:$0xff] %vm3392, %v3323
  %3407 = vst.msk [vmem:[#allocation2 + $0x150] sm:$0xff] %vm3392, %v3325
  %3408 = vst.msk [vmem:[#allocation2 + $0x168] sm:$0xff] %vm3392, %v3327
  %3409 = vst.msk [vmem:[#allocation2 + $0x180] sm:$0xff] %vm3392, %v3329
  %3410 = vst.msk [vmem:[#allocation2 + $0x198] sm:$0xff] %vm3392, %v3331
  %3411 = vst.msk [vmem:[#allocation2 + $0x1b0] sm:$0xff] %vm3392, %v3333
  %3412 = vst.msk [vmem:[#allocation2 + $0x1c8] sm:$0xff] %vm3392, %v3335
  %3413 = vst.msk [vmem:[#allocation2 + $0x1e0] sm:$0xff] %vm3392, %v3337
  %3414 = vst.msk [vmem:[#allocation2 + $0x1f8] sm:$0xff] %vm3392, %v3339
  %3415 = vst.msk [vmem:[#allocation2 + $0x210] sm:$0xff] %vm3392, %v3341
  %3416 = vst.msk [vmem:[#allocation2 + $0x228] sm:$0xff] %vm3392, %v3343
  %3417 = vst.msk [vmem:[#allocation2 + $0x240] sm:$0xff] %vm3392, %v3345
  %3418 = vst.msk [vmem:[#allocation2 + $0x258] sm:$0xff] %vm3392, %v3347
  %3419 = vst.msk [vmem:[#allocation2 + $0x270] sm:$0xff] %vm3392, %v3349
  %3420 = vst.msk [vmem:[#allocation2 + $0x288] sm:$0xff] %vm3392, %v3351
  %3421 = vst.msk [vmem:[#allocation2 + $0x2a0] sm:$0xff] %vm3392, %v3353
  %3422 = vst.msk [vmem:[#allocation2 + $0x2b8] sm:$0xff] %vm3392, %v3355
  %3423 = vst.msk [vmem:[#allocation2 + $0x2d0] sm:$0xff] %vm3392, %v3357
  %3424 = vst.msk [vmem:[#allocation2 + $0x2e8] sm:$0xff] %vm3392, %v3359
  %v3425 = vsel %vm1884, 1, 0
  %v3426 = vsel %vm1885, 1, 0
  %v3427 = vsel %vm1886, 1, 0
  %v3428 = vsel %vm1887, 1, 0
  %v3429 = vsel %vm1888, 1, 0
  %v3430 = vsel %vm1889, 1, 0
  %v3431 = vsel %vm1890, 1, 0
  %v3432 = vsel %vm1891, 1, 0
  %v3433 = vsel %vm1892, 1, 0
  %v3434 = vsel %vm1893, 1, 0
  %v3435 = vsel %vm1894, 1, 0
  %v3436 = vsel %vm1895, 1, 0
  %v3437 = vsel %vm1896, 1, 0
  %v3438 = vsel %vm1897, 1, 0
  %v3439 = vsel %vm1898, 1, 0
  %v3440 = vsel %vm1899, 1, 0
  %v3441 = vsel %vm1900, 1, 0
  %v3442 = vsel %vm1901, 1, 0
  %v3443 = vsel %vm1902, 1, 0
  %v3444 = vsel %vm1903, 1, 0
  %v3445 = vsel %vm1904, 1, 0
  %v3446 = vsel %vm1905, 1, 0
  %v3447 = vsel %vm1906, 1, 0
  %v3448 = vsel %vm1907, 1, 0
  %v3449 = vsel %vm1908, 1, 0
  %v3450 = vsel %vm1909, 1, 0
  %v3451 = vsel %vm1910, 1, 0
  %v3452 = vsel %vm1911, 1, 0
  %v3453 = vsel %vm1912, 1, 0
  %v3454 = vsel %vm1913, 1, 0
  %v3455 = vsel %vm1914, 1, 0
  %v3456 = vsel %vm1915, 1, 0
  %v3457 = vsel %vm1916, 1, 0
  %v3458 = vsel %vm1917, 1, 0
  %v3459 = vsel %vm1918, 1, 0
  %v3460 = vsel %vm1919, 1, 0
  %v3461 = vsel %vm1920, 1, 0
  %v3462 = vsel %vm1921, 1, 0
  %v3463 = vsel %vm1922, 1, 0
  %v3464 = vsel %vm1923, 1, 0
  %v3465 = vsel %vm1924, 1, 0
  %v3466 = vsel %vm1925, 1, 0
  %v3467 = vsel %vm1926, 1, 0
  %v3468 = vsel %vm1927, 1, 0
  %v3469 = vsel %vm1928, 1, 0
  %v3470 = vsel %vm1929, 1, 0
  %v3471 = vsel %vm1930, 1, 0
  %v3472 = vsel %vm1931, 1, 0
  %v3473 = vsel %vm1932, 1, 0
  %v3474 = vsel %vm1933, 1, 0
  %v3475 = vsel %vm1934, 1, 0
  %v3476 = vsel %vm1935, 1, 0
  %v3477 = vsel %vm1936, 1, 0
  %v3478 = vsel %vm1937, 1, 0
  %v3479 = vsel %vm1938, 1, 0
  %v3480 = vsel %vm1939, 1, 0
  %v3481 = vsel %vm1940, 1, 0
  %v3482 = vsel %vm1941, 1, 0
  %v3483 = vsel %vm1942, 1, 0
  %v3484 = vsel %vm1943, 1, 0
  %v3485 = vsel %vm1944, 1, 0
  %v3486 = vsel %vm1945, 1, 0
  %v3487 = vsel %vm1946, 1, 0
  %v3488 = vsel %vm1947, 1, 0
  %vm3489 = vcmp.eq.s32.totalorder %v3425, 1
  %vm3490 = vcmp.eq.s32.totalorder %v3426, 1
  %vm3491 = vcmp.eq.s32.totalorder %v3427, 1
  %vm3492 = vcmp.eq.s32.totalorder %v3428, 1
  %vm3493 = vcmp.eq.s32.totalorder %v3429, 1
  %vm3494 = vcmp.eq.s32.totalorder %v3430, 1
  %vm3495 = vcmp.eq.s32.totalorder %v3431, 1
  %vm3496 = vcmp.eq.s32.totalorder %v3432, 1
  %vm3497 = vcmp.eq.s32.totalorder %v3433, 1
  %vm3498 = vcmp.eq.s32.totalorder %v3434, 1
  %vm3499 = vcmp.eq.s32.totalorder %v3435, 1
  %vm3500 = vcmp.eq.s32.totalorder %v3436, 1
  %vm3501 = vcmp.eq.s32.totalorder %v3437, 1
  %vm3502 = vcmp.eq.s32.totalorder %v3438, 1
  %vm3503 = vcmp.eq.s32.totalorder %v3439, 1
  %vm3504 = vcmp.eq.s32.totalorder %v3440, 1
  %vm3505 = vcmp.eq.s32.totalorder %v3441, 1
  %vm3506 = vcmp.eq.s32.totalorder %v3442, 1
  %vm3507 = vcmp.eq.s32.totalorder %v3443, 1
  %vm3508 = vcmp.eq.s32.totalorder %v3444, 1
  %vm3509 = vcmp.eq.s32.totalorder %v3445, 1
  %vm3510 = vcmp.eq.s32.totalorder %v3446, 1
  %vm3511 = vcmp.eq.s32.totalorder %v3447, 1
  %vm3512 = vcmp.eq.s32.totalorder %v3448, 1
  %vm3513 = vcmp.eq.s32.totalorder %v3449, 1
  %vm3514 = vcmp.eq.s32.totalorder %v3450, 1
  %vm3515 = vcmp.eq.s32.totalorder %v3451, 1
  %vm3516 = vcmp.eq.s32.totalorder %v3452, 1
  %vm3517 = vcmp.eq.s32.totalorder %v3453, 1
  %vm3518 = vcmp.eq.s32.totalorder %v3454, 1
  %vm3519 = vcmp.eq.s32.totalorder %v3455, 1
  %vm3520 = vcmp.eq.s32.totalorder %v3456, 1
  %vm3521 = vcmp.eq.s32.totalorder %v3457, 1
  %vm3522 = vcmp.eq.s32.totalorder %v3458, 1
  %vm3523 = vcmp.eq.s32.totalorder %v3459, 1
  %vm3524 = vcmp.eq.s32.totalorder %v3460, 1
  %vm3525 = vcmp.eq.s32.totalorder %v3461, 1
  %vm3526 = vcmp.eq.s32.totalorder %v3462, 1
  %vm3527 = vcmp.eq.s32.totalorder %v3463, 1
  %vm3528 = vcmp.eq.s32.totalorder %v3464, 1
  %vm3529 = vcmp.eq.s32.totalorder %v3465, 1
  %vm3530 = vcmp.eq.s32.totalorder %v3466, 1
  %vm3531 = vcmp.eq.s32.totalorder %v3467, 1
  %vm3532 = vcmp.eq.s32.totalorder %v3468, 1
  %vm3533 = vcmp.eq.s32.totalorder %v3469, 1
  %vm3534 = vcmp.eq.s32.totalorder %v3470, 1
  %vm3535 = vcmp.eq.s32.totalorder %v3471, 1
  %vm3536 = vcmp.eq.s32.totalorder %v3472, 1
  %vm3537 = vcmp.eq.s32.totalorder %v3473, 1
  %vm3538 = vcmp.eq.s32.totalorder %v3474, 1
  %vm3539 = vcmp.eq.s32.totalorder %v3475, 1
  %vm3540 = vcmp.eq.s32.totalorder %v3476, 1
  %vm3541 = vcmp.eq.s32.totalorder %v3477, 1
  %vm3542 = vcmp.eq.s32.totalorder %v3478, 1
  %vm3543 = vcmp.eq.s32.totalorder %v3479, 1
  %vm3544 = vcmp.eq.s32.totalorder %v3480, 1
  %vm3545 = vcmp.eq.s32.totalorder %v3481, 1
  %vm3546 = vcmp.eq.s32.totalorder %v3482, 1
  %vm3547 = vcmp.eq.s32.totalorder %v3483, 1
  %vm3548 = vcmp.eq.s32.totalorder %v3484, 1
  %vm3549 = vcmp.eq.s32.totalorder %v3485, 1
  %vm3550 = vcmp.eq.s32.totalorder %v3486, 1
  %vm3551 = vcmp.eq.s32.totalorder %v3487, 1
  %vm3552 = vcmp.eq.s32.totalorder %v3488, 1
  %v3553 = vsel %vm3489, %v2140, 0.0
  %v3554 = vsel %vm3490, %v2139, 0.0
  %v3555 = vsel %vm3491, %v2138, 0.0
  %v3556 = vsel %vm3492, %v2137, 0.0
  %v3557 = vsel %vm3493, %v2136, 0.0
  %v3558 = vsel %vm3494, %v2135, 0.0
  %v3559 = vsel %vm3495, %v2134, 0.0
  %v3560 = vsel %vm3496, %v2133, 0.0
  %v3561 = vsel %vm3497, %v2132, 0.0
  %v3562 = vsel %vm3498, %v2131, 0.0
  %v3563 = vsel %vm3499, %v2130, 0.0
  %v3564 = vsel %vm3500, %v2129, 0.0
  %v3565 = vsel %vm3501, %v2128, 0.0
  %v3566 = vsel %vm3502, %v2127, 0.0
  %v3567 = vsel %vm3503, %v2126, 0.0
  %v3568 = vsel %vm3504, %v2125, 0.0
  %v3569 = vsel %vm3505, %v2124, 0.0
  %v3570 = vsel %vm3506, %v2123, 0.0
  %v3571 = vsel %vm3507, %v2122, 0.0
  %v3572 = vsel %vm3508, %v2121, 0.0
  %v3573 = vsel %vm3509, %v2120, 0.0
  %v3574 = vsel %vm3510, %v2119, 0.0
  %v3575 = vsel %vm3511, %v2118, 0.0
  %v3576 = vsel %vm3512, %v2117, 0.0
  %v3577 = vsel %vm3513, %v2116, 0.0
  %v3578 = vsel %vm3514, %v2115, 0.0
  %v3579 = vsel %vm3515, %v2114, 0.0
  %v3580 = vsel %vm3516, %v2113, 0.0
  %v3581 = vsel %vm3517, %v2112, 0.0
  %v3582 = vsel %vm3518, %v2111, 0.0
  %v3583 = vsel %vm3519, %v2110, 0.0
  %v3584 = vsel %vm3520, %v2109, 0.0
  %v3585 = vsel %vm3521, %v2108, 0.0
  %v3586 = vsel %vm3522, %v2107, 0.0
  %v3587 = vsel %vm3523, %v2106, 0.0
  %v3588 = vsel %vm3524, %v2105, 0.0
  %v3589 = vsel %vm3525, %v2104, 0.0
  %v3590 = vsel %vm3526, %v2103, 0.0
  %v3591 = vsel %vm3527, %v2102, 0.0
  %v3592 = vsel %vm3528, %v2101, 0.0
  %v3593 = vsel %vm3529, %v2100, 0.0
  %v3594 = vsel %vm3530, %v2099, 0.0
  %v3595 = vsel %vm3531, %v2098, 0.0
  %v3596 = vsel %vm3532, %v2097, 0.0
  %v3597 = vsel %vm3533, %v2096, 0.0
  %v3598 = vsel %vm3534, %v2095, 0.0
  %v3599 = vsel %vm3535, %v2094, 0.0
  %v3600 = vsel %vm3536, %v2093, 0.0
  %v3601 = vsel %vm3537, %v2092, 0.0
  %v3602 = vsel %vm3538, %v2091, 0.0
  %v3603 = vsel %vm3539, %v2090, 0.0
  %v3604 = vsel %vm3540, %v2089, 0.0
  %v3605 = vsel %vm3541, %v2088, 0.0
  %v3606 = vsel %vm3542, %v2087, 0.0
  %v3607 = vsel %vm3543, %v2086, 0.0
  %v3608 = vsel %vm3544, %v2085, 0.0
  %v3609 = vsel %vm3545, %v2084, 0.0
  %v3610 = vsel %vm3546, %v2083, 0.0
  %v3611 = vsel %vm3547, %v2082, 0.0
  %v3612 = vsel %vm3548, %v2081, 0.0
  %v3613 = vsel %vm3549, %v2080, 0.0
  %v3614 = vsel %vm3550, %v2079, 0.0
  %v3615 = vsel %vm3551, %v2078, 0.0
  %v3616 = vsel %vm3552, %v2077, 0.0
  %v3617 = vpack.c.bf16 %v3554, %v3553
  %v3618 = vpack.c.bf16 %v3556, %v3555
  %v3619 = vpack.c.bf16 %v3558, %v3557
  %v3620 = vpack.c.bf16 %v3560, %v3559
  %v3621 = vpack.c.bf16 %v3562, %v3561
  %v3622 = vpack.c.bf16 %v3564, %v3563
  %v3623 = vpack.c.bf16 %v3566, %v3565
  %v3624 = vpack.c.bf16 %v3568, %v3567
  %v3625 = vpack.c.bf16 %v3570, %v3569
  %v3626 = vpack.c.bf16 %v3572, %v3571
  %v3627 = vpack.c.bf16 %v3574, %v3573
  %v3628 = vpack.c.bf16 %v3576, %v3575
  %v3629 = vpack.c.bf16 %v3578, %v3577
  %v3630 = vpack.c.bf16 %v3580, %v3579
  %v3631 = vpack.c.bf16 %v3582, %v3581
  %v3632 = vpack.c.bf16 %v3584, %v3583
  %v3633 = vpack.c.bf16 %v3586, %v3585
  %v3634 = vpack.c.bf16 %v3588, %v3587
  %v3635 = vpack.c.bf16 %v3590, %v3589
  %v3636 = vpack.c.bf16 %v3592, %v3591
  %v3637 = vpack.c.bf16 %v3594, %v3593
  %v3638 = vpack.c.bf16 %v3596, %v3595
  %v3639 = vpack.c.bf16 %v3598, %v3597
  %v3640 = vpack.c.bf16 %v3600, %v3599
  %v3641 = vpack.c.bf16 %v3602, %v3601
  %v3642 = vpack.c.bf16 %v3604, %v3603
  %v3643 = vpack.c.bf16 %v3606, %v3605
  %v3644 = vpack.c.bf16 %v3608, %v3607
  %v3645 = vpack.c.bf16 %v3610, %v3609
  %v3646 = vpack.c.bf16 %v3612, %v3611
  %v3647 = vpack.c.bf16 %v3614, %v3613
  %v3648 = vpack.c.bf16 %v3616, %v3615
  %3681 = vrot.lane.b32.xlu0 %v3617, 96
  %v3682 = vpop.permute.xlu0 %3681
  %3683 = vrot.lane.b32.xlu0 %v3618, 96
  %v3684 = vpop.permute.xlu0 %3683
  %3685 = vrot.lane.b32.xlu0 %v3619, 96
  %v3686 = vpop.permute.xlu0 %3685
  %3687 = vrot.lane.b32.xlu0 %v3620, 96
  %v3688 = vpop.permute.xlu0 %3687
  %3689 = vrot.lane.b32.xlu0 %v3621, 96
  %v3690 = vpop.permute.xlu0 %3689
  %3691 = vrot.lane.b32.xlu0 %v3622, 96
  %v3692 = vpop.permute.xlu0 %3691
  %3693 = vrot.lane.b32.xlu0 %v3623, 96
  %v3694 = vpop.permute.xlu0 %3693
  %3695 = vrot.lane.b32.xlu0 %v3624, 96
  %v3696 = vpop.permute.xlu0 %3695
  %3697 = vrot.lane.b32.xlu0 %v3625, 96
  %v3698 = vpop.permute.xlu0 %3697
  %3699 = vrot.lane.b32.xlu0 %v3626, 96
  %v3700 = vpop.permute.xlu0 %3699
  %3701 = vrot.lane.b32.xlu0 %v3627, 96
  %v3702 = vpop.permute.xlu0 %3701
  %3703 = vrot.lane.b32.xlu0 %v3628, 96
  %v3704 = vpop.permute.xlu0 %3703
  %3705 = vrot.lane.b32.xlu0 %v3629, 96
  %v3706 = vpop.permute.xlu0 %3705
  %3707 = vrot.lane.b32.xlu0 %v3630, 96
  %v3708 = vpop.permute.xlu0 %3707
  %3709 = vrot.lane.b32.xlu0 %v3631, 96
  %v3710 = vpop.permute.xlu0 %3709
  %3711 = vrot.lane.b32.xlu0 %v3632, 96
  %v3712 = vpop.permute.xlu0 %3711
  %3713 = vrot.lane.b32.xlu0 %v3633, 96
  %v3714 = vpop.permute.xlu0 %3713
  %3715 = vrot.lane.b32.xlu0 %v3634, 96
  %v3716 = vpop.permute.xlu0 %3715
  %3717 = vrot.lane.b32.xlu0 %v3635, 96
  %v3718 = vpop.permute.xlu0 %3717
  %3719 = vrot.lane.b32.xlu0 %v3636, 96
  %v3720 = vpop.permute.xlu0 %3719
  %3721 = vrot.lane.b32.xlu0 %v3637, 96
  %v3722 = vpop.permute.xlu0 %3721
  %3723 = vrot.lane.b32.xlu0 %v3638, 96
  %v3724 = vpop.permute.xlu0 %3723
  %3725 = vrot.lane.b32.xlu0 %v3639, 96
  %v3726 = vpop.permute.xlu0 %3725
  %3727 = vrot.lane.b32.xlu0 %v3640, 96
  %v3728 = vpop.permute.xlu0 %3727
  %3729 = vrot.lane.b32.xlu0 %v3641, 96
  %v3730 = vpop.permute.xlu0 %3729
  %3731 = vrot.lane.b32.xlu0 %v3642, 96
  %v3732 = vpop.permute.xlu0 %3731
  %3733 = vrot.lane.b32.xlu0 %v3643, 96
  %v3734 = vpop.permute.xlu0 %3733
  %3735 = vrot.lane.b32.xlu0 %v3644, 96
  %v3736 = vpop.permute.xlu0 %3735
  %3737 = vrot.lane.b32.xlu0 %v3645, 96
  %v3738 = vpop.permute.xlu0 %3737
  %3739 = vrot.lane.b32.xlu0 %v3646, 96
  %v3740 = vpop.permute.xlu0 %3739
  %3741 = vrot.lane.b32.xlu0 %v3647, 96
  %v3742 = vpop.permute.xlu0 %3741
  %3743 = vrot.lane.b32.xlu0 %v3648, 96
  %v3744 = vpop.permute.xlu0 %3743
  %vm3777 = vcmask 1048320
  %3778 = vst.msk [vmem:[#allocation2] sm:$0xff] %vm3777, %v3682
  %3779 = vst.msk [vmem:[#allocation2 + $0x18] sm:$0xff] %vm3777, %v3684
  %3780 = vst.msk [vmem:[#allocation2 + $0x30] sm:$0xff] %vm3777, %v3686
  %3781 = vst.msk [vmem:[#allocation2 + $0x48] sm:$0xff] %vm3777, %v3688
  %3782 = vst.msk [vmem:[#allocation2 + $0x60] sm:$0xff] %vm3777, %v3690
  %3783 = vst.msk [vmem:[#allocation2 + $0x78] sm:$0xff] %vm3777, %v3692
  %3784 = vst.msk [vmem:[#allocation2 + $0x90] sm:$0xff] %vm3777, %v3694
  %3785 = vst.msk [vmem:[#allocation2 + $0xa8] sm:$0xff] %vm3777, %v3696
  %3786 = vst.msk [vmem:[#allocation2 + $0xc0] sm:$0xff] %vm3777, %v3698
  %3787 = vst.msk [vmem:[#allocation2 + $0xd8] sm:$0xff] %vm3777, %v3700
  %3788 = vst.msk [vmem:[#allocation2 + $0xf0] sm:$0xff] %vm3777, %v3702
  %3789 = vst.msk [vmem:[#allocation2 + $0x108] sm:$0xff] %vm3777, %v3704
  %3790 = vst.msk [vmem:[#allocation2 + $0x120] sm:$0xff] %vm3777, %v3706
  %3791 = vst.msk [vmem:[#allocation2 + $0x138] sm:$0xff] %vm3777, %v3708
  %3792 = vst.msk [vmem:[#allocation2 + $0x150] sm:$0xff] %vm3777, %v3710
  %3793 = vst.msk [vmem:[#allocation2 + $0x168] sm:$0xff] %vm3777, %v3712
  %3794 = vst.msk [vmem:[#allocation2 + $0x180] sm:$0xff] %vm3777, %v3714
  %3795 = vst.msk [vmem:[#allocation2 + $0x198] sm:$0xff] %vm3777, %v3716
  %3796 = vst.msk [vmem:[#allocation2 + $0x1b0] sm:$0xff] %vm3777, %v3718
  %3797 = vst.msk [vmem:[#allocation2 + $0x1c8] sm:$0xff] %vm3777, %v3720
  %3798 = vst.msk [vmem:[#allocation2 + $0x1e0] sm:$0xff] %vm3777, %v3722
  %3799 = vst.msk [vmem:[#allocation2 + $0x1f8] sm:$0xff] %vm3777, %v3724
  %3800 = vst.msk [vmem:[#allocation2 + $0x210] sm:$0xff] %vm3777, %v3726
  %3801 = vst.msk [vmem:[#allocation2 + $0x228] sm:$0xff] %vm3777, %v3728
  %3802 = vst.msk [vmem:[#allocation2 + $0x240] sm:$0xff] %vm3777, %v3730
  %3803 = vst.msk [vmem:[#allocation2 + $0x258] sm:$0xff] %vm3777, %v3732
  %3804 = vst.msk [vmem:[#allocation2 + $0x270] sm:$0xff] %vm3777, %v3734
  %3805 = vst.msk [vmem:[#allocation2 + $0x288] sm:$0xff] %vm3777, %v3736
  %3806 = vst.msk [vmem:[#allocation2 + $0x2a0] sm:$0xff] %vm3777, %v3738
  %3807 = vst.msk [vmem:[#allocation2 + $0x2b8] sm:$0xff] %vm3777, %v3740
  %3808 = vst.msk [vmem:[#allocation2 + $0x2d0] sm:$0xff] %vm3777, %v3742
  %3809 = vst.msk [vmem:[#allocation2 + $0x2e8] sm:$0xff] %vm3777, %v3744
  %v3874 = vunpack.c.l.b16 %v27
  %v3875 = vunpack.c.l.b16 %v28
  %v3876 = vunpack.c.l.b16 %v29
  %v3877 = vunpack.c.l.b16 %v30
  %v3878 = vunpack.c.l.b16 %v31
  %v3879 = vunpack.c.l.b16 %v32
  %v3880 = vunpack.c.l.b16 %v33
  %v3881 = vunpack.c.l.b16 %v34
  %v3882 = vunpack.c.l.b16 %v35
  %v3883 = vunpack.c.l.b16 %v36
  %v3884 = vunpack.c.l.b16 %v37
  %v3885 = vunpack.c.l.b16 %v38
  %v3886 = vunpack.c.l.b16 %v39
  %v3887 = vunpack.c.l.b16 %v40
  %v3888 = vunpack.c.l.b16 %v41
  %v3889 = vunpack.c.l.b16 %v42
  %v3890 = vunpack.c.l.b16 %v43
  %v3891 = vunpack.c.l.b16 %v44
  %v3892 = vunpack.c.l.b16 %v45
  %v3893 = vunpack.c.l.b16 %v46
  %v3894 = vunpack.c.l.b16 %v47
  %v3895 = vunpack.c.l.b16 %v48
  %v3896 = vunpack.c.l.b16 %v49
  %v3897 = vunpack.c.l.b16 %v50
  %v3898 = vunpack.c.l.b16 %v51
  %v3899 = vunpack.c.l.b16 %v52
  %v3900 = vunpack.c.l.b16 %v53
  %v3901 = vunpack.c.l.b16 %v54
  %v3902 = vunpack.c.l.b16 %v55
  %v3903 = vunpack.c.l.b16 %v56
  %v3904 = vunpack.c.l.b16 %v57
  %v3905 = vunpack.c.l.b16 %v58
  %v3906 = vunpack.c.l.b16 %v59
  %v3907 = vunpack.c.l.b16 %v60
  %v3908 = vunpack.c.l.b16 %v61
  %v3909 = vunpack.c.l.b16 %v62
  %v3910 = vunpack.c.l.b16 %v63
  %v3911 = vunpack.c.l.b16 %v64
  %v3912 = vunpack.c.l.b16 %v65
  %v3913 = vunpack.c.l.b16 %v66
  %v3914 = vunpack.c.l.b16 %v67
  %v3915 = vunpack.c.l.b16 %v68
  %v3916 = vunpack.c.l.b16 %v69
  %v3917 = vunpack.c.l.b16 %v70
  %v3918 = vunpack.c.l.b16 %v71
  %v3919 = vunpack.c.l.b16 %v72
  %v3920 = vunpack.c.l.b16 %v73
  %v3921 = vunpack.c.l.b16 %v74
  %v3922 = vunpack.c.l.b16 %v75
  %v3923 = vunpack.c.l.b16 %v76
  %v3924 = vunpack.c.l.b16 %v77
  %v3925 = vunpack.c.l.b16 %v78
  %v3926 = vunpack.c.l.b16 %v79
  %v3927 = vunpack.c.l.b16 %v80
  %v3928 = vunpack.c.l.b16 %v81
  %v3929 = vunpack.c.l.b16 %v82
  %v3930 = vunpack.c.l.b16 %v83
  %v3931 = vunpack.c.l.b16 %v84
  %v3932 = vunpack.c.l.b16 %v85
  %v3933 = vunpack.c.l.b16 %v86
  %v3934 = vunpack.c.l.b16 %v87
  %v3935 = vunpack.c.l.b16 %v88
  %v3936 = vunpack.c.l.b16 %v89
  %v3937 = vunpack.c.l.b16 %v90
  %v3938 = vpack.c.b16 %v3875, %v3874
  %v3939 = vpack.c.b16 %v3877, %v3876
  %v3940 = vpack.c.b16 %v3879, %v3878
  %v3941 = vpack.c.b16 %v3881, %v3880
  %v3942 = vpack.c.b16 %v3883, %v3882
  %v3943 = vpack.c.b16 %v3885, %v3884
  %v3944 = vpack.c.b16 %v3887, %v3886
  %v3945 = vpack.c.b16 %v3889, %v3888
  %v3946 = vpack.c.b16 %v3891, %v3890
  %v3947 = vpack.c.b16 %v3893, %v3892
  %v3948 = vpack.c.b16 %v3895, %v3894
  %v3949 = vpack.c.b16 %v3897, %v3896
  %v3950 = vpack.c.b16 %v3899, %v3898
  %v3951 = vpack.c.b16 %v3901, %v3900
  %v3952 = vpack.c.b16 %v3903, %v3902
  %v3953 = vpack.c.b16 %v3905, %v3904
  %v3954 = vpack.c.b16 %v3907, %v3906
  %v3955 = vpack.c.b16 %v3909, %v3908
  %v3956 = vpack.c.b16 %v3911, %v3910
  %v3957 = vpack.c.b16 %v3913, %v3912
  %v3958 = vpack.c.b16 %v3915, %v3914
  %v3959 = vpack.c.b16 %v3917, %v3916
  %v3960 = vpack.c.b16 %v3919, %v3918
  %v3961 = vpack.c.b16 %v3921, %v3920
  %v3962 = vpack.c.b16 %v3923, %v3922
  %v3963 = vpack.c.b16 %v3925, %v3924
  %v3964 = vpack.c.b16 %v3927, %v3926
  %v3965 = vpack.c.b16 %v3929, %v3928
  %v3966 = vpack.c.b16 %v3931, %v3930
  %v3967 = vpack.c.b16 %v3933, %v3932
  %v3968 = vpack.c.b16 %v3935, %v3934
  %v3969 = vpack.c.b16 %v3937, %v3936
  %4002 = vst.msk [vmem:[#allocation2 + $0x8] sm:$0xff] %vm2429, %v3938
  %4003 = vst.msk [vmem:[#allocation2 + $0x20] sm:$0xff] %vm2429, %v3939
  %4004 = vst.msk [vmem:[#allocation2 + $0x38] sm:$0xff] %vm2429, %v3940
  %4005 = vst.msk [vmem:[#allocation2 + $0x50] sm:$0xff] %vm2429, %v3941
  %4006 = vst.msk [vmem:[#allocation2 + $0x68] sm:$0xff] %vm2429, %v3942
  %4007 = vst.msk [vmem:[#allocation2 + $0x80] sm:$0xff] %vm2429, %v3943
  %4008 = vst.msk [vmem:[#allocation2 + $0x98] sm:$0xff] %vm2429, %v3944
  %4009 = vst.msk [vmem:[#allocation2 + $0xb0] sm:$0xff] %vm2429, %v3945
  %4010 = vst.msk [vmem:[#allocation2 + $0xc8] sm:$0xff] %vm2429, %v3946
  %4011 = vst.msk [vmem:[#allocation2 + $0xe0] sm:$0xff] %vm2429, %v3947
  %4012 = vst.msk [vmem:[#allocation2 + $0xf8] sm:$0xff] %vm2429, %v3948
  %4013 = vst.msk [vmem:[#allocation2 + $0x110] sm:$0xff] %vm2429, %v3949
  %4014 = vst.msk [vmem:[#allocation2 + $0x128] sm:$0xff] %vm2429, %v3950
  %4015 = vst.msk [vmem:[#allocation2 + $0x140] sm:$0xff] %vm2429, %v3951
  %4016 = vst.msk [vmem:[#allocation2 + $0x158] sm:$0xff] %vm2429, %v3952
  %4017 = vst.msk [vmem:[#allocation2 + $0x170] sm:$0xff] %vm2429, %v3953
  %4018 = vst.msk [vmem:[#allocation2 + $0x188] sm:$0xff] %vm2429, %v3954
  %4019 = vst.msk [vmem:[#allocation2 + $0x1a0] sm:$0xff] %vm2429, %v3955
  %4020 = vst.msk [vmem:[#allocation2 + $0x1b8] sm:$0xff] %vm2429, %v3956
  %4021 = vst.msk [vmem:[#allocation2 + $0x1d0] sm:$0xff] %vm2429, %v3957
  %4022 = vst.msk [vmem:[#allocation2 + $0x1e8] sm:$0xff] %vm2429, %v3958
  %4023 = vst.msk [vmem:[#allocation2 + $0x200] sm:$0xff] %vm2429, %v3959
  %4024 = vst.msk [vmem:[#allocation2 + $0x218] sm:$0xff] %vm2429, %v3960
  %4025 = vst.msk [vmem:[#allocation2 + $0x230] sm:$0xff] %vm2429, %v3961
  %4026 = vst.msk [vmem:[#allocation2 + $0x248] sm:$0xff] %vm2429, %v3962
  %4027 = vst.msk [vmem:[#allocation2 + $0x260] sm:$0xff] %vm2429, %v3963
  %4028 = vst.msk [vmem:[#allocation2 + $0x278] sm:$0xff] %vm2429, %v3964
  %4029 = vst.msk [vmem:[#allocation2 + $0x290] sm:$0xff] %vm2429, %v3965
  %4030 = vst.msk [vmem:[#allocation2 + $0x2a8] sm:$0xff] %vm2429, %v3966
  %4031 = vst.msk [vmem:[#allocation2 + $0x2c0] sm:$0xff] %vm2429, %v3967
  %4032 = vst.msk [vmem:[#allocation2 + $0x2d8] sm:$0xff] %vm2429, %v3968
  %4033 = vst.msk [vmem:[#allocation2 + $0x2f0] sm:$0xff] %vm2429, %v3969
  %v4034 = vsel %vm1948, 1, 0
  %v4035 = vsel %vm1949, 1, 0
  %v4036 = vsel %vm1950, 1, 0
  %v4037 = vsel %vm1951, 1, 0
  %v4038 = vsel %vm1952, 1, 0
  %v4039 = vsel %vm1953, 1, 0
  %v4040 = vsel %vm1954, 1, 0
  %v4041 = vsel %vm1955, 1, 0
  %v4042 = vsel %vm1956, 1, 0
  %v4043 = vsel %vm1957, 1, 0
  %v4044 = vsel %vm1958, 1, 0
  %v4045 = vsel %vm1959, 1, 0
  %v4046 = vsel %vm1960, 1, 0
  %v4047 = vsel %vm1961, 1, 0
  %v4048 = vsel %vm1962, 1, 0
  %v4049 = vsel %vm1963, 1, 0
  %v4050 = vsel %vm1964, 1, 0
  %v4051 = vsel %vm1965, 1, 0
  %v4052 = vsel %vm1966, 1, 0
  %v4053 = vsel %vm1967, 1, 0
  %v4054 = vsel %vm1968, 1, 0
  %v4055 = vsel %vm1969, 1, 0
  %v4056 = vsel %vm1970, 1, 0
  %v4057 = vsel %vm1971, 1, 0
  %v4058 = vsel %vm1972, 1, 0
  %v4059 = vsel %vm1973, 1, 0
  %v4060 = vsel %vm1974, 1, 0
  %v4061 = vsel %vm1975, 1, 0
  %v4062 = vsel %vm1976, 1, 0
  %v4063 = vsel %vm1977, 1, 0
  %v4064 = vsel %vm1978, 1, 0
  %v4065 = vsel %vm1979, 1, 0
  %v4066 = vsel %vm1980, 1, 0
  %v4067 = vsel %vm1981, 1, 0
  %v4068 = vsel %vm1982, 1, 0
  %v4069 = vsel %vm1983, 1, 0
  %v4070 = vsel %vm1984, 1, 0
  %v4071 = vsel %vm1985, 1, 0
  %v4072 = vsel %vm1986, 1, 0
  %v4073 = vsel %vm1987, 1, 0
  %v4074 = vsel %vm1988, 1, 0
  %v4075 = vsel %vm1989, 1, 0
  %v4076 = vsel %vm1990, 1, 0
  %v4077 = vsel %vm1991, 1, 0
  %v4078 = vsel %vm1992, 1, 0
  %v4079 = vsel %vm1993, 1, 0
  %v4080 = vsel %vm1994, 1, 0
  %v4081 = vsel %vm1995, 1, 0
  %v4082 = vsel %vm1996, 1, 0
  %v4083 = vsel %vm1997, 1, 0
  %v4084 = vsel %vm1998, 1, 0
  %v4085 = vsel %vm1999, 1, 0
  %v4086 = vsel %vm2000, 1, 0
  %v4087 = vsel %vm2001, 1, 0
  %v4088 = vsel %vm2002, 1, 0
  %v4089 = vsel %vm2003, 1, 0
  %v4090 = vsel %vm2004, 1, 0
  %v4091 = vsel %vm2005, 1, 0
  %v4092 = vsel %vm2006, 1, 0
  %v4093 = vsel %vm2007, 1, 0
  %v4094 = vsel %vm2008, 1, 0
  %v4095 = vsel %vm2009, 1, 0
  %v4096 = vsel %vm2010, 1, 0
  %v4097 = vsel %vm2011, 1, 0
  %vm4098 = vcmp.eq.s32.totalorder %v4034, 1
  %vm4099 = vcmp.eq.s32.totalorder %v4035, 1
  %vm4100 = vcmp.eq.s32.totalorder %v4036, 1
  %vm4101 = vcmp.eq.s32.totalorder %v4037, 1
  %vm4102 = vcmp.eq.s32.totalorder %v4038, 1
  %vm4103 = vcmp.eq.s32.totalorder %v4039, 1
  %vm4104 = vcmp.eq.s32.totalorder %v4040, 1
  %vm4105 = vcmp.eq.s32.totalorder %v4041, 1
  %vm4106 = vcmp.eq.s32.totalorder %v4042, 1
  %vm4107 = vcmp.eq.s32.totalorder %v4043, 1
  %vm4108 = vcmp.eq.s32.totalorder %v4044, 1
  %vm4109 = vcmp.eq.s32.totalorder %v4045, 1
  %vm4110 = vcmp.eq.s32.totalorder %v4046, 1
  %vm4111 = vcmp.eq.s32.totalorder %v4047, 1
  %vm4112 = vcmp.eq.s32.totalorder %v4048, 1
  %vm4113 = vcmp.eq.s32.totalorder %v4049, 1
  %vm4114 = vcmp.eq.s32.totalorder %v4050, 1
  %vm4115 = vcmp.eq.s32.totalorder %v4051, 1
  %vm4116 = vcmp.eq.s32.totalorder %v4052, 1
  %vm4117 = vcmp.eq.s32.totalorder %v4053, 1
  %vm4118 = vcmp.eq.s32.totalorder %v4054, 1
  %vm4119 = vcmp.eq.s32.totalorder %v4055, 1
  %vm4120 = vcmp.eq.s32.totalorder %v4056, 1
  %vm4121 = vcmp.eq.s32.totalorder %v4057, 1
  %vm4122 = vcmp.eq.s32.totalorder %v4058, 1
  %vm4123 = vcmp.eq.s32.totalorder %v4059, 1
  %vm4124 = vcmp.eq.s32.totalorder %v4060, 1
  %vm4125 = vcmp.eq.s32.totalorder %v4061, 1
  %vm4126 = vcmp.eq.s32.totalorder %v4062, 1
  %vm4127 = vcmp.eq.s32.totalorder %v4063, 1
  %vm4128 = vcmp.eq.s32.totalorder %v4064, 1
  %vm4129 = vcmp.eq.s32.totalorder %v4065, 1
  %vm4130 = vcmp.eq.s32.totalorder %v4066, 1
  %vm4131 = vcmp.eq.s32.totalorder %v4067, 1
  %vm4132 = vcmp.eq.s32.totalorder %v4068, 1
  %vm4133 = vcmp.eq.s32.totalorder %v4069, 1
  %vm4134 = vcmp.eq.s32.totalorder %v4070, 1
  %vm4135 = vcmp.eq.s32.totalorder %v4071, 1
  %vm4136 = vcmp.eq.s32.totalorder %v4072, 1
  %vm4137 = vcmp.eq.s32.totalorder %v4073, 1
  %vm4138 = vcmp.eq.s32.totalorder %v4074, 1
  %vm4139 = vcmp.eq.s32.totalorder %v4075, 1
  %vm4140 = vcmp.eq.s32.totalorder %v4076, 1
  %vm4141 = vcmp.eq.s32.totalorder %v4077, 1
  %vm4142 = vcmp.eq.s32.totalorder %v4078, 1
  %vm4143 = vcmp.eq.s32.totalorder %v4079, 1
  %vm4144 = vcmp.eq.s32.totalorder %v4080, 1
  %vm4145 = vcmp.eq.s32.totalorder %v4081, 1
  %vm4146 = vcmp.eq.s32.totalorder %v4082, 1
  %vm4147 = vcmp.eq.s32.totalorder %v4083, 1
  %vm4148 = vcmp.eq.s32.totalorder %v4084, 1
  %vm4149 = vcmp.eq.s32.totalorder %v4085, 1
  %vm4150 = vcmp.eq.s32.totalorder %v4086, 1
  %vm4151 = vcmp.eq.s32.totalorder %v4087, 1
  %vm4152 = vcmp.eq.s32.totalorder %v4088, 1
  %vm4153 = vcmp.eq.s32.totalorder %v4089, 1
  %vm4154 = vcmp.eq.s32.totalorder %v4090, 1
  %vm4155 = vcmp.eq.s32.totalorder %v4091, 1
  %vm4156 = vcmp.eq.s32.totalorder %v4092, 1
  %vm4157 = vcmp.eq.s32.totalorder %v4093, 1
  %vm4158 = vcmp.eq.s32.totalorder %v4094, 1
  %vm4159 = vcmp.eq.s32.totalorder %v4095, 1
  %vm4160 = vcmp.eq.s32.totalorder %v4096, 1
  %vm4161 = vcmp.eq.s32.totalorder %v4097, 1
  %v4162 = vsel %vm4098, %v2974, 0.0
  %v4163 = vsel %vm4099, %v2973, 0.0
  %v4164 = vsel %vm4100, %v2972, 0.0
  %v4165 = vsel %vm4101, %v2971, 0.0
  %v4166 = vsel %vm4102, %v2970, 0.0
  %v4167 = vsel %vm4103, %v2969, 0.0
  %v4168 = vsel %vm4104, %v2968, 0.0
  %v4169 = vsel %vm4105, %v2967, 0.0
  %v4170 = vsel %vm4106, %v2966, 0.0
  %v4171 = vsel %vm4107, %v2965, 0.0
  %v4172 = vsel %vm4108, %v2964, 0.0
  %v4173 = vsel %vm4109, %v2963, 0.0
  %v4174 = vsel %vm4110, %v2962, 0.0
  %v4175 = vsel %vm4111, %v2961, 0.0
  %v4176 = vsel %vm4112, %v2960, 0.0
  %v4177 = vsel %vm4113, %v2959, 0.0
  %v4178 = vsel %vm4114, %v2958, 0.0
  %v4179 = vsel %vm4115, %v2957, 0.0
  %v4180 = vsel %vm4116, %v2956, 0.0
  %v4181 = vsel %vm4117, %v2955, 0.0
  %v4182 = vsel %vm4118, %v2954, 0.0
  %v4183 = vsel %vm4119, %v2953, 0.0
  %v4184 = vsel %vm4120, %v2952, 0.0
  %v4185 = vsel %vm4121, %v2951, 0.0
  %v4186 = vsel %vm4122, %v2950, 0.0
  %v4187 = vsel %vm4123, %v2949, 0.0
  %v4188 = vsel %vm4124, %v2948, 0.0
  %v4189 = vsel %vm4125, %v2947, 0.0
  %v4190 = vsel %vm4126, %v2946, 0.0
  %v4191 = vsel %vm4127, %v2945, 0.0
  %v4192 = vsel %vm4128, %v2944, 0.0
  %v4193 = vsel %vm4129, %v2943, 0.0
  %v4194 = vsel %vm4130, %v2942, 0.0
  %v4195 = vsel %vm4131, %v2941, 0.0
  %v4196 = vsel %vm4132, %v2940, 0.0
  %v4197 = vsel %vm4133, %v2939, 0.0
  %v4198 = vsel %vm4134, %v2938, 0.0
  %v4199 = vsel %vm4135, %v2937, 0.0
  %v4200 = vsel %vm4136, %v2936, 0.0
  %v4201 = vsel %vm4137, %v2935, 0.0
  %v4202 = vsel %vm4138, %v2934, 0.0
  %v4203 = vsel %vm4139, %v2933, 0.0
  %v4204 = vsel %vm4140, %v2932, 0.0
  %v4205 = vsel %vm4141, %v2931, 0.0
  %v4206 = vsel %vm4142, %v2930, 0.0
  %v4207 = vsel %vm4143, %v2929, 0.0
  %v4208 = vsel %vm4144, %v2928, 0.0
  %v4209 = vsel %vm4145, %v2927, 0.0
  %v4210 = vsel %vm4146, %v2926, 0.0
  %v4211 = vsel %vm4147, %v2925, 0.0
  %v4212 = vsel %vm4148, %v2924, 0.0
  %v4213 = vsel %vm4149, %v2923, 0.0
  %v4214 = vsel %vm4150, %v2922, 0.0
  %v4215 = vsel %vm4151, %v2921, 0.0
  %v4216 = vsel %vm4152, %v2920, 0.0
  %v4217 = vsel %vm4153, %v2919, 0.0
  %v4218 = vsel %vm4154, %v2918, 0.0
  %v4219 = vsel %vm4155, %v2917, 0.0
  %v4220 = vsel %vm4156, %v2916, 0.0
  %v4221 = vsel %vm4157, %v2915, 0.0
  %v4222 = vsel %vm4158, %v2914, 0.0
  %v4223 = vsel %vm4159, %v2913, 0.0
  %v4224 = vsel %vm4160, %v2912, 0.0
  %v4225 = vsel %vm4161, %v2975, 0.0
  %v4226 = vpack.c.bf16 %v4163, %v4162
  %v4227 = vpack.c.bf16 %v4165, %v4164
  %v4228 = vpack.c.bf16 %v4167, %v4166
  %v4229 = vpack.c.bf16 %v4169, %v4168
  %v4230 = vpack.c.bf16 %v4171, %v4170
  %v4231 = vpack.c.bf16 %v4173, %v4172
  %v4232 = vpack.c.bf16 %v4175, %v4174
  %v4233 = vpack.c.bf16 %v4177, %v4176
  %v4234 = vpack.c.bf16 %v4179, %v4178
  %v4235 = vpack.c.bf16 %v4181, %v4180
  %v4236 = vpack.c.bf16 %v4183, %v4182
  %v4237 = vpack.c.bf16 %v4185, %v4184
  %v4238 = vpack.c.bf16 %v4187, %v4186
  %v4239 = vpack.c.bf16 %v4189, %v4188
  %v4240 = vpack.c.bf16 %v4191, %v4190
  %v4241 = vpack.c.bf16 %v4193, %v4192
  %v4242 = vpack.c.bf16 %v4195, %v4194
  %v4243 = vpack.c.bf16 %v4197, %v4196
  %v4244 = vpack.c.bf16 %v4199, %v4198
  %v4245 = vpack.c.bf16 %v4201, %v4200
  %v4246 = vpack.c.bf16 %v4203, %v4202
  %v4247 = vpack.c.bf16 %v4205, %v4204
  %v4248 = vpack.c.bf16 %v4207, %v4206
  %v4249 = vpack.c.bf16 %v4209, %v4208
  %v4250 = vpack.c.bf16 %v4211, %v4210
  %v4251 = vpack.c.bf16 %v4213, %v4212
  %v4252 = vpack.c.bf16 %v4215, %v4214
  %v4253 = vpack.c.bf16 %v4217, %v4216
  %v4254 = vpack.c.bf16 %v4219, %v4218
  %v4255 = vpack.c.bf16 %v4221, %v4220
  %v4256 = vpack.c.bf16 %v4223, %v4222
  %v4257 = vpack.c.bf16 %v4225, %v4224
  %4290 = vrot.lane.b32.xlu0 %v4226, 32
  %v4291 = vpop.permute.xlu0 %4290
  %4292 = vrot.lane.b32.xlu0 %v4227, 32
  %v4293 = vpop.permute.xlu0 %4292
  %4294 = vrot.lane.b32.xlu0 %v4228, 32
  %v4295 = vpop.permute.xlu0 %4294
  %4296 = vrot.lane.b32.xlu0 %v4229, 32
  %v4297 = vpop.permute.xlu0 %4296
  %4298 = vrot.lane.b32.xlu0 %v4230, 32
  %v4299 = vpop.permute.xlu0 %4298
  %4300 = vrot.lane.b32.xlu0 %v4231, 32
  %v4301 = vpop.permute.xlu0 %4300
  %4302 = vrot.lane.b32.xlu0 %v4232, 32
  %v4303 = vpop.permute.xlu0 %4302
  %4304 = vrot.lane.b32.xlu0 %v4233, 32
  %v4305 = vpop.permute.xlu0 %4304
  %4306 = vrot.lane.b32.xlu0 %v4234, 32
  %v4307 = vpop.permute.xlu0 %4306
  %4308 = vrot.lane.b32.xlu0 %v4235, 32
  %v4309 = vpop.permute.xlu0 %4308
  %4310 = vrot.lane.b32.xlu0 %v4236, 32
  %v4311 = vpop.permute.xlu0 %4310
  %4312 = vrot.lane.b32.xlu0 %v4237, 32
  %v4313 = vpop.permute.xlu0 %4312
  %4314 = vrot.lane.b32.xlu0 %v4238, 32
  %v4315 = vpop.permute.xlu0 %4314
  %4316 = vrot.lane.b32.xlu0 %v4239, 32
  %v4317 = vpop.permute.xlu0 %4316
  %4318 = vrot.lane.b32.xlu0 %v4240, 32
  %v4319 = vpop.permute.xlu0 %4318
  %4320 = vrot.lane.b32.xlu0 %v4241, 32
  %v4321 = vpop.permute.xlu0 %4320
  %4322 = vrot.lane.b32.xlu0 %v4242, 32
  %v4323 = vpop.permute.xlu0 %4322
  %4324 = vrot.lane.b32.xlu0 %v4243, 32
  %v4325 = vpop.permute.xlu0 %4324
  %4326 = vrot.lane.b32.xlu0 %v4244, 32
  %v4327 = vpop.permute.xlu0 %4326
  %4328 = vrot.lane.b32.xlu0 %v4245, 32
  %v4329 = vpop.permute.xlu0 %4328
  %4330 = vrot.lane.b32.xlu0 %v4246, 32
  %v4331 = vpop.permute.xlu0 %4330
  %4332 = vrot.lane.b32.xlu0 %v4247, 32
  %v4333 = vpop.permute.xlu0 %4332
  %4334 = vrot.lane.b32.xlu0 %v4248, 32
  %v4335 = vpop.permute.xlu0 %4334
  %4336 = vrot.lane.b32.xlu0 %v4249, 32
  %v4337 = vpop.permute.xlu0 %4336
  %4338 = vrot.lane.b32.xlu0 %v4250, 32
  %v4339 = vpop.permute.xlu0 %4338
  %4340 = vrot.lane.b32.xlu0 %v4251, 32
  %v4341 = vpop.permute.xlu0 %4340
  %4342 = vrot.lane.b32.xlu0 %v4252, 32
  %v4343 = vpop.permute.xlu0 %4342
  %4344 = vrot.lane.b32.xlu0 %v4253, 32
  %v4345 = vpop.permute.xlu0 %4344
  %4346 = vrot.lane.b32.xlu0 %v4254, 32
  %v4347 = vpop.permute.xlu0 %4346
  %4348 = vrot.lane.b32.xlu0 %v4255, 32
  %v4349 = vpop.permute.xlu0 %4348
  %4350 = vrot.lane.b32.xlu0 %v4256, 32
  %v4351 = vpop.permute.xlu0 %4350
  %4352 = vrot.lane.b32.xlu0 %v4257, 32
  %v4353 = vpop.permute.xlu0 %4352
  %4386 = vst.msk [vmem:[#allocation2 + $0x8] sm:$0xff] %vm2814, %v4291
  %4387 = vst.msk [vmem:[#allocation2 + $0x20] sm:$0xff] %vm2814, %v4293
  %4388 = vst.msk [vmem:[#allocation2 + $0x38] sm:$0xff] %vm2814, %v4295
  %4389 = vst.msk [vmem:[#allocation2 + $0x50] sm:$0xff] %vm2814, %v4297
  %4390 = vst.msk [vmem:[#allocation2 + $0x68] sm:$0xff] %vm2814, %v4299
  %4391 = vst.msk [vmem:[#allocation2 + $0x80] sm:$0xff] %vm2814, %v4301
  %4392 = vst.msk [vmem:[#allocation2 + $0x98] sm:$0xff] %vm2814, %v4303
  %4393 = vst.msk [vmem:[#allocation2 + $0xb0] sm:$0xff] %vm2814, %v4305
  %4394 = vst.msk [vmem:[#allocation2 + $0xc8] sm:$0xff] %vm2814, %v4307
  %4395 = vst.msk [vmem:[#allocation2 + $0xe0] sm:$0xff] %vm2814, %v4309
  %4396 = vst.msk [vmem:[#allocation2 + $0xf8] sm:$0xff] %vm2814, %v4311
  %4397 = vst.msk [vmem:[#allocation2 + $0x110] sm:$0xff] %vm2814, %v4313
  %4398 = vst.msk [vmem:[#allocation2 + $0x128] sm:$0xff] %vm2814, %v4315
  %4399 = vst.msk [vmem:[#allocation2 + $0x140] sm:$0xff] %vm2814, %v4317
  %4400 = vst.msk [vmem:[#allocation2 + $0x158] sm:$0xff] %vm2814, %v4319
  %4401 = vst.msk [vmem:[#allocation2 + $0x170] sm:$0xff] %vm2814, %v4321
  %4402 = vst.msk [vmem:[#allocation2 + $0x188] sm:$0xff] %vm2814, %v4323
  %4403 = vst.msk [vmem:[#allocation2 + $0x1a0] sm:$0xff] %vm2814, %v4325
  %4404 = vst.msk [vmem:[#allocation2 + $0x1b8] sm:$0xff] %vm2814, %v4327
  %4405 = vst.msk [vmem:[#allocation2 + $0x1d0] sm:$0xff] %vm2814, %v4329
  %4406 = vst.msk [vmem:[#allocation2 + $0x1e8] sm:$0xff] %vm2814, %v4331
  %4407 = vst.msk [vmem:[#allocation2 + $0x200] sm:$0xff] %vm2814, %v4333
  %4408 = vst.msk [vmem:[#allocation2 + $0x218] sm:$0xff] %vm2814, %v4335
  %4409 = vst.msk [vmem:[#allocation2 + $0x230] sm:$0xff] %vm2814, %v4337
  %4410 = vst.msk [vmem:[#allocation2 + $0x248] sm:$0xff] %vm2814, %v4339
  %4411 = vst.msk [vmem:[#allocation2 + $0x260] sm:$0xff] %vm2814, %v4341
  %4412 = vst.msk [vmem:[#allocation2 + $0x278] sm:$0xff] %vm2814, %v4343
  %4413 = vst.msk [vmem:[#allocation2 + $0x290] sm:$0xff] %vm2814, %v4345
  %4414 = vst.msk [vmem:[#allocation2 + $0x2a8] sm:$0xff] %vm2814, %v4347
  %4415 = vst.msk [vmem:[#allocation2 + $0x2c0] sm:$0xff] %vm2814, %v4349
  %4416 = vst.msk [vmem:[#allocation2 + $0x2d8] sm:$0xff] %vm2814, %v4351
  %4417 = vst.msk [vmem:[#allocation2 + $0x2f0] sm:$0xff] %vm2814, %v4353
  %vm4418 = vmand %vm1820, %vm1884
  %vm4419 = vmand %vm1821, %vm1885
  %vm4420 = vmand %vm1822, %vm1886
  %vm4421 = vmand %vm1823, %vm1887
  %vm4422 = vmand %vm1824, %vm1888
  %vm4423 = vmand %vm1825, %vm1889
  %vm4424 = vmand %vm1826, %vm1890
  %vm4425 = vmand %vm1827, %vm1891
  %vm4426 = vmand %vm1828, %vm1892
  %vm4427 = vmand %vm1829, %vm1893
  %vm4428 = vmand %vm1830, %vm1894
  %vm4429 = vmand %vm1831, %vm1895
  %vm4430 = vmand %vm1832, %vm1896
  %vm4431 = vmand %vm1833, %vm1897
  %vm4432 = vmand %vm1834, %vm1898
  %vm4433 = vmand %vm1835, %vm1899
  %vm4434 = vmand %vm1836, %vm1900
  %vm4435 = vmand %vm1837, %vm1901
  %vm4436 = vmand %vm1838, %vm1902
  %vm4437 = vmand %vm1839, %vm1903
  %vm4438 = vmand %vm1840, %vm1904
  %vm4439 = vmand %vm1841, %vm1905
  %vm4440 = vmand %vm1842, %vm1906
  %vm4441 = vmand %vm1843, %vm1907
  %vm4442 = vmand %vm1844, %vm1908
  %vm4443 = vmand %vm1845, %vm1909
  %vm4444 = vmand %vm1846, %vm1910
  %vm4445 = vmand %vm1847, %vm1911
  %vm4446 = vmand %vm1848, %vm1912
  %vm4447 = vmand %vm1849, %vm1913
  %vm4448 = vmand %vm1850, %vm1914
  %vm4449 = vmand %vm1851, %vm1915
  %vm4450 = vmand %vm1852, %vm1916
  %vm4451 = vmand %vm1853, %vm1917
  %vm4452 = vmand %vm1854, %vm1918
  %vm4453 = vmand %vm1855, %vm1919
  %vm4454 = vmand %vm1856, %vm1920
  %vm4455 = vmand %vm1857, %vm1921
  %vm4456 = vmand %vm1858, %vm1922
  %vm4457 = vmand %vm1859, %vm1923
  %vm4458 = vmand %vm1860, %vm1924
  %vm4459 = vmand %vm1861, %vm1925
  %vm4460 = vmand %vm1862, %vm1926
  %vm4461 = vmand %vm1863, %vm1927
  %vm4462 = vmand %vm1864, %vm1928
  %vm4463 = vmand %vm1865, %vm1929
  %vm4464 = vmand %vm1866, %vm1930
  %vm4465 = vmand %vm1867, %vm1931
  %vm4466 = vmand %vm1868, %vm1932
  %vm4467 = vmand %vm1869, %vm1933
  %vm4468 = vmand %vm1870, %vm1934
  %vm4469 = vmand %vm1871, %vm1935
  %vm4470 = vmand %vm1872, %vm1936
  %vm4471 = vmand %vm1873, %vm1937
  %vm4472 = vmand %vm1874, %vm1938
  %vm4473 = vmand %vm1875, %vm1939
  %vm4474 = vmand %vm1876, %vm1940
  %vm4475 = vmand %vm1877, %vm1941
  %vm4476 = vmand %vm1878, %vm1942
  %vm4477 = vmand %vm1879, %vm1943
  %vm4478 = vmand %vm1880, %vm1944
  %vm4479 = vmand %vm1881, %vm1945
  %vm4480 = vmand %vm1882, %vm1946
  %vm4481 = vmand %vm1883, %vm1947
  %v4482 = vsel %vm4418, 1, 0
  %v4483 = vsel %vm4419, 1, 0
  %v4484 = vsel %vm4420, 1, 0
  %v4485 = vsel %vm4421, 1, 0
  %v4486 = vsel %vm4422, 1, 0
  %v4487 = vsel %vm4423, 1, 0
  %v4488 = vsel %vm4424, 1, 0
  %v4489 = vsel %vm4425, 1, 0
  %v4490 = vsel %vm4426, 1, 0
  %v4491 = vsel %vm4427, 1, 0
  %v4492 = vsel %vm4428, 1, 0
  %v4493 = vsel %vm4429, 1, 0
  %v4494 = vsel %vm4430, 1, 0
  %v4495 = vsel %vm4431, 1, 0
  %v4496 = vsel %vm4432, 1, 0
  %v4497 = vsel %vm4433, 1, 0
  %v4498 = vsel %vm4434, 1, 0
  %v4499 = vsel %vm4435, 1, 0
  %v4500 = vsel %vm4436, 1, 0
  %v4501 = vsel %vm4437, 1, 0
  %v4502 = vsel %vm4438, 1, 0
  %v4503 = vsel %vm4439, 1, 0
  %v4504 = vsel %vm4440, 1, 0
  %v4505 = vsel %vm4441, 1, 0
  %v4506 = vsel %vm4442, 1, 0
  %v4507 = vsel %vm4443, 1, 0
  %v4508 = vsel %vm4444, 1, 0
  %v4509 = vsel %vm4445, 1, 0
  %v4510 = vsel %vm4446, 1, 0
  %v4511 = vsel %vm4447, 1, 0
  %v4512 = vsel %vm4448, 1, 0
  %v4513 = vsel %vm4449, 1, 0
  %v4514 = vsel %vm4450, 1, 0
  %v4515 = vsel %vm4451, 1, 0
  %v4516 = vsel %vm4452, 1, 0
  %v4517 = vsel %vm4453, 1, 0
  %v4518 = vsel %vm4454, 1, 0
  %v4519 = vsel %vm4455, 1, 0
  %v4520 = vsel %vm4456, 1, 0
  %v4521 = vsel %vm4457, 1, 0
  %v4522 = vsel %vm4458, 1, 0
  %v4523 = vsel %vm4459, 1, 0
  %v4524 = vsel %vm4460, 1, 0
  %v4525 = vsel %vm4461, 1, 0
  %v4526 = vsel %vm4462, 1, 0
  %v4527 = vsel %vm4463, 1, 0
  %v4528 = vsel %vm4464, 1, 0
  %v4529 = vsel %vm4465, 1, 0
  %v4530 = vsel %vm4466, 1, 0
  %v4531 = vsel %vm4467, 1, 0
  %v4532 = vsel %vm4468, 1, 0
  %v4533 = vsel %vm4469, 1, 0
  %v4534 = vsel %vm4470, 1, 0
  %v4535 = vsel %vm4471, 1, 0
  %v4536 = vsel %vm4472, 1, 0
  %v4537 = vsel %vm4473, 1, 0
  %v4538 = vsel %vm4474, 1, 0
  %v4539 = vsel %vm4475, 1, 0
  %v4540 = vsel %vm4476, 1, 0
  %v4541 = vsel %vm4477, 1, 0
  %v4542 = vsel %vm4478, 1, 0
  %v4543 = vsel %vm4479, 1, 0
  %v4544 = vsel %vm4480, 1, 0
  %v4545 = vsel %vm4481, 1, 0
  %vm4546 = vcmp.eq.s32.totalorder %v4482, 1
  %vm4547 = vcmp.eq.s32.totalorder %v4483, 1
  %vm4548 = vcmp.eq.s32.totalorder %v4484, 1
  %vm4549 = vcmp.eq.s32.totalorder %v4485, 1
  %vm4550 = vcmp.eq.s32.totalorder %v4486, 1
  %vm4551 = vcmp.eq.s32.totalorder %v4487, 1
  %vm4552 = vcmp.eq.s32.totalorder %v4488, 1
  %vm4553 = vcmp.eq.s32.totalorder %v4489, 1
  %vm4554 = vcmp.eq.s32.totalorder %v4490, 1
  %vm4555 = vcmp.eq.s32.totalorder %v4491, 1
  %vm4556 = vcmp.eq.s32.totalorder %v4492, 1
  %vm4557 = vcmp.eq.s32.totalorder %v4493, 1
  %vm4558 = vcmp.eq.s32.totalorder %v4494, 1
  %vm4559 = vcmp.eq.s32.totalorder %v4495, 1
  %vm4560 = vcmp.eq.s32.totalorder %v4496, 1
  %vm4561 = vcmp.eq.s32.totalorder %v4497, 1
  %vm4562 = vcmp.eq.s32.totalorder %v4498, 1
  %vm4563 = vcmp.eq.s32.totalorder %v4499, 1
  %vm4564 = vcmp.eq.s32.totalorder %v4500, 1
  %vm4565 = vcmp.eq.s32.totalorder %v4501, 1
  %vm4566 = vcmp.eq.s32.totalorder %v4502, 1
  %vm4567 = vcmp.eq.s32.totalorder %v4503, 1
  %vm4568 = vcmp.eq.s32.totalorder %v4504, 1
  %vm4569 = vcmp.eq.s32.totalorder %v4505, 1
  %vm4570 = vcmp.eq.s32.totalorder %v4506, 1
  %vm4571 = vcmp.eq.s32.totalorder %v4507, 1
  %vm4572 = vcmp.eq.s32.totalorder %v4508, 1
  %vm4573 = vcmp.eq.s32.totalorder %v4509, 1
  %vm4574 = vcmp.eq.s32.totalorder %v4510, 1
  %vm4575 = vcmp.eq.s32.totalorder %v4511, 1
  %vm4576 = vcmp.eq.s32.totalorder %v4512, 1
  %vm4577 = vcmp.eq.s32.totalorder %v4513, 1
  %vm4578 = vcmp.eq.s32.totalorder %v4514, 1
  %vm4579 = vcmp.eq.s32.totalorder %v4515, 1
  %vm4580 = vcmp.eq.s32.totalorder %v4516, 1
  %vm4581 = vcmp.eq.s32.totalorder %v4517, 1
  %vm4582 = vcmp.eq.s32.totalorder %v4518, 1
  %vm4583 = vcmp.eq.s32.totalorder %v4519, 1
  %vm4584 = vcmp.eq.s32.totalorder %v4520, 1
  %vm4585 = vcmp.eq.s32.totalorder %v4521, 1
  %vm4586 = vcmp.eq.s32.totalorder %v4522, 1
  %vm4587 = vcmp.eq.s32.totalorder %v4523, 1
  %vm4588 = vcmp.eq.s32.totalorder %v4524, 1
  %vm4589 = vcmp.eq.s32.totalorder %v4525, 1
  %vm4590 = vcmp.eq.s32.totalorder %v4526, 1
  %vm4591 = vcmp.eq.s32.totalorder %v4527, 1
  %vm4592 = vcmp.eq.s32.totalorder %v4528, 1
  %vm4593 = vcmp.eq.s32.totalorder %v4529, 1
  %vm4594 = vcmp.eq.s32.totalorder %v4530, 1
  %vm4595 = vcmp.eq.s32.totalorder %v4531, 1
  %vm4596 = vcmp.eq.s32.totalorder %v4532, 1
  %vm4597 = vcmp.eq.s32.totalorder %v4533, 1
  %vm4598 = vcmp.eq.s32.totalorder %v4534, 1
  %vm4599 = vcmp.eq.s32.totalorder %v4535, 1
  %vm4600 = vcmp.eq.s32.totalorder %v4536, 1
  %vm4601 = vcmp.eq.s32.totalorder %v4537, 1
  %vm4602 = vcmp.eq.s32.totalorder %v4538, 1
  %vm4603 = vcmp.eq.s32.totalorder %v4539, 1
  %vm4604 = vcmp.eq.s32.totalorder %v4540, 1
  %vm4605 = vcmp.eq.s32.totalorder %v4541, 1
  %vm4606 = vcmp.eq.s32.totalorder %v4542, 1
  %vm4607 = vcmp.eq.s32.totalorder %v4543, 1
  %vm4608 = vcmp.eq.s32.totalorder %v4544, 1
  %vm4609 = vcmp.eq.s32.totalorder %v4545, 1
  %v4610 = vsel %vm4546, %v2138, 0.0
  %v4611 = vsel %vm4547, %v2137, 0.0
  %v4612 = vsel %vm4548, %v2136, 0.0
  %v4613 = vsel %vm4549, %v2135, 0.0
  %v4614 = vsel %vm4550, %v2134, 0.0
  %v4615 = vsel %vm4551, %v2133, 0.0
  %v4616 = vsel %vm4552, %v2132, 0.0
  %v4617 = vsel %vm4553, %v2131, 0.0
  %v4618 = vsel %vm4554, %v2130, 0.0
  %v4619 = vsel %vm4555, %v2129, 0.0
  %v4620 = vsel %vm4556, %v2128, 0.0
  %v4621 = vsel %vm4557, %v2127, 0.0
  %v4622 = vsel %vm4558, %v2126, 0.0
  %v4623 = vsel %vm4559, %v2125, 0.0
  %v4624 = vsel %vm4560, %v2124, 0.0
  %v4625 = vsel %vm4561, %v2123, 0.0
  %v4626 = vsel %vm4562, %v2122, 0.0
  %v4627 = vsel %vm4563, %v2121, 0.0
  %v4628 = vsel %vm4564, %v2120, 0.0
  %v4629 = vsel %vm4565, %v2119, 0.0
  %v4630 = vsel %vm4566, %v2118, 0.0
  %v4631 = vsel %vm4567, %v2117, 0.0
  %v4632 = vsel %vm4568, %v2116, 0.0
  %v4633 = vsel %vm4569, %v2115, 0.0
  %v4634 = vsel %vm4570, %v2114, 0.0
  %v4635 = vsel %vm4571, %v2113, 0.0
  %v4636 = vsel %vm4572, %v2112, 0.0
  %v4637 = vsel %vm4573, %v2111, 0.0
  %v4638 = vsel %vm4574, %v2110, 0.0
  %v4639 = vsel %vm4575, %v2109, 0.0
  %v4640 = vsel %vm4576, %v2108, 0.0
  %v4641 = vsel %vm4577, %v2107, 0.0
  %v4642 = vsel %vm4578, %v2106, 0.0
  %v4643 = vsel %vm4579, %v2105, 0.0
  %v4644 = vsel %vm4580, %v2104, 0.0
  %v4645 = vsel %vm4581, %v2103, 0.0
  %v4646 = vsel %vm4582, %v2102, 0.0
  %v4647 = vsel %vm4583, %v2101, 0.0
  %v4648 = vsel %vm4584, %v2100, 0.0
  %v4649 = vsel %vm4585, %v2099, 0.0
  %v4650 = vsel %vm4586, %v2098, 0.0
  %v4651 = vsel %vm4587, %v2097, 0.0
  %v4652 = vsel %vm4588, %v2096, 0.0
  %v4653 = vsel %vm4589, %v2095, 0.0
  %v4654 = vsel %vm4590, %v2094, 0.0
  %v4655 = vsel %vm4591, %v2093, 0.0
  %v4656 = vsel %vm4592, %v2092, 0.0
  %v4657 = vsel %vm4593, %v2091, 0.0
  %v4658 = vsel %vm4594, %v2090, 0.0
  %v4659 = vsel %vm4595, %v2089, 0.0
  %v4660 = vsel %vm4596, %v2088, 0.0
  %v4661 = vsel %vm4597, %v2087, 0.0
  %v4662 = vsel %vm4598, %v2086, 0.0
  %v4663 = vsel %vm4599, %v2085, 0.0
  %v4664 = vsel %vm4600, %v2084, 0.0
  %v4665 = vsel %vm4601, %v2083, 0.0
  %v4666 = vsel %vm4602, %v2082, 0.0
  %v4667 = vsel %vm4603, %v2081, 0.0
  %v4668 = vsel %vm4604, %v2080, 0.0
  %v4669 = vsel %vm4605, %v2079, 0.0
  %v4670 = vsel %vm4606, %v2078, 0.0
  %v4671 = vsel %vm4607, %v2077, 0.0
  %v4672 = vsel %vm4608, %v2140, 0.0
  %v4673 = vsel %vm4609, %v2139, 0.0
  %v4674 = vpack.c.bf16 %v4611, %v4610
  %v4675 = vpack.c.bf16 %v4613, %v4612
  %v4676 = vpack.c.bf16 %v4615, %v4614
  %v4677 = vpack.c.bf16 %v4617, %v4616
  %v4678 = vpack.c.bf16 %v4619, %v4618
  %v4679 = vpack.c.bf16 %v4621, %v4620
  %v4680 = vpack.c.bf16 %v4623, %v4622
  %v4681 = vpack.c.bf16 %v4625, %v4624
  %v4682 = vpack.c.bf16 %v4627, %v4626
  %v4683 = vpack.c.bf16 %v4629, %v4628
  %v4684 = vpack.c.bf16 %v4631, %v4630
  %v4685 = vpack.c.bf16 %v4633, %v4632
  %v4686 = vpack.c.bf16 %v4635, %v4634
  %v4687 = vpack.c.bf16 %v4637, %v4636
  %v4688 = vpack.c.bf16 %v4639, %v4638
  %v4689 = vpack.c.bf16 %v4641, %v4640
  %v4690 = vpack.c.bf16 %v4643, %v4642
  %v4691 = vpack.c.bf16 %v4645, %v4644
  %v4692 = vpack.c.bf16 %v4647, %v4646
  %v4693 = vpack.c.bf16 %v4649, %v4648
  %v4694 = vpack.c.bf16 %v4651, %v4650
  %v4695 = vpack.c.bf16 %v4653, %v4652
  %v4696 = vpack.c.bf16 %v4655, %v4654
  %v4697 = vpack.c.bf16 %v4657, %v4656
  %v4698 = vpack.c.bf16 %v4659, %v4658
  %v4699 = vpack.c.bf16 %v4661, %v4660
  %v4700 = vpack.c.bf16 %v4663, %v4662
  %v4701 = vpack.c.bf16 %v4665, %v4664
  %v4702 = vpack.c.bf16 %v4667, %v4666
  %v4703 = vpack.c.bf16 %v4669, %v4668
  %v4704 = vpack.c.bf16 %v4671, %v4670
  %v4705 = vpack.c.bf16 %v4673, %v4672
  %4738 = vrot.lane.b32.xlu0 %v4674, 64
  %v4739 = vpop.permute.xlu0 %4738
  %4740 = vrot.lane.b32.xlu0 %v4675, 64
  %v4741 = vpop.permute.xlu0 %4740
  %4742 = vrot.lane.b32.xlu0 %v4676, 64
  %v4743 = vpop.permute.xlu0 %4742
  %4744 = vrot.lane.b32.xlu0 %v4677, 64
  %v4745 = vpop.permute.xlu0 %4744
  %4746 = vrot.lane.b32.xlu0 %v4678, 64
  %v4747 = vpop.permute.xlu0 %4746
  %4748 = vrot.lane.b32.xlu0 %v4679, 64
  %v4749 = vpop.permute.xlu0 %4748
  %4750 = vrot.lane.b32.xlu0 %v4680, 64
  %v4751 = vpop.permute.xlu0 %4750
  %4752 = vrot.lane.b32.xlu0 %v4681, 64
  %v4753 = vpop.permute.xlu0 %4752
  %4754 = vrot.lane.b32.xlu0 %v4682, 64
  %v4755 = vpop.permute.xlu0 %4754
  %4756 = vrot.lane.b32.xlu0 %v4683, 64
  %v4757 = vpop.permute.xlu0 %4756
  %4758 = vrot.lane.b32.xlu0 %v4684, 64
  %v4759 = vpop.permute.xlu0 %4758
  %4760 = vrot.lane.b32.xlu0 %v4685, 64
  %v4761 = vpop.permute.xlu0 %4760
  %4762 = vrot.lane.b32.xlu0 %v4686, 64
  %v4763 = vpop.permute.xlu0 %4762
  %4764 = vrot.lane.b32.xlu0 %v4687, 64
  %v4765 = vpop.permute.xlu0 %4764
  %4766 = vrot.lane.b32.xlu0 %v4688, 64
  %v4767 = vpop.permute.xlu0 %4766
  %4768 = vrot.lane.b32.xlu0 %v4689, 64
  %v4769 = vpop.permute.xlu0 %4768
  %4770 = vrot.lane.b32.xlu0 %v4690, 64
  %v4771 = vpop.permute.xlu0 %4770
  %4772 = vrot.lane.b32.xlu0 %v4691, 64
  %v4773 = vpop.permute.xlu0 %4772
  %4774 = vrot.lane.b32.xlu0 %v4692, 64
  %v4775 = vpop.permute.xlu0 %4774
  %4776 = vrot.lane.b32.xlu0 %v4693, 64
  %v4777 = vpop.permute.xlu0 %4776
  %4778 = vrot.lane.b32.xlu0 %v4694, 64
  %v4779 = vpop.permute.xlu0 %4778
  %4780 = vrot.lane.b32.xlu0 %v4695, 64
  %v4781 = vpop.permute.xlu0 %4780
  %4782 = vrot.lane.b32.xlu0 %v4696, 64
  %v4783 = vpop.permute.xlu0 %4782
  %4784 = vrot.lane.b32.xlu0 %v4697, 64
  %v4785 = vpop.permute.xlu0 %4784
  %4786 = vrot.lane.b32.xlu0 %v4698, 64
  %v4787 = vpop.permute.xlu0 %4786
  %4788 = vrot.lane.b32.xlu0 %v4699, 64
  %v4789 = vpop.permute.xlu0 %4788
  %4790 = vrot.lane.b32.xlu0 %v4700, 64
  %v4791 = vpop.permute.xlu0 %4790
  %4792 = vrot.lane.b32.xlu0 %v4701, 64
  %v4793 = vpop.permute.xlu0 %4792
  %4794 = vrot.lane.b32.xlu0 %v4702, 64
  %v4795 = vpop.permute.xlu0 %4794
  %4796 = vrot.lane.b32.xlu0 %v4703, 64
  %v4797 = vpop.permute.xlu0 %4796
  %4798 = vrot.lane.b32.xlu0 %v4704, 64
  %v4799 = vpop.permute.xlu0 %4798
  %4800 = vrot.lane.b32.xlu0 %v4705, 64
  %v4801 = vpop.permute.xlu0 %4800
  %4834 = vst.msk [vmem:[#allocation2 + $0x8] sm:$0xff] %vm3392, %v4739
  %4835 = vst.msk [vmem:[#allocation2 + $0x20] sm:$0xff] %vm3392, %v4741
  %4836 = vst.msk [vmem:[#allocation2 + $0x38] sm:$0xff] %vm3392, %v4743
  %4837 = vst.msk [vmem:[#allocation2 + $0x50] sm:$0xff] %vm3392, %v4745
  %4838 = vst.msk [vmem:[#allocation2 + $0x68] sm:$0xff] %vm3392, %v4747
  %4839 = vst.msk [vmem:[#allocation2 + $0x80] sm:$0xff] %vm3392, %v4749
  %4840 = vst.msk [vmem:[#allocation2 + $0x98] sm:$0xff] %vm3392, %v4751
  %4841 = vst.msk [vmem:[#allocation2 + $0xb0] sm:$0xff] %vm3392, %v4753
  %4842 = vst.msk [vmem:[#allocation2 + $0xc8] sm:$0xff] %vm3392, %v4755
  %4843 = vst.msk [vmem:[#allocation2 + $0xe0] sm:$0xff] %vm3392, %v4757
  %4844 = vst.msk [vmem:[#allocation2 + $0xf8] sm:$0xff] %vm3392, %v4759
  %4845 = vst.msk [vmem:[#allocation2 + $0x110] sm:$0xff] %vm3392, %v4761
  %4846 = vst.msk [vmem:[#allocation2 + $0x128] sm:$0xff] %vm3392, %v4763
  %4847 = vst.msk [vmem:[#allocation2 + $0x140] sm:$0xff] %vm3392, %v4765
  %4848 = vst.msk [vmem:[#allocation2 + $0x158] sm:$0xff] %vm3392, %v4767
  %4849 = vst.msk [vmem:[#allocation2 + $0x170] sm:$0xff] %vm3392, %v4769
  %4850 = vst.msk [vmem:[#allocation2 + $0x188] sm:$0xff] %vm3392, %v4771
  %4851 = vst.msk [vmem:[#allocation2 + $0x1a0] sm:$0xff] %vm3392, %v4773
  %4852 = vst.msk [vmem:[#allocation2 + $0x1b8] sm:$0xff] %vm3392, %v4775
  %4853 = vst.msk [vmem:[#allocation2 + $0x1d0] sm:$0xff] %vm3392, %v4777
  %4854 = vst.msk [vmem:[#allocation2 + $0x1e8] sm:$0xff] %vm3392, %v4779
  %4855 = vst.msk [vmem:[#allocation2 + $0x200] sm:$0xff] %vm3392, %v4781
  %4856 = vst.msk [vmem:[#allocation2 + $0x218] sm:$0xff] %vm3392, %v4783
  %4857 = vst.msk [vmem:[#allocation2 + $0x230] sm:$0xff] %vm3392, %v4785
  %4858 = vst.msk [vmem:[#allocation2 + $0x248] sm:$0xff] %vm3392, %v4787
  %4859 = vst.msk [vmem:[#allocation2 + $0x260] sm:$0xff] %vm3392, %v4789
  %4860 = vst.msk [vmem:[#allocation2 + $0x278] sm:$0xff] %vm3392, %v4791
  %4861 = vst.msk [vmem:[#allocation2 + $0x290] sm:$0xff] %vm3392, %v4793
  %4862 = vst.msk [vmem:[#allocation2 + $0x2a8] sm:$0xff] %vm3392, %v4795
  %4863 = vst.msk [vmem:[#allocation2 + $0x2c0] sm:$0xff] %vm3392, %v4797
  %4864 = vst.msk [vmem:[#allocation2 + $0x2d8] sm:$0xff] %vm3392, %v4799
  %4865 = vst.msk [vmem:[#allocation2 + $0x2f0] sm:$0xff] %vm3392, %v4801
  %v4866 = vsel %vm1820, 1, 0
  %v4867 = vsel %vm1821, 1, 0
  %v4868 = vsel %vm1822, 1, 0
  %v4869 = vsel %vm1823, 1, 0
  %v4870 = vsel %vm1824, 1, 0
  %v4871 = vsel %vm1825, 1, 0
  %v4872 = vsel %vm1826, 1, 0
  %v4873 = vsel %vm1827, 1, 0
  %v4874 = vsel %vm1828, 1, 0
  %v4875 = vsel %vm1829, 1, 0
  %v4876 = vsel %vm1830, 1, 0
  %v4877 = vsel %vm1831, 1, 0
  %v4878 = vsel %vm1832, 1, 0
  %v4879 = vsel %vm1833, 1, 0
  %v4880 = vsel %vm1834, 1, 0
  %v4881 = vsel %vm1835, 1, 0
  %v4882 = vsel %vm1836, 1, 0
  %v4883 = vsel %vm1837, 1, 0
  %v4884 = vsel %vm1838, 1, 0
  %v4885 = vsel %vm1839, 1, 0
  %v4886 = vsel %vm1840, 1, 0
  %v4887 = vsel %vm1841, 1, 0
  %v4888 = vsel %vm1842, 1, 0
  %v4889 = vsel %vm1843, 1, 0
  %v4890 = vsel %vm1844, 1, 0
  %v4891 = vsel %vm1845, 1, 0
  %v4892 = vsel %vm1846, 1, 0
  %v4893 = vsel %vm1847, 1, 0
  %v4894 = vsel %vm1848, 1, 0
  %v4895 = vsel %vm1849, 1, 0
  %v4896 = vsel %vm1850, 1, 0
  %v4897 = vsel %vm1851, 1, 0
  %v4898 = vsel %vm1852, 1, 0
  %v4899 = vsel %vm1853, 1, 0
  %v4900 = vsel %vm1854, 1, 0
  %v4901 = vsel %vm1855, 1, 0
  %v4902 = vsel %vm1856, 1, 0
  %v4903 = vsel %vm1857, 1, 0
  %v4904 = vsel %vm1858, 1, 0
  %v4905 = vsel %vm1859, 1, 0
  %v4906 = vsel %vm1860, 1, 0
  %v4907 = vsel %vm1861, 1, 0
  %v4908 = vsel %vm1862, 1, 0
  %v4909 = vsel %vm1863, 1, 0
  %v4910 = vsel %vm1864, 1, 0
  %v4911 = vsel %vm1865, 1, 0
  %v4912 = vsel %vm1866, 1, 0
  %v4913 = vsel %vm1867, 1, 0
  %v4914 = vsel %vm1868, 1, 0
  %v4915 = vsel %vm1869, 1, 0
  %v4916 = vsel %vm1870, 1, 0
  %v4917 = vsel %vm1871, 1, 0
  %v4918 = vsel %vm1872, 1, 0
  %v4919 = vsel %vm1873, 1, 0
  %v4920 = vsel %vm1874, 1, 0
  %v4921 = vsel %vm1875, 1, 0
  %v4922 = vsel %vm1876, 1, 0
  %v4923 = vsel %vm1877, 1, 0
  %v4924 = vsel %vm1878, 1, 0
  %v4925 = vsel %vm1879, 1, 0
  %v4926 = vsel %vm1880, 1, 0
  %v4927 = vsel %vm1881, 1, 0
  %v4928 = vsel %vm1882, 1, 0
  %v4929 = vsel %vm1883, 1, 0
  %vm4930 = vcmp.eq.s32.totalorder %v4866, 1
  %vm4931 = vcmp.eq.s32.totalorder %v4867, 1
  %vm4932 = vcmp.eq.s32.totalorder %v4868, 1
  %vm4933 = vcmp.eq.s32.totalorder %v4869, 1
  %vm4934 = vcmp.eq.s32.totalorder %v4870, 1
  %vm4935 = vcmp.eq.s32.totalorder %v4871, 1
  %vm4936 = vcmp.eq.s32.totalorder %v4872, 1
  %vm4937 = vcmp.eq.s32.totalorder %v4873, 1
  %vm4938 = vcmp.eq.s32.totalorder %v4874, 1
  %vm4939 = vcmp.eq.s32.totalorder %v4875, 1
  %vm4940 = vcmp.eq.s32.totalorder %v4876, 1
  %vm4941 = vcmp.eq.s32.totalorder %v4877, 1
  %vm4942 = vcmp.eq.s32.totalorder %v4878, 1
  %vm4943 = vcmp.eq.s32.totalorder %v4879, 1
  %vm4944 = vcmp.eq.s32.totalorder %v4880, 1
  %vm4945 = vcmp.eq.s32.totalorder %v4881, 1
  %vm4946 = vcmp.eq.s32.totalorder %v4882, 1
  %vm4947 = vcmp.eq.s32.totalorder %v4883, 1
  %vm4948 = vcmp.eq.s32.totalorder %v4884, 1
  %vm4949 = vcmp.eq.s32.totalorder %v4885, 1
  %vm4950 = vcmp.eq.s32.totalorder %v4886, 1
  %vm4951 = vcmp.eq.s32.totalorder %v4887, 1
  %vm4952 = vcmp.eq.s32.totalorder %v4888, 1
  %vm4953 = vcmp.eq.s32.totalorder %v4889, 1
  %vm4954 = vcmp.eq.s32.totalorder %v4890, 1
  %vm4955 = vcmp.eq.s32.totalorder %v4891, 1
  %vm4956 = vcmp.eq.s32.totalorder %v4892, 1
  %vm4957 = vcmp.eq.s32.totalorder %v4893, 1
  %vm4958 = vcmp.eq.s32.totalorder %v4894, 1
  %vm4959 = vcmp.eq.s32.totalorder %v4895, 1
  %vm4960 = vcmp.eq.s32.totalorder %v4896, 1
  %vm4961 = vcmp.eq.s32.totalorder %v4897, 1
  %vm4962 = vcmp.eq.s32.totalorder %v4898, 1
  %vm4963 = vcmp.eq.s32.totalorder %v4899, 1
  %vm4964 = vcmp.eq.s32.totalorder %v4900, 1
  %vm4965 = vcmp.eq.s32.totalorder %v4901, 1
  %vm4966 = vcmp.eq.s32.totalorder %v4902, 1
  %vm4967 = vcmp.eq.s32.totalorder %v4903, 1
  %vm4968 = vcmp.eq.s32.totalorder %v4904, 1
  %vm4969 = vcmp.eq.s32.totalorder %v4905, 1
  %vm4970 = vcmp.eq.s32.totalorder %v4906, 1
  %vm4971 = vcmp.eq.s32.totalorder %v4907, 1
  %vm4972 = vcmp.eq.s32.totalorder %v4908, 1
  %vm4973 = vcmp.eq.s32.totalorder %v4909, 1
  %vm4974 = vcmp.eq.s32.totalorder %v4910, 1
  %vm4975 = vcmp.eq.s32.totalorder %v4911, 1
  %vm4976 = vcmp.eq.s32.totalorder %v4912, 1
  %vm4977 = vcmp.eq.s32.totalorder %v4913, 1
  %vm4978 = vcmp.eq.s32.totalorder %v4914, 1
  %vm4979 = vcmp.eq.s32.totalorder %v4915, 1
  %vm4980 = vcmp.eq.s32.totalorder %v4916, 1
  %vm4981 = vcmp.eq.s32.totalorder %v4917, 1
  %vm4982 = vcmp.eq.s32.totalorder %v4918, 1
  %vm4983 = vcmp.eq.s32.totalorder %v4919, 1
  %vm4984 = vcmp.eq.s32.totalorder %v4920, 1
  %vm4985 = vcmp.eq.s32.totalorder %v4921, 1
  %vm4986 = vcmp.eq.s32.totalorder %v4922, 1
  %vm4987 = vcmp.eq.s32.totalorder %v4923, 1
  %vm4988 = vcmp.eq.s32.totalorder %v4924, 1
  %vm4989 = vcmp.eq.s32.totalorder %v4925, 1
  %vm4990 = vcmp.eq.s32.totalorder %v4926, 1
  %vm4991 = vcmp.eq.s32.totalorder %v4927, 1
  %vm4992 = vcmp.eq.s32.totalorder %v4928, 1
  %vm4993 = vcmp.eq.s32.totalorder %v4929, 1
  %v4994 = vsel %vm4930, %v93, 0.0
  %v4995 = vsel %vm4931, %v94, 0.0
  %v4996 = vsel %vm4932, %v95, 0.0
  %v4997 = vsel %vm4933, %v96, 0.0
  %v4998 = vsel %vm4934, %v97, 0.0
  %v4999 = vsel %vm4935, %v98, 0.0
  %v5000 = vsel %vm4936, %v99, 0.0
  %v5001 = vsel %vm4937, %v100, 0.0
  %v5002 = vsel %vm4938, %v101, 0.0
  %v5003 = vsel %vm4939, %v102, 0.0
  %v5004 = vsel %vm4940, %v103, 0.0
  %v5005 = vsel %vm4941, %v104, 0.0
  %v5006 = vsel %vm4942, %v105, 0.0
  %v5007 = vsel %vm4943, %v106, 0.0
  %v5008 = vsel %vm4944, %v107, 0.0
  %v5009 = vsel %vm4945, %v108, 0.0
  %v5010 = vsel %vm4946, %v109, 0.0
  %v5011 = vsel %vm4947, %v110, 0.0
  %v5012 = vsel %vm4948, %v111, 0.0
  %v5013 = vsel %vm4949, %v112, 0.0
  %v5014 = vsel %vm4950, %v113, 0.0
  %v5015 = vsel %vm4951, %v114, 0.0
  %v5016 = vsel %vm4952, %v115, 0.0
  %v5017 = vsel %vm4953, %v116, 0.0
  %v5018 = vsel %vm4954, %v117, 0.0
  %v5019 = vsel %vm4955, %v118, 0.0
  %v5020 = vsel %vm4956, %v119, 0.0
  %v5021 = vsel %vm4957, %v120, 0.0
  %v5022 = vsel %vm4958, %v121, 0.0
  %v5023 = vsel %vm4959, %v122, 0.0
  %v5024 = vsel %vm4960, %v123, 0.0
  %v5025 = vsel %vm4961, %v124, 0.0
  %v5026 = vsel %vm4962, %v125, 0.0
  %v5027 = vsel %vm4963, %v126, 0.0
  %v5028 = vsel %vm4964, %v127, 0.0
  %v5029 = vsel %vm4965, %v128, 0.0
  %v5030 = vsel %vm4966, %v129, 0.0
  %v5031 = vsel %vm4967, %v130, 0.0
  %v5032 = vsel %vm4968, %v131, 0.0
  %v5033 = vsel %vm4969, %v132, 0.0
  %v5034 = vsel %vm4970, %v133, 0.0
  %v5035 = vsel %vm4971, %v134, 0.0
  %v5036 = vsel %vm4972, %v135, 0.0
  %v5037 = vsel %vm4973, %v136, 0.0
  %v5038 = vsel %vm4974, %v137, 0.0
  %v5039 = vsel %vm4975, %v138, 0.0
  %v5040 = vsel %vm4976, %v139, 0.0
  %v5041 = vsel %vm4977, %v140, 0.0
  %v5042 = vsel %vm4978, %v141, 0.0
  %v5043 = vsel %vm4979, %v142, 0.0
  %v5044 = vsel %vm4980, %v143, 0.0
  %v5045 = vsel %vm4981, %v144, 0.0
  %v5046 = vsel %vm4982, %v145, 0.0
  %v5047 = vsel %vm4983, %v146, 0.0
  %v5048 = vsel %vm4984, %v147, 0.0
  %v5049 = vsel %vm4985, %v148, 0.0
  %v5050 = vsel %vm4986, %v149, 0.0
  %v5051 = vsel %vm4987, %v150, 0.0
  %v5052 = vsel %vm4988, %v151, 0.0
  %v5053 = vsel %vm4989, %v152, 0.0
  %v5054 = vsel %vm4990, %v153, 0.0
  %v5055 = vsel %vm4991, %v154, 0.0
  %v5056 = vsel %vm4992, %v91, 0.0
  %v5057 = vsel %vm4993, %v92, 0.0
  %v5058 = vpack.c.bf16 %v4995, %v4994
  %v5059 = vpack.c.bf16 %v4997, %v4996
  %v5060 = vpack.c.bf16 %v4999, %v4998
  %v5061 = vpack.c.bf16 %v5001, %v5000
  %v5062 = vpack.c.bf16 %v5003, %v5002
  %v5063 = vpack.c.bf16 %v5005, %v5004
  %v5064 = vpack.c.bf16 %v5007, %v5006
  %v5065 = vpack.c.bf16 %v5009, %v5008
  %v5066 = vpack.c.bf16 %v5011, %v5010
  %v5067 = vpack.c.bf16 %v5013, %v5012
  %v5068 = vpack.c.bf16 %v5015, %v5014
  %v5069 = vpack.c.bf16 %v5017, %v5016
  %v5070 = vpack.c.bf16 %v5019, %v5018
  %v5071 = vpack.c.bf16 %v5021, %v5020
  %v5072 = vpack.c.bf16 %v5023, %v5022
  %v5073 = vpack.c.bf16 %v5025, %v5024
  %v5074 = vpack.c.bf16 %v5027, %v5026
  %v5075 = vpack.c.bf16 %v5029, %v5028
  %v5076 = vpack.c.bf16 %v5031, %v5030
  %v5077 = vpack.c.bf16 %v5033, %v5032
  %v5078 = vpack.c.bf16 %v5035, %v5034
  %v5079 = vpack.c.bf16 %v5037, %v5036
  %v5080 = vpack.c.bf16 %v5039, %v5038
  %v5081 = vpack.c.bf16 %v5041, %v5040
  %v5082 = vpack.c.bf16 %v5043, %v5042
  %v5083 = vpack.c.bf16 %v5045, %v5044
  %v5084 = vpack.c.bf16 %v5047, %v5046
  %v5085 = vpack.c.bf16 %v5049, %v5048
  %v5086 = vpack.c.bf16 %v5051, %v5050
  %v5087 = vpack.c.bf16 %v5053, %v5052
  %v5088 = vpack.c.bf16 %v5055, %v5054
  %v5089 = vpack.c.bf16 %v5057, %v5056
  %5122 = vrot.lane.b32.xlu0 %v5058, 96
  %v5123 = vpop.permute.xlu0 %5122
  %5124 = vrot.lane.b32.xlu0 %v5059, 96
  %v5125 = vpop.permute.xlu0 %5124
  %5126 = vrot.lane.b32.xlu0 %v5060, 96
  %v5127 = vpop.permute.xlu0 %5126
  %5128 = vrot.lane.b32.xlu0 %v5061, 96
  %v5129 = vpop.permute.xlu0 %5128
  %5130 = vrot.lane.b32.xlu0 %v5062, 96
  %v5131 = vpop.permute.xlu0 %5130
  %5132 = vrot.lane.b32.xlu0 %v5063, 96
  %v5133 = vpop.permute.xlu0 %5132
  %5134 = vrot.lane.b32.xlu0 %v5064, 96
  %v5135 = vpop.permute.xlu0 %5134
  %5136 = vrot.lane.b32.xlu0 %v5065, 96
  %v5137 = vpop.permute.xlu0 %5136
  %5138 = vrot.lane.b32.xlu0 %v5066, 96
  %v5139 = vpop.permute.xlu0 %5138
  %5140 = vrot.lane.b32.xlu0 %v5067, 96
  %v5141 = vpop.permute.xlu0 %5140
  %5142 = vrot.lane.b32.xlu0 %v5068, 96
  %v5143 = vpop.permute.xlu0 %5142
  %5144 = vrot.lane.b32.xlu0 %v5069, 96
  %v5145 = vpop.permute.xlu0 %5144
  %5146 = vrot.lane.b32.xlu0 %v5070, 96
  %v5147 = vpop.permute.xlu0 %5146
  %5148 = vrot.lane.b32.xlu0 %v5071, 96
  %v5149 = vpop.permute.xlu0 %5148
  %5150 = vrot.lane.b32.xlu0 %v5072, 96
  %v5151 = vpop.permute.xlu0 %5150
  %5152 = vrot.lane.b32.xlu0 %v5073, 96
  %v5153 = vpop.permute.xlu0 %5152
  %5154 = vrot.lane.b32.xlu0 %v5074, 96
  %v5155 = vpop.permute.xlu0 %5154
  %5156 = vrot.lane.b32.xlu0 %v5075, 96
  %v5157 = vpop.permute.xlu0 %5156
  %5158 = vrot.lane.b32.xlu0 %v5076, 96
  %v5159 = vpop.permute.xlu0 %5158
  %5160 = vrot.lane.b32.xlu0 %v5077, 96
  %v5161 = vpop.permute.xlu0 %5160
  %5162 = vrot.lane.b32.xlu0 %v5078, 96
  %v5163 = vpop.permute.xlu0 %5162
  %5164 = vrot.lane.b32.xlu0 %v5079, 96
  %v5165 = vpop.permute.xlu0 %5164
  %5166 = vrot.lane.b32.xlu0 %v5080, 96
  %v5167 = vpop.permute.xlu0 %5166
  %5168 = vrot.lane.b32.xlu0 %v5081, 96
  %v5169 = vpop.permute.xlu0 %5168
  %5170 = vrot.lane.b32.xlu0 %v5082, 96
  %v5171 = vpop.permute.xlu0 %5170
  %5172 = vrot.lane.b32.xlu0 %v5083, 96
  %v5173 = vpop.permute.xlu0 %5172
  %5174 = vrot.lane.b32.xlu0 %v5084, 96
  %v5175 = vpop.permute.xlu0 %5174
  %5176 = vrot.lane.b32.xlu0 %v5085, 96
  %v5177 = vpop.permute.xlu0 %5176
  %5178 = vrot.lane.b32.xlu0 %v5086, 96
  %v5179 = vpop.permute.xlu0 %5178
  %5180 = vrot.lane.b32.xlu0 %v5087, 96
  %v5181 = vpop.permute.xlu0 %5180
  %5182 = vrot.lane.b32.xlu0 %v5088, 96
  %v5183 = vpop.permute.xlu0 %5182
  %5184 = vrot.lane.b32.xlu0 %v5089, 96
  %v5185 = vpop.permute.xlu0 %5184
  %5218 = vst.msk [vmem:[#allocation2 + $0x8] sm:$0xff] %vm3777, %v5123
  %5219 = vst.msk [vmem:[#allocation2 + $0x20] sm:$0xff] %vm3777, %v5125
  %5220 = vst.msk [vmem:[#allocation2 + $0x38] sm:$0xff] %vm3777, %v5127
  %5221 = vst.msk [vmem:[#allocation2 + $0x50] sm:$0xff] %vm3777, %v5129
  %5222 = vst.msk [vmem:[#allocation2 + $0x68] sm:$0xff] %vm3777, %v5131
  %5223 = vst.msk [vmem:[#allocation2 + $0x80] sm:$0xff] %vm3777, %v5133
  %5224 = vst.msk [vmem:[#allocation2 + $0x98] sm:$0xff] %vm3777, %v5135
  %5225 = vst.msk [vmem:[#allocation2 + $0xb0] sm:$0xff] %vm3777, %v5137
  %5226 = vst.msk [vmem:[#allocation2 + $0xc8] sm:$0xff] %vm3777, %v5139
  %5227 = vst.msk [vmem:[#allocation2 + $0xe0] sm:$0xff] %vm3777, %v5141
  %5228 = vst.msk [vmem:[#allocation2 + $0xf8] sm:$0xff] %vm3777, %v5143
  %5229 = vst.msk [vmem:[#allocation2 + $0x110] sm:$0xff] %vm3777, %v5145
  %5230 = vst.msk [vmem:[#allocation2 + $0x128] sm:$0xff] %vm3777, %v5147
  %5231 = vst.msk [vmem:[#allocation2 + $0x140] sm:$0xff] %vm3777, %v5149
  %5232 = vst.msk [vmem:[#allocation2 + $0x158] sm:$0xff] %vm3777, %v5151
  %5233 = vst.msk [vmem:[#allocation2 + $0x170] sm:$0xff] %vm3777, %v5153
  %5234 = vst.msk [vmem:[#allocation2 + $0x188] sm:$0xff] %vm3777, %v5155
  %5235 = vst.msk [vmem:[#allocation2 + $0x1a0] sm:$0xff] %vm3777, %v5157
  %5236 = vst.msk [vmem:[#allocation2 + $0x1b8] sm:$0xff] %vm3777, %v5159
  %5237 = vst.msk [vmem:[#allocation2 + $0x1d0] sm:$0xff] %vm3777, %v5161
  %5238 = vst.msk [vmem:[#allocation2 + $0x1e8] sm:$0xff] %vm3777, %v5163
  %5239 = vst.msk [vmem:[#allocation2 + $0x200] sm:$0xff] %vm3777, %v5165
  %5240 = vst.msk [vmem:[#allocation2 + $0x218] sm:$0xff] %vm3777, %v5167
  %5241 = vst.msk [vmem:[#allocation2 + $0x230] sm:$0xff] %vm3777, %v5169
  %5242 = vst.msk [vmem:[#allocation2 + $0x248] sm:$0xff] %vm3777, %v5171
  %5243 = vst.msk [vmem:[#allocation2 + $0x260] sm:$0xff] %vm3777, %v5173
  %5244 = vst.msk [vmem:[#allocation2 + $0x278] sm:$0xff] %vm3777, %v5175
  %5245 = vst.msk [vmem:[#allocation2 + $0x290] sm:$0xff] %vm3777, %v5177
  %5246 = vst.msk [vmem:[#allocation2 + $0x2a8] sm:$0xff] %vm3777, %v5179
  %5247 = vst.msk [vmem:[#allocation2 + $0x2c0] sm:$0xff] %vm3777, %v5181
  %5248 = vst.msk [vmem:[#allocation2 + $0x2d8] sm:$0xff] %vm3777, %v5183
  %5249 = vst.msk [vmem:[#allocation2 + $0x2f0] sm:$0xff] %vm3777, %v5185
  %vm5250 = vmand %vm1820, %vm1948
  %vm5251 = vmand %vm1821, %vm1949
  %vm5252 = vmand %vm1822, %vm1950
  %vm5253 = vmand %vm1823, %vm1951
  %vm5254 = vmand %vm1824, %vm1952
  %vm5255 = vmand %vm1825, %vm1953
  %vm5256 = vmand %vm1826, %vm1954
  %vm5257 = vmand %vm1827, %vm1955
  %vm5258 = vmand %vm1828, %vm1956
  %vm5259 = vmand %vm1829, %vm1957
  %vm5260 = vmand %vm1830, %vm1958
  %vm5261 = vmand %vm1831, %vm1959
  %vm5262 = vmand %vm1832, %vm1960
  %vm5263 = vmand %vm1833, %vm1961
  %vm5264 = vmand %vm1834, %vm1962
  %vm5265 = vmand %vm1835, %vm1963
  %vm5266 = vmand %vm1836, %vm1964
  %vm5267 = vmand %vm1837, %vm1965
  %vm5268 = vmand %vm1838, %vm1966
  %vm5269 = vmand %vm1839, %vm1967
  %vm5270 = vmand %vm1840, %vm1968
  %vm5271 = vmand %vm1841, %vm1969
  %vm5272 = vmand %vm1842, %vm1970
  %vm5273 = vmand %vm1843, %vm1971
  %vm5274 = vmand %vm1844, %vm1972
  %vm5275 = vmand %vm1845, %vm1973
  %vm5276 = vmand %vm1846, %vm1974
  %vm5277 = vmand %vm1847, %vm1975
  %vm5278 = vmand %vm1848, %vm1976
  %vm5279 = vmand %vm1849, %vm1977
  %vm5280 = vmand %vm1850, %vm1978
  %vm5281 = vmand %vm1851, %vm1979
  %vm5282 = vmand %vm1852, %vm1980
  %vm5283 = vmand %vm1853, %vm1981
  %vm5284 = vmand %vm1854, %vm1982
  %vm5285 = vmand %vm1855, %vm1983
  %vm5286 = vmand %vm1856, %vm1984
  %vm5287 = vmand %vm1857, %vm1985
  %vm5288 = vmand %vm1858, %vm1986
  %vm5289 = vmand %vm1859, %vm1987
  %vm5290 = vmand %vm1860, %vm1988
  %vm5291 = vmand %vm1861, %vm1989
  %vm5292 = vmand %vm1862, %vm1990
  %vm5293 = vmand %vm1863, %vm1991
  %vm5294 = vmand %vm1864, %vm1992
  %vm5295 = vmand %vm1865, %vm1993
  %vm5296 = vmand %vm1866, %vm1994
  %vm5297 = vmand %vm1867, %vm1995
  %vm5298 = vmand %vm1868, %vm1996
  %vm5299 = vmand %vm1869, %vm1997
  %vm5300 = vmand %vm1870, %vm1998
  %vm5301 = vmand %vm1871, %vm1999
  %vm5302 = vmand %vm1872, %vm2000
  %vm5303 = vmand %vm1873, %vm2001
  %vm5304 = vmand %vm1874, %vm2002
  %vm5305 = vmand %vm1875, %vm2003
  %vm5306 = vmand %vm1876, %vm2004
  %vm5307 = vmand %vm1877, %vm2005
  %vm5308 = vmand %vm1878, %vm2006
  %vm5309 = vmand %vm1879, %vm2007
  %vm5310 = vmand %vm1880, %vm2008
  %vm5311 = vmand %vm1881, %vm2009
  %vm5312 = vmand %vm1882, %vm2010
  %vm5313 = vmand %vm1883, %vm2011
  %v5314 = vsel %vm5250, 1, 0
  %v5315 = vsel %vm5251, 1, 0
  %v5316 = vsel %vm5252, 1, 0
  %v5317 = vsel %vm5253, 1, 0
  %v5318 = vsel %vm5254, 1, 0
  %v5319 = vsel %vm5255, 1, 0
  %v5320 = vsel %vm5256, 1, 0
  %v5321 = vsel %vm5257, 1, 0
  %v5322 = vsel %vm5258, 1, 0
  %v5323 = vsel %vm5259, 1, 0
  %v5324 = vsel %vm5260, 1, 0
  %v5325 = vsel %vm5261, 1, 0
  %v5326 = vsel %vm5262, 1, 0
  %v5327 = vsel %vm5263, 1, 0
  %v5328 = vsel %vm5264, 1, 0
  %v5329 = vsel %vm5265, 1, 0
  %v5330 = vsel %vm5266, 1, 0
  %v5331 = vsel %vm5267, 1, 0
  %v5332 = vsel %vm5268, 1, 0
  %v5333 = vsel %vm5269, 1, 0
  %v5334 = vsel %vm5270, 1, 0
  %v5335 = vsel %vm5271, 1, 0
  %v5336 = vsel %vm5272, 1, 0
  %v5337 = vsel %vm5273, 1, 0
  %v5338 = vsel %vm5274, 1, 0
  %v5339 = vsel %vm5275, 1, 0
  %v5340 = vsel %vm5276, 1, 0
  %v5341 = vsel %vm5277, 1, 0
  %v5342 = vsel %vm5278, 1, 0
  %v5343 = vsel %vm5279, 1, 0
  %v5344 = vsel %vm5280, 1, 0
  %v5345 = vsel %vm5281, 1, 0
  %v5346 = vsel %vm5282, 1, 0
  %v5347 = vsel %vm5283, 1, 0
  %v5348 = vsel %vm5284, 1, 0
  %v5349 = vsel %vm5285, 1, 0
  %v5350 = vsel %vm5286, 1, 0
  %v5351 = vsel %vm5287, 1, 0
  %v5352 = vsel %vm5288, 1, 0
  %v5353 = vsel %vm5289, 1, 0
  %v5354 = vsel %vm5290, 1, 0
  %v5355 = vsel %vm5291, 1, 0
  %v5356 = vsel %vm5292, 1, 0
  %v5357 = vsel %vm5293, 1, 0
  %v5358 = vsel %vm5294, 1, 0
  %v5359 = vsel %vm5295, 1, 0
  %v5360 = vsel %vm5296, 1, 0
  %v5361 = vsel %vm5297, 1, 0
  %v5362 = vsel %vm5298, 1, 0
  %v5363 = vsel %vm5299, 1, 0
  %v5364 = vsel %vm5300, 1, 0
  %v5365 = vsel %vm5301, 1, 0
  %v5366 = vsel %vm5302, 1, 0
  %v5367 = vsel %vm5303, 1, 0
  %v5368 = vsel %vm5304, 1, 0
  %v5369 = vsel %vm5305, 1, 0
  %v5370 = vsel %vm5306, 1, 0
  %v5371 = vsel %vm5307, 1, 0
  %v5372 = vsel %vm5308, 1, 0
  %v5373 = vsel %vm5309, 1, 0
  %v5374 = vsel %vm5310, 1, 0
  %v5375 = vsel %vm5311, 1, 0
  %v5376 = vsel %vm5312, 1, 0
  %v5377 = vsel %vm5313, 1, 0
  %vm5378 = vcmp.eq.s32.totalorder %v5314, 1
  %vm5379 = vcmp.eq.s32.totalorder %v5315, 1
  %vm5380 = vcmp.eq.s32.totalorder %v5316, 1
  %vm5381 = vcmp.eq.s32.totalorder %v5317, 1
  %vm5382 = vcmp.eq.s32.totalorder %v5318, 1
  %vm5383 = vcmp.eq.s32.totalorder %v5319, 1
  %vm5384 = vcmp.eq.s32.totalorder %v5320, 1
  %vm5385 = vcmp.eq.s32.totalorder %v5321, 1
  %vm5386 = vcmp.eq.s32.totalorder %v5322, 1
  %vm5387 = vcmp.eq.s32.totalorder %v5323, 1
  %vm5388 = vcmp.eq.s32.totalorder %v5324, 1
  %vm5389 = vcmp.eq.s32.totalorder %v5325, 1
  %vm5390 = vcmp.eq.s32.totalorder %v5326, 1
  %vm5391 = vcmp.eq.s32.totalorder %v5327, 1
  %vm5392 = vcmp.eq.s32.totalorder %v5328, 1
  %vm5393 = vcmp.eq.s32.totalorder %v5329, 1
  %vm5394 = vcmp.eq.s32.totalorder %v5330, 1
  %vm5395 = vcmp.eq.s32.totalorder %v5331, 1
  %vm5396 = vcmp.eq.s32.totalorder %v5332, 1
  %vm5397 = vcmp.eq.s32.totalorder %v5333, 1
  %vm5398 = vcmp.eq.s32.totalorder %v5334, 1
  %vm5399 = vcmp.eq.s32.totalorder %v5335, 1
  %vm5400 = vcmp.eq.s32.totalorder %v5336, 1
  %vm5401 = vcmp.eq.s32.totalorder %v5337, 1
  %vm5402 = vcmp.eq.s32.totalorder %v5338, 1
  %vm5403 = vcmp.eq.s32.totalorder %v5339, 1
  %vm5404 = vcmp.eq.s32.totalorder %v5340, 1
  %vm5405 = vcmp.eq.s32.totalorder %v5341, 1
  %vm5406 = vcmp.eq.s32.totalorder %v5342, 1
  %vm5407 = vcmp.eq.s32.totalorder %v5343, 1
  %vm5408 = vcmp.eq.s32.totalorder %v5344, 1
  %vm5409 = vcmp.eq.s32.totalorder %v5345, 1
  %vm5410 = vcmp.eq.s32.totalorder %v5346, 1
  %vm5411 = vcmp.eq.s32.totalorder %v5347, 1
  %vm5412 = vcmp.eq.s32.totalorder %v5348, 1
  %vm5413 = vcmp.eq.s32.totalorder %v5349, 1
  %vm5414 = vcmp.eq.s32.totalorder %v5350, 1
  %vm5415 = vcmp.eq.s32.totalorder %v5351, 1
  %vm5416 = vcmp.eq.s32.totalorder %v5352, 1
  %vm5417 = vcmp.eq.s32.totalorder %v5353, 1
  %vm5418 = vcmp.eq.s32.totalorder %v5354, 1
  %vm5419 = vcmp.eq.s32.totalorder %v5355, 1
  %vm5420 = vcmp.eq.s32.totalorder %v5356, 1
  %vm5421 = vcmp.eq.s32.totalorder %v5357, 1
  %vm5422 = vcmp.eq.s32.totalorder %v5358, 1
  %vm5423 = vcmp.eq.s32.totalorder %v5359, 1
  %vm5424 = vcmp.eq.s32.totalorder %v5360, 1
  %vm5425 = vcmp.eq.s32.totalorder %v5361, 1
  %vm5426 = vcmp.eq.s32.totalorder %v5362, 1
  %vm5427 = vcmp.eq.s32.totalorder %v5363, 1
  %vm5428 = vcmp.eq.s32.totalorder %v5364, 1
  %vm5429 = vcmp.eq.s32.totalorder %v5365, 1
  %vm5430 = vcmp.eq.s32.totalorder %v5366, 1
  %vm5431 = vcmp.eq.s32.totalorder %v5367, 1
  %vm5432 = vcmp.eq.s32.totalorder %v5368, 1
  %vm5433 = vcmp.eq.s32.totalorder %v5369, 1
  %vm5434 = vcmp.eq.s32.totalorder %v5370, 1
  %vm5435 = vcmp.eq.s32.totalorder %v5371, 1
  %vm5436 = vcmp.eq.s32.totalorder %v5372, 1
  %vm5437 = vcmp.eq.s32.totalorder %v5373, 1
  %vm5438 = vcmp.eq.s32.totalorder %v5374, 1
  %vm5439 = vcmp.eq.s32.totalorder %v5375, 1
  %vm5440 = vcmp.eq.s32.totalorder %v5376, 1
  %vm5441 = vcmp.eq.s32.totalorder %v5377, 1
  %v5442 = vsel %vm5378, %v2972, 0.0
  %v5443 = vsel %vm5379, %v2971, 0.0
  %v5444 = vsel %vm5380, %v2970, 0.0
  %v5445 = vsel %vm5381, %v2969, 0.0
  %v5446 = vsel %vm5382, %v2968, 0.0
  %v5447 = vsel %vm5383, %v2967, 0.0
  %v5448 = vsel %vm5384, %v2966, 0.0
  %v5449 = vsel %vm5385, %v2965, 0.0
  %v5450 = vsel %vm5386, %v2964, 0.0
  %v5451 = vsel %vm5387, %v2963, 0.0
  %v5452 = vsel %vm5388, %v2962, 0.0
  %v5453 = vsel %vm5389, %v2961, 0.0
  %v5454 = vsel %vm5390, %v2960, 0.0
  %v5455 = vsel %vm5391, %v2959, 0.0
  %v5456 = vsel %vm5392, %v2958, 0.0
  %v5457 = vsel %vm5393, %v2957, 0.0
  %v5458 = vsel %vm5394, %v2956, 0.0
  %v5459 = vsel %vm5395, %v2955, 0.0
  %v5460 = vsel %vm5396, %v2954, 0.0
  %v5461 = vsel %vm5397, %v2953, 0.0
  %v5462 = vsel %vm5398, %v2952, 0.0
  %v5463 = vsel %vm5399, %v2951, 0.0
  %v5464 = vsel %vm5400, %v2950, 0.0
  %v5465 = vsel %vm5401, %v2949, 0.0
  %v5466 = vsel %vm5402, %v2948, 0.0
  %v5467 = vsel %vm5403, %v2947, 0.0
  %v5468 = vsel %vm5404, %v2946, 0.0
  %v5469 = vsel %vm5405, %v2945, 0.0
  %v5470 = vsel %vm5406, %v2944, 0.0
  %v5471 = vsel %vm5407, %v2943, 0.0
  %v5472 = vsel %vm5408, %v2942, 0.0
  %v5473 = vsel %vm5409, %v2941, 0.0
  %v5474 = vsel %vm5410, %v2940, 0.0
  %v5475 = vsel %vm5411, %v2939, 0.0
  %v5476 = vsel %vm5412, %v2938, 0.0
  %v5477 = vsel %vm5413, %v2937, 0.0
  %v5478 = vsel %vm5414, %v2936, 0.0
  %v5479 = vsel %vm5415, %v2935, 0.0
  %v5480 = vsel %vm5416, %v2934, 0.0
  %v5481 = vsel %vm5417, %v2933, 0.0
  %v5482 = vsel %vm5418, %v2932, 0.0
  %v5483 = vsel %vm5419, %v2931, 0.0
  %v5484 = vsel %vm5420, %v2930, 0.0
  %v5485 = vsel %vm5421, %v2929, 0.0
  %v5486 = vsel %vm5422, %v2928, 0.0
  %v5487 = vsel %vm5423, %v2927, 0.0
  %v5488 = vsel %vm5424, %v2926, 0.0
  %v5489 = vsel %vm5425, %v2925, 0.0
  %v5490 = vsel %vm5426, %v2924, 0.0
  %v5491 = vsel %vm5427, %v2923, 0.0
  %v5492 = vsel %vm5428, %v2922, 0.0
  %v5493 = vsel %vm5429, %v2921, 0.0
  %v5494 = vsel %vm5430, %v2920, 0.0
  %v5495 = vsel %vm5431, %v2919, 0.0
  %v5496 = vsel %vm5432, %v2918, 0.0
  %v5497 = vsel %vm5433, %v2917, 0.0
  %v5498 = vsel %vm5434, %v2916, 0.0
  %v5499 = vsel %vm5435, %v2915, 0.0
  %v5500 = vsel %vm5436, %v2914, 0.0
  %v5501 = vsel %vm5437, %v2913, 0.0
  %v5502 = vsel %vm5438, %v2912, 0.0
  %v5503 = vsel %vm5439, %v2975, 0.0
  %v5504 = vsel %vm5440, %v2974, 0.0
  %v5505 = vsel %vm5441, %v2973, 0.0
  %v5506 = vpack.c.bf16 %v5443, %v5442
  %v5507 = vpack.c.bf16 %v5445, %v5444
  %v5508 = vpack.c.bf16 %v5447, %v5446
  %v5509 = vpack.c.bf16 %v5449, %v5448
  %v5510 = vpack.c.bf16 %v5451, %v5450
  %v5511 = vpack.c.bf16 %v5453, %v5452
  %v5512 = vpack.c.bf16 %v5455, %v5454
  %v5513 = vpack.c.bf16 %v5457, %v5456
  %v5514 = vpack.c.bf16 %v5459, %v5458
  %v5515 = vpack.c.bf16 %v5461, %v5460
  %v5516 = vpack.c.bf16 %v5463, %v5462
  %v5517 = vpack.c.bf16 %v5465, %v5464
  %v5518 = vpack.c.bf16 %v5467, %v5466
  %v5519 = vpack.c.bf16 %v5469, %v5468
  %v5520 = vpack.c.bf16 %v5471, %v5470
  %v5521 = vpack.c.bf16 %v5473, %v5472
  %v5522 = vpack.c.bf16 %v5475, %v5474
  %v5523 = vpack.c.bf16 %v5477, %v5476
  %v5524 = vpack.c.bf16 %v5479, %v5478
  %v5525 = vpack.c.bf16 %v5481, %v5480
  %v5526 = vpack.c.bf16 %v5483, %v5482
  %v5527 = vpack.c.bf16 %v5485, %v5484
  %v5528 = vpack.c.bf16 %v5487, %v5486
  %v5529 = vpack.c.bf16 %v5489, %v5488
  %v5530 = vpack.c.bf16 %v5491, %v5490
  %v5531 = vpack.c.bf16 %v5493, %v5492
  %v5532 = vpack.c.bf16 %v5495, %v5494
  %v5533 = vpack.c.bf16 %v5497, %v5496
  %v5534 = vpack.c.bf16 %v5499, %v5498
  %v5535 = vpack.c.bf16 %v5501, %v5500
  %v5536 = vpack.c.bf16 %v5503, %v5502
  %v5537 = vpack.c.bf16 %v5505, %v5504
  %5538 = vst.msk [vmem:[#allocation2 + $0x10] sm:$0xff] %vm2429, %v5506
  %5539 = vst.msk [vmem:[#allocation2 + $0x28] sm:$0xff] %vm2429, %v5507
  %5540 = vst.msk [vmem:[#allocation2 + $0x40] sm:$0xff] %vm2429, %v5508
  %5541 = vst.msk [vmem:[#allocation2 + $0x58] sm:$0xff] %vm2429, %v5509
  %5542 = vst.msk [vmem:[#allocation2 + $0x70] sm:$0xff] %vm2429, %v5510
  %5543 = vst.msk [vmem:[#allocation2 + $0x88] sm:$0xff] %vm2429, %v5511
  %5544 = vst.msk [vmem:[#allocation2 + $0xa0] sm:$0xff] %vm2429, %v5512
  %5545 = vst.msk [vmem:[#allocation2 + $0xb8] sm:$0xff] %vm2429, %v5513
  %5546 = vst.msk [vmem:[#allocation2 + $0xd0] sm:$0xff] %vm2429, %v5514
  %5547 = vst.msk [vmem:[#allocation2 + $0xe8] sm:$0xff] %vm2429, %v5515
  %5548 = vst.msk [vmem:[#allocation2 + $0x100] sm:$0xff] %vm2429, %v5516
  %5549 = vst.msk [vmem:[#allocation2 + $0x118] sm:$0xff] %vm2429, %v5517
  %5550 = vst.msk [vmem:[#allocation2 + $0x130] sm:$0xff] %vm2429, %v5518
  %5551 = vst.msk [vmem:[#allocation2 + $0x148] sm:$0xff] %vm2429, %v5519
  %5552 = vst.msk [vmem:[#allocation2 + $0x160] sm:$0xff] %vm2429, %v5520
  %5553 = vst.msk [vmem:[#allocation2 + $0x178] sm:$0xff] %vm2429, %v5521
  %5554 = vst.msk [vmem:[#allocation2 + $0x190] sm:$0xff] %vm2429, %v5522
  %5555 = vst.msk [vmem:[#allocation2 + $0x1a8] sm:$0xff] %vm2429, %v5523
  %5556 = vst.msk [vmem:[#allocation2 + $0x1c0] sm:$0xff] %vm2429, %v5524
  %5557 = vst.msk [vmem:[#allocation2 + $0x1d8] sm:$0xff] %vm2429, %v5525
  %5558 = vst.msk [vmem:[#allocation2 + $0x1f0] sm:$0xff] %vm2429, %v5526
  %5559 = vst.msk [vmem:[#allocation2 + $0x208] sm:$0xff] %vm2429, %v5527
  %5560 = vst.msk [vmem:[#allocation2 + $0x220] sm:$0xff] %vm2429, %v5528
  %5561 = vst.msk [vmem:[#allocation2 + $0x238] sm:$0xff] %vm2429, %v5529
  %5562 = vst.msk [vmem:[#allocation2 + $0x250] sm:$0xff] %vm2429, %v5530
  %5563 = vst.msk [vmem:[#allocation2 + $0x268] sm:$0xff] %vm2429, %v5531
  %5564 = vst.msk [vmem:[#allocation2 + $0x280] sm:$0xff] %vm2429, %v5532
  %5565 = vst.msk [vmem:[#allocation2 + $0x298] sm:$0xff] %vm2429, %v5533
  %5566 = vst.msk [vmem:[#allocation2 + $0x2b0] sm:$0xff] %vm2429, %v5534
  %5567 = vst.msk [vmem:[#allocation2 + $0x2c8] sm:$0xff] %vm2429, %v5535
  %5568 = vst.msk [vmem:[#allocation2 + $0x2e0] sm:$0xff] %vm2429, %v5536
  %5569 = vst.msk [vmem:[#allocation2 + $0x2f8] sm:$0xff] %vm2429, %v5537
  %v5570 = vld [vmem:[#allocation2] sm:$0xff]
  %v5571 = vld [vmem:[#allocation2 + $0x8] sm:$0xff]
  %v5572 = vld [vmem:[#allocation2 + $0x10] sm:$0xff]
  %v5573 = vld [vmem:[#allocation2 + $0x18] sm:$0xff]
  %v5574 = vld [vmem:[#allocation2 + $0x20] sm:$0xff]
  %v5575 = vld [vmem:[#allocation2 + $0x28] sm:$0xff]
  %v5576 = vld [vmem:[#allocation2 + $0x30] sm:$0xff]
  %v5577 = vld [vmem:[#allocation2 + $0x38] sm:$0xff]
  %v5578 = vld [vmem:[#allocation2 + $0x40] sm:$0xff]
  %v5579 = vld [vmem:[#allocation2 + $0x48] sm:$0xff]
  %v5580 = vld [vmem:[#allocation2 + $0x50] sm:$0xff]
  %v5581 = vld [vmem:[#allocation2 + $0x58] sm:$0xff]
  %v5582 = vld [vmem:[#allocation2 + $0x60] sm:$0xff]
  %v5583 = vld [vmem:[#allocation2 + $0x68] sm:$0xff]
  %v5584 = vld [vmem:[#allocation2 + $0x70] sm:$0xff]
  %v5585 = vld [vmem:[#allocation2 + $0x78] sm:$0xff]
  %v5586 = vld [vmem:[#allocation2 + $0x80] sm:$0xff]
  %v5587 = vld [vmem:[#allocation2 + $0x88] sm:$0xff]
  %v5588 = vld [vmem:[#allocation2 + $0x90] sm:$0xff]
  %v5589 = vld [vmem:[#allocation2 + $0x98] sm:$0xff]
  %v5590 = vld [vmem:[#allocation2 + $0xa0] sm:$0xff]
  %v5591 = vld [vmem:[#allocation2 + $0xa8] sm:$0xff]
  %v5592 = vld [vmem:[#allocation2 + $0xb0] sm:$0xff]
  %v5593 = vld [vmem:[#allocation2 + $0xb8] sm:$0xff]
  %v5594 = vld [vmem:[#allocation2 + $0xc0] sm:$0xff]
  %v5595 = vld [vmem:[#allocation2 + $0xc8] sm:$0xff]
  %v5596 = vld [vmem:[#allocation2 + $0xd0] sm:$0xff]
  %v5597 = vld [vmem:[#allocation2 + $0xd8] sm:$0xff]
  %v5598 = vld [vmem:[#allocation2 + $0xe0] sm:$0xff]
  %v5599 = vld [vmem:[#allocation2 + $0xe8] sm:$0xff]
  %v5600 = vld [vmem:[#allocation2 + $0xf0] sm:$0xff]
  %v5601 = vld [vmem:[#allocation2 + $0xf8] sm:$0xff]
  %v5602 = vld [vmem:[#allocation2 + $0x100] sm:$0xff]
  %v5603 = vld [vmem:[#allocation2 + $0x108] sm:$0xff]
  %v5604 = vld [vmem:[#allocation2 + $0x110] sm:$0xff]
  %v5605 = vld [vmem:[#allocation2 + $0x118] sm:$0xff]
  %v5606 = vld [vmem:[#allocation2 + $0x120] sm:$0xff]
  %v5607 = vld [vmem:[#allocation2 + $0x128] sm:$0xff]
  %v5608 = vld [vmem:[#allocation2 + $0x130] sm:$0xff]
  %v5609 = vld [vmem:[#allocation2 + $0x138] sm:$0xff]
  %v5610 = vld [vmem:[#allocation2 + $0x140] sm:$0xff]
  %v5611 = vld [vmem:[#allocation2 + $0x148] sm:$0xff]
  %v5612 = vld [vmem:[#allocation2 + $0x150] sm:$0xff]
  %v5613 = vld [vmem:[#allocation2 + $0x158] sm:$0xff]
  %v5614 = vld [vmem:[#allocation2 + $0x160] sm:$0xff]
  %v5615 = vld [vmem:[#allocation2 + $0x168] sm:$0xff]
  %v5616 = vld [vmem:[#allocation2 + $0x170] sm:$0xff]
  %v5617 = vld [vmem:[#allocation2 + $0x178] sm:$0xff]
  %v5618 = vld [vmem:[#allocation2 + $0x180] sm:$0xff]
  %v5619 = vld [vmem:[#allocation2 + $0x188] sm:$0xff]
  %v5620 = vld [vmem:[#allocation2 + $0x190] sm:$0xff]
  %v5621 = vld [vmem:[#allocation2 + $0x198] sm:$0xff]
  %v5622 = vld [vmem:[#allocation2 + $0x1a0] sm:$0xff]
  %v5623 = vld [vmem:[#allocation2 + $0x1a8] sm:$0xff]
  %v5624 = vld [vmem:[#allocation2 + $0x1b0] sm:$0xff]
  %v5625 = vld [vmem:[#allocation2 + $0x1b8] sm:$0xff]
  %v5626 = vld [vmem:[#allocation2 + $0x1c0] sm:$0xff]
  %v5627 = vld [vmem:[#allocation2 + $0x1c8] sm:$0xff]
  %v5628 = vld [vmem:[#allocation2 + $0x1d0] sm:$0xff]
  %v5629 = vld [vmem:[#allocation2 + $0x1d8] sm:$0xff]
  %v5630 = vld [vmem:[#allocation2 + $0x1e0] sm:$0xff]
  %v5631 = vld [vmem:[#allocation2 + $0x1e8] sm:$0xff]
  %v5632 = vld [vmem:[#allocation2 + $0x1f0] sm:$0xff]
  %v5633 = vld [vmem:[#allocation2 + $0x1f8] sm:$0xff]
  %v5634 = vld [vmem:[#allocation2 + $0x200] sm:$0xff]
  %v5635 = vld [vmem:[#allocation2 + $0x208] sm:$0xff]
  %v5636 = vld [vmem:[#allocation2 + $0x210] sm:$0xff]
  %v5637 = vld [vmem:[#allocation2 + $0x218] sm:$0xff]
  %v5638 = vld [vmem:[#allocation2 + $0x220] sm:$0xff]
  %v5639 = vld [vmem:[#allocation2 + $0x228] sm:$0xff]
  %v5640 = vld [vmem:[#allocation2 + $0x230] sm:$0xff]
  %v5641 = vld [vmem:[#allocation2 + $0x238] sm:$0xff]
  %v5642 = vld [vmem:[#allocation2 + $0x240] sm:$0xff]
  %v5643 = vld [vmem:[#allocation2 + $0x248] sm:$0xff]
  %v5644 = vld [vmem:[#allocation2 + $0x250] sm:$0xff]
  %v5645 = vld [vmem:[#allocation2 + $0x258] sm:$0xff]
  %v5646 = vld [vmem:[#allocation2 + $0x260] sm:$0xff]
  %v5647 = vld [vmem:[#allocation2 + $0x268] sm:$0xff]
  %v5648 = vld [vmem:[#allocation2 + $0x270] sm:$0xff]
  %v5649 = vld [vmem:[#allocation2 + $0x278] sm:$0xff]
  %v5650 = vld [vmem:[#allocation2 + $0x280] sm:$0xff]
  %v5651 = vld [vmem:[#allocation2 + $0x288] sm:$0xff]
  %v5652 = vld [vmem:[#allocation2 + $0x290] sm:$0xff]
  %v5653 = vld [vmem:[#allocation2 + $0x298] sm:$0xff]
  %v5654 = vld [vmem:[#allocation2 + $0x2a0] sm:$0xff]
  %v5655 = vld [vmem:[#allocation2 + $0x2a8] sm:$0xff]
  %v5656 = vld [vmem:[#allocation2 + $0x2b0] sm:$0xff]
  %v5657 = vld [vmem:[#allocation2 + $0x2b8] sm:$0xff]
  %v5658 = vld [vmem:[#allocation2 + $0x2c0] sm:$0xff]
  %v5659 = vld [vmem:[#allocation2 + $0x2c8] sm:$0xff]
  %v5660 = vld [vmem:[#allocation2 + $0x2d0] sm:$0xff]
  %v5661 = vld [vmem:[#allocation2 + $0x2d8] sm:$0xff]
  %v5662 = vld [vmem:[#allocation2 + $0x2e0] sm:$0xff]
  %v5663 = vld [vmem:[#allocation2 + $0x2e8] sm:$0xff]
  %v5664 = vld [vmem:[#allocation2 + $0x2f0] sm:$0xff]
  %v5665 = vld [vmem:[#allocation2 + $0x2f8] sm:$0xff]
  %v5666 = vld [vmem:[%s1] sm:$0xf]
  %v5667 = vld [vmem:[%s1 + $0x4] sm:$0xf]
  %v5668 = vld [vmem:[%s1 + $0x8] sm:$0xf]
  %v5669 = vld [vmem:[%s1 + $0xc] sm:$0xf]
  %v5670 = vld [vmem:[%s1 + $0x10] sm:$0xf]
  %v5671 = vld [vmem:[%s1 + $0x14] sm:$0xf]
  %v5672 = vld [vmem:[%s1 + $0x18] sm:$0xf]
  %v5673 = vld [vmem:[%s1 + $0x1c] sm:$0xf]
  %v5674 = vld [vmem:[%s1 + $0x20] sm:$0xf]
  %v5675 = vld [vmem:[%s1 + $0x24] sm:$0xf]
  %v5676 = vld [vmem:[%s1 + $0x28] sm:$0xf]
  %v5677 = vld [vmem:[%s1 + $0x2c] sm:$0xf]
  %v5678 = vld [vmem:[%s1 + $0x30] sm:$0xf]
  %v5679 = vld [vmem:[%s1 + $0x34] sm:$0xf]
  %v5680 = vld [vmem:[%s1 + $0x38] sm:$0xf]
  %v5681 = vld [vmem:[%s1 + $0x3c] sm:$0xf]
  %v5682 = vld [vmem:[%s1 + $0x40] sm:$0xf]
  %v5683 = vld [vmem:[%s1 + $0x44] sm:$0xf]
  %v5684 = vld [vmem:[%s1 + $0x48] sm:$0xf]
  %v5685 = vld [vmem:[%s1 + $0x4c] sm:$0xf]
  %v5686 = vld [vmem:[%s1 + $0x50] sm:$0xf]
  %v5687 = vld [vmem:[%s1 + $0x54] sm:$0xf]
  %v5688 = vld [vmem:[%s1 + $0x58] sm:$0xf]
  %v5689 = vld [vmem:[%s1 + $0x5c] sm:$0xf]
  %v5690 = vld [vmem:[%s1 + $0x60] sm:$0xf]
  %v5691 = vld [vmem:[%s1 + $0x64] sm:$0xf]
  %v5692 = vld [vmem:[%s1 + $0x68] sm:$0xf]
  %v5693 = vld [vmem:[%s1 + $0x6c] sm:$0xf]
  %v5694 = vld [vmem:[%s1 + $0x70] sm:$0xf]
  %v5695 = vld [vmem:[%s1 + $0x74] sm:$0xf]
  %v5696 = vld [vmem:[%s1 + $0x78] sm:$0xf]
  %v5697 = vld [vmem:[%s1 + $0x7c] sm:$0xf]
  %v5698 = vld [vmem:[%s1 + $0x80] sm:$0xf]
  %v5699 = vld [vmem:[%s1 + $0x84] sm:$0xf]
  %v5700 = vld [vmem:[%s1 + $0x88] sm:$0xf]
  %v5701 = vld [vmem:[%s1 + $0x8c] sm:$0xf]
  %v5738 = vunpack.c.l.b16 %v5666
  %v5739 = vunpack.c.l.b16 %v5667
  %v5740 = vunpack.c.l.b16 %v5668
  %v5741 = vunpack.c.l.b16 %v5669
  %v5742 = vunpack.c.l.b16 %v5670
  %v5743 = vunpack.c.l.b16 %v5671
  %v5744 = vunpack.c.l.b16 %v5672
  %v5745 = vunpack.c.l.b16 %v5673
  %v5746 = vunpack.c.l.b16 %v5674
  %v5747 = vunpack.c.l.b16 %v5675
  %v5748 = vunpack.c.l.b16 %v5676
  %v5749 = vunpack.c.l.b16 %v5677
  %v5750 = vunpack.c.l.b16 %v5678
  %v5751 = vunpack.c.l.b16 %v5679
  %v5752 = vunpack.c.l.b16 %v5680
  %v5753 = vunpack.c.l.b16 %v5681
  %v5754 = vunpack.c.l.b16 %v5682
  %v5755 = vunpack.c.l.b16 %v5683
  %v5756 = vunpack.c.l.b16 %v5684
  %v5757 = vunpack.c.l.b16 %v5685
  %v5758 = vunpack.c.l.b16 %v5686
  %v5759 = vunpack.c.l.b16 %v5687
  %v5760 = vunpack.c.l.b16 %v5688
  %v5761 = vunpack.c.l.b16 %v5689
  %v5762 = vunpack.c.l.b16 %v5690
  %v5763 = vunpack.c.l.b16 %v5691
  %v5764 = vunpack.c.l.b16 %v5692
  %v5765 = vunpack.c.l.b16 %v5693
  %v5766 = vunpack.c.l.b16 %v5694
  %v5767 = vunpack.c.l.b16 %v5695
  %v5768 = vunpack.c.l.b16 %v5696
  %v5769 = vunpack.c.l.b16 %v5697
  %v5770 = vunpack.c.l.b16 %v5698
  %v5771 = vunpack.c.l.b16 %v5699
  %v5772 = vunpack.c.l.b16 %v5700
  %v5773 = vunpack.c.l.b16 %v5701
  %v5774 = vpack.c.b16 %v5739, %v5738
  %v5775 = vpack.c.b16 %v5741, %v5740
  %v5776 = vpack.c.b16 %v5743, %v5742
  %v5777 = vpack.c.b16 %v5745, %v5744
  %v5778 = vpack.c.b16 %v5747, %v5746
  %v5779 = vpack.c.b16 %v5749, %v5748
  %v5780 = vpack.c.b16 %v5751, %v5750
  %v5781 = vpack.c.b16 %v5753, %v5752
  %v5782 = vpack.c.b16 %v5755, %v5754
  %v5783 = vpack.c.b16 %v5757, %v5756
  %v5784 = vpack.c.b16 %v5759, %v5758
  %v5785 = vpack.c.b16 %v5761, %v5760
  %v5786 = vpack.c.b16 %v5763, %v5762
  %v5787 = vpack.c.b16 %v5765, %v5764
  %v5788 = vpack.c.b16 %v5767, %v5766
  %v5789 = vpack.c.b16 %v5769, %v5768
  %v5790 = vpack.c.b16 %v5771, %v5770
  %v5791 = vpack.c.b16 %v5773, %v5772
  %v5811 = vsel %vm2429, %v5572, 0
  %v5814 = vsel %vm2429, %v5575, 0
  %v5817 = vsel %vm2429, %v5578, 0
  %v5820 = vsel %vm2429, %v5581, 0
  %v5823 = vsel %vm2429, %v5584, 0
  %v5826 = vsel %vm2429, %v5587, 0
  %v5829 = vsel %vm2429, %v5590, 0
  %v5832 = vsel %vm2429, %v5593, 0
  %v5835 = vsel %vm2429, %v5596, 0
  %v5838 = vsel %vm2429, %v5599, 0
  %v5841 = vsel %vm2429, %v5602, 0
  %v5844 = vsel %vm2429, %v5605, 0
  %v5847 = vsel %vm2429, %v5608, 0
  %v5850 = vsel %vm2429, %v5611, 0
  %v5853 = vsel %vm2429, %v5614, 0
  %v5856 = vsel %vm2429, %v5617, 0
  %v5859 = vsel %vm2429, %v5620, 0
  %v5862 = vsel %vm2429, %v5623, 0
  %v5865 = vsel %vm2429, %v5626, 0
  %v5868 = vsel %vm2429, %v5629, 0
  %v5871 = vsel %vm2429, %v5632, 0
  %v5874 = vsel %vm2429, %v5635, 0
  %v5877 = vsel %vm2429, %v5638, 0
  %v5880 = vsel %vm2429, %v5641, 0
  %v5883 = vsel %vm2429, %v5644, 0
  %v5886 = vsel %vm2429, %v5647, 0
  %v5889 = vsel %vm2429, %v5650, 0
  %v5892 = vsel %vm2429, %v5653, 0
  %v5895 = vsel %vm2429, %v5656, 0
  %v5898 = vsel %vm2429, %v5659, 0
  %v5901 = vsel %vm2429, %v5662, 0
  %v5904 = vsel %vm2429, %v5665, 0
  %5906 = vmatprep.subr.bf16.mxu0 0
  %5907 = vmatpush1.bf16.msra.mxu0 %v5774
  %5908 = vmatprep.subr.bf16.mxu0 0
  %5909 = vmatpush1.bf16.msra.mxu0 %v5775
  %5910 = vmatprep.subr.bf16.mxu0 0
  %5911 = vmatpush1.bf16.msra.mxu0 %v5776
  %5912 = vmatprep.subr.bf16.mxu0 0
  %5913 = vmatpush1.bf16.msra.mxu0 %v5777
  %5914 = vmatprep.subr.bf16.mxu0 0
  %5915 = vmatpush1.bf16.msra.mxu0 %v5778
  %5916 = vmatprep.subr.bf16.mxu0 0
  %5917 = vmatpush1.bf16.msra.mxu0 %v5779
  %5918 = vmatprep.subr.bf16.mxu0 0
  %5919 = vmatpush1.bf16.msra.mxu0 %v5780
  %5920 = vmatprep.subr.bf16.mxu0 0
  %5921 = vmatpush1.bf16.msra.mxu0 %v5781
  %5922 = vmatprep.subr.bf16.mxu0 0
  %5923 = vmatpush1.bf16.msra.mxu0 %v5782
  %5924 = vmatprep.subr.bf16.mxu0 0
  %5925 = vmatpush1.bf16.msra.mxu0 %v5783
  %5926 = vmatprep.subr.bf16.mxu0 0
  %5927 = vmatpush1.bf16.msra.mxu0 %v5784
  %5928 = vmatprep.subr.bf16.mxu0 0
  %5929 = vmatpush1.bf16.msra.mxu0 %v5785
  %5930 = vmatprep.subr.bf16.mxu0 0
  %5931 = vmatpush1.bf16.msra.mxu0 %v5786
  %5932 = vmatprep.subr.bf16.mxu0 0
  %5933 = vmatpush1.bf16.msra.mxu0 %v5787
  %5934 = vmatprep.subr.bf16.mxu0 0
  %5935 = vmatpush1.bf16.msra.mxu0 %v5788
  %5936 = vmatprep.subr.bf16.mxu0 0
  %5937 = vmatpush1.bf16.msra.mxu0 %v5789
  %5938 = vmatprep.mubr.bf16.mxu0 %v5571
  %5939 = vmatmul.mubr.bf16.gmra.mrb[0].mxu0 %v5570
  %v5940 = vpop.f32.mrb[0].mxu0
  %v5941 = vadd.f32 0.0, %v5940
  %v5942 = vpop.f32.mrb[0].mxu0
  %v5943 = vpop.f32.mrb[0].mxu0
  %v5944 = vadd.f32 0.0, %v5943
  %v5945 = vpop.f32.mrb[0].mxu0
  %5946 = vmatprep.mubr.bf16.mxu0 %v5574
  %5947 = vmatmul.mubr.bf16.gmra.mrb[0].mxu0 %v5573
  %v5948 = vpop.f32.mrb[0].mxu0
  %v5949 = vadd.f32 0.0, %v5948
  %v5950 = vpop.f32.mrb[0].mxu0
  %v5951 = vpop.f32.mrb[0].mxu0
  %v5952 = vadd.f32 0.0, %v5951
  %v5953 = vpop.f32.mrb[0].mxu0
  %5954 = vmatprep.mubr.bf16.mxu0 %v5577
  %5955 = vmatmul.mubr.bf16.gmra.mrb[0].mxu0 %v5576
  %v5956 = vpop.f32.mrb[0].mxu0
  %v5957 = vadd.f32 0.0, %v5956
  %v5958 = vpop.f32.mrb[0].mxu0
  %v5959 = vpop.f32.mrb[0].mxu0
  %v5960 = vadd.f32 0.0, %v5959
  %v5961 = vpop.f32.mrb[0].mxu0
  %5962 = vmatprep.mubr.bf16.mxu0 %v5580
  %5963 = vmatmul.mubr.bf16.gmra.mrb[0].mxu0 %v5579
  %v5964 = vpop.f32.mrb[0].mxu0
  %v5965 = vadd.f32 0.0, %v5964
  %v5966 = vpop.f32.mrb[0].mxu0
  %v5967 = vpop.f32.mrb[0].mxu0
  %v5968 = vadd.f32 0.0, %v5967
  %v5969 = vpop.f32.mrb[0].mxu0
  %5970 = vmatprep.mubr.bf16.mxu0 %v5583
  %5971 = vmatmul.mubr.bf16.gmra.mrb[0].mxu0 %v5582
  %v5972 = vpop.f32.mrb[0].mxu0
  %v5973 = vadd.f32 0.0, %v5972
  %v5974 = vpop.f32.mrb[0].mxu0
  %v5975 = vpop.f32.mrb[0].mxu0
  %v5976 = vadd.f32 0.0, %v5975
  %v5977 = vpop.f32.mrb[0].mxu0
  %5978 = vmatprep.mubr.bf16.mxu0 %v5586
  %5979 = vmatmul.mubr.bf16.gmra.mrb[0].mxu0 %v5585
  %v5980 = vpop.f32.mrb[0].mxu0
  %v5981 = vadd.f32 0.0, %v5980
  %v5982 = vpop.f32.mrb[0].mxu0
  %v5983 = vpop.f32.mrb[0].mxu0
  %v5984 = vadd.f32 0.0, %v5983
  %v5985 = vpop.f32.mrb[0].mxu0
  %5986 = vmatprep.mubr.bf16.mxu0 %v5589
  %5987 = vmatmul.mubr.bf16.gmra.mrb[0].mxu0 %v5588
  %v5988 = vpop.f32.mrb[0].mxu0
  %v5989 = vadd.f32 0.0, %v5988
  %v5990 = vpop.f32.mrb[0].mxu0
  %v5991 = vpop.f32.mrb[0].mxu0
  %v5992 = vadd.f32 0.0, %v5991
  %v5993 = vpop.f32.mrb[0].mxu0
  %5994 = vmatprep.mubr.bf16.mxu0 %v5592
  %5995 = vmatmul.mubr.bf16.gmra.mrb[0].mxu0 %v5591
  %v5996 = vpop.f32.mrb[0].mxu0
  %v5997 = vadd.f32 0.0, %v5996
  %v5998 = vpop.f32.mrb[0].mxu0
  %v5999 = vpop.f32.mrb[0].mxu0
  %v6000 = vadd.f32 0.0, %v5999
  %v6001 = vpop.f32.mrb[0].mxu0
  %6002 = vmatprep.mubr.bf16.mxu0 %v5595
  %6003 = vmatmul.mubr.bf16.gmra.mrb[0].mxu0 %v5594
  %v6004 = vpop.f32.mrb[0].mxu0
  %v6005 = vadd.f32 0.0, %v6004
  %v6006 = vpop.f32.mrb[0].mxu0
  %v6007 = vpop.f32.mrb[0].mxu0
  %v6008 = vadd.f32 0.0, %v6007
  %v6009 = vpop.f32.mrb[0].mxu0
  %6010 = vmatprep.mubr.bf16.mxu0 %v5598
  %6011 = vmatmul.mubr.bf16.gmra.mrb[0].mxu0 %v5597
  %v6012 = vpop.f32.mrb[0].mxu0
  %v6013 = vadd.f32 0.0, %v6012
  %v6014 = vpop.f32.mrb[0].mxu0
  %v6015 = vpop.f32.mrb[0].mxu0
  %v6016 = vadd.f32 0.0, %v6015
  %v6017 = vpop.f32.mrb[0].mxu0
  %6018 = vmatprep.mubr.bf16.mxu0 %v5601
  %6019 = vmatmul.mubr.bf16.gmra.mrb[0].mxu0 %v5600
  %v6020 = vpop.f32.mrb[0].mxu0
  %v6021 = vadd.f32 0.0, %v6020
  %v6022 = vpop.f32.mrb[0].mxu0
  %v6023 = vpop.f32.mrb[0].mxu0
  %v6024 = vadd.f32 0.0, %v6023
  %v6025 = vpop.f32.mrb[0].mxu0
  %6026 = vmatprep.mubr.bf16.mxu0 %v5604
  %6027 = vmatmul.mubr.bf16.gmra.mrb[0].mxu0 %v5603
  %v6028 = vpop.f32.mrb[0].mxu0
  %v6029 = vadd.f32 0.0, %v6028
  %v6030 = vpop.f32.mrb[0].mxu0
  %v6031 = vpop.f32.mrb[0].mxu0
  %v6032 = vadd.f32 0.0, %v6031
  %v6033 = vpop.f32.mrb[0].mxu0
  %6034 = vmatprep.mubr.bf16.mxu0 %v5607
  %6035 = vmatmul.mubr.bf16.gmra.mrb[0].mxu0 %v5606
  %v6036 = vpop.f32.mrb[0].mxu0
  %v6037 = vadd.f32 0.0, %v6036
  %v6038 = vpop.f32.mrb[0].mxu0
  %v6039 = vpop.f32.mrb[0].mxu0
  %v6040 = vadd.f32 0.0, %v6039
  %v6041 = vpop.f32.mrb[0].mxu0
  %6042 = vmatprep.mubr.bf16.mxu0 %v5610
  %6043 = vmatmul.mubr.bf16.gmra.mrb[0].mxu0 %v5609
  %v6044 = vpop.f32.mrb[0].mxu0
  %v6045 = vadd.f32 0.0, %v6044
  %v6046 = vpop.f32.mrb[0].mxu0
  %v6047 = vpop.f32.mrb[0].mxu0
  %v6048 = vadd.f32 0.0, %v6047
  %v6049 = vpop.f32.mrb[0].mxu0
  %6050 = vmatprep.mubr.bf16.mxu0 %v5613
  %6051 = vmatmul.mubr.bf16.gmra.mrb[0].mxu0 %v5612
  %v6052 = vpop.f32.mrb[0].mxu0
  %v6053 = vadd.f32 0.0, %v6052
  %v6054 = vpop.f32.mrb[0].mxu0
  %v6055 = vpop.f32.mrb[0].mxu0
  %v6056 = vadd.f32 0.0, %v6055
  %v6057 = vpop.f32.mrb[0].mxu0
  %6058 = vmatprep.mubr.bf16.mxu0 %v5616
  %6059 = vmatmul.mubr.bf16.gmra.mrb[0].mxu0 %v5615
  %v6060 = vpop.f32.mrb[0].mxu0
  %v6061 = vadd.f32 0.0, %v6060
  %v6062 = vpop.f32.mrb[0].mxu0
  %v6063 = vpop.f32.mrb[0].mxu0
  %v6064 = vadd.f32 0.0, %v6063
  %v6065 = vpop.f32.mrb[0].mxu0
  %6066 = vmatprep.mubr.bf16.mxu0 %v5619
  %6067 = vmatmul.mubr.bf16.gmra.mrb[0].mxu0 %v5618
  %v6068 = vpop.f32.mrb[0].mxu0
  %v6069 = vadd.f32 0.0, %v6068
  %v6070 = vpop.f32.mrb[0].mxu0
  %v6071 = vpop.f32.mrb[0].mxu0
  %v6072 = vadd.f32 0.0, %v6071
  %v6073 = vpop.f32.mrb[0].mxu0
  %6074 = vmatprep.mubr.bf16.mxu0 %v5622
  %6075 = vmatmul.mubr.bf16.gmra.mrb[0].mxu0 %v5621
  %v6076 = vpop.f32.mrb[0].mxu0
  %v6077 = vadd.f32 0.0, %v6076
  %v6078 = vpop.f32.mrb[0].mxu0
  %v6079 = vpop.f32.mrb[0].mxu0
  %v6080 = vadd.f32 0.0, %v6079
  %v6081 = vpop.f32.mrb[0].mxu0
  %6082 = vmatprep.mubr.bf16.mxu0 %v5625
  %6083 = vmatmul.mubr.bf16.gmra.mrb[0].mxu0 %v5624
  %v6084 = vpop.f32.mrb[0].mxu0
  %v6085 = vadd.f32 0.0, %v6084
  %v6086 = vpop.f32.mrb[0].mxu0
  %v6087 = vpop.f32.mrb[0].mxu0
  %v6088 = vadd.f32 0.0, %v6087
  %v6089 = vpop.f32.mrb[0].mxu0
  %6090 = vmatprep.mubr.bf16.mxu0 %v5628
  %6091 = vmatmul.mubr.bf16.gmra.mrb[0].mxu0 %v5627
  %v6092 = vpop.f32.mrb[0].mxu0
  %v6093 = vadd.f32 0.0, %v6092
  %v6094 = vpop.f32.mrb[0].mxu0
  %v6095 = vpop.f32.mrb[0].mxu0
  %v6096 = vadd.f32 0.0, %v6095
  %v6097 = vpop.f32.mrb[0].mxu0
  %6098 = vmatprep.mubr.bf16.mxu0 %v5631
  %6099 = vmatmul.mubr.bf16.gmra.mrb[0].mxu0 %v5630
  %v6100 = vpop.f32.mrb[0].mxu0
  %v6101 = vadd.f32 0.0, %v6100
  %v6102 = vpop.f32.mrb[0].mxu0
  %v6103 = vpop.f32.mrb[0].mxu0
  %v6104 = vadd.f32 0.0, %v6103
  %v6105 = vpop.f32.mrb[0].mxu0
  %6106 = vmatprep.mubr.bf16.mxu0 %v5634
  %6107 = vmatmul.mubr.bf16.gmra.mrb[0].mxu0 %v5633
  %v6108 = vpop.f32.mrb[0].mxu0
  %v6109 = vadd.f32 0.0, %v6108
  %v6110 = vpop.f32.mrb[0].mxu0
  %v6111 = vpop.f32.mrb[0].mxu0
  %v6112 = vadd.f32 0.0, %v6111
  %v6113 = vpop.f32.mrb[0].mxu0
  %6114 = vmatprep.mubr.bf16.mxu0 %v5637
  %6115 = vmatmul.mubr.bf16.gmra.mrb[0].mxu0 %v5636
  %v6116 = vpop.f32.mrb[0].mxu0
  %v6117 = vadd.f32 0.0, %v6116
  %v6118 = vpop.f32.mrb[0].mxu0
  %v6119 = vpop.f32.mrb[0].mxu0
  %v6120 = vadd.f32 0.0, %v6119
  %v6121 = vpop.f32.mrb[0].mxu0
  %6122 = vmatprep.mubr.bf16.mxu0 %v5640
  %6123 = vmatmul.mubr.bf16.gmra.mrb[0].mxu0 %v5639
  %v6124 = vpop.f32.mrb[0].mxu0
  %v6125 = vadd.f32 0.0, %v6124
  %v6126 = vpop.f32.mrb[0].mxu0
  %v6127 = vpop.f32.mrb[0].mxu0
  %v6128 = vadd.f32 0.0, %v6127
  %v6129 = vpop.f32.mrb[0].mxu0
  %6130 = vmatprep.mubr.bf16.mxu0 %v5643
  %6131 = vmatmul.mubr.bf16.gmra.mrb[0].mxu0 %v5642
  %v6132 = vpop.f32.mrb[0].mxu0
  %v6133 = vadd.f32 0.0, %v6132
  %v6134 = vpop.f32.mrb[0].mxu0
  %v6135 = vpop.f32.mrb[0].mxu0
  %v6136 = vadd.f32 0.0, %v6135
  %v6137 = vpop.f32.mrb[0].mxu0
  %6138 = vmatprep.mubr.bf16.mxu0 %v5646
  %6139 = vmatmul.mubr.bf16.gmra.mrb[0].mxu0 %v5645
  %v6140 = vpop.f32.mrb[0].mxu0
  %v6141 = vadd.f32 0.0, %v6140
  %v6142 = vpop.f32.mrb[0].mxu0
  %v6143 = vpop.f32.mrb[0].mxu0
  %v6144 = vadd.f32 0.0, %v6143
  %v6145 = vpop.f32.mrb[0].mxu0
  %6146 = vmatprep.mubr.bf16.mxu0 %v5649
  %6147 = vmatmul.mubr.bf16.gmra.mrb[0].mxu0 %v5648
  %v6148 = vpop.f32.mrb[0].mxu0
  %v6149 = vadd.f32 0.0, %v6148
  %v6150 = vpop.f32.mrb[0].mxu0
  %v6151 = vpop.f32.mrb[0].mxu0
  %v6152 = vadd.f32 0.0, %v6151
  %v6153 = vpop.f32.mrb[0].mxu0
  %6154 = vmatprep.mubr.bf16.mxu0 %v5652
  %6155 = vmatmul.mubr.bf16.gmra.mrb[0].mxu0 %v5651
  %v6156 = vpop.f32.mrb[0].mxu0
  %v6157 = vadd.f32 0.0, %v6156
  %v6158 = vpop.f32.mrb[0].mxu0
  %v6159 = vpop.f32.mrb[0].mxu0
  %v6160 = vadd.f32 0.0, %v6159
  %v6161 = vpop.f32.mrb[0].mxu0
  %6162 = vmatprep.mubr.bf16.mxu0 %v5655
  %6163 = vmatmul.mubr.bf16.gmra.mrb[0].mxu0 %v5654
  %v6164 = vpop.f32.mrb[0].mxu0
  %v6165 = vadd.f32 0.0, %v6164
  %v6166 = vpop.f32.mrb[0].mxu0
  %v6167 = vpop.f32.mrb[0].mxu0
  %v6168 = vadd.f32 0.0, %v6167
  %v6169 = vpop.f32.mrb[0].mxu0
  %6170 = vmatprep.mubr.bf16.mxu0 %v5658
  %6171 = vmatmul.mubr.bf16.gmra.mrb[0].mxu0 %v5657
  %v6172 = vpop.f32.mrb[0].mxu0
  %v6173 = vadd.f32 0.0, %v6172
  %v6174 = vpop.f32.mrb[0].mxu0
  %v6175 = vpop.f32.mrb[0].mxu0
  %v6176 = vadd.f32 0.0, %v6175
  %v6177 = vpop.f32.mrb[0].mxu0
  %6178 = vmatprep.mubr.bf16.mxu0 %v5661
  %6179 = vmatmul.mubr.bf16.gmra.mrb[0].mxu0 %v5660
  %v6180 = vpop.f32.mrb[0].mxu0
  %v6181 = vadd.f32 0.0, %v6180
  %v6182 = vpop.f32.mrb[0].mxu0
  %v6183 = vpop.f32.mrb[0].mxu0
  %v6184 = vadd.f32 0.0, %v6183
  %v6185 = vpop.f32.mrb[0].mxu0
  %6186 = vmatprep.mubr.bf16.mxu0 %v5664
  %6187 = vmatmul.mubr.bf16.gmra.mrb[0].mxu0 %v5663
  %v6188 = vpop.f32.mrb[0].mxu0
  %v6189 = vadd.f32 0.0, %v6188
  %v6190 = vpop.f32.mrb[0].mxu0
  %v6191 = vpop.f32.mrb[0].mxu0
  %v6192 = vadd.f32 0.0, %v6191
  %v6193 = vpop.f32.mrb[0].mxu0
  %6194 = vdwg.mxu0
  %6195 = vmatprep.subr.bf16.mxu0 0
  %6196 = vmatpush1.bf16.msra.mxu0 %v5790
  %6197 = vmatprep.subr.bf16.mxu0 0
  %6198 = vmatpush1.bf16.msra.mxu0 %v5791
  %6199 = vmatprep.subr.bf16.mxu0 0
  %6200 = vmatpush1.bf16.msra.mxu0 0
  %6201 = vmatprep.subr.bf16.mxu0 0
  %6202 = vmatpush1.bf16.msra.mxu0 0
  %6203 = vmatprep.subr.bf16.mxu0 0
  %6204 = vmatpush1.bf16.msra.mxu0 0
  %6205 = vmatprep.subr.bf16.mxu0 0
  %6206 = vmatpush1.bf16.msra.mxu0 0
  %6207 = vmatprep.subr.bf16.mxu0 0
  %6208 = vmatpush1.bf16.msra.mxu0 0
  %6209 = vmatprep.subr.bf16.mxu0 0
  %6210 = vmatpush1.bf16.msra.mxu0 0
  %6211 = vmatprep.subr.bf16.mxu0 0
  %6212 = vmatpush1.bf16.msra.mxu0 0
  %6213 = vmatprep.subr.bf16.mxu0 0
  %6214 = vmatpush1.bf16.msra.mxu0 0
  %6215 = vmatprep.subr.bf16.mxu0 0
  %6216 = vmatpush1.bf16.msra.mxu0 0
  %6217 = vmatprep.subr.bf16.mxu0 0
  %6218 = vmatpush1.bf16.msra.mxu0 0
  %6219 = vmatprep.subr.bf16.mxu0 0
  %6220 = vmatpush1.bf16.msra.mxu0 0
  %6221 = vmatprep.subr.bf16.mxu0 0
  %6222 = vmatpush1.bf16.msra.mxu0 0
  %6223 = vmatprep.subr.bf16.mxu0 0
  %6224 = vmatpush1.bf16.msra.mxu0 0
  %6225 = vmatprep.subr.bf16.mxu0 0
  %6226 = vmatpush1.bf16.msra.mxu0 0
  %6227 = vmatprep.mubr.bf16.mxu0 0
  %6228 = vmatmul.mubr.bf16.gmra.mrb[0].mxu0 %v5811
  %v6229 = vpop.f32.mrb[0].mxu0
  %v6230 = vadd.f32 %v5941, %v6229
  %v6231 = vpop.f32.mrb[0].mxu0
  %v6232 = vpop.f32.mrb[0].mxu0
  %v6233 = vadd.f32 %v5944, %v6232
  %v6234 = vpop.f32.mrb[0].mxu0
  %6235 = vmatprep.mubr.bf16.mxu0 0
  %6236 = vmatmul.mubr.bf16.gmra.mrb[0].mxu0 %v5814
  %v6237 = vpop.f32.mrb[0].mxu0
  %v6238 = vadd.f32 %v5949, %v6237
  %v6239 = vpop.f32.mrb[0].mxu0
  %v6240 = vpop.f32.mrb[0].mxu0
  %v6241 = vadd.f32 %v5952, %v6240
  %v6242 = vpop.f32.mrb[0].mxu0
  %6243 = vmatprep.mubr.bf16.mxu0 0
  %6244 = vmatmul.mubr.bf16.gmra.mrb[0].mxu0 %v5817
  %v6245 = vpop.f32.mrb[0].mxu0
  %v6246 = vadd.f32 %v5957, %v6245
  %v6247 = vpop.f32.mrb[0].mxu0
  %v6248 = vpop.f32.mrb[0].mxu0
  %v6249 = vadd.f32 %v5960, %v6248
  %v6250 = vpop.f32.mrb[0].mxu0
  %6251 = vmatprep.mubr.bf16.mxu0 0
  %6252 = vmatmul.mubr.bf16.gmra.mrb[0].mxu0 %v5820
  %v6253 = vpop.f32.mrb[0].mxu0
  %v6254 = vadd.f32 %v5965, %v6253
  %v6255 = vpop.f32.mrb[0].mxu0
  %v6256 = vpop.f32.mrb[0].mxu0
  %v6257 = vadd.f32 %v5968, %v6256
  %v6258 = vpop.f32.mrb[0].mxu0
  %6259 = vmatprep.mubr.bf16.mxu0 0
  %6260 = vmatmul.mubr.bf16.gmra.mrb[0].mxu0 %v5823
  %v6261 = vpop.f32.mrb[0].mxu0
  %v6262 = vadd.f32 %v5973, %v6261
  %v6263 = vpop.f32.mrb[0].mxu0
  %v6264 = vpop.f32.mrb[0].mxu0
  %v6265 = vadd.f32 %v5976, %v6264
  %v6266 = vpop.f32.mrb[0].mxu0
  %6267 = vmatprep.mubr.bf16.mxu0 0
  %6268 = vmatmul.mubr.bf16.gmra.mrb[0].mxu0 %v5826
  %v6269 = vpop.f32.mrb[0].mxu0
  %v6270 = vadd.f32 %v5981, %v6269
  %v6271 = vpop.f32.mrb[0].mxu0
  %v6272 = vpop.f32.mrb[0].mxu0
  %v6273 = vadd.f32 %v5984, %v6272
  %v6274 = vpop.f32.mrb[0].mxu0
  %6275 = vmatprep.mubr.bf16.mxu0 0
  %6276 = vmatmul.mubr.bf16.gmra.mrb[0].mxu0 %v5829
  %v6277 = vpop.f32.mrb[0].mxu0
  %v6278 = vadd.f32 %v5989, %v6277
  %v6279 = vpop.f32.mrb[0].mxu0
  %v6280 = vpop.f32.mrb[0].mxu0
  %v6281 = vadd.f32 %v5992, %v6280
  %v6282 = vpop.f32.mrb[0].mxu0
  %6283 = vmatprep.mubr.bf16.mxu0 0
  %6284 = vmatmul.mubr.bf16.gmra.mrb[0].mxu0 %v5832
  %v6285 = vpop.f32.mrb[0].mxu0
  %v6286 = vadd.f32 %v5997, %v6285
  %v6287 = vpop.f32.mrb[0].mxu0
  %v6288 = vpop.f32.mrb[0].mxu0
  %v6289 = vadd.f32 %v6000, %v6288
  %v6290 = vpop.f32.mrb[0].mxu0
  %6291 = vmatprep.mubr.bf16.mxu0 0
  %6292 = vmatmul.mubr.bf16.gmra.mrb[0].mxu0 %v5835
  %v6293 = vpop.f32.mrb[0].mxu0
  %v6294 = vadd.f32 %v6005, %v6293
  %v6295 = vpop.f32.mrb[0].mxu0
  %v6296 = vpop.f32.mrb[0].mxu0
  %v6297 = vadd.f32 %v6008, %v6296
  %v6298 = vpop.f32.mrb[0].mxu0
  %6299 = vmatprep.mubr.bf16.mxu0 0
  %6300 = vmatmul.mubr.bf16.gmra.mrb[0].mxu0 %v5838
  %v6301 = vpop.f32.mrb[0].mxu0
  %v6302 = vadd.f32 %v6013, %v6301
  %v6303 = vpop.f32.mrb[0].mxu0
  %v6304 = vpop.f32.mrb[0].mxu0
  %v6305 = vadd.f32 %v6016, %v6304
  %v6306 = vpop.f32.mrb[0].mxu0
  %6307 = vmatprep.mubr.bf16.mxu0 0
  %6308 = vmatmul.mubr.bf16.gmra.mrb[0].mxu0 %v5841
  %v6309 = vpop.f32.mrb[0].mxu0
  %v6310 = vadd.f32 %v6021, %v6309
  %v6311 = vpop.f32.mrb[0].mxu0
  %v6312 = vpop.f32.mrb[0].mxu0
  %v6313 = vadd.f32 %v6024, %v6312
  %v6314 = vpop.f32.mrb[0].mxu0
  %6315 = vmatprep.mubr.bf16.mxu0 0
  %6316 = vmatmul.mubr.bf16.gmra.mrb[0].mxu0 %v5844
  %v6317 = vpop.f32.mrb[0].mxu0
  %v6318 = vadd.f32 %v6029, %v6317
  %v6319 = vpop.f32.mrb[0].mxu0
  %v6320 = vpop.f32.mrb[0].mxu0
  %v6321 = vadd.f32 %v6032, %v6320
  %v6322 = vpop.f32.mrb[0].mxu0
  %6323 = vmatprep.mubr.bf16.mxu0 0
  %6324 = vmatmul.mubr.bf16.gmra.mrb[0].mxu0 %v5847
  %v6325 = vpop.f32.mrb[0].mxu0
  %v6326 = vadd.f32 %v6037, %v6325
  %v6327 = vpop.f32.mrb[0].mxu0
  %v6328 = vpop.f32.mrb[0].mxu0
  %v6329 = vadd.f32 %v6040, %v6328
  %v6330 = vpop.f32.mrb[0].mxu0
  %6331 = vmatprep.mubr.bf16.mxu0 0
  %6332 = vmatmul.mubr.bf16.gmra.mrb[0].mxu0 %v5850
  %v6333 = vpop.f32.mrb[0].mxu0
  %v6334 = vadd.f32 %v6045, %v6333
  %v6335 = vpop.f32.mrb[0].mxu0
  %v6336 = vpop.f32.mrb[0].mxu0
  %v6337 = vadd.f32 %v6048, %v6336
  %v6338 = vpop.f32.mrb[0].mxu0
  %6339 = vmatprep.mubr.bf16.mxu0 0
  %6340 = vmatmul.mubr.bf16.gmra.mrb[0].mxu0 %v5853
  %v6341 = vpop.f32.mrb[0].mxu0
  %v6342 = vadd.f32 %v6053, %v6341
  %v6343 = vpop.f32.mrb[0].mxu0
  %v6344 = vpop.f32.mrb[0].mxu0
  %v6345 = vadd.f32 %v6056, %v6344
  %v6346 = vpop.f32.mrb[0].mxu0
  %6347 = vmatprep.mubr.bf16.mxu0 0
  %6348 = vmatmul.mubr.bf16.gmra.mrb[0].mxu0 %v5856
  %v6349 = vpop.f32.mrb[0].mxu0
  %v6350 = vadd.f32 %v6061, %v6349
  %v6351 = vpop.f32.mrb[0].mxu0
  %v6352 = vpop.f32.mrb[0].mxu0
  %v6353 = vadd.f32 %v6064, %v6352
  %v6354 = vpop.f32.mrb[0].mxu0
  %6355 = vmatprep.mubr.bf16.mxu0 0
  %6356 = vmatmul.mubr.bf16.gmra.mrb[0].mxu0 %v5859
  %v6357 = vpop.f32.mrb[0].mxu0
  %v6358 = vadd.f32 %v6069, %v6357
  %v6359 = vpop.f32.mrb[0].mxu0
  %v6360 = vpop.f32.mrb[0].mxu0
  %v6361 = vadd.f32 %v6072, %v6360
  %v6362 = vpop.f32.mrb[0].mxu0
  %6363 = vmatprep.mubr.bf16.mxu0 0
  %6364 = vmatmul.mubr.bf16.gmra.mrb[0].mxu0 %v5862
  %v6365 = vpop.f32.mrb[0].mxu0
  %v6366 = vadd.f32 %v6077, %v6365
  %v6367 = vpop.f32.mrb[0].mxu0
  %v6368 = vpop.f32.mrb[0].mxu0
  %v6369 = vadd.f32 %v6080, %v6368
  %v6370 = vpop.f32.mrb[0].mxu0
  %6371 = vmatprep.mubr.bf16.mxu0 0
  %6372 = vmatmul.mubr.bf16.gmra.mrb[0].mxu0 %v5865
  %v6373 = vpop.f32.mrb[0].mxu0
  %v6374 = vadd.f32 %v6085, %v6373
  %v6375 = vpop.f32.mrb[0].mxu0
  %v6376 = vpop.f32.mrb[0].mxu0
  %v6377 = vadd.f32 %v6088, %v6376
  %v6378 = vpop.f32.mrb[0].mxu0
  %6379 = vmatprep.mubr.bf16.mxu0 0
  %6380 = vmatmul.mubr.bf16.gmra.mrb[0].mxu0 %v5868
  %v6381 = vpop.f32.mrb[0].mxu0
  %v6382 = vadd.f32 %v6093, %v6381
  %v6383 = vpop.f32.mrb[0].mxu0
  %v6384 = vpop.f32.mrb[0].mxu0
  %v6385 = vadd.f32 %v6096, %v6384
  %v6386 = vpop.f32.mrb[0].mxu0
  %6387 = vmatprep.mubr.bf16.mxu0 0
  %6388 = vmatmul.mubr.bf16.gmra.mrb[0].mxu0 %v5871
  %v6389 = vpop.f32.mrb[0].mxu0
  %v6390 = vadd.f32 %v6101, %v6389
  %v6391 = vpop.f32.mrb[0].mxu0
  %v6392 = vpop.f32.mrb[0].mxu0
  %v6393 = vadd.f32 %v6104, %v6392
  %v6394 = vpop.f32.mrb[0].mxu0
  %6395 = vmatprep.mubr.bf16.mxu0 0
  %6396 = vmatmul.mubr.bf16.gmra.mrb[0].mxu0 %v5874
  %v6397 = vpop.f32.mrb[0].mxu0
  %v6398 = vadd.f32 %v6109, %v6397
  %v6399 = vpop.f32.mrb[0].mxu0
  %v6400 = vpop.f32.mrb[0].mxu0
  %v6401 = vadd.f32 %v6112, %v6400
  %v6402 = vpop.f32.mrb[0].mxu0
  %6403 = vmatprep.mubr.bf16.mxu0 0
  %6404 = vmatmul.mubr.bf16.gmra.mrb[0].mxu0 %v5877
  %v6405 = vpop.f32.mrb[0].mxu0
  %v6406 = vadd.f32 %v6117, %v6405
  %v6407 = vpop.f32.mrb[0].mxu0
  %v6408 = vpop.f32.mrb[0].mxu0
  %v6409 = vadd.f32 %v6120, %v6408
  %v6410 = vpop.f32.mrb[0].mxu0
  %6411 = vmatprep.mubr.bf16.mxu0 0
  %6412 = vmatmul.mubr.bf16.gmra.mrb[0].mxu0 %v5880
  %v6413 = vpop.f32.mrb[0].mxu0
  %v6414 = vadd.f32 %v6125, %v6413
  %v6415 = vpop.f32.mrb[0].mxu0
  %v6416 = vpop.f32.mrb[0].mxu0
  %v6417 = vadd.f32 %v6128, %v6416
  %v6418 = vpop.f32.mrb[0].mxu0
  %6419 = vmatprep.mubr.bf16.mxu0 0
  %6420 = vmatmul.mubr.bf16.gmra.mrb[0].mxu0 %v5883
  %v6421 = vpop.f32.mrb[0].mxu0
  %v6422 = vadd.f32 %v6133, %v6421
  %v6423 = vpop.f32.mrb[0].mxu0
  %v6424 = vpop.f32.mrb[0].mxu0
  %v6425 = vadd.f32 %v6136, %v6424
  %v6426 = vpop.f32.mrb[0].mxu0
  %6427 = vmatprep.mubr.bf16.mxu0 0
  %6428 = vmatmul.mubr.bf16.gmra.mrb[0].mxu0 %v5886
  %v6429 = vpop.f32.mrb[0].mxu0
  %v6430 = vadd.f32 %v6141, %v6429
  %v6431 = vpop.f32.mrb[0].mxu0
  %v6432 = vpop.f32.mrb[0].mxu0
  %v6433 = vadd.f32 %v6144, %v6432
  %v6434 = vpop.f32.mrb[0].mxu0
  %6435 = vmatprep.mubr.bf16.mxu0 0
  %6436 = vmatmul.mubr.bf16.gmra.mrb[0].mxu0 %v5889
  %v6437 = vpop.f32.mrb[0].mxu0
  %v6438 = vadd.f32 %v6149, %v6437
  %v6439 = vpop.f32.mrb[0].mxu0
  %v6440 = vpop.f32.mrb[0].mxu0
  %v6441 = vadd.f32 %v6152, %v6440
  %v6442 = vpop.f32.mrb[0].mxu0
  %6443 = vmatprep.mubr.bf16.mxu0 0
  %6444 = vmatmul.mubr.bf16.gmra.mrb[0].mxu0 %v5892
  %v6445 = vpop.f32.mrb[0].mxu0
  %v6446 = vadd.f32 %v6157, %v6445
  %v6447 = vpop.f32.mrb[0].mxu0
  %v6448 = vpop.f32.mrb[0].mxu0
  %v6449 = vadd.f32 %v6160, %v6448
  %v6450 = vpop.f32.mrb[0].mxu0
  %6451 = vmatprep.mubr.bf16.mxu0 0
  %6452 = vmatmul.mubr.bf16.gmra.mrb[0].mxu0 %v5895
  %v6453 = vpop.f32.mrb[0].mxu0
  %v6454 = vadd.f32 %v6165, %v6453
  %v6455 = vpop.f32.mrb[0].mxu0
  %v6456 = vpop.f32.mrb[0].mxu0
  %v6457 = vadd.f32 %v6168, %v6456
  %v6458 = vpop.f32.mrb[0].mxu0
  %6459 = vmatprep.mubr.bf16.mxu0 0
  %6460 = vmatmul.mubr.bf16.gmra.mrb[0].mxu0 %v5898
  %v6461 = vpop.f32.mrb[0].mxu0
  %v6462 = vadd.f32 %v6173, %v6461
  %v6463 = vpop.f32.mrb[0].mxu0
  %v6464 = vpop.f32.mrb[0].mxu0
  %v6465 = vadd.f32 %v6176, %v6464
  %v6466 = vpop.f32.mrb[0].mxu0
  %6467 = vmatprep.mubr.bf16.mxu0 0
  %6468 = vmatmul.mubr.bf16.gmra.mrb[0].mxu0 %v5901
  %v6469 = vpop.f32.mrb[0].mxu0
  %v6470 = vadd.f32 %v6181, %v6469
  %v6471 = vpop.f32.mrb[0].mxu0
  %v6472 = vpop.f32.mrb[0].mxu0
  %v6473 = vadd.f32 %v6184, %v6472
  %v6474 = vpop.f32.mrb[0].mxu0
  %6475 = vmatprep.mubr.bf16.mxu0 0
  %6476 = vmatmul.mubr.bf16.gmra.mrb[0].mxu0 %v5904
  %v6477 = vpop.f32.mrb[0].mxu0
  %v6478 = vadd.f32 %v6189, %v6477
  %v6479 = vpop.f32.mrb[0].mxu0
  %v6480 = vpop.f32.mrb[0].mxu0
  %v6481 = vadd.f32 %v6192, %v6480
  %v6482 = vpop.f32.mrb[0].mxu0
  %6483 = vdwg.mxu0
  %v6484 = vld [vmem:[%s2] sm:$0x1]
  %v6486 = vlaneseq
  %v6487 = vshrl.u32 %v6486, 7
  %v6488 = vsub.s32 0, %v6487
  %v6489 = vrot.slane %v6484, %v6488
  %v6491 = vmul.f32 %v6230, %v6489
  %v6492 = vmul.f32 %v6233, %v6489
  %v6493 = vmul.f32 %v6238, %v6489
  %v6494 = vmul.f32 %v6241, %v6489
  %v6495 = vmul.f32 %v6246, %v6489
  %v6496 = vmul.f32 %v6249, %v6489
  %v6497 = vmul.f32 %v6254, %v6489
  %v6498 = vmul.f32 %v6257, %v6489
  %v6499 = vmul.f32 %v6262, %v6489
  %v6500 = vmul.f32 %v6265, %v6489
  %v6501 = vmul.f32 %v6270, %v6489
  %v6502 = vmul.f32 %v6273, %v6489
  %v6503 = vmul.f32 %v6278, %v6489
  %v6504 = vmul.f32 %v6281, %v6489
  %v6505 = vmul.f32 %v6286, %v6489
  %v6506 = vmul.f32 %v6289, %v6489
  %v6507 = vmul.f32 %v6294, %v6489
  %v6508 = vmul.f32 %v6297, %v6489
  %v6509 = vmul.f32 %v6302, %v6489
  %v6510 = vmul.f32 %v6305, %v6489
  %v6511 = vmul.f32 %v6310, %v6489
  %v6512 = vmul.f32 %v6313, %v6489
  %v6513 = vmul.f32 %v6318, %v6489
  %v6514 = vmul.f32 %v6321, %v6489
  %v6515 = vmul.f32 %v6326, %v6489
  %v6516 = vmul.f32 %v6329, %v6489
  %v6517 = vmul.f32 %v6334, %v6489
  %v6518 = vmul.f32 %v6337, %v6489
  %v6519 = vmul.f32 %v6342, %v6489
  %v6520 = vmul.f32 %v6345, %v6489
  %v6521 = vmul.f32 %v6350, %v6489
  %v6522 = vmul.f32 %v6353, %v6489
  %v6523 = vmul.f32 %v6358, %v6489
  %v6524 = vmul.f32 %v6361, %v6489
  %v6525 = vmul.f32 %v6366, %v6489
  %v6526 = vmul.f32 %v6369, %v6489
  %v6527 = vmul.f32 %v6374, %v6489
  %v6528 = vmul.f32 %v6377, %v6489
  %v6529 = vmul.f32 %v6382, %v6489
  %v6530 = vmul.f32 %v6385, %v6489
  %v6531 = vmul.f32 %v6390, %v6489
  %v6532 = vmul.f32 %v6393, %v6489
  %v6533 = vmul.f32 %v6398, %v6489
  %v6534 = vmul.f32 %v6401, %v6489
  %v6535 = vmul.f32 %v6406, %v6489
  %v6536 = vmul.f32 %v6409, %v6489
  %v6537 = vmul.f32 %v6414, %v6489
  %v6538 = vmul.f32 %v6417, %v6489
  %v6539 = vmul.f32 %v6422, %v6489
  %v6540 = vmul.f32 %v6425, %v6489
  %v6541 = vmul.f32 %v6430, %v6489
  %v6542 = vmul.f32 %v6433, %v6489
  %v6543 = vmul.f32 %v6438, %v6489
  %v6544 = vmul.f32 %v6441, %v6489
  %v6545 = vmul.f32 %v6446, %v6489
  %v6546 = vmul.f32 %v6449, %v6489
  %v6547 = vmul.f32 %v6454, %v6489
  %v6548 = vmul.f32 %v6457, %v6489
  %v6549 = vmul.f32 %v6462, %v6489
  %v6550 = vmul.f32 %v6465, %v6489
  %v6551 = vmul.f32 %v6470, %v6489
  %v6552 = vmul.f32 %v6473, %v6489
  %v6553 = vmul.f32 %v6478, %v6489
  %v6554 = vmul.f32 %v6481, %v6489
  %v6555 = vld [vmem:[%s3] sm:$0x1]
  %v6557 = vlaneseq
  %v6558 = vshrl.u32 %v6557, 7
  %v6559 = vsub.s32 0, %v6558
  %v6560 = vrot.slane %v6555, %v6559
  %v6562 = vadd.f32 %v6491, %v6560
  %v6563 = vadd.f32 %v6492, %v6560
  %v6564 = vadd.f32 %v6493, %v6560
  %v6565 = vadd.f32 %v6494, %v6560
  %v6566 = vadd.f32 %v6495, %v6560
  %v6567 = vadd.f32 %v6496, %v6560
  %v6568 = vadd.f32 %v6497, %v6560
  %v6569 = vadd.f32 %v6498, %v6560
  %v6570 = vadd.f32 %v6499, %v6560
  %v6571 = vadd.f32 %v6500, %v6560
  %v6572 = vadd.f32 %v6501, %v6560
  %v6573 = vadd.f32 %v6502, %v6560
  %v6574 = vadd.f32 %v6503, %v6560
  %v6575 = vadd.f32 %v6504, %v6560
  %v6576 = vadd.f32 %v6505, %v6560
  %v6577 = vadd.f32 %v6506, %v6560
  %v6578 = vadd.f32 %v6507, %v6560
  %v6579 = vadd.f32 %v6508, %v6560
  %v6580 = vadd.f32 %v6509, %v6560
  %v6581 = vadd.f32 %v6510, %v6560
  %v6582 = vadd.f32 %v6511, %v6560
  %v6583 = vadd.f32 %v6512, %v6560
  %v6584 = vadd.f32 %v6513, %v6560
  %v6585 = vadd.f32 %v6514, %v6560
  %v6586 = vadd.f32 %v6515, %v6560
  %v6587 = vadd.f32 %v6516, %v6560
  %v6588 = vadd.f32 %v6517, %v6560
  %v6589 = vadd.f32 %v6518, %v6560
  %v6590 = vadd.f32 %v6519, %v6560
  %v6591 = vadd.f32 %v6520, %v6560
  %v6592 = vadd.f32 %v6521, %v6560
  %v6593 = vadd.f32 %v6522, %v6560
  %v6594 = vadd.f32 %v6523, %v6560
  %v6595 = vadd.f32 %v6524, %v6560
  %v6596 = vadd.f32 %v6525, %v6560
  %v6597 = vadd.f32 %v6526, %v6560
  %v6598 = vadd.f32 %v6527, %v6560
  %v6599 = vadd.f32 %v6528, %v6560
  %v6600 = vadd.f32 %v6529, %v6560
  %v6601 = vadd.f32 %v6530, %v6560
  %v6602 = vadd.f32 %v6531, %v6560
  %v6603 = vadd.f32 %v6532, %v6560
  %v6604 = vadd.f32 %v6533, %v6560
  %v6605 = vadd.f32 %v6534, %v6560
  %v6606 = vadd.f32 %v6535, %v6560
  %v6607 = vadd.f32 %v6536, %v6560
  %v6608 = vadd.f32 %v6537, %v6560
  %v6609 = vadd.f32 %v6538, %v6560
  %v6610 = vadd.f32 %v6539, %v6560
  %v6611 = vadd.f32 %v6540, %v6560
  %v6612 = vadd.f32 %v6541, %v6560
  %v6613 = vadd.f32 %v6542, %v6560
  %v6614 = vadd.f32 %v6543, %v6560
  %v6615 = vadd.f32 %v6544, %v6560
  %v6616 = vadd.f32 %v6545, %v6560
  %v6617 = vadd.f32 %v6546, %v6560
  %v6618 = vadd.f32 %v6547, %v6560
  %v6619 = vadd.f32 %v6548, %v6560
  %v6620 = vadd.f32 %v6549, %v6560
  %v6621 = vadd.f32 %v6550, %v6560
  %v6622 = vadd.f32 %v6551, %v6560
  %v6623 = vadd.f32 %v6552, %v6560
  %v6624 = vadd.f32 %v6553, %v6560
  %v6625 = vadd.f32 %v6554, %v6560
  %v6626 = vmax.f32 %v6562, 0.0
  %v6627 = vmax.f32 %v6563, 0.0
  %v6628 = vmax.f32 %v6564, 0.0
  %v6629 = vmax.f32 %v6565, 0.0
  %v6630 = vmax.f32 %v6566, 0.0
  %v6631 = vmax.f32 %v6567, 0.0
  %v6632 = vmax.f32 %v6568, 0.0
  %v6633 = vmax.f32 %v6569, 0.0
  %v6634 = vmax.f32 %v6570, 0.0
  %v6635 = vmax.f32 %v6571, 0.0
  %v6636 = vmax.f32 %v6572, 0.0
  %v6637 = vmax.f32 %v6573, 0.0
  %v6638 = vmax.f32 %v6574, 0.0
  %v6639 = vmax.f32 %v6575, 0.0
  %v6640 = vmax.f32 %v6576, 0.0
  %v6641 = vmax.f32 %v6577, 0.0
  %v6642 = vmax.f32 %v6578, 0.0
  %v6643 = vmax.f32 %v6579, 0.0
  %v6644 = vmax.f32 %v6580, 0.0
  %v6645 = vmax.f32 %v6581, 0.0
  %v6646 = vmax.f32 %v6582, 0.0
  %v6647 = vmax.f32 %v6583, 0.0
  %v6648 = vmax.f32 %v6584, 0.0
  %v6649 = vmax.f32 %v6585, 0.0
  %v6650 = vmax.f32 %v6586, 0.0
  %v6651 = vmax.f32 %v6587, 0.0
  %v6652 = vmax.f32 %v6588, 0.0
  %v6653 = vmax.f32 %v6589, 0.0
  %v6654 = vmax.f32 %v6590, 0.0
  %v6655 = vmax.f32 %v6591, 0.0
  %v6656 = vmax.f32 %v6592, 0.0
  %v6657 = vmax.f32 %v6593, 0.0
  %v6658 = vmax.f32 %v6594, 0.0
  %v6659 = vmax.f32 %v6595, 0.0
  %v6660 = vmax.f32 %v6596, 0.0
  %v6661 = vmax.f32 %v6597, 0.0
  %v6662 = vmax.f32 %v6598, 0.0
  %v6663 = vmax.f32 %v6599, 0.0
  %v6664 = vmax.f32 %v6600, 0.0
  %v6665 = vmax.f32 %v6601, 0.0
  %v6666 = vmax.f32 %v6602, 0.0
  %v6667 = vmax.f32 %v6603, 0.0
  %v6668 = vmax.f32 %v6604, 0.0
  %v6669 = vmax.f32 %v6605, 0.0
  %v6670 = vmax.f32 %v6606, 0.0
  %v6671 = vmax.f32 %v6607, 0.0
  %v6672 = vmax.f32 %v6608, 0.0
  %v6673 = vmax.f32 %v6609, 0.0
  %v6674 = vmax.f32 %v6610, 0.0
  %v6675 = vmax.f32 %v6611, 0.0
  %v6676 = vmax.f32 %v6612, 0.0
  %v6677 = vmax.f32 %v6613, 0.0
  %v6678 = vmax.f32 %v6614, 0.0
  %v6679 = vmax.f32 %v6615, 0.0
  %v6680 = vmax.f32 %v6616, 0.0
  %v6681 = vmax.f32 %v6617, 0.0
  %v6682 = vmax.f32 %v6618, 0.0
  %v6683 = vmax.f32 %v6619, 0.0
  %v6684 = vmax.f32 %v6620, 0.0
  %v6685 = vmax.f32 %v6621, 0.0
  %v6686 = vmax.f32 %v6622, 0.0
  %v6687 = vmax.f32 %v6623, 0.0
  %v6688 = vmax.f32 %v6624, 0.0
  %v6689 = vmax.f32 %v6625, 0.0
  %v6690 = vrot.slane %v6626, 7
  %v6691 = vrot.slane %v6627, 7
  %v6692 = vrot.slane %v6628, 7
  %v6693 = vrot.slane %v6629, 7
  %v6694 = vrot.slane %v6630, 7
  %v6695 = vrot.slane %v6631, 7
  %v6696 = vrot.slane %v6632, 7
  %v6697 = vrot.slane %v6633, 7
  %v6698 = vrot.slane %v6634, 7
  %v6699 = vrot.slane %v6635, 7
  %v6700 = vrot.slane %v6636, 7
  %v6701 = vrot.slane %v6637, 7
  %v6702 = vrot.slane %v6638, 7
  %v6703 = vrot.slane %v6639, 7
  %v6704 = vrot.slane %v6640, 7
  %v6705 = vrot.slane %v6641, 7
  %v6706 = vrot.slane %v6642, 7
  %v6707 = vrot.slane %v6643, 7
  %v6708 = vrot.slane %v6644, 7
  %v6709 = vrot.slane %v6645, 7
  %v6710 = vrot.slane %v6646, 7
  %v6711 = vrot.slane %v6647, 7
  %v6712 = vrot.slane %v6648, 7
  %v6713 = vrot.slane %v6649, 7
  %v6714 = vrot.slane %v6650, 7
  %v6715 = vrot.slane %v6651, 7
  %v6716 = vrot.slane %v6652, 7
  %v6717 = vrot.slane %v6653, 7
  %v6718 = vrot.slane %v6654, 7
  %v6719 = vrot.slane %v6655, 7
  %v6720 = vrot.slane %v6656, 7
  %v6721 = vrot.slane %v6657, 7
  %v6722 = vrot.slane %v6658, 7
  %v6723 = vrot.slane %v6659, 7
  %v6724 = vrot.slane %v6660, 7
  %v6725 = vrot.slane %v6661, 7
  %v6726 = vrot.slane %v6662, 7
  %v6727 = vrot.slane %v6663, 7
  %v6728 = vrot.slane %v6664, 7
  %v6729 = vrot.slane %v6665, 7
  %v6730 = vrot.slane %v6666, 7
  %v6731 = vrot.slane %v6667, 7
  %v6732 = vrot.slane %v6668, 7
  %v6733 = vrot.slane %v6669, 7
  %v6734 = vrot.slane %v6670, 7
  %v6735 = vrot.slane %v6671, 7
  %v6736 = vrot.slane %v6672, 7
  %v6737 = vrot.slane %v6673, 7
  %v6738 = vrot.slane %v6674, 7
  %v6739 = vrot.slane %v6675, 7
  %v6740 = vrot.slane %v6676, 7
  %v6741 = vrot.slane %v6677, 7
  %v6742 = vrot.slane %v6678, 7
  %v6743 = vrot.slane %v6679, 7
  %v6744 = vrot.slane %v6680, 7
  %v6745 = vrot.slane %v6681, 7
  %v6746 = vrot.slane %v6682, 7
  %v6747 = vrot.slane %v6683, 7
  %v6748 = vrot.slane %v6684, 7
  %v6749 = vrot.slane %v6685, 7
  %v6750 = vrot.slane %v6686, 7
  %v6751 = vrot.slane %v6687, 7
  %v6752 = vrot.slane %v6688, 7
  %v6753 = vrot.slane %v6689, 7
  %v6754 = vsel %vm2076, %v6752, %v6753
  %v6755 = vsel %vm2076, %v6751, %v6752
  %v6756 = vsel %vm2076, %v6750, %v6751
  %v6757 = vsel %vm2076, %v6749, %v6750
  %v6758 = vsel %vm2076, %v6748, %v6749
  %v6759 = vsel %vm2076, %v6747, %v6748
  %v6760 = vsel %vm2076, %v6746, %v6747
  %v6761 = vsel %vm2076, %v6745, %v6746
  %v6762 = vsel %vm2076, %v6744, %v6745
  %v6763 = vsel %vm2076, %v6743, %v6744
  %v6764 = vsel %vm2076, %v6742, %v6743
  %v6765 = vsel %vm2076, %v6741, %v6742
  %v6766 = vsel %vm2076, %v6740, %v6741
  %v6767 = vsel %vm2076, %v6739, %v6740
  %v6768 = vsel %vm2076, %v6738, %v6739
  %v6769 = vsel %vm2076, %v6737, %v6738
  %v6770 = vsel %vm2076, %v6736, %v6737
  %v6771 = vsel %vm2076, %v6735, %v6736
  %v6772 = vsel %vm2076, %v6734, %v6735
  %v6773 = vsel %vm2076, %v6733, %v6734
  %v6774 = vsel %vm2076, %v6732, %v6733
  %v6775 = vsel %vm2076, %v6731, %v6732
  %v6776 = vsel %vm2076, %v6730, %v6731
  %v6777 = vsel %vm2076, %v6729, %v6730
  %v6778 = vsel %vm2076, %v6728, %v6729
  %v6779 = vsel %vm2076, %v6727, %v6728
  %v6780 = vsel %vm2076, %v6726, %v6727
  %v6781 = vsel %vm2076, %v6725, %v6726
  %v6782 = vsel %vm2076, %v6724, %v6725
  %v6783 = vsel %vm2076, %v6723, %v6724
  %v6784 = vsel %vm2076, %v6722, %v6723
  %v6785 = vsel %vm2076, %v6721, %v6722
  %v6786 = vsel %vm2076, %v6720, %v6721
  %v6787 = vsel %vm2076, %v6719, %v6720
  %v6788 = vsel %vm2076, %v6718, %v6719
  %v6789 = vsel %vm2076, %v6717, %v6718
  %v6790 = vsel %vm2076, %v6716, %v6717
  %v6791 = vsel %vm2076, %v6715, %v6716
  %v6792 = vsel %vm2076, %v6714, %v6715
  %v6793 = vsel %vm2076, %v6713, %v6714
  %v6794 = vsel %vm2076, %v6712, %v6713
  %v6795 = vsel %vm2076, %v6711, %v6712
  %v6796 = vsel %vm2076, %v6710, %v6711
  %v6797 = vsel %vm2076, %v6709, %v6710
  %v6798 = vsel %vm2076, %v6708, %v6709
  %v6799 = vsel %vm2076, %v6707, %v6708
  %v6800 = vsel %vm2076, %v6706, %v6707
  %v6801 = vsel %vm2076, %v6705, %v6706
  %v6802 = vsel %vm2076, %v6704, %v6705
  %v6803 = vsel %vm2076, %v6703, %v6704
  %v6804 = vsel %vm2076, %v6702, %v6703
  %v6805 = vsel %vm2076, %v6701, %v6702
  %v6806 = vsel %vm2076, %v6700, %v6701
  %v6807 = vsel %vm2076, %v6699, %v6700
  %v6808 = vsel %vm2076, %v6698, %v6699
  %v6809 = vsel %vm2076, %v6697, %v6698
  %v6810 = vsel %vm2076, %v6696, %v6697
  %v6811 = vsel %vm2076, %v6695, %v6696
  %v6812 = vsel %vm2076, %v6694, %v6695
  %v6813 = vsel %vm2076, %v6693, %v6694
  %v6814 = vsel %vm2076, %v6692, %v6693
  %v6815 = vsel %vm2076, %v6691, %v6692
  %v6816 = vsel %vm2076, %v6690, %v6691
  %v6817 = vsel %vm2076, %v6753, %v6690
  %v6818 = vsel %vm2269, %v6755, 0.0
  %v6819 = vsel %vm2270, %v6754, 0.0
  %v6820 = vsel %vm2271, %v6817, 0.0
  %v6821 = vsel %vm2272, %v6816, 0.0
  %v6822 = vsel %vm2273, %v6815, 0.0
  %v6823 = vsel %vm2274, %v6814, 0.0
  %v6824 = vsel %vm2275, %v6813, 0.0
  %v6825 = vsel %vm2276, %v6812, 0.0
  %v6826 = vsel %vm2277, %v6811, 0.0
  %v6827 = vsel %vm2278, %v6810, 0.0
  %v6828 = vsel %vm2279, %v6809, 0.0
  %v6829 = vsel %vm2280, %v6808, 0.0
  %v6830 = vsel %vm2281, %v6807, 0.0
  %v6831 = vsel %vm2282, %v6806, 0.0
  %v6832 = vsel %vm2283, %v6805, 0.0
  %v6833 = vsel %vm2284, %v6804, 0.0
  %v6834 = vsel %vm2285, %v6803, 0.0
  %v6835 = vsel %vm2286, %v6802, 0.0
  %v6836 = vsel %vm2287, %v6801, 0.0
  %v6837 = vsel %vm2288, %v6800, 0.0
  %v6838 = vsel %vm2289, %v6799, 0.0
  %v6839 = vsel %vm2290, %v6798, 0.0
  %v6840 = vsel %vm2291, %v6797, 0.0
  %v6841 = vsel %vm2292, %v6796, 0.0
  %v6842 = vsel %vm2293, %v6795, 0.0
  %v6843 = vsel %vm2294, %v6794, 0.0
  %v6844 = vsel %vm2295, %v6793, 0.0
  %v6845 = vsel %vm2296, %v6792, 0.0
  %v6846 = vsel %vm2297, %v6791, 0.0
  %v6847 = vsel %vm2298, %v6790, 0.0
  %v6848 = vsel %vm2299, %v6789, 0.0
  %v6849 = vsel %vm2300, %v6788, 0.0
  %v6850 = vsel %vm2301, %v6787, 0.0
  %v6851 = vsel %vm2302, %v6786, 0.0
  %v6852 = vsel %vm2303, %v6785, 0.0
  %v6853 = vsel %vm2304, %v6784, 0.0
  %v6854 = vsel %vm2305, %v6783, 0.0
  %v6855 = vsel %vm2306, %v6782, 0.0
  %v6856 = vsel %vm2307, %v6781, 0.0
  %v6857 = vsel %vm2308, %v6780, 0.0
  %v6858 = vsel %vm2309, %v6779, 0.0
  %v6859 = vsel %vm2310, %v6778, 0.0
  %v6860 = vsel %vm2311, %v6777, 0.0
  %v6861 = vsel %vm2312, %v6776, 0.0
  %v6862 = vsel %vm2313, %v6775, 0.0
  %v6863 = vsel %vm2314, %v6774, 0.0
  %v6864 = vsel %vm2315, %v6773, 0.0
  %v6865 = vsel %vm2316, %v6772, 0.0
  %v6866 = vsel %vm2317, %v6771, 0.0
  %v6867 = vsel %vm2318, %v6770, 0.0
  %v6868 = vsel %vm2319, %v6769, 0.0
  %v6869 = vsel %vm2320, %v6768, 0.0
  %v6870 = vsel %vm2321, %v6767, 0.0
  %v6871 = vsel %vm2322, %v6766, 0.0
  %v6872 = vsel %vm2323, %v6765, 0.0
  %v6873 = vsel %vm2324, %v6764, 0.0
  %v6874 = vsel %vm2325, %v6763, 0.0
  %v6875 = vsel %vm2326, %v6762, 0.0
  %v6876 = vsel %vm2327, %v6761, 0.0
  %v6877 = vsel %vm2328, %v6760, 0.0
  %v6878 = vsel %vm2329, %v6759, 0.0
  %v6879 = vsel %vm2330, %v6758, 0.0
  %v6880 = vsel %vm2331, %v6757, 0.0
  %v6881 = vsel %vm2332, %v6756, 0.0
  %v6882 = vpack.c.bf16 %v6819, %v6818
  %v6883 = vpack.c.bf16 %v6821, %v6820
  %v6884 = vpack.c.bf16 %v6823, %v6822
  %v6885 = vpack.c.bf16 %v6825, %v6824
  %v6886 = vpack.c.bf16 %v6827, %v6826
  %v6887 = vpack.c.bf16 %v6829, %v6828
  %v6888 = vpack.c.bf16 %v6831, %v6830
  %v6889 = vpack.c.bf16 %v6833, %v6832
  %v6890 = vpack.c.bf16 %v6835, %v6834
  %v6891 = vpack.c.bf16 %v6837, %v6836
  %v6892 = vpack.c.bf16 %v6839, %v6838
  %v6893 = vpack.c.bf16 %v6841, %v6840
  %v6894 = vpack.c.bf16 %v6843, %v6842
  %v6895 = vpack.c.bf16 %v6845, %v6844
  %v6896 = vpack.c.bf16 %v6847, %v6846
  %v6897 = vpack.c.bf16 %v6849, %v6848
  %v6898 = vpack.c.bf16 %v6851, %v6850
  %v6899 = vpack.c.bf16 %v6853, %v6852
  %v6900 = vpack.c.bf16 %v6855, %v6854
  %v6901 = vpack.c.bf16 %v6857, %v6856
  %v6902 = vpack.c.bf16 %v6859, %v6858
  %v6903 = vpack.c.bf16 %v6861, %v6860
  %v6904 = vpack.c.bf16 %v6863, %v6862
  %v6905 = vpack.c.bf16 %v6865, %v6864
  %v6906 = vpack.c.bf16 %v6867, %v6866
  %v6907 = vpack.c.bf16 %v6869, %v6868
  %v6908 = vpack.c.bf16 %v6871, %v6870
  %v6909 = vpack.c.bf16 %v6873, %v6872
  %v6910 = vpack.c.bf16 %v6875, %v6874
  %v6911 = vpack.c.bf16 %v6877, %v6876
  %v6912 = vpack.c.bf16 %v6879, %v6878
  %v6913 = vpack.c.bf16 %v6881, %v6880
  %6914 = vst.msk [vmem:[#allocation3] sm:$0xff] %vm2429, %v6882
  %6915 = vst.msk [vmem:[#allocation3 + $0x18] sm:$0xff] %vm2429, %v6883
  %6916 = vst.msk [vmem:[#allocation3 + $0x30] sm:$0xff] %vm2429, %v6884
  %6917 = vst.msk [vmem:[#allocation3 + $0x48] sm:$0xff] %vm2429, %v6885
  %6918 = vst.msk [vmem:[#allocation3 + $0x60] sm:$0xff] %vm2429, %v6886
  %6919 = vst.msk [vmem:[#allocation3 + $0x78] sm:$0xff] %vm2429, %v6887
  %6920 = vst.msk [vmem:[#allocation3 + $0x90] sm:$0xff] %vm2429, %v6888
  %6921 = vst.msk [vmem:[#allocation3 + $0xa8] sm:$0xff] %vm2429, %v6889
  %6922 = vst.msk [vmem:[#allocation3 + $0xc0] sm:$0xff] %vm2429, %v6890
  %6923 = vst.msk [vmem:[#allocation3 + $0xd8] sm:$0xff] %vm2429, %v6891
  %6924 = vst.msk [vmem:[#allocation3 + $0xf0] sm:$0xff] %vm2429, %v6892
  %6925 = vst.msk [vmem:[#allocation3 + $0x108] sm:$0xff] %vm2429, %v6893
  %6926 = vst.msk [vmem:[#allocation3 + $0x120] sm:$0xff] %vm2429, %v6894
  %6927 = vst.msk [vmem:[#allocation3 + $0x138] sm:$0xff] %vm2429, %v6895
  %6928 = vst.msk [vmem:[#allocation3 + $0x150] sm:$0xff] %vm2429, %v6896
  %6929 = vst.msk [vmem:[#allocation3 + $0x168] sm:$0xff] %vm2429, %v6897
  %6930 = vst.msk [vmem:[#allocation3 + $0x180] sm:$0xff] %vm2429, %v6898
  %6931 = vst.msk [vmem:[#allocation3 + $0x198] sm:$0xff] %vm2429, %v6899
  %6932 = vst.msk [vmem:[#allocation3 + $0x1b0] sm:$0xff] %vm2429, %v6900
  %6933 = vst.msk [vmem:[#allocation3 + $0x1c8] sm:$0xff] %vm2429, %v6901
  %6934 = vst.msk [vmem:[#allocation3 + $0x1e0] sm:$0xff] %vm2429, %v6902
  %6935 = vst.msk [vmem:[#allocation3 + $0x1f8] sm:$0xff] %vm2429, %v6903
  %6936 = vst.msk [vmem:[#allocation3 + $0x210] sm:$0xff] %vm2429, %v6904
  %6937 = vst.msk [vmem:[#allocation3 + $0x228] sm:$0xff] %vm2429, %v6905
  %6938 = vst.msk [vmem:[#allocation3 + $0x240] sm:$0xff] %vm2429, %v6906
  %6939 = vst.msk [vmem:[#allocation3 + $0x258] sm:$0xff] %vm2429, %v6907
  %6940 = vst.msk [vmem:[#allocation3 + $0x270] sm:$0xff] %vm2429, %v6908
  %6941 = vst.msk [vmem:[#allocation3 + $0x288] sm:$0xff] %vm2429, %v6909
  %6942 = vst.msk [vmem:[#allocation3 + $0x2a0] sm:$0xff] %vm2429, %v6910
  %6943 = vst.msk [vmem:[#allocation3 + $0x2b8] sm:$0xff] %vm2429, %v6911
  %6944 = vst.msk [vmem:[#allocation3 + $0x2d0] sm:$0xff] %vm2429, %v6912
  %6945 = vst.msk [vmem:[#allocation3 + $0x2e8] sm:$0xff] %vm2429, %v6913
  %v6946 = vsel %vm2526, %v6688, 0.0
  %v6947 = vsel %vm2527, %v6689, 0.0
  %v6948 = vsel %vm2528, %v6626, 0.0
  %v6949 = vsel %vm2529, %v6627, 0.0
  %v6950 = vsel %vm2530, %v6628, 0.0
  %v6951 = vsel %vm2531, %v6629, 0.0
  %v6952 = vsel %vm2532, %v6630, 0.0
  %v6953 = vsel %vm2533, %v6631, 0.0
  %v6954 = vsel %vm2534, %v6632, 0.0
  %v6955 = vsel %vm2535, %v6633, 0.0
  %v6956 = vsel %vm2536, %v6634, 0.0
  %v6957 = vsel %vm2537, %v6635, 0.0
  %v6958 = vsel %vm2538, %v6636, 0.0
  %v6959 = vsel %vm2539, %v6637, 0.0
  %v6960 = vsel %vm2540, %v6638, 0.0
  %v6961 = vsel %vm2541, %v6639, 0.0
  %v6962 = vsel %vm2542, %v6640, 0.0
  %v6963 = vsel %vm2543, %v6641, 0.0
  %v6964 = vsel %vm2544, %v6642, 0.0
  %v6965 = vsel %vm2545, %v6643, 0.0
  %v6966 = vsel %vm2546, %v6644, 0.0
  %v6967 = vsel %vm2547, %v6645, 0.0
  %v6968 = vsel %vm2548, %v6646, 0.0
  %v6969 = vsel %vm2549, %v6647, 0.0
  %v6970 = vsel %vm2550, %v6648, 0.0
  %v6971 = vsel %vm2551, %v6649, 0.0
  %v6972 = vsel %vm2552, %v6650, 0.0
  %v6973 = vsel %vm2553, %v6651, 0.0
  %v6974 = vsel %vm2554, %v6652, 0.0
  %v6975 = vsel %vm2555, %v6653, 0.0
  %v6976 = vsel %vm2556, %v6654, 0.0
  %v6977 = vsel %vm2557, %v6655, 0.0
  %v6978 = vsel %vm2558, %v6656, 0.0
  %v6979 = vsel %vm2559, %v6657, 0.0
  %v6980 = vsel %vm2560, %v6658, 0.0
  %v6981 = vsel %vm2561, %v6659, 0.0
  %v6982 = vsel %vm2562, %v6660, 0.0
  %v6983 = vsel %vm2563, %v6661, 0.0
  %v6984 = vsel %vm2564, %v6662, 0.0
  %v6985 = vsel %vm2565, %v6663, 0.0
  %v6986 = vsel %vm2566, %v6664, 0.0
  %v6987 = vsel %vm2567, %v6665, 0.0
  %v6988 = vsel %vm2568, %v6666, 0.0
  %v6989 = vsel %vm2569, %v6667, 0.0
  %v6990 = vsel %vm2570, %v6668, 0.0
  %v6991 = vsel %vm2571, %v6669, 0.0
  %v6992 = vsel %vm2572, %v6670, 0.0
  %v6993 = vsel %vm2573, %v6671, 0.0
  %v6994 = vsel %vm2574, %v6672, 0.0
  %v6995 = vsel %vm2575, %v6673, 0.0
  %v6996 = vsel %vm2576, %v6674, 0.0
  %v6997 = vsel %vm2577, %v6675, 0.0
  %v6998 = vsel %vm2578, %v6676, 0.0
  %v6999 = vsel %vm2579, %v6677, 0.0
  %v7000 = vsel %vm2580, %v6678, 0.0
  %v7001 = vsel %vm2581, %v6679, 0.0
  %v7002 = vsel %vm2582, %v6680, 0.0
  %v7003 = vsel %vm2583, %v6681, 0.0
  %v7004 = vsel %vm2584, %v6682, 0.0
  %v7005 = vsel %vm2585, %v6683, 0.0
  %v7006 = vsel %vm2586, %v6684, 0.0
  %v7007 = vsel %vm2587, %v6685, 0.0
  %v7008 = vsel %vm2588, %v6686, 0.0
  %v7009 = vsel %vm2589, %v6687, 0.0
  %v7010 = vpack.c.bf16 %v6947, %v6946
  %v7011 = vpack.c.bf16 %v6949, %v6948
  %v7012 = vpack.c.bf16 %v6951, %v6950
  %v7013 = vpack.c.bf16 %v6953, %v6952
  %v7014 = vpack.c.bf16 %v6955, %v6954
  %v7015 = vpack.c.bf16 %v6957, %v6956
  %v7016 = vpack.c.bf16 %v6959, %v6958
  %v7017 = vpack.c.bf16 %v6961, %v6960
  %v7018 = vpack.c.bf16 %v6963, %v6962
  %v7019 = vpack.c.bf16 %v6965, %v6964
  %v7020 = vpack.c.bf16 %v6967, %v6966
  %v7021 = vpack.c.bf16 %v6969, %v6968
  %v7022 = vpack.c.bf16 %v6971, %v6970
  %v7023 = vpack.c.bf16 %v6973, %v6972
  %v7024 = vpack.c.bf16 %v6975, %v6974
  %v7025 = vpack.c.bf16 %v6977, %v6976
  %v7026 = vpack.c.bf16 %v6979, %v6978
  %v7027 = vpack.c.bf16 %v6981, %v6980
  %v7028 = vpack.c.bf16 %v6983, %v6982
  %v7029 = vpack.c.bf16 %v6985, %v6984
  %v7030 = vpack.c.bf16 %v6987, %v6986
  %v7031 = vpack.c.bf16 %v6989, %v6988
  %v7032 = vpack.c.bf16 %v6991, %v6990
  %v7033 = vpack.c.bf16 %v6993, %v6992
  %v7034 = vpack.c.bf16 %v6995, %v6994
  %v7035 = vpack.c.bf16 %v6997, %v6996
  %v7036 = vpack.c.bf16 %v6999, %v6998
  %v7037 = vpack.c.bf16 %v7001, %v7000
  %v7038 = vpack.c.bf16 %v7003, %v7002
  %v7039 = vpack.c.bf16 %v7005, %v7004
  %v7040 = vpack.c.bf16 %v7007, %v7006
  %v7041 = vpack.c.bf16 %v7009, %v7008
  %7074 = vrot.lane.b32.xlu0 %v7010, 32
  %v7075 = vpop.permute.xlu0 %7074
  %7076 = vrot.lane.b32.xlu0 %v7011, 32
  %v7077 = vpop.permute.xlu0 %7076
  %7078 = vrot.lane.b32.xlu0 %v7012, 32
  %v7079 = vpop.permute.xlu0 %7078
  %7080 = vrot.lane.b32.xlu0 %v7013, 32
  %v7081 = vpop.permute.xlu0 %7080
  %7082 = vrot.lane.b32.xlu0 %v7014, 32
  %v7083 = vpop.permute.xlu0 %7082
  %7084 = vrot.lane.b32.xlu0 %v7015, 32
  %v7085 = vpop.permute.xlu0 %7084
  %7086 = vrot.lane.b32.xlu0 %v7016, 32
  %v7087 = vpop.permute.xlu0 %7086
  %7088 = vrot.lane.b32.xlu0 %v7017, 32
  %v7089 = vpop.permute.xlu0 %7088
  %7090 = vrot.lane.b32.xlu0 %v7018, 32
  %v7091 = vpop.permute.xlu0 %7090
  %7092 = vrot.lane.b32.xlu0 %v7019, 32
  %v7093 = vpop.permute.xlu0 %7092
  %7094 = vrot.lane.b32.xlu0 %v7020, 32
  %v7095 = vpop.permute.xlu0 %7094
  %7096 = vrot.lane.b32.xlu0 %v7021, 32
  %v7097 = vpop.permute.xlu0 %7096
  %7098 = vrot.lane.b32.xlu0 %v7022, 32
  %v7099 = vpop.permute.xlu0 %7098
  %7100 = vrot.lane.b32.xlu0 %v7023, 32
  %v7101 = vpop.permute.xlu0 %7100
  %7102 = vrot.lane.b32.xlu0 %v7024, 32
  %v7103 = vpop.permute.xlu0 %7102
  %7104 = vrot.lane.b32.xlu0 %v7025, 32
  %v7105 = vpop.permute.xlu0 %7104
  %7106 = vrot.lane.b32.xlu0 %v7026, 32
  %v7107 = vpop.permute.xlu0 %7106
  %7108 = vrot.lane.b32.xlu0 %v7027, 32
  %v7109 = vpop.permute.xlu0 %7108
  %7110 = vrot.lane.b32.xlu0 %v7028, 32
  %v7111 = vpop.permute.xlu0 %7110
  %7112 = vrot.lane.b32.xlu0 %v7029, 32
  %v7113 = vpop.permute.xlu0 %7112
  %7114 = vrot.lane.b32.xlu0 %v7030, 32
  %v7115 = vpop.permute.xlu0 %7114
  %7116 = vrot.lane.b32.xlu0 %v7031, 32
  %v7117 = vpop.permute.xlu0 %7116
  %7118 = vrot.lane.b32.xlu0 %v7032, 32
  %v7119 = vpop.permute.xlu0 %7118
  %7120 = vrot.lane.b32.xlu0 %v7033, 32
  %v7121 = vpop.permute.xlu0 %7120
  %7122 = vrot.lane.b32.xlu0 %v7034, 32
  %v7123 = vpop.permute.xlu0 %7122
  %7124 = vrot.lane.b32.xlu0 %v7035, 32
  %v7125 = vpop.permute.xlu0 %7124
  %7126 = vrot.lane.b32.xlu0 %v7036, 32
  %v7127 = vpop.permute.xlu0 %7126
  %7128 = vrot.lane.b32.xlu0 %v7037, 32
  %v7129 = vpop.permute.xlu0 %7128
  %7130 = vrot.lane.b32.xlu0 %v7038, 32
  %v7131 = vpop.permute.xlu0 %7130
  %7132 = vrot.lane.b32.xlu0 %v7039, 32
  %v7133 = vpop.permute.xlu0 %7132
  %7134 = vrot.lane.b32.xlu0 %v7040, 32
  %v7135 = vpop.permute.xlu0 %7134
  %7136 = vrot.lane.b32.xlu0 %v7041, 32
  %v7137 = vpop.permute.xlu0 %7136
  %7170 = vst.msk [vmem:[#allocation3] sm:$0xff] %vm2814, %v7075
  %7171 = vst.msk [vmem:[#allocation3 + $0x18] sm:$0xff] %vm2814, %v7077
  %7172 = vst.msk [vmem:[#allocation3 + $0x30] sm:$0xff] %vm2814, %v7079
  %7173 = vst.msk [vmem:[#allocation3 + $0x48] sm:$0xff] %vm2814, %v7081
  %7174 = vst.msk [vmem:[#allocation3 + $0x60] sm:$0xff] %vm2814, %v7083
  %7175 = vst.msk [vmem:[#allocation3 + $0x78] sm:$0xff] %vm2814, %v7085
  %7176 = vst.msk [vmem:[#allocation3 + $0x90] sm:$0xff] %vm2814, %v7087
  %7177 = vst.msk [vmem:[#allocation3 + $0xa8] sm:$0xff] %vm2814, %v7089
  %7178 = vst.msk [vmem:[#allocation3 + $0xc0] sm:$0xff] %vm2814, %v7091
  %7179 = vst.msk [vmem:[#allocation3 + $0xd8] sm:$0xff] %vm2814, %v7093
  %7180 = vst.msk [vmem:[#allocation3 + $0xf0] sm:$0xff] %vm2814, %v7095
  %7181 = vst.msk [vmem:[#allocation3 + $0x108] sm:$0xff] %vm2814, %v7097
  %7182 = vst.msk [vmem:[#allocation3 + $0x120] sm:$0xff] %vm2814, %v7099
  %7183 = vst.msk [vmem:[#allocation3 + $0x138] sm:$0xff] %vm2814, %v7101
  %7184 = vst.msk [vmem:[#allocation3 + $0x150] sm:$0xff] %vm2814, %v7103
  %7185 = vst.msk [vmem:[#allocation3 + $0x168] sm:$0xff] %vm2814, %v7105
  %7186 = vst.msk [vmem:[#allocation3 + $0x180] sm:$0xff] %vm2814, %v7107
  %7187 = vst.msk [vmem:[#allocation3 + $0x198] sm:$0xff] %vm2814, %v7109
  %7188 = vst.msk [vmem:[#allocation3 + $0x1b0] sm:$0xff] %vm2814, %v7111
  %7189 = vst.msk [vmem:[#allocation3 + $0x1c8] sm:$0xff] %vm2814, %v7113
  %7190 = vst.msk [vmem:[#allocation3 + $0x1e0] sm:$0xff] %vm2814, %v7115
  %7191 = vst.msk [vmem:[#allocation3 + $0x1f8] sm:$0xff] %vm2814, %v7117
  %7192 = vst.msk [vmem:[#allocation3 + $0x210] sm:$0xff] %vm2814, %v7119
  %7193 = vst.msk [vmem:[#allocation3 + $0x228] sm:$0xff] %vm2814, %v7121
  %7194 = vst.msk [vmem:[#allocation3 + $0x240] sm:$0xff] %vm2814, %v7123
  %7195 = vst.msk [vmem:[#allocation3 + $0x258] sm:$0xff] %vm2814, %v7125
  %7196 = vst.msk [vmem:[#allocation3 + $0x270] sm:$0xff] %vm2814, %v7127
  %7197 = vst.msk [vmem:[#allocation3 + $0x288] sm:$0xff] %vm2814, %v7129
  %7198 = vst.msk [vmem:[#allocation3 + $0x2a0] sm:$0xff] %vm2814, %v7131
  %7199 = vst.msk [vmem:[#allocation3 + $0x2b8] sm:$0xff] %vm2814, %v7133
  %7200 = vst.msk [vmem:[#allocation3 + $0x2d0] sm:$0xff] %vm2814, %v7135
  %7201 = vst.msk [vmem:[#allocation3 + $0x2e8] sm:$0xff] %vm2814, %v7137
  %v7202 = vrot.slane %v6626, 1
  %v7203 = vrot.slane %v6627, 1
  %v7204 = vrot.slane %v6628, 1
  %v7205 = vrot.slane %v6629, 1
  %v7206 = vrot.slane %v6630, 1
  %v7207 = vrot.slane %v6631, 1
  %v7208 = vrot.slane %v6632, 1
  %v7209 = vrot.slane %v6633, 1
  %v7210 = vrot.slane %v6634, 1
  %v7211 = vrot.slane %v6635, 1
  %v7212 = vrot.slane %v6636, 1
  %v7213 = vrot.slane %v6637, 1
  %v7214 = vrot.slane %v6638, 1
  %v7215 = vrot.slane %v6639, 1
  %v7216 = vrot.slane %v6640, 1
  %v7217 = vrot.slane %v6641, 1
  %v7218 = vrot.slane %v6642, 1
  %v7219 = vrot.slane %v6643, 1
  %v7220 = vrot.slane %v6644, 1
  %v7221 = vrot.slane %v6645, 1
  %v7222 = vrot.slane %v6646, 1
  %v7223 = vrot.slane %v6647, 1
  %v7224 = vrot.slane %v6648, 1
  %v7225 = vrot.slane %v6649, 1
  %v7226 = vrot.slane %v6650, 1
  %v7227 = vrot.slane %v6651, 1
  %v7228 = vrot.slane %v6652, 1
  %v7229 = vrot.slane %v6653, 1
  %v7230 = vrot.slane %v6654, 1
  %v7231 = vrot.slane %v6655, 1
  %v7232 = vrot.slane %v6656, 1
  %v7233 = vrot.slane %v6657, 1
  %v7234 = vrot.slane %v6658, 1
  %v7235 = vrot.slane %v6659, 1
  %v7236 = vrot.slane %v6660, 1
  %v7237 = vrot.slane %v6661, 1
  %v7238 = vrot.slane %v6662, 1
  %v7239 = vrot.slane %v6663, 1
  %v7240 = vrot.slane %v6664, 1
  %v7241 = vrot.slane %v6665, 1
  %v7242 = vrot.slane %v6666, 1
  %v7243 = vrot.slane %v6667, 1
  %v7244 = vrot.slane %v6668, 1
  %v7245 = vrot.slane %v6669, 1
  %v7246 = vrot.slane %v6670, 1
  %v7247 = vrot.slane %v6671, 1
  %v7248 = vrot.slane %v6672, 1
  %v7249 = vrot.slane %v6673, 1
  %v7250 = vrot.slane %v6674, 1
  %v7251 = vrot.slane %v6675, 1
  %v7252 = vrot.slane %v6676, 1
  %v7253 = vrot.slane %v6677, 1
  %v7254 = vrot.slane %v6678, 1
  %v7255 = vrot.slane %v6679, 1
  %v7256 = vrot.slane %v6680, 1
  %v7257 = vrot.slane %v6681, 1
  %v7258 = vrot.slane %v6682, 1
  %v7259 = vrot.slane %v6683, 1
  %v7260 = vrot.slane %v6684, 1
  %v7261 = vrot.slane %v6685, 1
  %v7262 = vrot.slane %v6686, 1
  %v7263 = vrot.slane %v6687, 1
  %v7264 = vrot.slane %v6688, 1
  %v7265 = vrot.slane %v6689, 1
  %v7266 = vsel %vm2911, %v7264, %v7265
  %v7267 = vsel %vm2911, %v7263, %v7264
  %v7268 = vsel %vm2911, %v7262, %v7263
  %v7269 = vsel %vm2911, %v7261, %v7262
  %v7270 = vsel %vm2911, %v7260, %v7261
  %v7271 = vsel %vm2911, %v7259, %v7260
  %v7272 = vsel %vm2911, %v7258, %v7259
  %v7273 = vsel %vm2911, %v7257, %v7258
  %v7274 = vsel %vm2911, %v7256, %v7257
  %v7275 = vsel %vm2911, %v7255, %v7256
  %v7276 = vsel %vm2911, %v7254, %v7255
  %v7277 = vsel %vm2911, %v7253, %v7254
  %v7278 = vsel %vm2911, %v7252, %v7253
  %v7279 = vsel %vm2911, %v7251, %v7252
  %v7280 = vsel %vm2911, %v7250, %v7251
  %v7281 = vsel %vm2911, %v7249, %v7250
  %v7282 = vsel %vm2911, %v7248, %v7249
  %v7283 = vsel %vm2911, %v7247, %v7248
  %v7284 = vsel %vm2911, %v7246, %v7247
  %v7285 = vsel %vm2911, %v7245, %v7246
  %v7286 = vsel %vm2911, %v7244, %v7245
  %v7287 = vsel %vm2911, %v7243, %v7244
  %v7288 = vsel %vm2911, %v7242, %v7243
  %v7289 = vsel %vm2911, %v7241, %v7242
  %v7290 = vsel %vm2911, %v7240, %v7241
  %v7291 = vsel %vm2911, %v7239, %v7240
  %v7292 = vsel %vm2911, %v7238, %v7239
  %v7293 = vsel %vm2911, %v7237, %v7238
  %v7294 = vsel %vm2911, %v7236, %v7237
  %v7295 = vsel %vm2911, %v7235, %v7236
  %v7296 = vsel %vm2911, %v7234, %v7235
  %v7297 = vsel %vm2911, %v7233, %v7234
  %v7298 = vsel %vm2911, %v7232, %v7233
  %v7299 = vsel %vm2911, %v7231, %v7232
  %v7300 = vsel %vm2911, %v7230, %v7231
  %v7301 = vsel %vm2911, %v7229, %v7230
  %v7302 = vsel %vm2911, %v7228, %v7229
  %v7303 = vsel %vm2911, %v7227, %v7228
  %v7304 = vsel %vm2911, %v7226, %v7227
  %v7305 = vsel %vm2911, %v7225, %v7226
  %v7306 = vsel %vm2911, %v7224, %v7225
  %v7307 = vsel %vm2911, %v7223, %v7224
  %v7308 = vsel %vm2911, %v7222, %v7223
  %v7309 = vsel %vm2911, %v7221, %v7222
  %v7310 = vsel %vm2911, %v7220, %v7221
  %v7311 = vsel %vm2911, %v7219, %v7220
  %v7312 = vsel %vm2911, %v7218, %v7219
  %v7313 = vsel %vm2911, %v7217, %v7218
  %v7314 = vsel %vm2911, %v7216, %v7217
  %v7315 = vsel %vm2911, %v7215, %v7216
  %v7316 = vsel %vm2911, %v7214, %v7215
  %v7317 = vsel %vm2911, %v7213, %v7214
  %v7318 = vsel %vm2911, %v7212, %v7213
  %v7319 = vsel %vm2911, %v7211, %v7212
  %v7320 = vsel %vm2911, %v7210, %v7211
  %v7321 = vsel %vm2911, %v7209, %v7210
  %v7322 = vsel %vm2911, %v7208, %v7209
  %v7323 = vsel %vm2911, %v7207, %v7208
  %v7324 = vsel %vm2911, %v7206, %v7207
  %v7325 = vsel %vm2911, %v7205, %v7206
  %v7326 = vsel %vm2911, %v7204, %v7205
  %v7327 = vsel %vm2911, %v7203, %v7204
  %v7328 = vsel %vm2911, %v7202, %v7203
  %v7329 = vsel %vm2911, %v7265, %v7202
  %v7330 = vsel %vm3104, %v7266, 0.0
  %v7331 = vsel %vm3105, %v7329, 0.0
  %v7332 = vsel %vm3106, %v7328, 0.0
  %v7333 = vsel %vm3107, %v7327, 0.0
  %v7334 = vsel %vm3108, %v7326, 0.0
  %v7335 = vsel %vm3109, %v7325, 0.0
  %v7336 = vsel %vm3110, %v7324, 0.0
  %v7337 = vsel %vm3111, %v7323, 0.0
  %v7338 = vsel %vm3112, %v7322, 0.0
  %v7339 = vsel %vm3113, %v7321, 0.0
  %v7340 = vsel %vm3114, %v7320, 0.0
  %v7341 = vsel %vm3115, %v7319, 0.0
  %v7342 = vsel %vm3116, %v7318, 0.0
  %v7343 = vsel %vm3117, %v7317, 0.0
  %v7344 = vsel %vm3118, %v7316, 0.0
  %v7345 = vsel %vm3119, %v7315, 0.0
  %v7346 = vsel %vm3120, %v7314, 0.0
  %v7347 = vsel %vm3121, %v7313, 0.0
  %v7348 = vsel %vm3122, %v7312, 0.0
  %v7349 = vsel %vm3123, %v7311, 0.0
  %v7350 = vsel %vm3124, %v7310, 0.0
  %v7351 = vsel %vm3125, %v7309, 0.0
  %v7352 = vsel %vm3126, %v7308, 0.0
  %v7353 = vsel %vm3127, %v7307, 0.0
  %v7354 = vsel %vm3128, %v7306, 0.0
  %v7355 = vsel %vm3129, %v7305, 0.0
  %v7356 = vsel %vm3130, %v7304, 0.0
  %v7357 = vsel %vm3131, %v7303, 0.0
  %v7358 = vsel %vm3132, %v7302, 0.0
  %v7359 = vsel %vm3133, %v7301, 0.0
  %v7360 = vsel %vm3134, %v7300, 0.0
  %v7361 = vsel %vm3135, %v7299, 0.0
  %v7362 = vsel %vm3136, %v7298, 0.0
  %v7363 = vsel %vm3137, %v7297, 0.0
  %v7364 = vsel %vm3138, %v7296, 0.0
  %v7365 = vsel %vm3139, %v7295, 0.0
  %v7366 = vsel %vm3140, %v7294, 0.0
  %v7367 = vsel %vm3141, %v7293, 0.0
  %v7368 = vsel %vm3142, %v7292, 0.0
  %v7369 = vsel %vm3143, %v7291, 0.0
  %v7370 = vsel %vm3144, %v7290, 0.0
  %v7371 = vsel %vm3145, %v7289, 0.0
  %v7372 = vsel %vm3146, %v7288, 0.0
  %v7373 = vsel %vm3147, %v7287, 0.0
  %v7374 = vsel %vm3148, %v7286, 0.0
  %v7375 = vsel %vm3149, %v7285, 0.0
  %v7376 = vsel %vm3150, %v7284, 0.0
  %v7377 = vsel %vm3151, %v7283, 0.0
  %v7378 = vsel %vm3152, %v7282, 0.0
  %v7379 = vsel %vm3153, %v7281, 0.0
  %v7380 = vsel %vm3154, %v7280, 0.0
  %v7381 = vsel %vm3155, %v7279, 0.0
  %v7382 = vsel %vm3156, %v7278, 0.0
  %v7383 = vsel %vm3157, %v7277, 0.0
  %v7384 = vsel %vm3158, %v7276, 0.0
  %v7385 = vsel %vm3159, %v7275, 0.0
  %v7386 = vsel %vm3160, %v7274, 0.0
  %v7387 = vsel %vm3161, %v7273, 0.0
  %v7388 = vsel %vm3162, %v7272, 0.0
  %v7389 = vsel %vm3163, %v7271, 0.0
  %v7390 = vsel %vm3164, %v7270, 0.0
  %v7391 = vsel %vm3165, %v7269, 0.0
  %v7392 = vsel %vm3166, %v7268, 0.0
  %v7393 = vsel %vm3167, %v7267, 0.0
  %v7394 = vpack.c.bf16 %v7331, %v7330
  %v7395 = vpack.c.bf16 %v7333, %v7332
  %v7396 = vpack.c.bf16 %v7335, %v7334
  %v7397 = vpack.c.bf16 %v7337, %v7336
  %v7398 = vpack.c.bf16 %v7339, %v7338
  %v7399 = vpack.c.bf16 %v7341, %v7340
  %v7400 = vpack.c.bf16 %v7343, %v7342
  %v7401 = vpack.c.bf16 %v7345, %v7344
  %v7402 = vpack.c.bf16 %v7347, %v7346
  %v7403 = vpack.c.bf16 %v7349, %v7348
  %v7404 = vpack.c.bf16 %v7351, %v7350
  %v7405 = vpack.c.bf16 %v7353, %v7352
  %v7406 = vpack.c.bf16 %v7355, %v7354
  %v7407 = vpack.c.bf16 %v7357, %v7356
  %v7408 = vpack.c.bf16 %v7359, %v7358
  %v7409 = vpack.c.bf16 %v7361, %v7360
  %v7410 = vpack.c.bf16 %v7363, %v7362
  %v7411 = vpack.c.bf16 %v7365, %v7364
  %v7412 = vpack.c.bf16 %v7367, %v7366
  %v7413 = vpack.c.bf16 %v7369, %v7368
  %v7414 = vpack.c.bf16 %v7371, %v7370
  %v7415 = vpack.c.bf16 %v7373, %v7372
  %v7416 = vpack.c.bf16 %v7375, %v7374
  %v7417 = vpack.c.bf16 %v7377, %v7376
  %v7418 = vpack.c.bf16 %v7379, %v7378
  %v7419 = vpack.c.bf16 %v7381, %v7380
  %v7420 = vpack.c.bf16 %v7383, %v7382
  %v7421 = vpack.c.bf16 %v7385, %v7384
  %v7422 = vpack.c.bf16 %v7387, %v7386
  %v7423 = vpack.c.bf16 %v7389, %v7388
  %v7424 = vpack.c.bf16 %v7391, %v7390
  %v7425 = vpack.c.bf16 %v7393, %v7392
  %7458 = vrot.lane.b32.xlu0 %v7394, 64
  %v7459 = vpop.permute.xlu0 %7458
  %7460 = vrot.lane.b32.xlu0 %v7395, 64
  %v7461 = vpop.permute.xlu0 %7460
  %7462 = vrot.lane.b32.xlu0 %v7396, 64
  %v7463 = vpop.permute.xlu0 %7462
  %7464 = vrot.lane.b32.xlu0 %v7397, 64
  %v7465 = vpop.permute.xlu0 %7464
  %7466 = vrot.lane.b32.xlu0 %v7398, 64
  %v7467 = vpop.permute.xlu0 %7466
  %7468 = vrot.lane.b32.xlu0 %v7399, 64
  %v7469 = vpop.permute.xlu0 %7468
  %7470 = vrot.lane.b32.xlu0 %v7400, 64
  %v7471 = vpop.permute.xlu0 %7470
  %7472 = vrot.lane.b32.xlu0 %v7401, 64
  %v7473 = vpop.permute.xlu0 %7472
  %7474 = vrot.lane.b32.xlu0 %v7402, 64
  %v7475 = vpop.permute.xlu0 %7474
  %7476 = vrot.lane.b32.xlu0 %v7403, 64
  %v7477 = vpop.permute.xlu0 %7476
  %7478 = vrot.lane.b32.xlu0 %v7404, 64
  %v7479 = vpop.permute.xlu0 %7478
  %7480 = vrot.lane.b32.xlu0 %v7405, 64
  %v7481 = vpop.permute.xlu0 %7480
  %7482 = vrot.lane.b32.xlu0 %v7406, 64
  %v7483 = vpop.permute.xlu0 %7482
  %7484 = vrot.lane.b32.xlu0 %v7407, 64
  %v7485 = vpop.permute.xlu0 %7484
  %7486 = vrot.lane.b32.xlu0 %v7408, 64
  %v7487 = vpop.permute.xlu0 %7486
  %7488 = vrot.lane.b32.xlu0 %v7409, 64
  %v7489 = vpop.permute.xlu0 %7488
  %7490 = vrot.lane.b32.xlu0 %v7410, 64
  %v7491 = vpop.permute.xlu0 %7490
  %7492 = vrot.lane.b32.xlu0 %v7411, 64
  %v7493 = vpop.permute.xlu0 %7492
  %7494 = vrot.lane.b32.xlu0 %v7412, 64
  %v7495 = vpop.permute.xlu0 %7494
  %7496 = vrot.lane.b32.xlu0 %v7413, 64
  %v7497 = vpop.permute.xlu0 %7496
  %7498 = vrot.lane.b32.xlu0 %v7414, 64
  %v7499 = vpop.permute.xlu0 %7498
  %7500 = vrot.lane.b32.xlu0 %v7415, 64
  %v7501 = vpop.permute.xlu0 %7500
  %7502 = vrot.lane.b32.xlu0 %v7416, 64
  %v7503 = vpop.permute.xlu0 %7502
  %7504 = vrot.lane.b32.xlu0 %v7417, 64
  %v7505 = vpop.permute.xlu0 %7504
  %7506 = vrot.lane.b32.xlu0 %v7418, 64
  %v7507 = vpop.permute.xlu0 %7506
  %7508 = vrot.lane.b32.xlu0 %v7419, 64
  %v7509 = vpop.permute.xlu0 %7508
  %7510 = vrot.lane.b32.xlu0 %v7420, 64
  %v7511 = vpop.permute.xlu0 %7510
  %7512 = vrot.lane.b32.xlu0 %v7421, 64
  %v7513 = vpop.permute.xlu0 %7512
  %7514 = vrot.lane.b32.xlu0 %v7422, 64
  %v7515 = vpop.permute.xlu0 %7514
  %7516 = vrot.lane.b32.xlu0 %v7423, 64
  %v7517 = vpop.permute.xlu0 %7516
  %7518 = vrot.lane.b32.xlu0 %v7424, 64
  %v7519 = vpop.permute.xlu0 %7518
  %7520 = vrot.lane.b32.xlu0 %v7425, 64
  %v7521 = vpop.permute.xlu0 %7520
  %7554 = vst.msk [vmem:[#allocation3] sm:$0xff] %vm3392, %v7459
  %7555 = vst.msk [vmem:[#allocation3 + $0x18] sm:$0xff] %vm3392, %v7461
  %7556 = vst.msk [vmem:[#allocation3 + $0x30] sm:$0xff] %vm3392, %v7463
  %7557 = vst.msk [vmem:[#allocation3 + $0x48] sm:$0xff] %vm3392, %v7465
  %7558 = vst.msk [vmem:[#allocation3 + $0x60] sm:$0xff] %vm3392, %v7467
  %7559 = vst.msk [vmem:[#allocation3 + $0x78] sm:$0xff] %vm3392, %v7469
  %7560 = vst.msk [vmem:[#allocation3 + $0x90] sm:$0xff] %vm3392, %v7471
  %7561 = vst.msk [vmem:[#allocation3 + $0xa8] sm:$0xff] %vm3392, %v7473
  %7562 = vst.msk [vmem:[#allocation3 + $0xc0] sm:$0xff] %vm3392, %v7475
  %7563 = vst.msk [vmem:[#allocation3 + $0xd8] sm:$0xff] %vm3392, %v7477
  %7564 = vst.msk [vmem:[#allocation3 + $0xf0] sm:$0xff] %vm3392, %v7479
  %7565 = vst.msk [vmem:[#allocation3 + $0x108] sm:$0xff] %vm3392, %v7481
  %7566 = vst.msk [vmem:[#allocation3 + $0x120] sm:$0xff] %vm3392, %v7483
  %7567 = vst.msk [vmem:[#allocation3 + $0x138] sm:$0xff] %vm3392, %v7485
  %7568 = vst.msk [vmem:[#allocation3 + $0x150] sm:$0xff] %vm3392, %v7487
  %7569 = vst.msk [vmem:[#allocation3 + $0x168] sm:$0xff] %vm3392, %v7489
  %7570 = vst.msk [vmem:[#allocation3 + $0x180] sm:$0xff] %vm3392, %v7491
  %7571 = vst.msk [vmem:[#allocation3 + $0x198] sm:$0xff] %vm3392, %v7493
  %7572 = vst.msk [vmem:[#allocation3 + $0x1b0] sm:$0xff] %vm3392, %v7495
  %7573 = vst.msk [vmem:[#allocation3 + $0x1c8] sm:$0xff] %vm3392, %v7497
  %7574 = vst.msk [vmem:[#allocation3 + $0x1e0] sm:$0xff] %vm3392, %v7499
  %7575 = vst.msk [vmem:[#allocation3 + $0x1f8] sm:$0xff] %vm3392, %v7501
  %7576 = vst.msk [vmem:[#allocation3 + $0x210] sm:$0xff] %vm3392, %v7503
  %7577 = vst.msk [vmem:[#allocation3 + $0x228] sm:$0xff] %vm3392, %v7505
  %7578 = vst.msk [vmem:[#allocation3 + $0x240] sm:$0xff] %vm3392, %v7507
  %7579 = vst.msk [vmem:[#allocation3 + $0x258] sm:$0xff] %vm3392, %v7509
  %7580 = vst.msk [vmem:[#allocation3 + $0x270] sm:$0xff] %vm3392, %v7511
  %7581 = vst.msk [vmem:[#allocation3 + $0x288] sm:$0xff] %vm3392, %v7513
  %7582 = vst.msk [vmem:[#allocation3 + $0x2a0] sm:$0xff] %vm3392, %v7515
  %7583 = vst.msk [vmem:[#allocation3 + $0x2b8] sm:$0xff] %vm3392, %v7517
  %7584 = vst.msk [vmem:[#allocation3 + $0x2d0] sm:$0xff] %vm3392, %v7519
  %7585 = vst.msk [vmem:[#allocation3 + $0x2e8] sm:$0xff] %vm3392, %v7521
  %v7586 = vsel %vm3489, %v6817, 0.0
  %v7587 = vsel %vm3490, %v6816, 0.0
  %v7588 = vsel %vm3491, %v6815, 0.0
  %v7589 = vsel %vm3492, %v6814, 0.0
  %v7590 = vsel %vm3493, %v6813, 0.0
  %v7591 = vsel %vm3494, %v6812, 0.0
  %v7592 = vsel %vm3495, %v6811, 0.0
  %v7593 = vsel %vm3496, %v6810, 0.0
  %v7594 = vsel %vm3497, %v6809, 0.0
  %v7595 = vsel %vm3498, %v6808, 0.0
  %v7596 = vsel %vm3499, %v6807, 0.0
  %v7597 = vsel %vm3500, %v6806, 0.0
  %v7598 = vsel %vm3501, %v6805, 0.0
  %v7599 = vsel %vm3502, %v6804, 0.0
  %v7600 = vsel %vm3503, %v6803, 0.0
  %v7601 = vsel %vm3504, %v6802, 0.0
  %v7602 = vsel %vm3505, %v6801, 0.0
  %v7603 = vsel %vm3506, %v6800, 0.0
  %v7604 = vsel %vm3507, %v6799, 0.0
  %v7605 = vsel %vm3508, %v6798, 0.0
  %v7606 = vsel %vm3509, %v6797, 0.0
  %v7607 = vsel %vm3510, %v6796, 0.0
  %v7608 = vsel %vm3511, %v6795, 0.0
  %v7609 = vsel %vm3512, %v6794, 0.0
  %v7610 = vsel %vm3513, %v6793, 0.0
  %v7611 = vsel %vm3514, %v6792, 0.0
  %v7612 = vsel %vm3515, %v6791, 0.0
  %v7613 = vsel %vm3516, %v6790, 0.0
  %v7614 = vsel %vm3517, %v6789, 0.0
  %v7615 = vsel %vm3518, %v6788, 0.0
  %v7616 = vsel %vm3519, %v6787, 0.0
  %v7617 = vsel %vm3520, %v6786, 0.0
  %v7618 = vsel %vm3521, %v6785, 0.0
  %v7619 = vsel %vm3522, %v6784, 0.0
  %v7620 = vsel %vm3523, %v6783, 0.0
  %v7621 = vsel %vm3524, %v6782, 0.0
  %v7622 = vsel %vm3525, %v6781, 0.0
  %v7623 = vsel %vm3526, %v6780, 0.0
  %v7624 = vsel %vm3527, %v6779, 0.0
  %v7625 = vsel %vm3528, %v6778, 0.0
  %v7626 = vsel %vm3529, %v6777, 0.0
  %v7627 = vsel %vm3530, %v6776, 0.0
  %v7628 = vsel %vm3531, %v6775, 0.0
  %v7629 = vsel %vm3532, %v6774, 0.0
  %v7630 = vsel %vm3533, %v6773, 0.0
  %v7631 = vsel %vm3534, %v6772, 0.0
  %v7632 = vsel %vm3535, %v6771, 0.0
  %v7633 = vsel %vm3536, %v6770, 0.0
  %v7634 = vsel %vm3537, %v6769, 0.0
  %v7635 = vsel %vm3538, %v6768, 0.0
  %v7636 = vsel %vm3539, %v6767, 0.0
  %v7637 = vsel %vm3540, %v6766, 0.0
  %v7638 = vsel %vm3541, %v6765, 0.0
  %v7639 = vsel %vm3542, %v6764, 0.0
  %v7640 = vsel %vm3543, %v6763, 0.0
  %v7641 = vsel %vm3544, %v6762, 0.0
  %v7642 = vsel %vm3545, %v6761, 0.0
  %v7643 = vsel %vm3546, %v6760, 0.0
  %v7644 = vsel %vm3547, %v6759, 0.0
  %v7645 = vsel %vm3548, %v6758, 0.0
  %v7646 = vsel %vm3549, %v6757, 0.0
  %v7647 = vsel %vm3550, %v6756, 0.0
  %v7648 = vsel %vm3551, %v6755, 0.0
  %v7649 = vsel %vm3552, %v6754, 0.0
  %v7650 = vpack.c.bf16 %v7587, %v7586
  %v7651 = vpack.c.bf16 %v7589, %v7588
  %v7652 = vpack.c.bf16 %v7591, %v7590
  %v7653 = vpack.c.bf16 %v7593, %v7592
  %v7654 = vpack.c.bf16 %v7595, %v7594
  %v7655 = vpack.c.bf16 %v7597, %v7596
  %v7656 = vpack.c.bf16 %v7599, %v7598
  %v7657 = vpack.c.bf16 %v7601, %v7600
  %v7658 = vpack.c.bf16 %v7603, %v7602
  %v7659 = vpack.c.bf16 %v7605, %v7604
  %v7660 = vpack.c.bf16 %v7607, %v7606
  %v7661 = vpack.c.bf16 %v7609, %v7608
  %v7662 = vpack.c.bf16 %v7611, %v7610
  %v7663 = vpack.c.bf16 %v7613, %v7612
  %v7664 = vpack.c.bf16 %v7615, %v7614
  %v7665 = vpack.c.bf16 %v7617, %v7616
  %v7666 = vpack.c.bf16 %v7619, %v7618
  %v7667 = vpack.c.bf16 %v7621, %v7620
  %v7668 = vpack.c.bf16 %v7623, %v7622
  %v7669 = vpack.c.bf16 %v7625, %v7624
  %v7670 = vpack.c.bf16 %v7627, %v7626
  %v7671 = vpack.c.bf16 %v7629, %v7628
  %v7672 = vpack.c.bf16 %v7631, %v7630
  %v7673 = vpack.c.bf16 %v7633, %v7632
  %v7674 = vpack.c.bf16 %v7635, %v7634
  %v7675 = vpack.c.bf16 %v7637, %v7636
  %v7676 = vpack.c.bf16 %v7639, %v7638
  %v7677 = vpack.c.bf16 %v7641, %v7640
  %v7678 = vpack.c.bf16 %v7643, %v7642
  %v7679 = vpack.c.bf16 %v7645, %v7644
  %v7680 = vpack.c.bf16 %v7647, %v7646
  %v7681 = vpack.c.bf16 %v7649, %v7648
  %7714 = vrot.lane.b32.xlu0 %v7650, 96
  %v7715 = vpop.permute.xlu0 %7714
  %7716 = vrot.lane.b32.xlu0 %v7651, 96
  %v7717 = vpop.permute.xlu0 %7716
  %7718 = vrot.lane.b32.xlu0 %v7652, 96
  %v7719 = vpop.permute.xlu0 %7718
  %7720 = vrot.lane.b32.xlu0 %v7653, 96
  %v7721 = vpop.permute.xlu0 %7720
  %7722 = vrot.lane.b32.xlu0 %v7654, 96
  %v7723 = vpop.permute.xlu0 %7722
  %7724 = vrot.lane.b32.xlu0 %v7655, 96
  %v7725 = vpop.permute.xlu0 %7724
  %7726 = vrot.lane.b32.xlu0 %v7656, 96
  %v7727 = vpop.permute.xlu0 %7726
  %7728 = vrot.lane.b32.xlu0 %v7657, 96
  %v7729 = vpop.permute.xlu0 %7728
  %7730 = vrot.lane.b32.xlu0 %v7658, 96
  %v7731 = vpop.permute.xlu0 %7730
  %7732 = vrot.lane.b32.xlu0 %v7659, 96
  %v7733 = vpop.permute.xlu0 %7732
  %7734 = vrot.lane.b32.xlu0 %v7660, 96
  %v7735 = vpop.permute.xlu0 %7734
  %7736 = vrot.lane.b32.xlu0 %v7661, 96
  %v7737 = vpop.permute.xlu0 %7736
  %7738 = vrot.lane.b32.xlu0 %v7662, 96
  %v7739 = vpop.permute.xlu0 %7738
  %7740 = vrot.lane.b32.xlu0 %v7663, 96
  %v7741 = vpop.permute.xlu0 %7740
  %7742 = vrot.lane.b32.xlu0 %v7664, 96
  %v7743 = vpop.permute.xlu0 %7742
  %7744 = vrot.lane.b32.xlu0 %v7665, 96
  %v7745 = vpop.permute.xlu0 %7744
  %7746 = vrot.lane.b32.xlu0 %v7666, 96
  %v7747 = vpop.permute.xlu0 %7746
  %7748 = vrot.lane.b32.xlu0 %v7667, 96
  %v7749 = vpop.permute.xlu0 %7748
  %7750 = vrot.lane.b32.xlu0 %v7668, 96
  %v7751 = vpop.permute.xlu0 %7750
  %7752 = vrot.lane.b32.xlu0 %v7669, 96
  %v7753 = vpop.permute.xlu0 %7752
  %7754 = vrot.lane.b32.xlu0 %v7670, 96
  %v7755 = vpop.permute.xlu0 %7754
  %7756 = vrot.lane.b32.xlu0 %v7671, 96
  %v7757 = vpop.permute.xlu0 %7756
  %7758 = vrot.lane.b32.xlu0 %v7672, 96
  %v7759 = vpop.permute.xlu0 %7758
  %7760 = vrot.lane.b32.xlu0 %v7673, 96
  %v7761 = vpop.permute.xlu0 %7760
  %7762 = vrot.lane.b32.xlu0 %v7674, 96
  %v7763 = vpop.permute.xlu0 %7762
  %7764 = vrot.lane.b32.xlu0 %v7675, 96
  %v7765 = vpop.permute.xlu0 %7764
  %7766 = vrot.lane.b32.xlu0 %v7676, 96
  %v7767 = vpop.permute.xlu0 %7766
  %7768 = vrot.lane.b32.xlu0 %v7677, 96
  %v7769 = vpop.permute.xlu0 %7768
  %7770 = vrot.lane.b32.xlu0 %v7678, 96
  %v7771 = vpop.permute.xlu0 %7770
  %7772 = vrot.lane.b32.xlu0 %v7679, 96
  %v7773 = vpop.permute.xlu0 %7772
  %7774 = vrot.lane.b32.xlu0 %v7680, 96
  %v7775 = vpop.permute.xlu0 %7774
  %7776 = vrot.lane.b32.xlu0 %v7681, 96
  %v7777 = vpop.permute.xlu0 %7776
  %7810 = vst.msk [vmem:[#allocation3] sm:$0xff] %vm3777, %v7715
  %7811 = vst.msk [vmem:[#allocation3 + $0x18] sm:$0xff] %vm3777, %v7717
  %7812 = vst.msk [vmem:[#allocation3 + $0x30] sm:$0xff] %vm3777, %v7719
  %7813 = vst.msk [vmem:[#allocation3 + $0x48] sm:$0xff] %vm3777, %v7721
  %7814 = vst.msk [vmem:[#allocation3 + $0x60] sm:$0xff] %vm3777, %v7723
  %7815 = vst.msk [vmem:[#allocation3 + $0x78] sm:$0xff] %vm3777, %v7725
  %7816 = vst.msk [vmem:[#allocation3 + $0x90] sm:$0xff] %vm3777, %v7727
  %7817 = vst.msk [vmem:[#allocation3 + $0xa8] sm:$0xff] %vm3777, %v7729
  %7818 = vst.msk [vmem:[#allocation3 + $0xc0] sm:$0xff] %vm3777, %v7731
  %7819 = vst.msk [vmem:[#allocation3 + $0xd8] sm:$0xff] %vm3777, %v7733
  %7820 = vst.msk [vmem:[#allocation3 + $0xf0] sm:$0xff] %vm3777, %v7735
  %7821 = vst.msk [vmem:[#allocation3 + $0x108] sm:$0xff] %vm3777, %v7737
  %7822 = vst.msk [vmem:[#allocation3 + $0x120] sm:$0xff] %vm3777, %v7739
  %7823 = vst.msk [vmem:[#allocation3 + $0x138] sm:$0xff] %vm3777, %v7741
  %7824 = vst.msk [vmem:[#allocation3 + $0x150] sm:$0xff] %vm3777, %v7743
  %7825 = vst.msk [vmem:[#allocation3 + $0x168] sm:$0xff] %vm3777, %v7745
  %7826 = vst.msk [vmem:[#allocation3 + $0x180] sm:$0xff] %vm3777, %v7747
  %7827 = vst.msk [vmem:[#allocation3 + $0x198] sm:$0xff] %vm3777, %v7749
  %7828 = vst.msk [vmem:[#allocation3 + $0x1b0] sm:$0xff] %vm3777, %v7751
  %7829 = vst.msk [vmem:[#allocation3 + $0x1c8] sm:$0xff] %vm3777, %v7753
  %7830 = vst.msk [vmem:[#allocation3 + $0x1e0] sm:$0xff] %vm3777, %v7755
  %7831 = vst.msk [vmem:[#allocation3 + $0x1f8] sm:$0xff] %vm3777, %v7757
  %7832 = vst.msk [vmem:[#allocation3 + $0x210] sm:$0xff] %vm3777, %v7759
  %7833 = vst.msk [vmem:[#allocation3 + $0x228] sm:$0xff] %vm3777, %v7761
  %7834 = vst.msk [vmem:[#allocation3 + $0x240] sm:$0xff] %vm3777, %v7763
  %7835 = vst.msk [vmem:[#allocation3 + $0x258] sm:$0xff] %vm3777, %v7765
  %7836 = vst.msk [vmem:[#allocation3 + $0x270] sm:$0xff] %vm3777, %v7767
  %7837 = vst.msk [vmem:[#allocation3 + $0x288] sm:$0xff] %vm3777, %v7769
  %7838 = vst.msk [vmem:[#allocation3 + $0x2a0] sm:$0xff] %vm3777, %v7771
  %7839 = vst.msk [vmem:[#allocation3 + $0x2b8] sm:$0xff] %vm3777, %v7773
  %7840 = vst.msk [vmem:[#allocation3 + $0x2d0] sm:$0xff] %vm3777, %v7775
  %7841 = vst.msk [vmem:[#allocation3 + $0x2e8] sm:$0xff] %vm3777, %v7777
  %v7842 = vpack.c.bf16 %v6627, %v6626
  %v7843 = vpack.c.bf16 %v6629, %v6628
  %v7844 = vpack.c.bf16 %v6631, %v6630
  %v7845 = vpack.c.bf16 %v6633, %v6632
  %v7846 = vpack.c.bf16 %v6635, %v6634
  %v7847 = vpack.c.bf16 %v6637, %v6636
  %v7848 = vpack.c.bf16 %v6639, %v6638
  %v7849 = vpack.c.bf16 %v6641, %v6640
  %v7850 = vpack.c.bf16 %v6643, %v6642
  %v7851 = vpack.c.bf16 %v6645, %v6644
  %v7852 = vpack.c.bf16 %v6647, %v6646
  %v7853 = vpack.c.bf16 %v6649, %v6648
  %v7854 = vpack.c.bf16 %v6651, %v6650
  %v7855 = vpack.c.bf16 %v6653, %v6652
  %v7856 = vpack.c.bf16 %v6655, %v6654
  %v7857 = vpack.c.bf16 %v6657, %v6656
  %v7858 = vpack.c.bf16 %v6659, %v6658
  %v7859 = vpack.c.bf16 %v6661, %v6660
  %v7860 = vpack.c.bf16 %v6663, %v6662
  %v7861 = vpack.c.bf16 %v6665, %v6664
  %v7862 = vpack.c.bf16 %v6667, %v6666
  %v7863 = vpack.c.bf16 %v6669, %v6668
  %v7864 = vpack.c.bf16 %v6671, %v6670
  %v7865 = vpack.c.bf16 %v6673, %v6672
  %v7866 = vpack.c.bf16 %v6675, %v6674
  %v7867 = vpack.c.bf16 %v6677, %v6676
  %v7868 = vpack.c.bf16 %v6679, %v6678
  %v7869 = vpack.c.bf16 %v6681, %v6680
  %v7870 = vpack.c.bf16 %v6683, %v6682
  %v7871 = vpack.c.bf16 %v6685, %v6684
  %v7872 = vpack.c.bf16 %v6687, %v6686
  %v7873 = vpack.c.bf16 %v6689, %v6688
  %7874 = vst.msk [vmem:[#allocation3 + $0x8] sm:$0xff] %vm2429, %v7842
  %7875 = vst.msk [vmem:[#allocation3 + $0x20] sm:$0xff] %vm2429, %v7843
  %7876 = vst.msk [vmem:[#allocation3 + $0x38] sm:$0xff] %vm2429, %v7844
  %7877 = vst.msk [vmem:[#allocation3 + $0x50] sm:$0xff] %vm2429, %v7845
  %7878 = vst.msk [vmem:[#allocation3 + $0x68] sm:$0xff] %vm2429, %v7846
  %7879 = vst.msk [vmem:[#allocation3 + $0x80] sm:$0xff] %vm2429, %v7847
  %7880 = vst.msk [vmem:[#allocation3 + $0x98] sm:$0xff] %vm2429, %v7848
  %7881 = vst.msk [vmem:[#allocation3 + $0xb0] sm:$0xff] %vm2429, %v7849
  %7882 = vst.msk [vmem:[#allocation3 + $0xc8] sm:$0xff] %vm2429, %v7850
  %7883 = vst.msk [vmem:[#allocation3 + $0xe0] sm:$0xff] %vm2429, %v7851
  %7884 = vst.msk [vmem:[#allocation3 + $0xf8] sm:$0xff] %vm2429, %v7852
  %7885 = vst.msk [vmem:[#allocation3 + $0x110] sm:$0xff] %vm2429, %v7853
  %7886 = vst.msk [vmem:[#allocation3 + $0x128] sm:$0xff] %vm2429, %v7854
  %7887 = vst.msk [vmem:[#allocation3 + $0x140] sm:$0xff] %vm2429, %v7855
  %7888 = vst.msk [vmem:[#allocation3 + $0x158] sm:$0xff] %vm2429, %v7856
  %7889 = vst.msk [vmem:[#allocation3 + $0x170] sm:$0xff] %vm2429, %v7857
  %7890 = vst.msk [vmem:[#allocation3 + $0x188] sm:$0xff] %vm2429, %v7858
  %7891 = vst.msk [vmem:[#allocation3 + $0x1a0] sm:$0xff] %vm2429, %v7859
  %7892 = vst.msk [vmem:[#allocation3 + $0x1b8] sm:$0xff] %vm2429, %v7860
  %7893 = vst.msk [vmem:[#allocation3 + $0x1d0] sm:$0xff] %vm2429, %v7861
  %7894 = vst.msk [vmem:[#allocation3 + $0x1e8] sm:$0xff] %vm2429, %v7862
  %7895 = vst.msk [vmem:[#allocation3 + $0x200] sm:$0xff] %vm2429, %v7863
  %7896 = vst.msk [vmem:[#allocation3 + $0x218] sm:$0xff] %vm2429, %v7864
  %7897 = vst.msk [vmem:[#allocation3 + $0x230] sm:$0xff] %vm2429, %v7865
  %7898 = vst.msk [vmem:[#allocation3 + $0x248] sm:$0xff] %vm2429, %v7866
  %7899 = vst.msk [vmem:[#allocation3 + $0x260] sm:$0xff] %vm2429, %v7867
  %7900 = vst.msk [vmem:[#allocation3 + $0x278] sm:$0xff] %vm2429, %v7868
  %7901 = vst.msk [vmem:[#allocation3 + $0x290] sm:$0xff] %vm2429, %v7869
  %7902 = vst.msk [vmem:[#allocation3 + $0x2a8] sm:$0xff] %vm2429, %v7870
  %7903 = vst.msk [vmem:[#allocation3 + $0x2c0] sm:$0xff] %vm2429, %v7871
  %7904 = vst.msk [vmem:[#allocation3 + $0x2d8] sm:$0xff] %vm2429, %v7872
  %7905 = vst.msk [vmem:[#allocation3 + $0x2f0] sm:$0xff] %vm2429, %v7873
  %v7906 = vsel %vm4098, %v7328, 0.0
  %v7907 = vsel %vm4099, %v7327, 0.0
  %v7908 = vsel %vm4100, %v7326, 0.0
  %v7909 = vsel %vm4101, %v7325, 0.0
  %v7910 = vsel %vm4102, %v7324, 0.0
  %v7911 = vsel %vm4103, %v7323, 0.0
  %v7912 = vsel %vm4104, %v7322, 0.0
  %v7913 = vsel %vm4105, %v7321, 0.0
  %v7914 = vsel %vm4106, %v7320, 0.0
  %v7915 = vsel %vm4107, %v7319, 0.0
  %v7916 = vsel %vm4108, %v7318, 0.0
  %v7917 = vsel %vm4109, %v7317, 0.0
  %v7918 = vsel %vm4110, %v7316, 0.0
  %v7919 = vsel %vm4111, %v7315, 0.0
  %v7920 = vsel %vm4112, %v7314, 0.0
  %v7921 = vsel %vm4113, %v7313, 0.0
  %v7922 = vsel %vm4114, %v7312, 0.0
  %v7923 = vsel %vm4115, %v7311, 0.0
  %v7924 = vsel %vm4116, %v7310, 0.0
  %v7925 = vsel %vm4117, %v7309, 0.0
  %v7926 = vsel %vm4118, %v7308, 0.0
  %v7927 = vsel %vm4119, %v7307, 0.0
  %v7928 = vsel %vm4120, %v7306, 0.0
  %v7929 = vsel %vm4121, %v7305, 0.0
  %v7930 = vsel %vm4122, %v7304, 0.0
  %v7931 = vsel %vm4123, %v7303, 0.0
  %v7932 = vsel %vm4124, %v7302, 0.0
  %v7933 = vsel %vm4125, %v7301, 0.0
  %v7934 = vsel %vm4126, %v7300, 0.0
  %v7935 = vsel %vm4127, %v7299, 0.0
  %v7936 = vsel %vm4128, %v7298, 0.0
  %v7937 = vsel %vm4129, %v7297, 0.0
  %v7938 = vsel %vm4130, %v7296, 0.0
  %v7939 = vsel %vm4131, %v7295, 0.0
  %v7940 = vsel %vm4132, %v7294, 0.0
  %v7941 = vsel %vm4133, %v7293, 0.0
  %v7942 = vsel %vm4134, %v7292, 0.0
  %v7943 = vsel %vm4135, %v7291, 0.0
  %v7944 = vsel %vm4136, %v7290, 0.0
  %v7945 = vsel %vm4137, %v7289, 0.0
  %v7946 = vsel %vm4138, %v7288, 0.0
  %v7947 = vsel %vm4139, %v7287, 0.0
  %v7948 = vsel %vm4140, %v7286, 0.0
  %v7949 = vsel %vm4141, %v7285, 0.0
  %v7950 = vsel %vm4142, %v7284, 0.0
  %v7951 = vsel %vm4143, %v7283, 0.0
  %v7952 = vsel %vm4144, %v7282, 0.0
  %v7953 = vsel %vm4145, %v7281, 0.0
  %v7954 = vsel %vm4146, %v7280, 0.0
  %v7955 = vsel %vm4147, %v7279, 0.0
  %v7956 = vsel %vm4148, %v7278, 0.0
  %v7957 = vsel %vm4149, %v7277, 0.0
  %v7958 = vsel %vm4150, %v7276, 0.0
  %v7959 = vsel %vm4151, %v7275, 0.0
  %v7960 = vsel %vm4152, %v7274, 0.0
  %v7961 = vsel %vm4153, %v7273, 0.0
  %v7962 = vsel %vm4154, %v7272, 0.0
  %v7963 = vsel %vm4155, %v7271, 0.0
  %v7964 = vsel %vm4156, %v7270, 0.0
  %v7965 = vsel %vm4157, %v7269, 0.0
  %v7966 = vsel %vm4158, %v7268, 0.0
  %v7967 = vsel %vm4159, %v7267, 0.0
  %v7968 = vsel %vm4160, %v7266, 0.0
  %v7969 = vsel %vm4161, %v7329, 0.0
  %v7970 = vpack.c.bf16 %v7907, %v7906
  %v7971 = vpack.c.bf16 %v7909, %v7908
  %v7972 = vpack.c.bf16 %v7911, %v7910
  %v7973 = vpack.c.bf16 %v7913, %v7912
  %v7974 = vpack.c.bf16 %v7915, %v7914
  %v7975 = vpack.c.bf16 %v7917, %v7916
  %v7976 = vpack.c.bf16 %v7919, %v7918
  %v7977 = vpack.c.bf16 %v7921, %v7920
  %v7978 = vpack.c.bf16 %v7923, %v7922
  %v7979 = vpack.c.bf16 %v7925, %v7924
  %v7980 = vpack.c.bf16 %v7927, %v7926
  %v7981 = vpack.c.bf16 %v7929, %v7928
  %v7982 = vpack.c.bf16 %v7931, %v7930
  %v7983 = vpack.c.bf16 %v7933, %v7932
  %v7984 = vpack.c.bf16 %v7935, %v7934
  %v7985 = vpack.c.bf16 %v7937, %v7936
  %v7986 = vpack.c.bf16 %v7939, %v7938
  %v7987 = vpack.c.bf16 %v7941, %v7940
  %v7988 = vpack.c.bf16 %v7943, %v7942
  %v7989 = vpack.c.bf16 %v7945, %v7944
  %v7990 = vpack.c.bf16 %v7947, %v7946
  %v7991 = vpack.c.bf16 %v7949, %v7948
  %v7992 = vpack.c.bf16 %v7951, %v7950
  %v7993 = vpack.c.bf16 %v7953, %v7952
  %v7994 = vpack.c.bf16 %v7955, %v7954
  %v7995 = vpack.c.bf16 %v7957, %v7956
  %v7996 = vpack.c.bf16 %v7959, %v7958
  %v7997 = vpack.c.bf16 %v7961, %v7960
  %v7998 = vpack.c.bf16 %v7963, %v7962
  %v7999 = vpack.c.bf16 %v7965, %v7964
  %v8000 = vpack.c.bf16 %v7967, %v7966
  %v8001 = vpack.c.bf16 %v7969, %v7968
  %8034 = vrot.lane.b32.xlu0 %v7970, 32
  %v8035 = vpop.permute.xlu0 %8034
  %8036 = vrot.lane.b32.xlu0 %v7971, 32
  %v8037 = vpop.permute.xlu0 %8036
  %8038 = vrot.lane.b32.xlu0 %v7972, 32
  %v8039 = vpop.permute.xlu0 %8038
  %8040 = vrot.lane.b32.xlu0 %v7973, 32
  %v8041 = vpop.permute.xlu0 %8040
  %8042 = vrot.lane.b32.xlu0 %v7974, 32
  %v8043 = vpop.permute.xlu0 %8042
  %8044 = vrot.lane.b32.xlu0 %v7975, 32
  %v8045 = vpop.permute.xlu0 %8044
  %8046 = vrot.lane.b32.xlu0 %v7976, 32
  %v8047 = vpop.permute.xlu0 %8046
  %8048 = vrot.lane.b32.xlu0 %v7977, 32
  %v8049 = vpop.permute.xlu0 %8048
  %8050 = vrot.lane.b32.xlu0 %v7978, 32
  %v8051 = vpop.permute.xlu0 %8050
  %8052 = vrot.lane.b32.xlu0 %v7979, 32
  %v8053 = vpop.permute.xlu0 %8052
  %8054 = vrot.lane.b32.xlu0 %v7980, 32
  %v8055 = vpop.permute.xlu0 %8054
  %8056 = vrot.lane.b32.xlu0 %v7981, 32
  %v8057 = vpop.permute.xlu0 %8056
  %8058 = vrot.lane.b32.xlu0 %v7982, 32
  %v8059 = vpop.permute.xlu0 %8058
  %8060 = vrot.lane.b32.xlu0 %v7983, 32
  %v8061 = vpop.permute.xlu0 %8060
  %8062 = vrot.lane.b32.xlu0 %v7984, 32
  %v8063 = vpop.permute.xlu0 %8062
  %8064 = vrot.lane.b32.xlu0 %v7985, 32
  %v8065 = vpop.permute.xlu0 %8064
  %8066 = vrot.lane.b32.xlu0 %v7986, 32
  %v8067 = vpop.permute.xlu0 %8066
  %8068 = vrot.lane.b32.xlu0 %v7987, 32
  %v8069 = vpop.permute.xlu0 %8068
  %8070 = vrot.lane.b32.xlu0 %v7988, 32
  %v8071 = vpop.permute.xlu0 %8070
  %8072 = vrot.lane.b32.xlu0 %v7989, 32
  %v8073 = vpop.permute.xlu0 %8072
  %8074 = vrot.lane.b32.xlu0 %v7990, 32
  %v8075 = vpop.permute.xlu0 %8074
  %8076 = vrot.lane.b32.xlu0 %v7991, 32
  %v8077 = vpop.permute.xlu0 %8076
  %8078 = vrot.lane.b32.xlu0 %v7992, 32
  %v8079 = vpop.permute.xlu0 %8078
  %8080 = vrot.lane.b32.xlu0 %v7993, 32
  %v8081 = vpop.permute.xlu0 %8080
  %8082 = vrot.lane.b32.xlu0 %v7994, 32
  %v8083 = vpop.permute.xlu0 %8082
  %8084 = vrot.lane.b32.xlu0 %v7995, 32
  %v8085 = vpop.permute.xlu0 %8084
  %8086 = vrot.lane.b32.xlu0 %v7996, 32
  %v8087 = vpop.permute.xlu0 %8086
  %8088 = vrot.lane.b32.xlu0 %v7997, 32
  %v8089 = vpop.permute.xlu0 %8088
  %8090 = vrot.lane.b32.xlu0 %v7998, 32
  %v8091 = vpop.permute.xlu0 %8090
  %8092 = vrot.lane.b32.xlu0 %v7999, 32
  %v8093 = vpop.permute.xlu0 %8092
  %8094 = vrot.lane.b32.xlu0 %v8000, 32
  %v8095 = vpop.permute.xlu0 %8094
  %8096 = vrot.lane.b32.xlu0 %v8001, 32
  %v8097 = vpop.permute.xlu0 %8096
  %8130 = vst.msk [vmem:[#allocation3 + $0x8] sm:$0xff] %vm2814, %v8035
  %8131 = vst.msk [vmem:[#allocation3 + $0x20] sm:$0xff] %vm2814, %v8037
  %8132 = vst.msk [vmem:[#allocation3 + $0x38] sm:$0xff] %vm2814, %v8039
  %8133 = vst.msk [vmem:[#allocation3 + $0x50] sm:$0xff] %vm2814, %v8041
  %8134 = vst.msk [vmem:[#allocation3 + $0x68] sm:$0xff] %vm2814, %v8043
  %8135 = vst.msk [vmem:[#allocation3 + $0x80] sm:$0xff] %vm2814, %v8045
  %8136 = vst.msk [vmem:[#allocation3 + $0x98] sm:$0xff] %vm2814, %v8047
  %8137 = vst.msk [vmem:[#allocation3 + $0xb0] sm:$0xff] %vm2814, %v8049
  %8138 = vst.msk [vmem:[#allocation3 + $0xc8] sm:$0xff] %vm2814, %v8051
  %8139 = vst.msk [vmem:[#allocation3 + $0xe0] sm:$0xff] %vm2814, %v8053
  %8140 = vst.msk [vmem:[#allocation3 + $0xf8] sm:$0xff] %vm2814, %v8055
  %8141 = vst.msk [vmem:[#allocation3 + $0x110] sm:$0xff] %vm2814, %v8057
  %8142 = vst.msk [vmem:[#allocation3 + $0x128] sm:$0xff] %vm2814, %v8059
  %8143 = vst.msk [vmem:[#allocation3 + $0x140] sm:$0xff] %vm2814, %v8061
  %8144 = vst.msk [vmem:[#allocation3 + $0x158] sm:$0xff] %vm2814, %v8063
  %8145 = vst.msk [vmem:[#allocation3 + $0x170] sm:$0xff] %vm2814, %v8065
  %8146 = vst.msk [vmem:[#allocation3 + $0x188] sm:$0xff] %vm2814, %v8067
  %8147 = vst.msk [vmem:[#allocation3 + $0x1a0] sm:$0xff] %vm2814, %v8069
  %8148 = vst.msk [vmem:[#allocation3 + $0x1b8] sm:$0xff] %vm2814, %v8071
  %8149 = vst.msk [vmem:[#allocation3 + $0x1d0] sm:$0xff] %vm2814, %v8073
  %8150 = vst.msk [vmem:[#allocation3 + $0x1e8] sm:$0xff] %vm2814, %v8075
  %8151 = vst.msk [vmem:[#allocation3 + $0x200] sm:$0xff] %vm2814, %v8077
  %8152 = vst.msk [vmem:[#allocation3 + $0x218] sm:$0xff] %vm2814, %v8079
  %8153 = vst.msk [vmem:[#allocation3 + $0x230] sm:$0xff] %vm2814, %v8081
  %8154 = vst.msk [vmem:[#allocation3 + $0x248] sm:$0xff] %vm2814, %v8083
  %8155 = vst.msk [vmem:[#allocation3 + $0x260] sm:$0xff] %vm2814, %v8085
  %8156 = vst.msk [vmem:[#allocation3 + $0x278] sm:$0xff] %vm2814, %v8087
  %8157 = vst.msk [vmem:[#allocation3 + $0x290] sm:$0xff] %vm2814, %v8089
  %8158 = vst.msk [vmem:[#allocation3 + $0x2a8] sm:$0xff] %vm2814, %v8091
  %8159 = vst.msk [vmem:[#allocation3 + $0x2c0] sm:$0xff] %vm2814, %v8093
  %8160 = vst.msk [vmem:[#allocation3 + $0x2d8] sm:$0xff] %vm2814, %v8095
  %8161 = vst.msk [vmem:[#allocation3 + $0x2f0] sm:$0xff] %vm2814, %v8097
  %v8162 = vsel %vm4546, %v6815, 0.0
  %v8163 = vsel %vm4547, %v6814, 0.0
  %v8164 = vsel %vm4548, %v6813, 0.0
  %v8165 = vsel %vm4549, %v6812, 0.0
  %v8166 = vsel %vm4550, %v6811, 0.0
  %v8167 = vsel %vm4551, %v6810, 0.0
  %v8168 = vsel %vm4552, %v6809, 0.0
  %v8169 = vsel %vm4553, %v6808, 0.0
  %v8170 = vsel %vm4554, %v6807, 0.0
  %v8171 = vsel %vm4555, %v6806, 0.0
  %v8172 = vsel %vm4556, %v6805, 0.0
  %v8173 = vsel %vm4557, %v6804, 0.0
  %v8174 = vsel %vm4558, %v6803, 0.0
  %v8175 = vsel %vm4559, %v6802, 0.0
  %v8176 = vsel %vm4560, %v6801, 0.0
  %v8177 = vsel %vm4561, %v6800, 0.0
  %v8178 = vsel %vm4562, %v6799, 0.0
  %v8179 = vsel %vm4563, %v6798, 0.0
  %v8180 = vsel %vm4564, %v6797, 0.0
  %v8181 = vsel %vm4565, %v6796, 0.0
  %v8182 = vsel %vm4566, %v6795, 0.0
  %v8183 = vsel %vm4567, %v6794, 0.0
  %v8184 = vsel %vm4568, %v6793, 0.0
  %v8185 = vsel %vm4569, %v6792, 0.0
  %v8186 = vsel %vm4570, %v6791, 0.0
  %v8187 = vsel %vm4571, %v6790, 0.0
  %v8188 = vsel %vm4572, %v6789, 0.0
  %v8189 = vsel %vm4573, %v6788, 0.0
  %v8190 = vsel %vm4574, %v6787, 0.0
  %v8191 = vsel %vm4575, %v6786, 0.0
  %v8192 = vsel %vm4576, %v6785, 0.0
  %v8193 = vsel %vm4577, %v6784, 0.0
  %v8194 = vsel %vm4578, %v6783, 0.0
  %v8195 = vsel %vm4579, %v6782, 0.0
  %v8196 = vsel %vm4580, %v6781, 0.0
  %v8197 = vsel %vm4581, %v6780, 0.0
  %v8198 = vsel %vm4582, %v6779, 0.0
  %v8199 = vsel %vm4583, %v6778, 0.0
  %v8200 = vsel %vm4584, %v6777, 0.0
  %v8201 = vsel %vm4585, %v6776, 0.0
  %v8202 = vsel %vm4586, %v6775, 0.0
  %v8203 = vsel %vm4587, %v6774, 0.0
  %v8204 = vsel %vm4588, %v6773, 0.0
  %v8205 = vsel %vm4589, %v6772, 0.0
  %v8206 = vsel %vm4590, %v6771, 0.0
  %v8207 = vsel %vm4591, %v6770, 0.0
  %v8208 = vsel %vm4592, %v6769, 0.0
  %v8209 = vsel %vm4593, %v6768, 0.0
  %v8210 = vsel %vm4594, %v6767, 0.0
  %v8211 = vsel %vm4595, %v6766, 0.0
  %v8212 = vsel %vm4596, %v6765, 0.0
  %v8213 = vsel %vm4597, %v6764, 0.0
  %v8214 = vsel %vm4598, %v6763, 0.0
  %v8215 = vsel %vm4599, %v6762, 0.0
  %v8216 = vsel %vm4600, %v6761, 0.0
  %v8217 = vsel %vm4601, %v6760, 0.0
  %v8218 = vsel %vm4602, %v6759, 0.0
  %v8219 = vsel %vm4603, %v6758, 0.0
  %v8220 = vsel %vm4604, %v6757, 0.0
  %v8221 = vsel %vm4605, %v6756, 0.0
  %v8222 = vsel %vm4606, %v6755, 0.0
  %v8223 = vsel %vm4607, %v6754, 0.0
  %v8224 = vsel %vm4608, %v6817, 0.0
  %v8225 = vsel %vm4609, %v6816, 0.0
  %v8226 = vpack.c.bf16 %v8163, %v8162
  %v8227 = vpack.c.bf16 %v8165, %v8164
  %v8228 = vpack.c.bf16 %v8167, %v8166
  %v8229 = vpack.c.bf16 %v8169, %v8168
  %v8230 = vpack.c.bf16 %v8171, %v8170
  %v8231 = vpack.c.bf16 %v8173, %v8172
  %v8232 = vpack.c.bf16 %v8175, %v8174
  %v8233 = vpack.c.bf16 %v8177, %v8176
  %v8234 = vpack.c.bf16 %v8179, %v8178
  %v8235 = vpack.c.bf16 %v8181, %v8180
  %v8236 = vpack.c.bf16 %v8183, %v8182
  %v8237 = vpack.c.bf16 %v8185, %v8184
  %v8238 = vpack.c.bf16 %v8187, %v8186
  %v8239 = vpack.c.bf16 %v8189, %v8188
  %v8240 = vpack.c.bf16 %v8191, %v8190
  %v8241 = vpack.c.bf16 %v8193, %v8192
  %v8242 = vpack.c.bf16 %v8195, %v8194
  %v8243 = vpack.c.bf16 %v8197, %v8196
  %v8244 = vpack.c.bf16 %v8199, %v8198
  %v8245 = vpack.c.bf16 %v8201, %v8200
  %v8246 = vpack.c.bf16 %v8203, %v8202
  %v8247 = vpack.c.bf16 %v8205, %v8204
  %v8248 = vpack.c.bf16 %v8207, %v8206
  %v8249 = vpack.c.bf16 %v8209, %v8208
  %v8250 = vpack.c.bf16 %v8211, %v8210
  %v8251 = vpack.c.bf16 %v8213, %v8212
  %v8252 = vpack.c.bf16 %v8215, %v8214
  %v8253 = vpack.c.bf16 %v8217, %v8216
  %v8254 = vpack.c.bf16 %v8219, %v8218
  %v8255 = vpack.c.bf16 %v8221, %v8220
  %v8256 = vpack.c.bf16 %v8223, %v8222
  %v8257 = vpack.c.bf16 %v8225, %v8224
  %8290 = vrot.lane.b32.xlu0 %v8226, 64
  %v8291 = vpop.permute.xlu0 %8290
  %8292 = vrot.lane.b32.xlu0 %v8227, 64
  %v8293 = vpop.permute.xlu0 %8292
  %8294 = vrot.lane.b32.xlu0 %v8228, 64
  %v8295 = vpop.permute.xlu0 %8294
  %8296 = vrot.lane.b32.xlu0 %v8229, 64
  %v8297 = vpop.permute.xlu0 %8296
  %8298 = vrot.lane.b32.xlu0 %v8230, 64
  %v8299 = vpop.permute.xlu0 %8298
  %8300 = vrot.lane.b32.xlu0 %v8231, 64
  %v8301 = vpop.permute.xlu0 %8300
  %8302 = vrot.lane.b32.xlu0 %v8232, 64
  %v8303 = vpop.permute.xlu0 %8302
  %8304 = vrot.lane.b32.xlu0 %v8233, 64
  %v8305 = vpop.permute.xlu0 %8304
  %8306 = vrot.lane.b32.xlu0 %v8234, 64
  %v8307 = vpop.permute.xlu0 %8306
  %8308 = vrot.lane.b32.xlu0 %v8235, 64
  %v8309 = vpop.permute.xlu0 %8308
  %8310 = vrot.lane.b32.xlu0 %v8236, 64
  %v8311 = vpop.permute.xlu0 %8310
  %8312 = vrot.lane.b32.xlu0 %v8237, 64
  %v8313 = vpop.permute.xlu0 %8312
  %8314 = vrot.lane.b32.xlu0 %v8238, 64
  %v8315 = vpop.permute.xlu0 %8314
  %8316 = vrot.lane.b32.xlu0 %v8239, 64
  %v8317 = vpop.permute.xlu0 %8316
  %8318 = vrot.lane.b32.xlu0 %v8240, 64
  %v8319 = vpop.permute.xlu0 %8318
  %8320 = vrot.lane.b32.xlu0 %v8241, 64
  %v8321 = vpop.permute.xlu0 %8320
  %8322 = vrot.lane.b32.xlu0 %v8242, 64
  %v8323 = vpop.permute.xlu0 %8322
  %8324 = vrot.lane.b32.xlu0 %v8243, 64
  %v8325 = vpop.permute.xlu0 %8324
  %8326 = vrot.lane.b32.xlu0 %v8244, 64
  %v8327 = vpop.permute.xlu0 %8326
  %8328 = vrot.lane.b32.xlu0 %v8245, 64
  %v8329 = vpop.permute.xlu0 %8328
  %8330 = vrot.lane.b32.xlu0 %v8246, 64
  %v8331 = vpop.permute.xlu0 %8330
  %8332 = vrot.lane.b32.xlu0 %v8247, 64
  %v8333 = vpop.permute.xlu0 %8332
  %8334 = vrot.lane.b32.xlu0 %v8248, 64
  %v8335 = vpop.permute.xlu0 %8334
  %8336 = vrot.lane.b32.xlu0 %v8249, 64
  %v8337 = vpop.permute.xlu0 %8336
  %8338 = vrot.lane.b32.xlu0 %v8250, 64
  %v8339 = vpop.permute.xlu0 %8338
  %8340 = vrot.lane.b32.xlu0 %v8251, 64
  %v8341 = vpop.permute.xlu0 %8340
  %8342 = vrot.lane.b32.xlu0 %v8252, 64
  %v8343 = vpop.permute.xlu0 %8342
  %8344 = vrot.lane.b32.xlu0 %v8253, 64
  %v8345 = vpop.permute.xlu0 %8344
  %8346 = vrot.lane.b32.xlu0 %v8254, 64
  %v8347 = vpop.permute.xlu0 %8346
  %8348 = vrot.lane.b32.xlu0 %v8255, 64
  %v8349 = vpop.permute.xlu0 %8348
  %8350 = vrot.lane.b32.xlu0 %v8256, 64
  %v8351 = vpop.permute.xlu0 %8350
  %8352 = vrot.lane.b32.xlu0 %v8257, 64
  %v8353 = vpop.permute.xlu0 %8352
  %8386 = vst.msk [vmem:[#allocation3 + $0x8] sm:$0xff] %vm3392, %v8291
  %8387 = vst.msk [vmem:[#allocation3 + $0x20] sm:$0xff] %vm3392, %v8293
  %8388 = vst.msk [vmem:[#allocation3 + $0x38] sm:$0xff] %vm3392, %v8295
  %8389 = vst.msk [vmem:[#allocation3 + $0x50] sm:$0xff] %vm3392, %v8297
  %8390 = vst.msk [vmem:[#allocation3 + $0x68] sm:$0xff] %vm3392, %v8299
  %8391 = vst.msk [vmem:[#allocation3 + $0x80] sm:$0xff] %vm3392, %v8301
  %8392 = vst.msk [vmem:[#allocation3 + $0x98] sm:$0xff] %vm3392, %v8303
  %8393 = vst.msk [vmem:[#allocation3 + $0xb0] sm:$0xff] %vm3392, %v8305
  %8394 = vst.msk [vmem:[#allocation3 + $0xc8] sm:$0xff] %vm3392, %v8307
  %8395 = vst.msk [vmem:[#allocation3 + $0xe0] sm:$0xff] %vm3392, %v8309
  %8396 = vst.msk [vmem:[#allocation3 + $0xf8] sm:$0xff] %vm3392, %v8311
  %8397 = vst.msk [vmem:[#allocation3 + $0x110] sm:$0xff] %vm3392, %v8313
  %8398 = vst.msk [vmem:[#allocation3 + $0x128] sm:$0xff] %vm3392, %v8315
  %8399 = vst.msk [vmem:[#allocation3 + $0x140] sm:$0xff] %vm3392, %v8317
  %8400 = vst.msk [vmem:[#allocation3 + $0x158] sm:$0xff] %vm3392, %v8319
  %8401 = vst.msk [vmem:[#allocation3 + $0x170] sm:$0xff] %vm3392, %v8321
  %8402 = vst.msk [vmem:[#allocation3 + $0x188] sm:$0xff] %vm3392, %v8323
  %8403 = vst.msk [vmem:[#allocation3 + $0x1a0] sm:$0xff] %vm3392, %v8325
  %8404 = vst.msk [vmem:[#allocation3 + $0x1b8] sm:$0xff] %vm3392, %v8327
  %8405 = vst.msk [vmem:[#allocation3 + $0x1d0] sm:$0xff] %vm3392, %v8329
  %8406 = vst.msk [vmem:[#allocation3 + $0x1e8] sm:$0xff] %vm3392, %v8331
  %8407 = vst.msk [vmem:[#allocation3 + $0x200] sm:$0xff] %vm3392, %v8333
  %8408 = vst.msk [vmem:[#allocation3 + $0x218] sm:$0xff] %vm3392, %v8335
  %8409 = vst.msk [vmem:[#allocation3 + $0x230] sm:$0xff] %vm3392, %v8337
  %8410 = vst.msk [vmem:[#allocation3 + $0x248] sm:$0xff] %vm3392, %v8339
  %8411 = vst.msk [vmem:[#allocation3 + $0x260] sm:$0xff] %vm3392, %v8341
  %8412 = vst.msk [vmem:[#allocation3 + $0x278] sm:$0xff] %vm3392, %v8343
  %8413 = vst.msk [vmem:[#allocation3 + $0x290] sm:$0xff] %vm3392, %v8345
  %8414 = vst.msk [vmem:[#allocation3 + $0x2a8] sm:$0xff] %vm3392, %v8347
  %8415 = vst.msk [vmem:[#allocation3 + $0x2c0] sm:$0xff] %vm3392, %v8349
  %8416 = vst.msk [vmem:[#allocation3 + $0x2d8] sm:$0xff] %vm3392, %v8351
  %8417 = vst.msk [vmem:[#allocation3 + $0x2f0] sm:$0xff] %vm3392, %v8353
  %v8418 = vsel %vm4930, %v6628, 0.0
  %v8419 = vsel %vm4931, %v6629, 0.0
  %v8420 = vsel %vm4932, %v6630, 0.0
  %v8421 = vsel %vm4933, %v6631, 0.0
  %v8422 = vsel %vm4934, %v6632, 0.0
  %v8423 = vsel %vm4935, %v6633, 0.0
  %v8424 = vsel %vm4936, %v6634, 0.0
  %v8425 = vsel %vm4937, %v6635, 0.0
  %v8426 = vsel %vm4938, %v6636, 0.0
  %v8427 = vsel %vm4939, %v6637, 0.0
  %v8428 = vsel %vm4940, %v6638, 0.0
  %v8429 = vsel %vm4941, %v6639, 0.0
  %v8430 = vsel %vm4942, %v6640, 0.0
  %v8431 = vsel %vm4943, %v6641, 0.0
  %v8432 = vsel %vm4944, %v6642, 0.0
  %v8433 = vsel %vm4945, %v6643, 0.0
  %v8434 = vsel %vm4946, %v6644, 0.0
  %v8435 = vsel %vm4947, %v6645, 0.0
  %v8436 = vsel %vm4948, %v6646, 0.0
  %v8437 = vsel %vm4949, %v6647, 0.0
  %v8438 = vsel %vm4950, %v6648, 0.0
  %v8439 = vsel %vm4951, %v6649, 0.0
  %v8440 = vsel %vm4952, %v6650, 0.0
  %v8441 = vsel %vm4953, %v6651, 0.0
  %v8442 = vsel %vm4954, %v6652, 0.0
  %v8443 = vsel %vm4955, %v6653, 0.0
  %v8444 = vsel %vm4956, %v6654, 0.0
  %v8445 = vsel %vm4957, %v6655, 0.0
  %v8446 = vsel %vm4958, %v6656, 0.0
  %v8447 = vsel %vm4959, %v6657, 0.0
  %v8448 = vsel %vm4960, %v6658, 0.0
  %v8449 = vsel %vm4961, %v6659, 0.0
  %v8450 = vsel %vm4962, %v6660, 0.0
  %v8451 = vsel %vm4963, %v6661, 0.0
  %v8452 = vsel %vm4964, %v6662, 0.0
  %v8453 = vsel %vm4965, %v6663, 0.0
  %v8454 = vsel %vm4966, %v6664, 0.0
  %v8455 = vsel %vm4967, %v6665, 0.0
  %v8456 = vsel %vm4968, %v6666, 0.0
  %v8457 = vsel %vm4969, %v6667, 0.0
  %v8458 = vsel %vm4970, %v6668, 0.0
  %v8459 = vsel %vm4971, %v6669, 0.0
  %v8460 = vsel %vm4972, %v6670, 0.0
  %v8461 = vsel %vm4973, %v6671, 0.0
  %v8462 = vsel %vm4974, %v6672, 0.0
  %v8463 = vsel %vm4975, %v6673, 0.0
  %v8464 = vsel %vm4976, %v6674, 0.0
  %v8465 = vsel %vm4977, %v6675, 0.0
  %v8466 = vsel %vm4978, %v6676, 0.0
  %v8467 = vsel %vm4979, %v6677, 0.0
  %v8468 = vsel %vm4980, %v6678, 0.0
  %v8469 = vsel %vm4981, %v6679, 0.0
  %v8470 = vsel %vm4982, %v6680, 0.0
  %v8471 = vsel %vm4983, %v6681, 0.0
  %v8472 = vsel %vm4984, %v6682, 0.0
  %v8473 = vsel %vm4985, %v6683, 0.0
  %v8474 = vsel %vm4986, %v6684, 0.0
  %v8475 = vsel %vm4987, %v6685, 0.0
  %v8476 = vsel %vm4988, %v6686, 0.0
  %v8477 = vsel %vm4989, %v6687, 0.0
  %v8478 = vsel %vm4990, %v6688, 0.0
  %v8479 = vsel %vm4991, %v6689, 0.0
  %v8480 = vsel %vm4992, %v6626, 0.0
  %v8481 = vsel %vm4993, %v6627, 0.0
  %v8482 = vpack.c.bf16 %v8419, %v8418
  %v8483 = vpack.c.bf16 %v8421, %v8420
  %v8484 = vpack.c.bf16 %v8423, %v8422
  %v8485 = vpack.c.bf16 %v8425, %v8424
  %v8486 = vpack.c.bf16 %v8427, %v8426
  %v8487 = vpack.c.bf16 %v8429, %v8428
  %v8488 = vpack.c.bf16 %v8431, %v8430
  %v8489 = vpack.c.bf16 %v8433, %v8432
  %v8490 = vpack.c.bf16 %v8435, %v8434
  %v8491 = vpack.c.bf16 %v8437, %v8436
  %v8492 = vpack.c.bf16 %v8439, %v8438
  %v8493 = vpack.c.bf16 %v8441, %v8440
  %v8494 = vpack.c.bf16 %v8443, %v8442
  %v8495 = vpack.c.bf16 %v8445, %v8444
  %v8496 = vpack.c.bf16 %v8447, %v8446
  %v8497 = vpack.c.bf16 %v8449, %v8448
  %v8498 = vpack.c.bf16 %v8451, %v8450
  %v8499 = vpack.c.bf16 %v8453, %v8452
  %v8500 = vpack.c.bf16 %v8455, %v8454
  %v8501 = vpack.c.bf16 %v8457, %v8456
  %v8502 = vpack.c.bf16 %v8459, %v8458
  %v8503 = vpack.c.bf16 %v8461, %v8460
  %v8504 = vpack.c.bf16 %v8463, %v8462
  %v8505 = vpack.c.bf16 %v8465, %v8464
  %v8506 = vpack.c.bf16 %v8467, %v8466
  %v8507 = vpack.c.bf16 %v8469, %v8468
  %v8508 = vpack.c.bf16 %v8471, %v8470
  %v8509 = vpack.c.bf16 %v8473, %v8472
  %v8510 = vpack.c.bf16 %v8475, %v8474
  %v8511 = vpack.c.bf16 %v8477, %v8476
  %v8512 = vpack.c.bf16 %v8479, %v8478
  %v8513 = vpack.c.bf16 %v8481, %v8480
  %8546 = vrot.lane.b32.xlu0 %v8482, 96
  %v8547 = vpop.permute.xlu0 %8546
  %8548 = vrot.lane.b32.xlu0 %v8483, 96
  %v8549 = vpop.permute.xlu0 %8548
  %8550 = vrot.lane.b32.xlu0 %v8484, 96
  %v8551 = vpop.permute.xlu0 %8550
  %8552 = vrot.lane.b32.xlu0 %v8485, 96
  %v8553 = vpop.permute.xlu0 %8552
  %8554 = vrot.lane.b32.xlu0 %v8486, 96
  %v8555 = vpop.permute.xlu0 %8554
  %8556 = vrot.lane.b32.xlu0 %v8487, 96
  %v8557 = vpop.permute.xlu0 %8556
  %8558 = vrot.lane.b32.xlu0 %v8488, 96
  %v8559 = vpop.permute.xlu0 %8558
  %8560 = vrot.lane.b32.xlu0 %v8489, 96
  %v8561 = vpop.permute.xlu0 %8560
  %8562 = vrot.lane.b32.xlu0 %v8490, 96
  %v8563 = vpop.permute.xlu0 %8562
  %8564 = vrot.lane.b32.xlu0 %v8491, 96
  %v8565 = vpop.permute.xlu0 %8564
  %8566 = vrot.lane.b32.xlu0 %v8492, 96
  %v8567 = vpop.permute.xlu0 %8566
  %8568 = vrot.lane.b32.xlu0 %v8493, 96
  %v8569 = vpop.permute.xlu0 %8568
  %8570 = vrot.lane.b32.xlu0 %v8494, 96
  %v8571 = vpop.permute.xlu0 %8570
  %8572 = vrot.lane.b32.xlu0 %v8495, 96
  %v8573 = vpop.permute.xlu0 %8572
  %8574 = vrot.lane.b32.xlu0 %v8496, 96
  %v8575 = vpop.permute.xlu0 %8574
  %8576 = vrot.lane.b32.xlu0 %v8497, 96
  %v8577 = vpop.permute.xlu0 %8576
  %8578 = vrot.lane.b32.xlu0 %v8498, 96
  %v8579 = vpop.permute.xlu0 %8578
  %8580 = vrot.lane.b32.xlu0 %v8499, 96
  %v8581 = vpop.permute.xlu0 %8580
  %8582 = vrot.lane.b32.xlu0 %v8500, 96
  %v8583 = vpop.permute.xlu0 %8582
  %8584 = vrot.lane.b32.xlu0 %v8501, 96
  %v8585 = vpop.permute.xlu0 %8584
  %8586 = vrot.lane.b32.xlu0 %v8502, 96
  %v8587 = vpop.permute.xlu0 %8586
  %8588 = vrot.lane.b32.xlu0 %v8503, 96
  %v8589 = vpop.permute.xlu0 %8588
  %8590 = vrot.lane.b32.xlu0 %v8504, 96
  %v8591 = vpop.permute.xlu0 %8590
  %8592 = vrot.lane.b32.xlu0 %v8505, 96
  %v8593 = vpop.permute.xlu0 %8592
  %8594 = vrot.lane.b32.xlu0 %v8506, 96
  %v8595 = vpop.permute.xlu0 %8594
  %8596 = vrot.lane.b32.xlu0 %v8507, 96
  %v8597 = vpop.permute.xlu0 %8596
  %8598 = vrot.lane.b32.xlu0 %v8508, 96
  %v8599 = vpop.permute.xlu0 %8598
  %8600 = vrot.lane.b32.xlu0 %v8509, 96
  %v8601 = vpop.permute.xlu0 %8600
  %8602 = vrot.lane.b32.xlu0 %v8510, 96
  %v8603 = vpop.permute.xlu0 %8602
  %8604 = vrot.lane.b32.xlu0 %v8511, 96
  %v8605 = vpop.permute.xlu0 %8604
  %8606 = vrot.lane.b32.xlu0 %v8512, 96
  %v8607 = vpop.permute.xlu0 %8606
  %8608 = vrot.lane.b32.xlu0 %v8513, 96
  %v8609 = vpop.permute.xlu0 %8608
  %8642 = vst.msk [vmem:[#allocation3 + $0x8] sm:$0xff] %vm3777, %v8547
  %8643 = vst.msk [vmem:[#allocation3 + $0x20] sm:$0xff] %vm3777, %v8549
  %8644 = vst.msk [vmem:[#allocation3 + $0x38] sm:$0xff] %vm3777, %v8551
  %8645 = vst.msk [vmem:[#allocation3 + $0x50] sm:$0xff] %vm3777, %v8553
  %8646 = vst.msk [vmem:[#allocation3 + $0x68] sm:$0xff] %vm3777, %v8555
  %8647 = vst.msk [vmem:[#allocation3 + $0x80] sm:$0xff] %vm3777, %v8557
  %8648 = vst.msk [vmem:[#allocation3 + $0x98] sm:$0xff] %vm3777, %v8559
  %8649 = vst.msk [vmem:[#allocation3 + $0xb0] sm:$0xff] %vm3777, %v8561
  %8650 = vst.msk [vmem:[#allocation3 + $0xc8] sm:$0xff] %vm3777, %v8563
  %8651 = vst.msk [vmem:[#allocation3 + $0xe0] sm:$0xff] %vm3777, %v8565
  %8652 = vst.msk [vmem:[#allocation3 + $0xf8] sm:$0xff] %vm3777, %v8567
  %8653 = vst.msk [vmem:[#allocation3 + $0x110] sm:$0xff] %vm3777, %v8569
  %8654 = vst.msk [vmem:[#allocation3 + $0x128] sm:$0xff] %vm3777, %v8571
  %8655 = vst.msk [vmem:[#allocation3 + $0x140] sm:$0xff] %vm3777, %v8573
  %8656 = vst.msk [vmem:[#allocation3 + $0x158] sm:$0xff] %vm3777, %v8575
  %8657 = vst.msk [vmem:[#allocation3 + $0x170] sm:$0xff] %vm3777, %v8577
  %8658 = vst.msk [vmem:[#allocation3 + $0x188] sm:$0xff] %vm3777, %v8579
  %8659 = vst.msk [vmem:[#allocation3 + $0x1a0] sm:$0xff] %vm3777, %v8581
  %8660 = vst.msk [vmem:[#allocation3 + $0x1b8] sm:$0xff] %vm3777, %v8583
  %8661 = vst.msk [vmem:[#allocation3 + $0x1d0] sm:$0xff] %vm3777, %v8585
  %8662 = vst.msk [vmem:[#allocation3 + $0x1e8] sm:$0xff] %vm3777, %v8587
  %8663 = vst.msk [vmem:[#allocation3 + $0x200] sm:$0xff] %vm3777, %v8589
  %8664 = vst.msk [vmem:[#allocation3 + $0x218] sm:$0xff] %vm3777, %v8591
  %8665 = vst.msk [vmem:[#allocation3 + $0x230] sm:$0xff] %vm3777, %v8593
  %8666 = vst.msk [vmem:[#allocation3 + $0x248] sm:$0xff] %vm3777, %v8595
  %8667 = vst.msk [vmem:[#allocation3 + $0x260] sm:$0xff] %vm3777, %v8597
  %8668 = vst.msk [vmem:[#allocation3 + $0x278] sm:$0xff] %vm3777, %v8599
  %8669 = vst.msk [vmem:[#allocation3 + $0x290] sm:$0xff] %vm3777, %v8601
  %8670 = vst.msk [vmem:[#allocation3 + $0x2a8] sm:$0xff] %vm3777, %v8603
  %8671 = vst.msk [vmem:[#allocation3 + $0x2c0] sm:$0xff] %vm3777, %v8605
  %8672 = vst.msk [vmem:[#allocation3 + $0x2d8] sm:$0xff] %vm3777, %v8607
  %8673 = vst.msk [vmem:[#allocation3 + $0x2f0] sm:$0xff] %vm3777, %v8609
  %v8674 = vsel %vm5378, %v7326, 0.0
  %v8675 = vsel %vm5379, %v7325, 0.0
  %v8676 = vsel %vm5380, %v7324, 0.0
  %v8677 = vsel %vm5381, %v7323, 0.0
  %v8678 = vsel %vm5382, %v7322, 0.0
  %v8679 = vsel %vm5383, %v7321, 0.0
  %v8680 = vsel %vm5384, %v7320, 0.0
  %v8681 = vsel %vm5385, %v7319, 0.0
  %v8682 = vsel %vm5386, %v7318, 0.0
  %v8683 = vsel %vm5387, %v7317, 0.0
  %v8684 = vsel %vm5388, %v7316, 0.0
  %v8685 = vsel %vm5389, %v7315, 0.0
  %v8686 = vsel %vm5390, %v7314, 0.0
  %v8687 = vsel %vm5391, %v7313, 0.0
  %v8688 = vsel %vm5392, %v7312, 0.0
  %v8689 = vsel %vm5393, %v7311, 0.0
  %v8690 = vsel %vm5394, %v7310, 0.0
  %v8691 = vsel %vm5395, %v7309, 0.0
  %v8692 = vsel %vm5396, %v7308, 0.0
  %v8693 = vsel %vm5397, %v7307, 0.0
  %v8694 = vsel %vm5398, %v7306, 0.0
  %v8695 = vsel %vm5399, %v7305, 0.0
  %v8696 = vsel %vm5400, %v7304, 0.0
  %v8697 = vsel %vm5401, %v7303, 0.0
  %v8698 = vsel %vm5402, %v7302, 0.0
  %v8699 = vsel %vm5403, %v7301, 0.0
  %v8700 = vsel %vm5404, %v7300, 0.0
  %v8701 = vsel %vm5405, %v7299, 0.0
  %v8702 = vsel %vm5406, %v7298, 0.0
  %v8703 = vsel %vm5407, %v7297, 0.0
  %v8704 = vsel %vm5408, %v7296, 0.0
  %v8705 = vsel %vm5409, %v7295, 0.0
  %v8706 = vsel %vm5410, %v7294, 0.0
  %v8707 = vsel %vm5411, %v7293, 0.0
  %v8708 = vsel %vm5412, %v7292, 0.0
  %v8709 = vsel %vm5413, %v7291, 0.0
  %v8710 = vsel %vm5414, %v7290, 0.0
  %v8711 = vsel %vm5415, %v7289, 0.0
  %v8712 = vsel %vm5416, %v7288, 0.0
  %v8713 = vsel %vm5417, %v7287, 0.0
  %v8714 = vsel %vm5418, %v7286, 0.0
  %v8715 = vsel %vm5419, %v7285, 0.0
  %v8716 = vsel %vm5420, %v7284, 0.0
  %v8717 = vsel %vm5421, %v7283, 0.0
  %v8718 = vsel %vm5422, %v7282, 0.0
  %v8719 = vsel %vm5423, %v7281, 0.0
  %v8720 = vsel %vm5424, %v7280, 0.0
  %v8721 = vsel %vm5425, %v7279, 0.0
  %v8722 = vsel %vm5426, %v7278, 0.0
  %v8723 = vsel %vm5427, %v7277, 0.0
  %v8724 = vsel %vm5428, %v7276, 0.0
  %v8725 = vsel %vm5429, %v7275, 0.0
  %v8726 = vsel %vm5430, %v7274, 0.0
  %v8727 = vsel %vm5431, %v7273, 0.0
  %v8728 = vsel %vm5432, %v7272, 0.0
  %v8729 = vsel %vm5433, %v7271, 0.0
  %v8730 = vsel %vm5434, %v7270, 0.0
  %v8731 = vsel %vm5435, %v7269, 0.0
  %v8732 = vsel %vm5436, %v7268, 0.0
  %v8733 = vsel %vm5437, %v7267, 0.0
  %v8734 = vsel %vm5438, %v7266, 0.0
  %v8735 = vsel %vm5439, %v7329, 0.0
  %v8736 = vsel %vm5440, %v7328, 0.0
  %v8737 = vsel %vm5441, %v7327, 0.0
  %v8738 = vpack.c.bf16 %v8675, %v8674
  %v8739 = vpack.c.bf16 %v8677, %v8676
  %v8740 = vpack.c.bf16 %v8679, %v8678
  %v8741 = vpack.c.bf16 %v8681, %v8680
  %v8742 = vpack.c.bf16 %v8683, %v8682
  %v8743 = vpack.c.bf16 %v8685, %v8684
  %v8744 = vpack.c.bf16 %v8687, %v8686
  %v8745 = vpack.c.bf16 %v8689, %v8688
  %v8746 = vpack.c.bf16 %v8691, %v8690
  %v8747 = vpack.c.bf16 %v8693, %v8692
  %v8748 = vpack.c.bf16 %v8695, %v8694
  %v8749 = vpack.c.bf16 %v8697, %v8696
  %v8750 = vpack.c.bf16 %v8699, %v8698
  %v8751 = vpack.c.bf16 %v8701, %v8700
  %v8752 = vpack.c.bf16 %v8703, %v8702
  %v8753 = vpack.c.bf16 %v8705, %v8704
  %v8754 = vpack.c.bf16 %v8707, %v8706
  %v8755 = vpack.c.bf16 %v8709, %v8708
  %v8756 = vpack.c.bf16 %v8711, %v8710
  %v8757 = vpack.c.bf16 %v8713, %v8712
  %v8758 = vpack.c.bf16 %v8715, %v8714
  %v8759 = vpack.c.bf16 %v8717, %v8716
  %v8760 = vpack.c.bf16 %v8719, %v8718
  %v8761 = vpack.c.bf16 %v8721, %v8720
  %v8762 = vpack.c.bf16 %v8723, %v8722
  %v8763 = vpack.c.bf16 %v8725, %v8724
  %v8764 = vpack.c.bf16 %v8727, %v8726
  %v8765 = vpack.c.bf16 %v8729, %v8728
  %v8766 = vpack.c.bf16 %v8731, %v8730
  %v8767 = vpack.c.bf16 %v8733, %v8732
  %v8768 = vpack.c.bf16 %v8735, %v8734
  %v8769 = vpack.c.bf16 %v8737, %v8736
  %8770 = vst.msk [vmem:[#allocation3 + $0x10] sm:$0xff] %vm2429, %v8738
  %8771 = vst.msk [vmem:[#allocation3 + $0x28] sm:$0xff] %vm2429, %v8739
  %8772 = vst.msk [vmem:[#allocation3 + $0x40] sm:$0xff] %vm2429, %v8740
  %8773 = vst.msk [vmem:[#allocation3 + $0x58] sm:$0xff] %vm2429, %v8741
  %8774 = vst.msk [vmem:[#allocation3 + $0x70] sm:$0xff] %vm2429, %v8742
  %8775 = vst.msk [vmem:[#allocation3 + $0x88] sm:$0xff] %vm2429, %v8743
  %8776 = vst.msk [vmem:[#allocation3 + $0xa0] sm:$0xff] %vm2429, %v8744
  %8777 = vst.msk [vmem:[#allocation3 + $0xb8] sm:$0xff] %vm2429, %v8745
  %8778 = vst.msk [vmem:[#allocation3 + $0xd0] sm:$0xff] %vm2429, %v8746
  %8779 = vst.msk [vmem:[#allocation3 + $0xe8] sm:$0xff] %vm2429, %v8747
  %8780 = vst.msk [vmem:[#allocation3 + $0x100] sm:$0xff] %vm2429, %v8748
  %8781 = vst.msk [vmem:[#allocation3 + $0x118] sm:$0xff] %vm2429, %v8749
  %8782 = vst.msk [vmem:[#allocation3 + $0x130] sm:$0xff] %vm2429, %v8750
  %8783 = vst.msk [vmem:[#allocation3 + $0x148] sm:$0xff] %vm2429, %v8751
  %8784 = vst.msk [vmem:[#allocation3 + $0x160] sm:$0xff] %vm2429, %v8752
  %8785 = vst.msk [vmem:[#allocation3 + $0x178] sm:$0xff] %vm2429, %v8753
  %8786 = vst.msk [vmem:[#allocation3 + $0x190] sm:$0xff] %vm2429, %v8754
  %8787 = vst.msk [vmem:[#allocation3 + $0x1a8] sm:$0xff] %vm2429, %v8755
  %8788 = vst.msk [vmem:[#allocation3 + $0x1c0] sm:$0xff] %vm2429, %v8756
  %8789 = vst.msk [vmem:[#allocation3 + $0x1d8] sm:$0xff] %vm2429, %v8757
  %8790 = vst.msk [vmem:[#allocation3 + $0x1f0] sm:$0xff] %vm2429, %v8758
  %8791 = vst.msk [vmem:[#allocation3 + $0x208] sm:$0xff] %vm2429, %v8759
  %8792 = vst.msk [vmem:[#allocation3 + $0x220] sm:$0xff] %vm2429, %v8760
  %8793 = vst.msk [vmem:[#allocation3 + $0x238] sm:$0xff] %vm2429, %v8761
  %8794 = vst.msk [vmem:[#allocation3 + $0x250] sm:$0xff] %vm2429, %v8762
  %8795 = vst.msk [vmem:[#allocation3 + $0x268] sm:$0xff] %vm2429, %v8763
  %8796 = vst.msk [vmem:[#allocation3 + $0x280] sm:$0xff] %vm2429, %v8764
  %8797 = vst.msk [vmem:[#allocation3 + $0x298] sm:$0xff] %vm2429, %v8765
  %8798 = vst.msk [vmem:[#allocation3 + $0x2b0] sm:$0xff] %vm2429, %v8766
  %8799 = vst.msk [vmem:[#allocation3 + $0x2c8] sm:$0xff] %vm2429, %v8767
  %8800 = vst.msk [vmem:[#allocation3 + $0x2e0] sm:$0xff] %vm2429, %v8768
  %8801 = vst.msk [vmem:[#allocation3 + $0x2f8] sm:$0xff] %vm2429, %v8769
  %v8802 = vld [vmem:[#allocation3] sm:$0xff]
  %v8803 = vld [vmem:[#allocation3 + $0x8] sm:$0xff]
  %v8804 = vld [vmem:[#allocation3 + $0x10] sm:$0xff]
  %v8805 = vld [vmem:[#allocation3 + $0x18] sm:$0xff]
  %v8806 = vld [vmem:[#allocation3 + $0x20] sm:$0xff]
  %v8807 = vld [vmem:[#allocation3 + $0x28] sm:$0xff]
  %v8808 = vld [vmem:[#allocation3 + $0x30] sm:$0xff]
  %v8809 = vld [vmem:[#allocation3 + $0x38] sm:$0xff]
  %v8810 = vld [vmem:[#allocation3 + $0x40] sm:$0xff]
  %v8811 = vld [vmem:[#allocation3 + $0x48] sm:$0xff]
  %v8812 = vld [vmem:[#allocation3 + $0x50] sm:$0xff]
  %v8813 = vld [vmem:[#allocation3 + $0x58] sm:$0xff]
  %v8814 = vld [vmem:[#allocation3 + $0x60] sm:$0xff]
  %v8815 = vld [vmem:[#allocation3 + $0x68] sm:$0xff]
  %v8816 = vld [vmem:[#allocation3 + $0x70] sm:$0xff]
  %v8817 = vld [vmem:[#allocation3 + $0x78] sm:$0xff]
  %v8818 = vld [vmem:[#allocation3 + $0x80] sm:$0xff]
  %v8819 = vld [vmem:[#allocation3 + $0x88] sm:$0xff]
  %v8820 = vld [vmem:[#allocation3 + $0x90] sm:$0xff]
  %v8821 = vld [vmem:[#allocation3 + $0x98] sm:$0xff]
  %v8822 = vld [vmem:[#allocation3 + $0xa0] sm:$0xff]
  %v8823 = vld [vmem:[#allocation3 + $0xa8] sm:$0xff]
  %v8824 = vld [vmem:[#allocation3 + $0xb0] sm:$0xff]
  %v8825 = vld [vmem:[#allocation3 + $0xb8] sm:$0xff]
  %v8826 = vld [vmem:[#allocation3 + $0xc0] sm:$0xff]
  %v8827 = vld [vmem:[#allocation3 + $0xc8] sm:$0xff]
  %v8828 = vld [vmem:[#allocation3 + $0xd0] sm:$0xff]
  %v8829 = vld [vmem:[#allocation3 + $0xd8] sm:$0xff]
  %v8830 = vld [vmem:[#allocation3 + $0xe0] sm:$0xff]
  %v8831 = vld [vmem:[#allocation3 + $0xe8] sm:$0xff]
  %v8832 = vld [vmem:[#allocation3 + $0xf0] sm:$0xff]
  %v8833 = vld [vmem:[#allocation3 + $0xf8] sm:$0xff]
  %v8834 = vld [vmem:[#allocation3 + $0x100] sm:$0xff]
  %v8835 = vld [vmem:[#allocation3 + $0x108] sm:$0xff]
  %v8836 = vld [vmem:[#allocation3 + $0x110] sm:$0xff]
  %v8837 = vld [vmem:[#allocation3 + $0x118] sm:$0xff]
  %v8838 = vld [vmem:[#allocation3 + $0x120] sm:$0xff]
  %v8839 = vld [vmem:[#allocation3 + $0x128] sm:$0xff]
  %v8840 = vld [vmem:[#allocation3 + $0x130] sm:$0xff]
  %v8841 = vld [vmem:[#allocation3 + $0x138] sm:$0xff]
  %v8842 = vld [vmem:[#allocation3 + $0x140] sm:$0xff]
  %v8843 = vld [vmem:[#allocation3 + $0x148] sm:$0xff]
  %v8844 = vld [vmem:[#allocation3 + $0x150] sm:$0xff]
  %v8845 = vld [vmem:[#allocation3 + $0x158] sm:$0xff]
  %v8846 = vld [vmem:[#allocation3 + $0x160] sm:$0xff]
  %v8847 = vld [vmem:[#allocation3 + $0x168] sm:$0xff]
  %v8848 = vld [vmem:[#allocation3 + $0x170] sm:$0xff]
  %v8849 = vld [vmem:[#allocation3 + $0x178] sm:$0xff]
  %v8850 = vld [vmem:[#allocation3 + $0x180] sm:$0xff]
  %v8851 = vld [vmem:[#allocation3 + $0x188] sm:$0xff]
  %v8852 = vld [vmem:[#allocation3 + $0x190] sm:$0xff]
  %v8853 = vld [vmem:[#allocation3 + $0x198] sm:$0xff]
  %v8854 = vld [vmem:[#allocation3 + $0x1a0] sm:$0xff]
  %v8855 = vld [vmem:[#allocation3 + $0x1a8] sm:$0xff]
  %v8856 = vld [vmem:[#allocation3 + $0x1b0] sm:$0xff]
  %v8857 = vld [vmem:[#allocation3 + $0x1b8] sm:$0xff]
  %v8858 = vld [vmem:[#allocation3 + $0x1c0] sm:$0xff]
  %v8859 = vld [vmem:[#allocation3 + $0x1c8] sm:$0xff]
  %v8860 = vld [vmem:[#allocation3 + $0x1d0] sm:$0xff]
  %v8861 = vld [vmem:[#allocation3 + $0x1d8] sm:$0xff]
  %v8862 = vld [vmem:[#allocation3 + $0x1e0] sm:$0xff]
  %v8863 = vld [vmem:[#allocation3 + $0x1e8] sm:$0xff]
  %v8864 = vld [vmem:[#allocation3 + $0x1f0] sm:$0xff]
  %v8865 = vld [vmem:[#allocation3 + $0x1f8] sm:$0xff]
  %v8866 = vld [vmem:[#allocation3 + $0x200] sm:$0xff]
  %v8867 = vld [vmem:[#allocation3 + $0x208] sm:$0xff]
  %v8868 = vld [vmem:[#allocation3 + $0x210] sm:$0xff]
  %v8869 = vld [vmem:[#allocation3 + $0x218] sm:$0xff]
  %v8870 = vld [vmem:[#allocation3 + $0x220] sm:$0xff]
  %v8871 = vld [vmem:[#allocation3 + $0x228] sm:$0xff]
  %v8872 = vld [vmem:[#allocation3 + $0x230] sm:$0xff]
  %v8873 = vld [vmem:[#allocation3 + $0x238] sm:$0xff]
  %v8874 = vld [vmem:[#allocation3 + $0x240] sm:$0xff]
  %v8875 = vld [vmem:[#allocation3 + $0x248] sm:$0xff]
  %v8876 = vld [vmem:[#allocation3 + $0x250] sm:$0xff]
  %v8877 = vld [vmem:[#allocation3 + $0x258] sm:$0xff]
  %v8878 = vld [vmem:[#allocation3 + $0x260] sm:$0xff]
  %v8879 = vld [vmem:[#allocation3 + $0x268] sm:$0xff]
  %v8880 = vld [vmem:[#allocation3 + $0x270] sm:$0xff]
  %v8881 = vld [vmem:[#allocation3 + $0x278] sm:$0xff]
  %v8882 = vld [vmem:[#allocation3 + $0x280] sm:$0xff]
  %v8883 = vld [vmem:[#allocation3 + $0x288] sm:$0xff]
  %v8884 = vld [vmem:[#allocation3 + $0x290] sm:$0xff]
  %v8885 = vld [vmem:[#allocation3 + $0x298] sm:$0xff]
  %v8886 = vld [vmem:[#allocation3 + $0x2a0] sm:$0xff]
  %v8887 = vld [vmem:[#allocation3 + $0x2a8] sm:$0xff]
  %v8888 = vld [vmem:[#allocation3 + $0x2b0] sm:$0xff]
  %v8889 = vld [vmem:[#allocation3 + $0x2b8] sm:$0xff]
  %v8890 = vld [vmem:[#allocation3 + $0x2c0] sm:$0xff]
  %v8891 = vld [vmem:[#allocation3 + $0x2c8] sm:$0xff]
  %v8892 = vld [vmem:[#allocation3 + $0x2d0] sm:$0xff]
  %v8893 = vld [vmem:[#allocation3 + $0x2d8] sm:$0xff]
  %v8894 = vld [vmem:[#allocation3 + $0x2e0] sm:$0xff]
  %v8895 = vld [vmem:[#allocation3 + $0x2e8] sm:$0xff]
  %v8896 = vld [vmem:[#allocation3 + $0x2f0] sm:$0xff]
  %v8897 = vld [vmem:[#allocation3 + $0x2f8] sm:$0xff]
  %v8898 = vld [vmem:[%s4] sm:$0xf]
  %v8899 = vld [vmem:[%s4 + $0x4] sm:$0xf]
  %v8900 = vld [vmem:[%s4 + $0x8] sm:$0xf]
  %v8901 = vld [vmem:[%s4 + $0xc] sm:$0xf]
  %v8902 = vld [vmem:[%s4 + $0x10] sm:$0xf]
  %v8903 = vld [vmem:[%s4 + $0x14] sm:$0xf]
  %v8904 = vld [vmem:[%s4 + $0x18] sm:$0xf]
  %v8905 = vld [vmem:[%s4 + $0x1c] sm:$0xf]
  %v8906 = vld [vmem:[%s4 + $0x20] sm:$0xf]
  %v8907 = vld [vmem:[%s4 + $0x24] sm:$0xf]
  %v8908 = vld [vmem:[%s4 + $0x28] sm:$0xf]
  %v8909 = vld [vmem:[%s4 + $0x2c] sm:$0xf]
  %v8910 = vld [vmem:[%s4 + $0x30] sm:$0xf]
  %v8911 = vld [vmem:[%s4 + $0x34] sm:$0xf]
  %v8912 = vld [vmem:[%s4 + $0x38] sm:$0xf]
  %v8913 = vld [vmem:[%s4 + $0x3c] sm:$0xf]
  %v8914 = vld [vmem:[%s4 + $0x40] sm:$0xf]
  %v8915 = vld [vmem:[%s4 + $0x44] sm:$0xf]
  %v8916 = vld [vmem:[%s4 + $0x48] sm:$0xf]
  %v8917 = vld [vmem:[%s4 + $0x4c] sm:$0xf]
  %v8918 = vld [vmem:[%s4 + $0x50] sm:$0xf]
  %v8919 = vld [vmem:[%s4 + $0x54] sm:$0xf]
  %v8920 = vld [vmem:[%s4 + $0x58] sm:$0xf]
  %v8921 = vld [vmem:[%s4 + $0x5c] sm:$0xf]
  %v8922 = vld [vmem:[%s4 + $0x60] sm:$0xf]
  %v8923 = vld [vmem:[%s4 + $0x64] sm:$0xf]
  %v8924 = vld [vmem:[%s4 + $0x68] sm:$0xf]
  %v8925 = vld [vmem:[%s4 + $0x6c] sm:$0xf]
  %v8926 = vld [vmem:[%s4 + $0x70] sm:$0xf]
  %v8927 = vld [vmem:[%s4 + $0x74] sm:$0xf]
  %v8928 = vld [vmem:[%s4 + $0x78] sm:$0xf]
  %v8929 = vld [vmem:[%s4 + $0x7c] sm:$0xf]
  %v8930 = vld [vmem:[%s4 + $0x80] sm:$0xf]
  %v8931 = vld [vmem:[%s4 + $0x84] sm:$0xf]
  %v8932 = vld [vmem:[%s4 + $0x88] sm:$0xf]
  %v8933 = vld [vmem:[%s4 + $0x8c] sm:$0xf]
  %v8970 = vunpack.c.l.b16 %v8898
  %v8971 = vunpack.c.l.b16 %v8899
  %v8972 = vunpack.c.l.b16 %v8900
  %v8973 = vunpack.c.l.b16 %v8901
  %v8974 = vunpack.c.l.b16 %v8902
  %v8975 = vunpack.c.l.b16 %v8903
  %v8976 = vunpack.c.l.b16 %v8904
  %v8977 = vunpack.c.l.b16 %v8905
  %v8978 = vunpack.c.l.b16 %v8906
  %v8979 = vunpack.c.l.b16 %v8907
  %v8980 = vunpack.c.l.b16 %v8908
  %v8981 = vunpack.c.l.b16 %v8909
  %v8982 = vunpack.c.l.b16 %v8910
  %v8983 = vunpack.c.l.b16 %v8911
  %v8984 = vunpack.c.l.b16 %v8912
  %v8985 = vunpack.c.l.b16 %v8913
  %v8986 = vunpack.c.l.b16 %v8914
  %v8987 = vunpack.c.l.b16 %v8915
  %v8988 = vunpack.c.l.b16 %v8916
  %v8989 = vunpack.c.l.b16 %v8917
  %v8990 = vunpack.c.l.b16 %v8918
  %v8991 = vunpack.c.l.b16 %v8919
  %v8992 = vunpack.c.l.b16 %v8920
  %v8993 = vunpack.c.l.b16 %v8921
  %v8994 = vunpack.c.l.b16 %v8922
  %v8995 = vunpack.c.l.b16 %v8923
  %v8996 = vunpack.c.l.b16 %v8924
  %v8997 = vunpack.c.l.b16 %v8925
  %v8998 = vunpack.c.l.b16 %v8926
  %v8999 = vunpack.c.l.b16 %v8927
  %v9000 = vunpack.c.l.b16 %v8928
  %v9001 = vunpack.c.l.b16 %v8929
  %v9002 = vunpack.c.l.b16 %v8930
  %v9003 = vunpack.c.l.b16 %v8931
  %v9004 = vunpack.c.l.b16 %v8932
  %v9005 = vunpack.c.l.b16 %v8933
  %v9006 = vpack.c.b16 %v8971, %v8970
  %v9007 = vpack.c.b16 %v8973, %v8972
  %v9008 = vpack.c.b16 %v8975, %v8974
  %v9009 = vpack.c.b16 %v8977, %v8976
  %v9010 = vpack.c.b16 %v8979, %v8978
  %v9011 = vpack.c.b16 %v8981, %v8980
  %v9012 = vpack.c.b16 %v8983, %v8982
  %v9013 = vpack.c.b16 %v8985, %v8984
  %v9014 = vpack.c.b16 %v8987, %v8986
  %v9015 = vpack.c.b16 %v8989, %v8988
  %v9016 = vpack.c.b16 %v8991, %v8990
  %v9017 = vpack.c.b16 %v8993, %v8992
  %v9018 = vpack.c.b16 %v8995, %v8994
  %v9019 = vpack.c.b16 %v8997, %v8996
  %v9020 = vpack.c.b16 %v8999, %v8998
  %v9021 = vpack.c.b16 %v9001, %v9000
  %v9022 = vpack.c.b16 %v9003, %v9002
  %v9023 = vpack.c.b16 %v9005, %v9004
  %v9043 = vsel %vm2429, %v8804, 0
  %v9046 = vsel %vm2429, %v8807, 0
  %v9049 = vsel %vm2429, %v8810, 0
  %v9052 = vsel %vm2429, %v8813, 0
  %v9055 = vsel %vm2429, %v8816, 0
  %v9058 = vsel %vm2429, %v8819, 0
  %v9061 = vsel %vm2429, %v8822, 0
  %v9064 = vsel %vm2429, %v8825, 0
  %v9067 = vsel %vm2429, %v8828, 0
  %v9070 = vsel %vm2429, %v8831, 0
  %v9073 = vsel %vm2429, %v8834, 0
  %v9076 = vsel %vm2429, %v8837, 0
  %v9079 = vsel %vm2429, %v8840, 0
  %v9082 = vsel %vm2429, %v8843, 0
  %v9085 = vsel %vm2429, %v8846, 0
  %v9088 = vsel %vm2429, %v8849, 0
  %v9091 = vsel %vm2429, %v8852, 0
  %v9094 = vsel %vm2429, %v8855, 0
  %v9097 = vsel %vm2429, %v8858, 0
  %v9100 = vsel %vm2429, %v8861, 0
  %v9103 = vsel %vm2429, %v8864, 0
  %v9106 = vsel %vm2429, %v8867, 0
  %v9109 = vsel %vm2429, %v8870, 0
  %v9112 = vsel %vm2429, %v8873, 0
  %v9115 = vsel %vm2429, %v8876, 0
  %v9118 = vsel %vm2429, %v8879, 0
  %v9121 = vsel %vm2429, %v8882, 0
  %v9124 = vsel %vm2429, %v8885, 0
  %v9127 = vsel %vm2429, %v8888, 0
  %v9130 = vsel %vm2429, %v8891, 0
  %v9133 = vsel %vm2429, %v8894, 0
  %v9136 = vsel %vm2429, %v8897, 0
  %9138 = vmatprep.subr.bf16.mxu0 0
  %9139 = vmatpush1.bf16.msra.mxu0 %v9006
  %9140 = vmatprep.subr.bf16.mxu0 0
  %9141 = vmatpush1.bf16.msra.mxu0 %v9007
  %9142 = vmatprep.subr.bf16.mxu0 0
  %9143 = vmatpush1.bf16.msra.mxu0 %v9008
  %9144 = vmatprep.subr.bf16.mxu0 0
  %9145 = vmatpush1.bf16.msra.mxu0 %v9009
  %9146 = vmatprep.subr.bf16.mxu0 0
  %9147 = vmatpush1.bf16.msra.mxu0 %v9010
  %9148 = vmatprep.subr.bf16.mxu0 0
  %9149 = vmatpush1.bf16.msra.mxu0 %v9011
  %9150 = vmatprep.subr.bf16.mxu0 0
  %9151 = vmatpush1.bf16.msra.mxu0 %v9012
  %9152 = vmatprep.subr.bf16.mxu0 0
  %9153 = vmatpush1.bf16.msra.mxu0 %v9013
  %9154 = vmatprep.subr.bf16.mxu0 0
  %9155 = vmatpush1.bf16.msra.mxu0 %v9014
  %9156 = vmatprep.subr.bf16.mxu0 0
  %9157 = vmatpush1.bf16.msra.mxu0 %v9015
  %9158 = vmatprep.subr.bf16.mxu0 0
  %9159 = vmatpush1.bf16.msra.mxu0 %v9016
  %9160 = vmatprep.subr.bf16.mxu0 0
  %9161 = vmatpush1.bf16.msra.mxu0 %v9017
  %9162 = vmatprep.subr.bf16.mxu0 0
  %9163 = vmatpush1.bf16.msra.mxu0 %v9018
  %9164 = vmatprep.subr.bf16.mxu0 0
  %9165 = vmatpush1.bf16.msra.mxu0 %v9019
  %9166 = vmatprep.subr.bf16.mxu0 0
  %9167 = vmatpush1.bf16.msra.mxu0 %v9020
  %9168 = vmatprep.subr.bf16.mxu0 0
  %9169 = vmatpush1.bf16.msra.mxu0 %v9021
  %9170 = vmatprep.mubr.bf16.mxu0 %v8803
  %9171 = vmatmul.mubr.bf16.gmra.mrb[0].mxu0 %v8802
  %v9172 = vpop.f32.mrb[0].mxu0
  %v9173 = vadd.f32 0.0, %v9172
  %v9174 = vpop.f32.mrb[0].mxu0
  %v9175 = vpop.f32.mrb[0].mxu0
  %v9176 = vadd.f32 0.0, %v9175
  %v9177 = vpop.f32.mrb[0].mxu0
  %9178 = vmatprep.mubr.bf16.mxu0 %v8806
  %9179 = vmatmul.mubr.bf16.gmra.mrb[0].mxu0 %v8805
  %v9180 = vpop.f32.mrb[0].mxu0
  %v9181 = vadd.f32 0.0, %v9180
  %v9182 = vpop.f32.mrb[0].mxu0
  %v9183 = vpop.f32.mrb[0].mxu0
  %v9184 = vadd.f32 0.0, %v9183
  %v9185 = vpop.f32.mrb[0].mxu0
  %9186 = vmatprep.mubr.bf16.mxu0 %v8809
  %9187 = vmatmul.mubr.bf16.gmra.mrb[0].mxu0 %v8808
  %v9188 = vpop.f32.mrb[0].mxu0
  %v9189 = vadd.f32 0.0, %v9188
  %v9190 = vpop.f32.mrb[0].mxu0
  %v9191 = vpop.f32.mrb[0].mxu0
  %v9192 = vadd.f32 0.0, %v9191
  %v9193 = vpop.f32.mrb[0].mxu0
  %9194 = vmatprep.mubr.bf16.mxu0 %v8812
  %9195 = vmatmul.mubr.bf16.gmra.mrb[0].mxu0 %v8811
  %v9196 = vpop.f32.mrb[0].mxu0
  %v9197 = vadd.f32 0.0, %v9196
  %v9198 = vpop.f32.mrb[0].mxu0
  %v9199 = vpop.f32.mrb[0].mxu0
  %v9200 = vadd.f32 0.0, %v9199
  %v9201 = vpop.f32.mrb[0].mxu0
  %9202 = vmatprep.mubr.bf16.mxu0 %v8815
  %9203 = vmatmul.mubr.bf16.gmra.mrb[0].mxu0 %v8814
  %v9204 = vpop.f32.mrb[0].mxu0
  %v9205 = vadd.f32 0.0, %v9204
  %v9206 = vpop.f32.mrb[0].mxu0
  %v9207 = vpop.f32.mrb[0].mxu0
  %v9208 = vadd.f32 0.0, %v9207
  %v9209 = vpop.f32.mrb[0].mxu0
  %9210 = vmatprep.mubr.bf16.mxu0 %v8818
  %9211 = vmatmul.mubr.bf16.gmra.mrb[0].mxu0 %v8817
  %v9212 = vpop.f32.mrb[0].mxu0
  %v9213 = vadd.f32 0.0, %v9212
  %v9214 = vpop.f32.mrb[0].mxu0
  %v9215 = vpop.f32.mrb[0].mxu0
  %v9216 = vadd.f32 0.0, %v9215
  %v9217 = vpop.f32.mrb[0].mxu0
  %9218 = vmatprep.mubr.bf16.mxu0 %v8821
  %9219 = vmatmul.mubr.bf16.gmra.mrb[0].mxu0 %v8820
  %v9220 = vpop.f32.mrb[0].mxu0
  %v9221 = vadd.f32 0.0, %v9220
  %v9222 = vpop.f32.mrb[0].mxu0
  %v9223 = vpop.f32.mrb[0].mxu0
  %v9224 = vadd.f32 0.0, %v9223
  %v9225 = vpop.f32.mrb[0].mxu0
  %9226 = vmatprep.mubr.bf16.mxu0 %v8824
  %9227 = vmatmul.mubr.bf16.gmra.mrb[0].mxu0 %v8823
  %v9228 = vpop.f32.mrb[0].mxu0
  %v9229 = vadd.f32 0.0, %v9228
  %v9230 = vpop.f32.mrb[0].mxu0
  %v9231 = vpop.f32.mrb[0].mxu0
  %v9232 = vadd.f32 0.0, %v9231
  %v9233 = vpop.f32.mrb[0].mxu0
  %9234 = vmatprep.mubr.bf16.mxu0 %v8827
  %9235 = vmatmul.mubr.bf16.gmra.mrb[0].mxu0 %v8826
  %v9236 = vpop.f32.mrb[0].mxu0
  %v9237 = vadd.f32 0.0, %v9236
  %v9238 = vpop.f32.mrb[0].mxu0
  %v9239 = vpop.f32.mrb[0].mxu0
  %v9240 = vadd.f32 0.0, %v9239
  %v9241 = vpop.f32.mrb[0].mxu0
  %9242 = vmatprep.mubr.bf16.mxu0 %v8830
  %9243 = vmatmul.mubr.bf16.gmra.mrb[0].mxu0 %v8829
  %v9244 = vpop.f32.mrb[0].mxu0
  %v9245 = vadd.f32 0.0, %v9244
  %v9246 = vpop.f32.mrb[0].mxu0
  %v9247 = vpop.f32.mrb[0].mxu0
  %v9248 = vadd.f32 0.0, %v9247
  %v9249 = vpop.f32.mrb[0].mxu0
  %9250 = vmatprep.mubr.bf16.mxu0 %v8833
  %9251 = vmatmul.mubr.bf16.gmra.mrb[0].mxu0 %v8832
  %v9252 = vpop.f32.mrb[0].mxu0
  %v9253 = vadd.f32 0.0, %v9252
  %v9254 = vpop.f32.mrb[0].mxu0
  %v9255 = vpop.f32.mrb[0].mxu0
  %v9256 = vadd.f32 0.0, %v9255
  %v9257 = vpop.f32.mrb[0].mxu0
  %9258 = vmatprep.mubr.bf16.mxu0 %v8836
  %9259 = vmatmul.mubr.bf16.gmra.mrb[0].mxu0 %v8835
  %v9260 = vpop.f32.mrb[0].mxu0
  %v9261 = vadd.f32 0.0, %v9260
  %v9262 = vpop.f32.mrb[0].mxu0
  %v9263 = vpop.f32.mrb[0].mxu0
  %v9264 = vadd.f32 0.0, %v9263
  %v9265 = vpop.f32.mrb[0].mxu0
  %9266 = vmatprep.mubr.bf16.mxu0 %v8839
  %9267 = vmatmul.mubr.bf16.gmra.mrb[0].mxu0 %v8838
  %v9268 = vpop.f32.mrb[0].mxu0
  %v9269 = vadd.f32 0.0, %v9268
  %v9270 = vpop.f32.mrb[0].mxu0
  %v9271 = vpop.f32.mrb[0].mxu0
  %v9272 = vadd.f32 0.0, %v9271
  %v9273 = vpop.f32.mrb[0].mxu0
  %9274 = vmatprep.mubr.bf16.mxu0 %v8842
  %9275 = vmatmul.mubr.bf16.gmra.mrb[0].mxu0 %v8841
  %v9276 = vpop.f32.mrb[0].mxu0
  %v9277 = vadd.f32 0.0, %v9276
  %v9278 = vpop.f32.mrb[0].mxu0
  %v9279 = vpop.f32.mrb[0].mxu0
  %v9280 = vadd.f32 0.0, %v9279
  %v9281 = vpop.f32.mrb[0].mxu0
  %9282 = vmatprep.mubr.bf16.mxu0 %v8845
  %9283 = vmatmul.mubr.bf16.gmra.mrb[0].mxu0 %v8844
  %v9284 = vpop.f32.mrb[0].mxu0
  %v9285 = vadd.f32 0.0, %v9284
  %v9286 = vpop.f32.mrb[0].mxu0
  %v9287 = vpop.f32.mrb[0].mxu0
  %v9288 = vadd.f32 0.0, %v9287
  %v9289 = vpop.f32.mrb[0].mxu0
  %9290 = vmatprep.mubr.bf16.mxu0 %v8848
  %9291 = vmatmul.mubr.bf16.gmra.mrb[0].mxu0 %v8847
  %v9292 = vpop.f32.mrb[0].mxu0
  %v9293 = vadd.f32 0.0, %v9292
  %v9294 = vpop.f32.mrb[0].mxu0
  %v9295 = vpop.f32.mrb[0].mxu0
  %v9296 = vadd.f32 0.0, %v9295
  %v9297 = vpop.f32.mrb[0].mxu0
  %9298 = vmatprep.mubr.bf16.mxu0 %v8851
  %9299 = vmatmul.mubr.bf16.gmra.mrb[0].mxu0 %v8850
  %v9300 = vpop.f32.mrb[0].mxu0
  %v9301 = vadd.f32 0.0, %v9300
  %v9302 = vpop.f32.mrb[0].mxu0
  %v9303 = vpop.f32.mrb[0].mxu0
  %v9304 = vadd.f32 0.0, %v9303
  %v9305 = vpop.f32.mrb[0].mxu0
  %9306 = vmatprep.mubr.bf16.mxu0 %v8854
  %9307 = vmatmul.mubr.bf16.gmra.mrb[0].mxu0 %v8853
  %v9308 = vpop.f32.mrb[0].mxu0
  %v9309 = vadd.f32 0.0, %v9308
  %v9310 = vpop.f32.mrb[0].mxu0
  %v9311 = vpop.f32.mrb[0].mxu0
  %v9312 = vadd.f32 0.0, %v9311
  %v9313 = vpop.f32.mrb[0].mxu0
  %9314 = vmatprep.mubr.bf16.mxu0 %v8857
  %9315 = vmatmul.mubr.bf16.gmra.mrb[0].mxu0 %v8856
  %v9316 = vpop.f32.mrb[0].mxu0
  %v9317 = vadd.f32 0.0, %v9316
  %v9318 = vpop.f32.mrb[0].mxu0
  %v9319 = vpop.f32.mrb[0].mxu0
  %v9320 = vadd.f32 0.0, %v9319
  %v9321 = vpop.f32.mrb[0].mxu0
  %9322 = vmatprep.mubr.bf16.mxu0 %v8860
  %9323 = vmatmul.mubr.bf16.gmra.mrb[0].mxu0 %v8859
  %v9324 = vpop.f32.mrb[0].mxu0
  %v9325 = vadd.f32 0.0, %v9324
  %v9326 = vpop.f32.mrb[0].mxu0
  %v9327 = vpop.f32.mrb[0].mxu0
  %v9328 = vadd.f32 0.0, %v9327
  %v9329 = vpop.f32.mrb[0].mxu0
  %9330 = vmatprep.mubr.bf16.mxu0 %v8863
  %9331 = vmatmul.mubr.bf16.gmra.mrb[0].mxu0 %v8862
  %v9332 = vpop.f32.mrb[0].mxu0
  %v9333 = vadd.f32 0.0, %v9332
  %v9334 = vpop.f32.mrb[0].mxu0
  %v9335 = vpop.f32.mrb[0].mxu0
  %v9336 = vadd.f32 0.0, %v9335
  %v9337 = vpop.f32.mrb[0].mxu0
  %9338 = vmatprep.mubr.bf16.mxu0 %v8866
  %9339 = vmatmul.mubr.bf16.gmra.mrb[0].mxu0 %v8865
  %v9340 = vpop.f32.mrb[0].mxu0
  %v9341 = vadd.f32 0.0, %v9340
  %v9342 = vpop.f32.mrb[0].mxu0
  %v9343 = vpop.f32.mrb[0].mxu0
  %v9344 = vadd.f32 0.0, %v9343
  %v9345 = vpop.f32.mrb[0].mxu0
  %9346 = vmatprep.mubr.bf16.mxu0 %v8869
  %9347 = vmatmul.mubr.bf16.gmra.mrb[0].mxu0 %v8868
  %v9348 = vpop.f32.mrb[0].mxu0
  %v9349 = vadd.f32 0.0, %v9348
  %v9350 = vpop.f32.mrb[0].mxu0
  %v9351 = vpop.f32.mrb[0].mxu0
  %v9352 = vadd.f32 0.0, %v9351
  %v9353 = vpop.f32.mrb[0].mxu0
  %9354 = vmatprep.mubr.bf16.mxu0 %v8872
  %9355 = vmatmul.mubr.bf16.gmra.mrb[0].mxu0 %v8871
  %v9356 = vpop.f32.mrb[0].mxu0
  %v9357 = vadd.f32 0.0, %v9356
  %v9358 = vpop.f32.mrb[0].mxu0
  %v9359 = vpop.f32.mrb[0].mxu0
  %v9360 = vadd.f32 0.0, %v9359
  %v9361 = vpop.f32.mrb[0].mxu0
  %9362 = vmatprep.mubr.bf16.mxu0 %v8875
  %9363 = vmatmul.mubr.bf16.gmra.mrb[0].mxu0 %v8874
  %v9364 = vpop.f32.mrb[0].mxu0
  %v9365 = vadd.f32 0.0, %v9364
  %v9366 = vpop.f32.mrb[0].mxu0
  %v9367 = vpop.f32.mrb[0].mxu0
  %v9368 = vadd.f32 0.0, %v9367
  %v9369 = vpop.f32.mrb[0].mxu0
  %9370 = vmatprep.mubr.bf16.mxu0 %v8878
  %9371 = vmatmul.mubr.bf16.gmra.mrb[0].mxu0 %v8877
  %v9372 = vpop.f32.mrb[0].mxu0
  %v9373 = vadd.f32 0.0, %v9372
  %v9374 = vpop.f32.mrb[0].mxu0
  %v9375 = vpop.f32.mrb[0].mxu0
  %v9376 = vadd.f32 0.0, %v9375
  %v9377 = vpop.f32.mrb[0].mxu0
  %9378 = vmatprep.mubr.bf16.mxu0 %v8881
  %9379 = vmatmul.mubr.bf16.gmra.mrb[0].mxu0 %v8880
  %v9380 = vpop.f32.mrb[0].mxu0
  %v9381 = vadd.f32 0.0, %v9380
  %v9382 = vpop.f32.mrb[0].mxu0
  %v9383 = vpop.f32.mrb[0].mxu0
  %v9384 = vadd.f32 0.0, %v9383
  %v9385 = vpop.f32.mrb[0].mxu0
  %9386 = vmatprep.mubr.bf16.mxu0 %v8884
  %9387 = vmatmul.mubr.bf16.gmra.mrb[0].mxu0 %v8883
  %v9388 = vpop.f32.mrb[0].mxu0
  %v9389 = vadd.f32 0.0, %v9388
  %v9390 = vpop.f32.mrb[0].mxu0
  %v9391 = vpop.f32.mrb[0].mxu0
  %v9392 = vadd.f32 0.0, %v9391
  %v9393 = vpop.f32.mrb[0].mxu0
  %9394 = vmatprep.mubr.bf16.mxu0 %v8887
  %9395 = vmatmul.mubr.bf16.gmra.mrb[0].mxu0 %v8886
  %v9396 = vpop.f32.mrb[0].mxu0
  %v9397 = vadd.f32 0.0, %v9396
  %v9398 = vpop.f32.mrb[0].mxu0
  %v9399 = vpop.f32.mrb[0].mxu0
  %v9400 = vadd.f32 0.0, %v9399
  %v9401 = vpop.f32.mrb[0].mxu0
  %9402 = vmatprep.mubr.bf16.mxu0 %v8890
  %9403 = vmatmul.mubr.bf16.gmra.mrb[0].mxu0 %v8889
  %v9404 = vpop.f32.mrb[0].mxu0
  %v9405 = vadd.f32 0.0, %v9404
  %v9406 = vpop.f32.mrb[0].mxu0
  %v9407 = vpop.f32.mrb[0].mxu0
  %v9408 = vadd.f32 0.0, %v9407
  %v9409 = vpop.f32.mrb[0].mxu0
  %9410 = vmatprep.mubr.bf16.mxu0 %v8893
  %9411 = vmatmul.mubr.bf16.gmra.mrb[0].mxu0 %v8892
  %v9412 = vpop.f32.mrb[0].mxu0
  %v9413 = vadd.f32 0.0, %v9412
  %v9414 = vpop.f32.mrb[0].mxu0
  %v9415 = vpop.f32.mrb[0].mxu0
  %v9416 = vadd.f32 0.0, %v9415
  %v9417 = vpop.f32.mrb[0].mxu0
  %9418 = vmatprep.mubr.bf16.mxu0 %v8896
  %9419 = vmatmul.mubr.bf16.gmra.mrb[0].mxu0 %v8895
  %v9420 = vpop.f32.mrb[0].mxu0
  %v9421 = vadd.f32 0.0, %v9420
  %v9422 = vpop.f32.mrb[0].mxu0
  %v9423 = vpop.f32.mrb[0].mxu0
  %v9424 = vadd.f32 0.0, %v9423
  %v9425 = vpop.f32.mrb[0].mxu0
  %9426 = vdwg.mxu0
  %9427 = vmatprep.subr.bf16.mxu0 0
  %9428 = vmatpush1.bf16.msra.mxu0 %v9022
  %9429 = vmatprep.subr.bf16.mxu0 0
  %9430 = vmatpush1.bf16.msra.mxu0 %v9023
  %9431 = vmatprep.subr.bf16.mxu0 0
  %9432 = vmatpush1.bf16.msra.mxu0 0
  %9433 = vmatprep.subr.bf16.mxu0 0
  %9434 = vmatpush1.bf16.msra.mxu0 0
  %9435 = vmatprep.subr.bf16.mxu0 0
  %9436 = vmatpush1.bf16.msra.mxu0 0
  %9437 = vmatprep.subr.bf16.mxu0 0
  %9438 = vmatpush1.bf16.msra.mxu0 0
  %9439 = vmatprep.subr.bf16.mxu0 0
  %9440 = vmatpush1.bf16.msra.mxu0 0
  %9441 = vmatprep.subr.bf16.mxu0 0
  %9442 = vmatpush1.bf16.msra.mxu0 0
  %9443 = vmatprep.subr.bf16.mxu0 0
  %9444 = vmatpush1.bf16.msra.mxu0 0
  %9445 = vmatprep.subr.bf16.mxu0 0
  %9446 = vmatpush1.bf16.msra.mxu0 0
  %9447 = vmatprep.subr.bf16.mxu0 0
  %9448 = vmatpush1.bf16.msra.mxu0 0
  %9449 = vmatprep.subr.bf16.mxu0 0
  %9450 = vmatpush1.bf16.msra.mxu0 0
  %9451 = vmatprep.subr.bf16.mxu0 0
  %9452 = vmatpush1.bf16.msra.mxu0 0
  %9453 = vmatprep.subr.bf16.mxu0 0
  %9454 = vmatpush1.bf16.msra.mxu0 0
  %9455 = vmatprep.subr.bf16.mxu0 0
  %9456 = vmatpush1.bf16.msra.mxu0 0
  %9457 = vmatprep.subr.bf16.mxu0 0
  %9458 = vmatpush1.bf16.msra.mxu0 0
  %9459 = vmatprep.mubr.bf16.mxu0 0
  %9460 = vmatmul.mubr.bf16.gmra.mrb[0].mxu0 %v9043
  %v9461 = vpop.f32.mrb[0].mxu0
  %v9462 = vadd.f32 %v9173, %v9461
  %v9463 = vpop.f32.mrb[0].mxu0
  %v9464 = vpop.f32.mrb[0].mxu0
  %v9465 = vadd.f32 %v9176, %v9464
  %v9466 = vpop.f32.mrb[0].mxu0
  %9467 = vmatprep.mubr.bf16.mxu0 0
  %9468 = vmatmul.mubr.bf16.gmra.mrb[0].mxu0 %v9046
  %v9469 = vpop.f32.mrb[0].mxu0
  %v9470 = vadd.f32 %v9181, %v9469
  %v9471 = vpop.f32.mrb[0].mxu0
  %v9472 = vpop.f32.mrb[0].mxu0
  %v9473 = vadd.f32 %v9184, %v9472
  %v9474 = vpop.f32.mrb[0].mxu0
  %9475 = vmatprep.mubr.bf16.mxu0 0
  %9476 = vmatmul.mubr.bf16.gmra.mrb[0].mxu0 %v9049
  %v9477 = vpop.f32.mrb[0].mxu0
  %v9478 = vadd.f32 %v9189, %v9477
  %v9479 = vpop.f32.mrb[0].mxu0
  %v9480 = vpop.f32.mrb[0].mxu0
  %v9481 = vadd.f32 %v9192, %v9480
  %v9482 = vpop.f32.mrb[0].mxu0
  %9483 = vmatprep.mubr.bf16.mxu0 0
  %9484 = vmatmul.mubr.bf16.gmra.mrb[0].mxu0 %v9052
  %v9485 = vpop.f32.mrb[0].mxu0
  %v9486 = vadd.f32 %v9197, %v9485
  %v9487 = vpop.f32.mrb[0].mxu0
  %v9488 = vpop.f32.mrb[0].mxu0
  %v9489 = vadd.f32 %v9200, %v9488
  %v9490 = vpop.f32.mrb[0].mxu0
  %9491 = vmatprep.mubr.bf16.mxu0 0
  %9492 = vmatmul.mubr.bf16.gmra.mrb[0].mxu0 %v9055
  %v9493 = vpop.f32.mrb[0].mxu0
  %v9494 = vadd.f32 %v9205, %v9493
  %v9495 = vpop.f32.mrb[0].mxu0
  %v9496 = vpop.f32.mrb[0].mxu0
  %v9497 = vadd.f32 %v9208, %v9496
  %v9498 = vpop.f32.mrb[0].mxu0
  %9499 = vmatprep.mubr.bf16.mxu0 0
  %9500 = vmatmul.mubr.bf16.gmra.mrb[0].mxu0 %v9058
  %v9501 = vpop.f32.mrb[0].mxu0
  %v9502 = vadd.f32 %v9213, %v9501
  %v9503 = vpop.f32.mrb[0].mxu0
  %v9504 = vpop.f32.mrb[0].mxu0
  %v9505 = vadd.f32 %v9216, %v9504
  %v9506 = vpop.f32.mrb[0].mxu0
  %9507 = vmatprep.mubr.bf16.mxu0 0
  %9508 = vmatmul.mubr.bf16.gmra.mrb[0].mxu0 %v9061
  %v9509 = vpop.f32.mrb[0].mxu0
  %v9510 = vadd.f32 %v9221, %v9509
  %v9511 = vpop.f32.mrb[0].mxu0
  %v9512 = vpop.f32.mrb[0].mxu0
  %v9513 = vadd.f32 %v9224, %v9512
  %v9514 = vpop.f32.mrb[0].mxu0
  %9515 = vmatprep.mubr.bf16.mxu0 0
  %9516 = vmatmul.mubr.bf16.gmra.mrb[0].mxu0 %v9064
  %v9517 = vpop.f32.mrb[0].mxu0
  %v9518 = vadd.f32 %v9229, %v9517
  %v9519 = vpop.f32.mrb[0].mxu0
  %v9520 = vpop.f32.mrb[0].mxu0
  %v9521 = vadd.f32 %v9232, %v9520
  %v9522 = vpop.f32.mrb[0].mxu0
  %9523 = vmatprep.mubr.bf16.mxu0 0
  %9524 = vmatmul.mubr.bf16.gmra.mrb[0].mxu0 %v9067
  %v9525 = vpop.f32.mrb[0].mxu0
  %v9526 = vadd.f32 %v9237, %v9525
  %v9527 = vpop.f32.mrb[0].mxu0
  %v9528 = vpop.f32.mrb[0].mxu0
  %v9529 = vadd.f32 %v9240, %v9528
  %v9530 = vpop.f32.mrb[0].mxu0
  %9531 = vmatprep.mubr.bf16.mxu0 0
  %9532 = vmatmul.mubr.bf16.gmra.mrb[0].mxu0 %v9070
  %v9533 = vpop.f32.mrb[0].mxu0
  %v9534 = vadd.f32 %v9245, %v9533
  %v9535 = vpop.f32.mrb[0].mxu0
  %v9536 = vpop.f32.mrb[0].mxu0
  %v9537 = vadd.f32 %v9248, %v9536
  %v9538 = vpop.f32.mrb[0].mxu0
  %9539 = vmatprep.mubr.bf16.mxu0 0
  %9540 = vmatmul.mubr.bf16.gmra.mrb[0].mxu0 %v9073
  %v9541 = vpop.f32.mrb[0].mxu0
  %v9542 = vadd.f32 %v9253, %v9541
  %v9543 = vpop.f32.mrb[0].mxu0
  %v9544 = vpop.f32.mrb[0].mxu0
  %v9545 = vadd.f32 %v9256, %v9544
  %v9546 = vpop.f32.mrb[0].mxu0
  %9547 = vmatprep.mubr.bf16.mxu0 0
  %9548 = vmatmul.mubr.bf16.gmra.mrb[0].mxu0 %v9076
  %v9549 = vpop.f32.mrb[0].mxu0
  %v9550 = vadd.f32 %v9261, %v9549
  %v9551 = vpop.f32.mrb[0].mxu0
  %v9552 = vpop.f32.mrb[0].mxu0
  %v9553 = vadd.f32 %v9264, %v9552
  %v9554 = vpop.f32.mrb[0].mxu0
  %9555 = vmatprep.mubr.bf16.mxu0 0
  %9556 = vmatmul.mubr.bf16.gmra.mrb[0].mxu0 %v9079
  %v9557 = vpop.f32.mrb[0].mxu0
  %v9558 = vadd.f32 %v9269, %v9557
  %v9559 = vpop.f32.mrb[0].mxu0
  %v9560 = vpop.f32.mrb[0].mxu0
  %v9561 = vadd.f32 %v9272, %v9560
  %v9562 = vpop.f32.mrb[0].mxu0
  %9563 = vmatprep.mubr.bf16.mxu0 0
  %9564 = vmatmul.mubr.bf16.gmra.mrb[0].mxu0 %v9082
  %v9565 = vpop.f32.mrb[0].mxu0
  %v9566 = vadd.f32 %v9277, %v9565
  %v9567 = vpop.f32.mrb[0].mxu0
  %v9568 = vpop.f32.mrb[0].mxu0
  %v9569 = vadd.f32 %v9280, %v9568
  %v9570 = vpop.f32.mrb[0].mxu0
  %9571 = vmatprep.mubr.bf16.mxu0 0
  %9572 = vmatmul.mubr.bf16.gmra.mrb[0].mxu0 %v9085
  %v9573 = vpop.f32.mrb[0].mxu0
  %v9574 = vadd.f32 %v9285, %v9573
  %v9575 = vpop.f32.mrb[0].mxu0
  %v9576 = vpop.f32.mrb[0].mxu0
  %v9577 = vadd.f32 %v9288, %v9576
  %v9578 = vpop.f32.mrb[0].mxu0
  %9579 = vmatprep.mubr.bf16.mxu0 0
  %9580 = vmatmul.mubr.bf16.gmra.mrb[0].mxu0 %v9088
  %v9581 = vpop.f32.mrb[0].mxu0
  %v9582 = vadd.f32 %v9293, %v9581
  %v9583 = vpop.f32.mrb[0].mxu0
  %v9584 = vpop.f32.mrb[0].mxu0
  %v9585 = vadd.f32 %v9296, %v9584
  %v9586 = vpop.f32.mrb[0].mxu0
  %9587 = vmatprep.mubr.bf16.mxu0 0
  %9588 = vmatmul.mubr.bf16.gmra.mrb[0].mxu0 %v9091
  %v9589 = vpop.f32.mrb[0].mxu0
  %v9590 = vadd.f32 %v9301, %v9589
  %v9591 = vpop.f32.mrb[0].mxu0
  %v9592 = vpop.f32.mrb[0].mxu0
  %v9593 = vadd.f32 %v9304, %v9592
  %v9594 = vpop.f32.mrb[0].mxu0
  %9595 = vmatprep.mubr.bf16.mxu0 0
  %9596 = vmatmul.mubr.bf16.gmra.mrb[0].mxu0 %v9094
  %v9597 = vpop.f32.mrb[0].mxu0
  %v9598 = vadd.f32 %v9309, %v9597
  %v9599 = vpop.f32.mrb[0].mxu0
  %v9600 = vpop.f32.mrb[0].mxu0
  %v9601 = vadd.f32 %v9312, %v9600
  %v9602 = vpop.f32.mrb[0].mxu0
  %9603 = vmatprep.mubr.bf16.mxu0 0
  %9604 = vmatmul.mubr.bf16.gmra.mrb[0].mxu0 %v9097
  %v9605 = vpop.f32.mrb[0].mxu0
  %v9606 = vadd.f32 %v9317, %v9605
  %v9607 = vpop.f32.mrb[0].mxu0
  %v9608 = vpop.f32.mrb[0].mxu0
  %v9609 = vadd.f32 %v9320, %v9608
  %v9610 = vpop.f32.mrb[0].mxu0
  %9611 = vmatprep.mubr.bf16.mxu0 0
  %9612 = vmatmul.mubr.bf16.gmra.mrb[0].mxu0 %v9100
  %v9613 = vpop.f32.mrb[0].mxu0
  %v9614 = vadd.f32 %v9325, %v9613
  %v9615 = vpop.f32.mrb[0].mxu0
  %v9616 = vpop.f32.mrb[0].mxu0
  %v9617 = vadd.f32 %v9328, %v9616
  %v9618 = vpop.f32.mrb[0].mxu0
  %9619 = vmatprep.mubr.bf16.mxu0 0
  %9620 = vmatmul.mubr.bf16.gmra.mrb[0].mxu0 %v9103
  %v9621 = vpop.f32.mrb[0].mxu0
  %v9622 = vadd.f32 %v9333, %v9621
  %v9623 = vpop.f32.mrb[0].mxu0
  %v9624 = vpop.f32.mrb[0].mxu0
  %v9625 = vadd.f32 %v9336, %v9624
  %v9626 = vpop.f32.mrb[0].mxu0
  %9627 = vmatprep.mubr.bf16.mxu0 0
  %9628 = vmatmul.mubr.bf16.gmra.mrb[0].mxu0 %v9106
  %v9629 = vpop.f32.mrb[0].mxu0
  %v9630 = vadd.f32 %v9341, %v9629
  %v9631 = vpop.f32.mrb[0].mxu0
  %v9632 = vpop.f32.mrb[0].mxu0
  %v9633 = vadd.f32 %v9344, %v9632
  %v9634 = vpop.f32.mrb[0].mxu0
  %9635 = vmatprep.mubr.bf16.mxu0 0
  %9636 = vmatmul.mubr.bf16.gmra.mrb[0].mxu0 %v9109
  %v9637 = vpop.f32.mrb[0].mxu0
  %v9638 = vadd.f32 %v9349, %v9637
  %v9639 = vpop.f32.mrb[0].mxu0
  %v9640 = vpop.f32.mrb[0].mxu0
  %v9641 = vadd.f32 %v9352, %v9640
  %v9642 = vpop.f32.mrb[0].mxu0
  %9643 = vmatprep.mubr.bf16.mxu0 0
  %9644 = vmatmul.mubr.bf16.gmra.mrb[0].mxu0 %v9112
  %v9645 = vpop.f32.mrb[0].mxu0
  %v9646 = vadd.f32 %v9357, %v9645
  %v9647 = vpop.f32.mrb[0].mxu0
  %v9648 = vpop.f32.mrb[0].mxu0
  %v9649 = vadd.f32 %v9360, %v9648
  %v9650 = vpop.f32.mrb[0].mxu0
  %9651 = vmatprep.mubr.bf16.mxu0 0
  %9652 = vmatmul.mubr.bf16.gmra.mrb[0].mxu0 %v9115
  %v9653 = vpop.f32.mrb[0].mxu0
  %v9654 = vadd.f32 %v9365, %v9653
  %v9655 = vpop.f32.mrb[0].mxu0
  %v9656 = vpop.f32.mrb[0].mxu0
  %v9657 = vadd.f32 %v9368, %v9656
  %v9658 = vpop.f32.mrb[0].mxu0
  %9659 = vmatprep.mubr.bf16.mxu0 0
  %9660 = vmatmul.mubr.bf16.gmra.mrb[0].mxu0 %v9118
  %v9661 = vpop.f32.mrb[0].mxu0
  %v9662 = vadd.f32 %v9373, %v9661
  %v9663 = vpop.f32.mrb[0].mxu0
  %v9664 = vpop.f32.mrb[0].mxu0
  %v9665 = vadd.f32 %v9376, %v9664
  %v9666 = vpop.f32.mrb[0].mxu0
  %9667 = vmatprep.mubr.bf16.mxu0 0
  %9668 = vmatmul.mubr.bf16.gmra.mrb[0].mxu0 %v9121
  %v9669 = vpop.f32.mrb[0].mxu0
  %v9670 = vadd.f32 %v9381, %v9669
  %v9671 = vpop.f32.mrb[0].mxu0
  %v9672 = vpop.f32.mrb[0].mxu0
  %v9673 = vadd.f32 %v9384, %v9672
  %v9674 = vpop.f32.mrb[0].mxu0
  %9675 = vmatprep.mubr.bf16.mxu0 0
  %9676 = vmatmul.mubr.bf16.gmra.mrb[0].mxu0 %v9124
  %v9677 = vpop.f32.mrb[0].mxu0
  %v9678 = vadd.f32 %v9389, %v9677
  %v9679 = vpop.f32.mrb[0].mxu0
  %v9680 = vpop.f32.mrb[0].mxu0
  %v9681 = vadd.f32 %v9392, %v9680
  %v9682 = vpop.f32.mrb[0].mxu0
  %9683 = vmatprep.mubr.bf16.mxu0 0
  %9684 = vmatmul.mubr.bf16.gmra.mrb[0].mxu0 %v9127
  %v9685 = vpop.f32.mrb[0].mxu0
  %v9686 = vadd.f32 %v9397, %v9685
  %v9687 = vpop.f32.mrb[0].mxu0
  %v9688 = vpop.f32.mrb[0].mxu0
  %v9689 = vadd.f32 %v9400, %v9688
  %v9690 = vpop.f32.mrb[0].mxu0
  %9691 = vmatprep.mubr.bf16.mxu0 0
  %9692 = vmatmul.mubr.bf16.gmra.mrb[0].mxu0 %v9130
  %v9693 = vpop.f32.mrb[0].mxu0
  %v9694 = vadd.f32 %v9405, %v9693
  %v9695 = vpop.f32.mrb[0].mxu0
  %v9696 = vpop.f32.mrb[0].mxu0
  %v9697 = vadd.f32 %v9408, %v9696
  %v9698 = vpop.f32.mrb[0].mxu0
  %9699 = vmatprep.mubr.bf16.mxu0 0
  %9700 = vmatmul.mubr.bf16.gmra.mrb[0].mxu0 %v9133
  %v9701 = vpop.f32.mrb[0].mxu0
  %v9702 = vadd.f32 %v9413, %v9701
  %v9703 = vpop.f32.mrb[0].mxu0
  %v9704 = vpop.f32.mrb[0].mxu0
  %v9705 = vadd.f32 %v9416, %v9704
  %v9706 = vpop.f32.mrb[0].mxu0
  %9707 = vmatprep.mubr.bf16.mxu0 0
  %9708 = vmatmul.mubr.bf16.gmra.mrb[0].mxu0 %v9136
  %v9709 = vpop.f32.mrb[0].mxu0
  %v9710 = vadd.f32 %v9421, %v9709
  %v9711 = vpop.f32.mrb[0].mxu0
  %v9712 = vpop.f32.mrb[0].mxu0
  %v9713 = vadd.f32 %v9424, %v9712
  %v9714 = vpop.f32.mrb[0].mxu0
  %9715 = vdwg.mxu0
  %v9716 = vld [vmem:[%s5] sm:$0x1]
  %v9718 = vlaneseq
  %v9719 = vshrl.u32 %v9718, 7
  %v9720 = vsub.s32 0, %v9719
  %v9721 = vrot.slane %v9716, %v9720
  %v9723 = vmul.f32 %v9462, %v9721
  %v9724 = vmul.f32 %v9465, %v9721
  %v9725 = vmul.f32 %v9470, %v9721
  %v9726 = vmul.f32 %v9473, %v9721
  %v9727 = vmul.f32 %v9478, %v9721
  %v9728 = vmul.f32 %v9481, %v9721
  %v9729 = vmul.f32 %v9486, %v9721
  %v9730 = vmul.f32 %v9489, %v9721
  %v9731 = vmul.f32 %v9494, %v9721
  %v9732 = vmul.f32 %v9497, %v9721
  %v9733 = vmul.f32 %v9502, %v9721
  %v9734 = vmul.f32 %v9505, %v9721
  %v9735 = vmul.f32 %v9510, %v9721
  %v9736 = vmul.f32 %v9513, %v9721
  %v9737 = vmul.f32 %v9518, %v9721
  %v9738 = vmul.f32 %v9521, %v9721
  %v9739 = vmul.f32 %v9526, %v9721
  %v9740 = vmul.f32 %v9529, %v9721
  %v9741 = vmul.f32 %v9534, %v9721
  %v9742 = vmul.f32 %v9537, %v9721
  %v9743 = vmul.f32 %v9542, %v9721
  %v9744 = vmul.f32 %v9545, %v9721
  %v9745 = vmul.f32 %v9550, %v9721
  %v9746 = vmul.f32 %v9553, %v9721
  %v9747 = vmul.f32 %v9558, %v9721
  %v9748 = vmul.f32 %v9561, %v9721
  %v9749 = vmul.f32 %v9566, %v9721
  %v9750 = vmul.f32 %v9569, %v9721
  %v9751 = vmul.f32 %v9574, %v9721
  %v9752 = vmul.f32 %v9577, %v9721
  %v9753 = vmul.f32 %v9582, %v9721
  %v9754 = vmul.f32 %v9585, %v9721
  %v9755 = vmul.f32 %v9590, %v9721
  %v9756 = vmul.f32 %v9593, %v9721
  %v9757 = vmul.f32 %v9598, %v9721
  %v9758 = vmul.f32 %v9601, %v9721
  %v9759 = vmul.f32 %v9606, %v9721
  %v9760 = vmul.f32 %v9609, %v9721
  %v9761 = vmul.f32 %v9614, %v9721
  %v9762 = vmul.f32 %v9617, %v9721
  %v9763 = vmul.f32 %v9622, %v9721
  %v9764 = vmul.f32 %v9625, %v9721
  %v9765 = vmul.f32 %v9630, %v9721
  %v9766 = vmul.f32 %v9633, %v9721
  %v9767 = vmul.f32 %v9638, %v9721
  %v9768 = vmul.f32 %v9641, %v9721
  %v9769 = vmul.f32 %v9646, %v9721
  %v9770 = vmul.f32 %v9649, %v9721
  %v9771 = vmul.f32 %v9654, %v9721
  %v9772 = vmul.f32 %v9657, %v9721
  %v9773 = vmul.f32 %v9662, %v9721
  %v9774 = vmul.f32 %v9665, %v9721
  %v9775 = vmul.f32 %v9670, %v9721
  %v9776 = vmul.f32 %v9673, %v9721
  %v9777 = vmul.f32 %v9678, %v9721
  %v9778 = vmul.f32 %v9681, %v9721
  %v9779 = vmul.f32 %v9686, %v9721
  %v9780 = vmul.f32 %v9689, %v9721
  %v9781 = vmul.f32 %v9694, %v9721
  %v9782 = vmul.f32 %v9697, %v9721
  %v9783 = vmul.f32 %v9702, %v9721
  %v9784 = vmul.f32 %v9705, %v9721
  %v9785 = vmul.f32 %v9710, %v9721
  %v9786 = vmul.f32 %v9713, %v9721
  %v9787 = vld [vmem:[%s6] sm:$0x1]
  %v9789 = vlaneseq
  %v9790 = vshrl.u32 %v9789, 7
  %v9791 = vsub.s32 0, %v9790
  %v9792 = vrot.slane %v9787, %v9791
  %v9794 = vadd.f32 %v9723, %v9792
  %v9795 = vadd.f32 %v9724, %v9792
  %v9796 = vadd.f32 %v9725, %v9792
  %v9797 = vadd.f32 %v9726, %v9792
  %v9798 = vadd.f32 %v9727, %v9792
  %v9799 = vadd.f32 %v9728, %v9792
  %v9800 = vadd.f32 %v9729, %v9792
  %v9801 = vadd.f32 %v9730, %v9792
  %v9802 = vadd.f32 %v9731, %v9792
  %v9803 = vadd.f32 %v9732, %v9792
  %v9804 = vadd.f32 %v9733, %v9792
  %v9805 = vadd.f32 %v9734, %v9792
  %v9806 = vadd.f32 %v9735, %v9792
  %v9807 = vadd.f32 %v9736, %v9792
  %v9808 = vadd.f32 %v9737, %v9792
  %v9809 = vadd.f32 %v9738, %v9792
  %v9810 = vadd.f32 %v9739, %v9792
  %v9811 = vadd.f32 %v9740, %v9792
  %v9812 = vadd.f32 %v9741, %v9792
  %v9813 = vadd.f32 %v9742, %v9792
  %v9814 = vadd.f32 %v9743, %v9792
  %v9815 = vadd.f32 %v9744, %v9792
  %v9816 = vadd.f32 %v9745, %v9792
  %v9817 = vadd.f32 %v9746, %v9792
  %v9818 = vadd.f32 %v9747, %v9792
  %v9819 = vadd.f32 %v9748, %v9792
  %v9820 = vadd.f32 %v9749, %v9792
  %v9821 = vadd.f32 %v9750, %v9792
  %v9822 = vadd.f32 %v9751, %v9792
  %v9823 = vadd.f32 %v9752, %v9792
  %v9824 = vadd.f32 %v9753, %v9792
  %v9825 = vadd.f32 %v9754, %v9792
  %v9826 = vadd.f32 %v9755, %v9792
  %v9827 = vadd.f32 %v9756, %v9792
  %v9828 = vadd.f32 %v9757, %v9792
  %v9829 = vadd.f32 %v9758, %v9792
  %v9830 = vadd.f32 %v9759, %v9792
  %v9831 = vadd.f32 %v9760, %v9792
  %v9832 = vadd.f32 %v9761, %v9792
  %v9833 = vadd.f32 %v9762, %v9792
  %v9834 = vadd.f32 %v9763, %v9792
  %v9835 = vadd.f32 %v9764, %v9792
  %v9836 = vadd.f32 %v9765, %v9792
  %v9837 = vadd.f32 %v9766, %v9792
  %v9838 = vadd.f32 %v9767, %v9792
  %v9839 = vadd.f32 %v9768, %v9792
  %v9840 = vadd.f32 %v9769, %v9792
  %v9841 = vadd.f32 %v9770, %v9792
  %v9842 = vadd.f32 %v9771, %v9792
  %v9843 = vadd.f32 %v9772, %v9792
  %v9844 = vadd.f32 %v9773, %v9792
  %v9845 = vadd.f32 %v9774, %v9792
  %v9846 = vadd.f32 %v9775, %v9792
  %v9847 = vadd.f32 %v9776, %v9792
  %v9848 = vadd.f32 %v9777, %v9792
  %v9849 = vadd.f32 %v9778, %v9792
  %v9850 = vadd.f32 %v9779, %v9792
  %v9851 = vadd.f32 %v9780, %v9792
  %v9852 = vadd.f32 %v9781, %v9792
  %v9853 = vadd.f32 %v9782, %v9792
  %v9854 = vadd.f32 %v9783, %v9792
  %v9855 = vadd.f32 %v9784, %v9792
  %v9856 = vadd.f32 %v9785, %v9792
  %v9857 = vadd.f32 %v9786, %v9792
  %v9858 = vadd.f32 %v9794, %v91
  %v9859 = vadd.f32 %v9795, %v92
  %v9860 = vadd.f32 %v9796, %v93
  %v9861 = vadd.f32 %v9797, %v94
  %v9862 = vadd.f32 %v9798, %v95
  %v9863 = vadd.f32 %v9799, %v96
  %v9864 = vadd.f32 %v9800, %v97
  %v9865 = vadd.f32 %v9801, %v98
  %v9866 = vadd.f32 %v9802, %v99
  %v9867 = vadd.f32 %v9803, %v100
  %v9868 = vadd.f32 %v9804, %v101
  %v9869 = vadd.f32 %v9805, %v102
  %v9870 = vadd.f32 %v9806, %v103
  %v9871 = vadd.f32 %v9807, %v104
  %v9872 = vadd.f32 %v9808, %v105
  %v9873 = vadd.f32 %v9809, %v106
  %v9874 = vadd.f32 %v9810, %v107
  %v9875 = vadd.f32 %v9811, %v108
  %v9876 = vadd.f32 %v9812, %v109
  %v9877 = vadd.f32 %v9813, %v110
  %v9878 = vadd.f32 %v9814, %v111
  %v9879 = vadd.f32 %v9815, %v112
  %v9880 = vadd.f32 %v9816, %v113
  %v9881 = vadd.f32 %v9817, %v114
  %v9882 = vadd.f32 %v9818, %v115
  %v9883 = vadd.f32 %v9819, %v116
  %v9884 = vadd.f32 %v9820, %v117
  %v9885 = vadd.f32 %v9821, %v118
  %v9886 = vadd.f32 %v9822, %v119
  %v9887 = vadd.f32 %v9823, %v120
  %v9888 = vadd.f32 %v9824, %v121
  %v9889 = vadd.f32 %v9825, %v122
  %v9890 = vadd.f32 %v9826, %v123
  %v9891 = vadd.f32 %v9827, %v124
  %v9892 = vadd.f32 %v9828, %v125
  %v9893 = vadd.f32 %v9829, %v126
  %v9894 = vadd.f32 %v9830, %v127
  %v9895 = vadd.f32 %v9831, %v128
  %v9896 = vadd.f32 %v9832, %v129
  %v9897 = vadd.f32 %v9833, %v130
  %v9898 = vadd.f32 %v9834, %v131
  %v9899 = vadd.f32 %v9835, %v132
  %v9900 = vadd.f32 %v9836, %v133
  %v9901 = vadd.f32 %v9837, %v134
  %v9902 = vadd.f32 %v9838, %v135
  %v9903 = vadd.f32 %v9839, %v136
  %v9904 = vadd.f32 %v9840, %v137
  %v9905 = vadd.f32 %v9841, %v138
  %v9906 = vadd.f32 %v9842, %v139
  %v9907 = vadd.f32 %v9843, %v140
  %v9908 = vadd.f32 %v9844, %v141
  %v9909 = vadd.f32 %v9845, %v142
  %v9910 = vadd.f32 %v9846, %v143
  %v9911 = vadd.f32 %v9847, %v144
  %v9912 = vadd.f32 %v9848, %v145
  %v9913 = vadd.f32 %v9849, %v146
  %v9914 = vadd.f32 %v9850, %v147
  %v9915 = vadd.f32 %v9851, %v148
  %v9916 = vadd.f32 %v9852, %v149
  %v9917 = vadd.f32 %v9853, %v150
  %v9918 = vadd.f32 %v9854, %v151
  %v9919 = vadd.f32 %v9855, %v152
  %v9920 = vadd.f32 %v9856, %v153
  %v9921 = vadd.f32 %v9857, %v154
  %v9922 = vmax.f32 %v9858, 0.0
  %v9923 = vmax.f32 %v9859, 0.0
  %v9924 = vmax.f32 %v9860, 0.0
  %v9925 = vmax.f32 %v9861, 0.0
  %v9926 = vmax.f32 %v9862, 0.0
  %v9927 = vmax.f32 %v9863, 0.0
  %v9928 = vmax.f32 %v9864, 0.0
  %v9929 = vmax.f32 %v9865, 0.0
  %v9930 = vmax.f32 %v9866, 0.0
  %v9931 = vmax.f32 %v9867, 0.0
  %v9932 = vmax.f32 %v9868, 0.0
  %v9933 = vmax.f32 %v9869, 0.0
  %v9934 = vmax.f32 %v9870, 0.0
  %v9935 = vmax.f32 %v9871, 0.0
  %v9936 = vmax.f32 %v9872, 0.0
  %v9937 = vmax.f32 %v9873, 0.0
  %v9938 = vmax.f32 %v9874, 0.0
  %v9939 = vmax.f32 %v9875, 0.0
  %v9940 = vmax.f32 %v9876, 0.0
  %v9941 = vmax.f32 %v9877, 0.0
  %v9942 = vmax.f32 %v9878, 0.0
  %v9943 = vmax.f32 %v9879, 0.0
  %v9944 = vmax.f32 %v9880, 0.0
  %v9945 = vmax.f32 %v9881, 0.0
  %v9946 = vmax.f32 %v9882, 0.0
  %v9947 = vmax.f32 %v9883, 0.0
  %v9948 = vmax.f32 %v9884, 0.0
  %v9949 = vmax.f32 %v9885, 0.0
  %v9950 = vmax.f32 %v9886, 0.0
  %v9951 = vmax.f32 %v9887, 0.0
  %v9952 = vmax.f32 %v9888, 0.0
  %v9953 = vmax.f32 %v9889, 0.0
  %v9954 = vmax.f32 %v9890, 0.0
  %v9955 = vmax.f32 %v9891, 0.0
  %v9956 = vmax.f32 %v9892, 0.0
  %v9957 = vmax.f32 %v9893, 0.0
  %v9958 = vmax.f32 %v9894, 0.0
  %v9959 = vmax.f32 %v9895, 0.0
  %v9960 = vmax.f32 %v9896, 0.0
  %v9961 = vmax.f32 %v9897, 0.0
  %v9962 = vmax.f32 %v9898, 0.0
  %v9963 = vmax.f32 %v9899, 0.0
  %v9964 = vmax.f32 %v9900, 0.0
  %v9965 = vmax.f32 %v9901, 0.0
  %v9966 = vmax.f32 %v9902, 0.0
  %v9967 = vmax.f32 %v9903, 0.0
  %v9968 = vmax.f32 %v9904, 0.0
  %v9969 = vmax.f32 %v9905, 0.0
  %v9970 = vmax.f32 %v9906, 0.0
  %v9971 = vmax.f32 %v9907, 0.0
  %v9972 = vmax.f32 %v9908, 0.0
  %v9973 = vmax.f32 %v9909, 0.0
  %v9974 = vmax.f32 %v9910, 0.0
  %v9975 = vmax.f32 %v9911, 0.0
  %v9976 = vmax.f32 %v9912, 0.0
  %v9977 = vmax.f32 %v9913, 0.0
  %v9978 = vmax.f32 %v9914, 0.0
  %v9979 = vmax.f32 %v9915, 0.0
  %v9980 = vmax.f32 %v9916, 0.0
  %v9981 = vmax.f32 %v9917, 0.0
  %v9982 = vmax.f32 %v9918, 0.0
  %v9983 = vmax.f32 %v9919, 0.0
  %v9984 = vmax.f32 %v9920, 0.0
  %v9985 = vmax.f32 %v9921, 0.0
  %v9986 = vpack.c.bf16 %v9923, %v9922
  %v9987 = vpack.c.bf16 %v9925, %v9924
  %v9988 = vpack.c.bf16 %v9927, %v9926
  %v9989 = vpack.c.bf16 %v9929, %v9928
  %v9990 = vpack.c.bf16 %v9931, %v9930
  %v9991 = vpack.c.bf16 %v9933, %v9932
  %v9992 = vpack.c.bf16 %v9935, %v9934
  %v9993 = vpack.c.bf16 %v9937, %v9936
  %v9994 = vpack.c.bf16 %v9939, %v9938
  %v9995 = vpack.c.bf16 %v9941, %v9940
  %v9996 = vpack.c.bf16 %v9943, %v9942
  %v9997 = vpack.c.bf16 %v9945, %v9944
  %v9998 = vpack.c.bf16 %v9947, %v9946
  %v9999 = vpack.c.bf16 %v9949, %v9948
  %v10000 = vpack.c.bf16 %v9951, %v9950
  %v10001 = vpack.c.bf16 %v9953, %v9952
  %v10002 = vpack.c.bf16 %v9955, %v9954
  %v10003 = vpack.c.bf16 %v9957, %v9956
  %v10004 = vpack.c.bf16 %v9959, %v9958
  %v10005 = vpack.c.bf16 %v9961, %v9960
  %v10006 = vpack.c.bf16 %v9963, %v9962
  %v10007 = vpack.c.bf16 %v9965, %v9964
  %v10008 = vpack.c.bf16 %v9967, %v9966
  %v10009 = vpack.c.bf16 %v9969, %v9968
  %v10010 = vpack.c.bf16 %v9971, %v9970
  %v10011 = vpack.c.bf16 %v9973, %v9972
  %v10012 = vpack.c.bf16 %v9975, %v9974
  %v10013 = vpack.c.bf16 %v9977, %v9976
  %v10014 = vpack.c.bf16 %v9979, %v9978
  %v10015 = vpack.c.bf16 %v9981, %v9980
  %v10016 = vpack.c.bf16 %v9983, %v9982
  %v10017 = vpack.c.bf16 %v9985, %v9984
  %v10050 = vunpack.c.l.b16 %v9986
  %v10051 = vunpack.c.h.b16 %v9986
  %v10052 = vunpack.c.l.b16 %v9987
  %v10053 = vunpack.c.h.b16 %v9987
  %v10054 = vunpack.c.l.b16 %v9988
  %v10055 = vunpack.c.h.b16 %v9988
  %v10056 = vunpack.c.l.b16 %v9989
  %v10057 = vunpack.c.h.b16 %v9989
  %v10058 = vunpack.c.l.b16 %v9990
  %v10059 = vunpack.c.h.b16 %v9990
  %v10060 = vunpack.c.l.b16 %v9991
  %v10061 = vunpack.c.h.b16 %v9991
  %v10062 = vunpack.c.l.b16 %v9992
  %v10063 = vunpack.c.h.b16 %v9992
  %v10064 = vunpack.c.l.b16 %v9993
  %v10065 = vunpack.c.h.b16 %v9993
  %v10066 = vunpack.c.l.b16 %v9994
  %v10067 = vunpack.c.h.b16 %v9994
  %v10068 = vunpack.c.l.b16 %v9995
  %v10069 = vunpack.c.h.b16 %v9995
  %v10070 = vunpack.c.l.b16 %v9996
  %v10071 = vunpack.c.h.b16 %v9996
  %v10072 = vunpack.c.l.b16 %v9997
  %v10073 = vunpack.c.h.b16 %v9997
  %v10074 = vunpack.c.l.b16 %v9998
  %v10075 = vunpack.c.h.b16 %v9998
  %v10076 = vunpack.c.l.b16 %v9999
  %v10077 = vunpack.c.h.b16 %v9999
  %v10078 = vunpack.c.l.b16 %v10000
  %v10079 = vunpack.c.h.b16 %v10000
  %v10080 = vunpack.c.l.b16 %v10001
  %v10081 = vunpack.c.h.b16 %v10001
  %v10082 = vunpack.c.l.b16 %v10002
  %v10083 = vunpack.c.h.b16 %v10002
  %v10084 = vunpack.c.l.b16 %v10003
  %v10085 = vunpack.c.h.b16 %v10003
  %v10086 = vunpack.c.l.b16 %v10004
  %v10087 = vunpack.c.h.b16 %v10004
  %v10088 = vunpack.c.l.b16 %v10005
  %v10089 = vunpack.c.h.b16 %v10005
  %v10090 = vunpack.c.l.b16 %v10006
  %v10091 = vunpack.c.h.b16 %v10006
  %v10092 = vunpack.c.l.b16 %v10007
  %v10093 = vunpack.c.h.b16 %v10007
  %v10094 = vunpack.c.l.b16 %v10008
  %v10095 = vunpack.c.h.b16 %v10008
  %v10096 = vunpack.c.l.b16 %v10009
  %v10097 = vunpack.c.h.b16 %v10009
  %v10098 = vunpack.c.l.b16 %v10010
  %v10099 = vunpack.c.h.b16 %v10010
  %v10100 = vunpack.c.l.b16 %v10011
  %v10101 = vunpack.c.h.b16 %v10011
  %v10102 = vunpack.c.l.b16 %v10012
  %v10103 = vunpack.c.h.b16 %v10012
  %v10104 = vunpack.c.l.b16 %v10013
  %v10105 = vunpack.c.h.b16 %v10013
  %v10106 = vunpack.c.l.b16 %v10014
  %v10107 = vunpack.c.h.b16 %v10014
  %v10108 = vunpack.c.l.b16 %v10015
  %v10109 = vunpack.c.h.b16 %v10015
  %v10110 = vunpack.c.l.b16 %v10016
  %v10111 = vunpack.c.h.b16 %v10016
  %v10112 = vunpack.c.l.b16 %v10017
  %v10113 = vunpack.c.h.b16 %v10017
  %v10114 = vpack.c.b16 %v10050, %v10050
  %v10115 = vpack.c.b16 %v10051, %v10051
  %v10116 = vpack.c.b16 %v10052, %v10052
  %v10117 = vpack.c.b16 %v10053, %v10053
  %v10118 = vpack.c.b16 %v10054, %v10054
  %v10119 = vpack.c.b16 %v10055, %v10055
  %v10120 = vpack.c.b16 %v10056, %v10056
  %v10121 = vpack.c.b16 %v10057, %v10057
  %v10122 = vpack.c.b16 %v10058, %v10058
  %v10123 = vpack.c.b16 %v10059, %v10059
  %v10124 = vpack.c.b16 %v10060, %v10060
  %v10125 = vpack.c.b16 %v10061, %v10061
  %v10126 = vpack.c.b16 %v10062, %v10062
  %v10127 = vpack.c.b16 %v10063, %v10063
  %v10128 = vpack.c.b16 %v10064, %v10064
  %v10129 = vpack.c.b16 %v10065, %v10065
  %v10130 = vpack.c.b16 %v10066, %v10066
  %v10131 = vpack.c.b16 %v10067, %v10067
  %v10132 = vpack.c.b16 %v10068, %v10068
  %v10133 = vpack.c.b16 %v10069, %v10069
  %v10134 = vpack.c.b16 %v10070, %v10070
  %v10135 = vpack.c.b16 %v10071, %v10071
  %v10136 = vpack.c.b16 %v10072, %v10072
  %v10137 = vpack.c.b16 %v10073, %v10073
  %v10138 = vpack.c.b16 %v10074, %v10074
  %v10139 = vpack.c.b16 %v10075, %v10075
  %v10140 = vpack.c.b16 %v10076, %v10076
  %v10141 = vpack.c.b16 %v10077, %v10077
  %v10142 = vpack.c.b16 %v10078, %v10078
  %v10143 = vpack.c.b16 %v10079, %v10079
  %v10144 = vpack.c.b16 %v10080, %v10080
  %v10145 = vpack.c.b16 %v10081, %v10081
  %v10146 = vpack.c.b16 %v10082, %v10082
  %v10147 = vpack.c.b16 %v10083, %v10083
  %v10148 = vpack.c.b16 %v10084, %v10084
  %v10149 = vpack.c.b16 %v10085, %v10085
  %v10150 = vpack.c.b16 %v10086, %v10086
  %v10151 = vpack.c.b16 %v10087, %v10087
  %v10152 = vpack.c.b16 %v10088, %v10088
  %v10153 = vpack.c.b16 %v10089, %v10089
  %v10154 = vpack.c.b16 %v10090, %v10090
  %v10155 = vpack.c.b16 %v10091, %v10091
  %v10156 = vpack.c.b16 %v10092, %v10092
  %v10157 = vpack.c.b16 %v10093, %v10093
  %v10158 = vpack.c.b16 %v10094, %v10094
  %v10159 = vpack.c.b16 %v10095, %v10095
  %v10160 = vpack.c.b16 %v10096, %v10096
  %v10161 = vpack.c.b16 %v10097, %v10097
  %v10162 = vpack.c.b16 %v10098, %v10098
  %v10163 = vpack.c.b16 %v10099, %v10099
  %v10164 = vpack.c.b16 %v10100, %v10100
  %v10165 = vpack.c.b16 %v10101, %v10101
  %v10166 = vpack.c.b16 %v10102, %v10102
  %v10167 = vpack.c.b16 %v10103, %v10103
  %v10168 = vpack.c.b16 %v10104, %v10104
  %v10169 = vpack.c.b16 %v10105, %v10105
  %v10170 = vpack.c.b16 %v10106, %v10106
  %v10171 = vpack.c.b16 %v10107, %v10107
  %v10172 = vpack.c.b16 %v10108, %v10108
  %v10173 = vpack.c.b16 %v10109, %v10109
  %v10174 = vpack.c.b16 %v10110, %v10110
  %v10175 = vpack.c.b16 %v10111, %v10111
  %v10176 = vpack.c.b16 %v10112, %v10112
  %v10177 = vpack.c.b16 %v10113, %v10113
  %vm10242 = vcmask 257024
  %10243 = vst.msk [vmem:[%s7] sm:$0xf] %vm10242, %v10114
  %10244 = vst.msk [vmem:[%s7 + $0x4] sm:$0xf] %vm10242, %v10115
  %10245 = vst.msk [vmem:[%s7 + $0x8] sm:$0xf] %vm10242, %v10116
  %10246 = vst.msk [vmem:[%s7 + $0xc] sm:$0xf] %vm10242, %v10117
  %10247 = vst.msk [vmem:[%s7 + $0x10] sm:$0xf] %vm10242, %v10118
  %10248 = vst.msk [vmem:[%s7 + $0x14] sm:$0xf] %vm10242, %v10119
  %10249 = vst.msk [vmem:[%s7 + $0x18] sm:$0xf] %vm10242, %v10120
  %10250 = vst.msk [vmem:[%s7 + $0x1c] sm:$0xf] %vm10242, %v10121
  %10251 = vst.msk [vmem:[%s7 + $0x20] sm:$0xf] %vm10242, %v10122
  %10252 = vst.msk [vmem:[%s7 + $0x24] sm:$0xf] %vm10242, %v10123
  %10253 = vst.msk [vmem:[%s7 + $0x28] sm:$0xf] %vm10242, %v10124
  %10254 = vst.msk [vmem:[%s7 + $0x2c] sm:$0xf] %vm10242, %v10125
  %10255 = vst.msk [vmem:[%s7 + $0x30] sm:$0xf] %vm10242, %v10126
  %10256 = vst.msk [vmem:[%s7 + $0x34] sm:$0xf] %vm10242, %v10127
  %10257 = vst.msk [vmem:[%s7 + $0x38] sm:$0xf] %vm10242, %v10128
  %10258 = vst.msk [vmem:[%s7 + $0x3c] sm:$0xf] %vm10242, %v10129
  %10259 = vst.msk [vmem:[%s7 + $0x40] sm:$0xf] %vm10242, %v10130
  %10260 = vst.msk [vmem:[%s7 + $0x44] sm:$0xf] %vm10242, %v10131
  %10261 = vst.msk [vmem:[%s7 + $0x48] sm:$0xf] %vm10242, %v10132
  %10262 = vst.msk [vmem:[%s7 + $0x4c] sm:$0xf] %vm10242, %v10133
  %10263 = vst.msk [vmem:[%s7 + $0x50] sm:$0xf] %vm10242, %v10134
  %10264 = vst.msk [vmem:[%s7 + $0x54] sm:$0xf] %vm10242, %v10135
  %10265 = vst.msk [vmem:[%s7 + $0x58] sm:$0xf] %vm10242, %v10136
  %10266 = vst.msk [vmem:[%s7 + $0x5c] sm:$0xf] %vm10242, %v10137
  %10267 = vst.msk [vmem:[%s7 + $0x60] sm:$0xf] %vm10242, %v10138
  %10268 = vst.msk [vmem:[%s7 + $0x64] sm:$0xf] %vm10242, %v10139
  %10269 = vst.msk [vmem:[%s7 + $0x68] sm:$0xf] %vm10242, %v10140
  %10270 = vst.msk [vmem:[%s7 + $0x6c] sm:$0xf] %vm10242, %v10141
  %10271 = vst.msk [vmem:[%s7 + $0x70] sm:$0xf] %vm10242, %v10142
  %10272 = vst.msk [vmem:[%s7 + $0x74] sm:$0xf] %vm10242, %v10143
  %10273 = vst.msk [vmem:[%s7 + $0x78] sm:$0xf] %vm10242, %v10144
  %10274 = vst.msk [vmem:[%s7 + $0x7c] sm:$0xf] %vm10242, %v10145
  %10275 = vst.msk [vmem:[%s7 + $0x80] sm:$0xf] %vm10242, %v10146
  %10276 = vst.msk [vmem:[%s7 + $0x84] sm:$0xf] %vm10242, %v10147
  %10277 = vst.msk [vmem:[%s7 + $0x88] sm:$0xf] %vm10242, %v10148
  %10278 = vst.msk [vmem:[%s7 + $0x8c] sm:$0xf] %vm10242, %v10149
  %10279 = vst.msk [vmem:[%s7 + $0x90] sm:$0xf] %vm10242, %v10150
  %10280 = vst.msk [vmem:[%s7 + $0x94] sm:$0xf] %vm10242, %v10151
  %10281 = vst.msk [vmem:[%s7 + $0x98] sm:$0xf] %vm10242, %v10152
  %10282 = vst.msk [vmem:[%s7 + $0x9c] sm:$0xf] %vm10242, %v10153
  %10283 = vst.msk [vmem:[%s7 + $0xa0] sm:$0xf] %vm10242, %v10154
  %10284 = vst.msk [vmem:[%s7 + $0xa4] sm:$0xf] %vm10242, %v10155
  %10285 = vst.msk [vmem:[%s7 + $0xa8] sm:$0xf] %vm10242, %v10156
  %10286 = vst.msk [vmem:[%s7 + $0xac] sm:$0xf] %vm10242, %v10157
  %10287 = vst.msk [vmem:[%s7 + $0xb0] sm:$0xf] %vm10242, %v10158
  %10288 = vst.msk [vmem:[%s7 + $0xb4] sm:$0xf] %vm10242, %v10159
  %10289 = vst.msk [vmem:[%s7 + $0xb8] sm:$0xf] %vm10242, %v10160
  %10290 = vst.msk [vmem:[%s7 + $0xbc] sm:$0xf] %vm10242, %v10161
  %10291 = vst.msk [vmem:[%s7 + $0xc0] sm:$0xf] %vm10242, %v10162
  %10292 = vst.msk [vmem:[%s7 + $0xc4] sm:$0xf] %vm10242, %v10163
  %10293 = vst.msk [vmem:[%s7 + $0xc8] sm:$0xf] %vm10242, %v10164
  %10294 = vst.msk [vmem:[%s7 + $0xcc] sm:$0xf] %vm10242, %v10165
  %10295 = vst.msk [vmem:[%s7 + $0xd0] sm:$0xf] %vm10242, %v10166
  %10296 = vst.msk [vmem:[%s7 + $0xd4] sm:$0xf] %vm10242, %v10167
  %10297 = vst.msk [vmem:[%s7 + $0xd8] sm:$0xf] %vm10242, %v10168
  %10298 = vst.msk [vmem:[%s7 + $0xdc] sm:$0xf] %vm10242, %v10169
  %10299 = vst.msk [vmem:[%s7 + $0xe0] sm:$0xf] %vm10242, %v10170
  %10300 = vst.msk [vmem:[%s7 + $0xe4] sm:$0xf] %vm10242, %v10171
  %10301 = vst.msk [vmem:[%s7 + $0xe8] sm:$0xf] %vm10242, %v10172
  %10302 = vst.msk [vmem:[%s7 + $0xec] sm:$0xf] %vm10242, %v10173
  %10303 = vst.msk [vmem:[%s7 + $0xf0] sm:$0xf] %vm10242, %v10174
  %10304 = vst.msk [vmem:[%s7 + $0xf4] sm:$0xf] %vm10242, %v10175
  %10305 = vst.msk [vmem:[%s7 + $0xf8] sm:$0xf] %vm10242, %v10176
  %10306 = vst.msk [vmem:[%s7 + $0xfc] sm:$0xf] %vm10242, %v10177
  // Predicated region
  $region30: #{tpu_custom_call.1} parent=0 // pred_check
    _
  $region31: #{tpu_custom_call.1} parent=0 // pred_check_branch
    %10308 = sbr.rel (0) target = $region33
  $region32: #{tpu_custom_call.1} parent=0 // pred_region
    _
  $region33: #{tpu_custom_call.1} parent=0 // pred_fallthru
    _
  // Predicated region
  $region34: #{tpu_custom_call.1} parent=0 // pred_check
    _
  $region35: #{tpu_custom_call.1} parent=0 // pred_check_branch
    %10310 = sbr.rel (0) target = $region37
  $region36: #{tpu_custom_call.1} parent=0 // pred_region
    _
  $region37: #{tpu_custom_call.1} parent=0 // pred_fallthru
    _

</llo_original>
